<compile_context>
chip_gen: v5e
topology: v5e:2x2
jax: 0.10.0
libtpu: 0.0.40
codegen_flags: <defaults>
</compile_context>

<pallas_src>
import jax
import jax.numpy as jnp
from jax.experimental import pallas as pl
from jax.experimental.pallas import tpu as pltpu

B = 2
H = W = 6              # fixed by fc1's 6*6*(64+1) input
C = 65                 # 64 + 1
CP = 128               # channels padded to the TPU lane width
HIDDEN = 512
RSUP = 21              # reward_support_size
HP, WP = H + 2, W + 2
NPOS = H * W           # 36 spatial positions
NPAIR = NPOS // 2      # 18 position pairs (s, s+18) packed into one 128-lane row
KPACK = NPAIR * CP     # 2304 compacted fc1 contraction length
HT = 128               # hidden tile (fc1 output columns per grid step)
NH = HIDDEN // HT      # 4 grid steps


# ----------------------------------------------------------------------------
# Fused kernel: conv1 -> relu -> conv2 -> +x -> relu -> pack -> fc1 -> relu -> fc2
# Grid axis j tiles fc1/fc2 over HIDDEN; conv stage only runs at j == 0.
# ----------------------------------------------------------------------------
def tiny_reward_kernel(x_ref, wc_ref, w1_ref, b1_ref, w64_ref, w2_ref, b2_ref,
                       rew_ref, pad_ref, col_ref, feat_ref, c64_ref, racc_ref):
    j = pl.program_id(0)

    @pl.when(j == 0)
    def _conv_stage():
        # ---- conv1: im2col from the zero-padded input, one K=1152 bf16 matmul
        xp = x_ref[...]                                   # (B, 8, 8, 128) f32
        xb = xp.astype(jnp.bfloat16)                      # single hoisted cast
        for t in range(9):
            dy, dx = divmod(t, 3)
            col_ref[:, t * CP:(t + 1) * CP] = (
                xb[:, dy:dy + H, dx:dx + W, :].reshape(B * NPOS, CP))
        y1 = jnp.dot(col_ref[...], wc_ref[0], preferred_element_type=jnp.float32)
        y1 = jnp.maximum(y1, 0.0)                         # (72, 128) f32

        # ---- conv2 on relu(conv1) with a zero border (border-only zeroing) ----
        pad_ref[:, 0:1, :, :] = jnp.zeros((B, 1, WP, CP), jnp.float32)
        pad_ref[:, HP - 1:HP, :, :] = jnp.zeros((B, 1, WP, CP), jnp.float32)
        pad_ref[:, 1:H + 1, 0:1, :] = jnp.zeros((B, H, 1, CP), jnp.float32)
        pad_ref[:, 1:H + 1, WP - 1:WP, :] = jnp.zeros((B, H, 1, CP), jnp.float32)
        pad_ref[:, 1:H + 1, 1:W + 1, :] = y1.reshape(B, H, W, CP)
        pb = pad_ref[...].astype(jnp.bfloat16)            # single hoisted cast
        for t in range(9):
            dy, dx = divmod(t, 3)
            col_ref[:, t * CP:(t + 1) * CP] = (
                pb[:, dy:dy + H, dx:dx + W, :].reshape(B * NPOS, CP))
        y2 = jnp.dot(col_ref[...], wc_ref[1], preferred_element_type=jnp.float32)
        resid = xp[:, 1:H + 1, 1:W + 1, :].reshape(B * NPOS, CP)
        out = jnp.maximum(y2 + resid, 0.0)                # (72, 128) f32

        # ---- compact packing for fc1:
        #   feat[b, p*128 + l] = out[b, s=p,    c=l]     for l < 64
        #                      = out[b, s=18+p, c=l-64]  for l >= 64
        #   c64[b, s]          = out[b, s, c=64]   (handled by a small f32 weight)
        rolled = pltpu.roll(out, shift=64, axis=1)        # ch64->lane0, ch0..63->64..127
        out3 = out.reshape(B, NPOS, CP)
        rol3 = rolled.reshape(B, NPOS, CP)
        lane = jax.lax.broadcasted_iota(jnp.int32, (B, NPAIR, CP), 2)
        featp = jnp.where(lane < 64, out3[:, :NPAIR, :], rol3[:, NPAIR:, :])
        featb = featp.astype(jnp.bfloat16)                # (B, 18, 128)
        for p in range(NPAIR):
            feat_ref[:, p * CP:(p + 1) * CP] = featb[:, p, :]
        c64_ref[...] = rol3[:, :, 0:1]                    # (B, 36, 1) f32

    # ---- per hidden tile j: fc1 column tile -> relu -> partial fc2 ----
    hid = jnp.dot(feat_ref[...], w1_ref[...], preferred_element_type=jnp.float32)
    hid = hid + jnp.sum(c64_ref[...] * w64_ref[...], axis=1) + b1_ref[...]
    hid = jnp.maximum(hid, 0.0)                           # (B, HT) f32
    contrib = jnp.dot(hid, w2_ref[...], preferred_element_type=jnp.float32)  # (B, RSUP)

    @pl.when(j == 0)
    def _init_acc():
        racc_ref[...] = contrib + b2_ref[...]

    @pl.when(j > 0)
    def _accumulate():
        racc_ref[...] = racc_ref[...] + contrib

    @pl.when(j == NH - 1)
    def _emit():
        rew_ref[...] = racc_ref[...]


def run_tiny_reward(x_pad, p):
    return pl.pallas_call(
        tiny_reward_kernel,
        out_shape=jax.ShapeDtypeStruct((B, RSUP), jnp.float32),
        grid=(NH,),
        in_specs=[
            pl.BlockSpec((B, HP, WP, CP), lambda j: (0, 0, 0, 0)),   # x_pad (resident)
            pl.BlockSpec((2, 9 * CP, CP), lambda j: (0, 0, 0)),      # conv im2col weights
            pl.BlockSpec((KPACK, HT), lambda j: (0, j)),             # fc1 main (col tiled)
            pl.BlockSpec((1, HT), lambda j: (0, j)),                 # fc1 bias tile
            pl.BlockSpec((NPOS, HT), lambda j: (0, j)),              # fc1 ch-64 weight tile
            pl.BlockSpec((HT, RSUP), lambda j: (j, 0)),              # fc2 weight row tile
            pl.BlockSpec((1, RSUP), lambda j: (0, 0)),               # fc2 bias
        ],
        out_specs=pl.BlockSpec((B, RSUP), lambda j: (0, 0)),
        scratch_shapes=[
            pltpu.VMEM((B, HP, WP, CP), jnp.float32),        # padded relu(conv1)
            pltpu.VMEM((B * NPOS, 9 * CP), jnp.bfloat16),    # shared im2col buffer
            pltpu.VMEM((B, KPACK), jnp.bfloat16),            # packed fc1 feature
            pltpu.VMEM((B, NPOS, 1), jnp.float32),           # channel-64 activations
            pltpu.VMEM((B, RSUP), jnp.float32),              # reward accumulator
        ],
        compiler_params=pltpu.CompilerParams(
            dimension_semantics=("arbitrary",),
            vmem_limit_bytes=8 * 1024 * 1024),
    )(x_pad, p["w_col"], p["w1_k"], p["b1_k"], p["w64_k"], p["w2_k"], p["b2_k"])


def tiny_reward(x_nchw, params):
    # NCHW -> NHWC, zero-pad spatial border (3x3 / pad=1) and channels 65 -> 128.
    x_nhwc = jnp.transpose(x_nchw, (0, 2, 3, 1))                 # (B, 6, 6, 65)
    x_pad = jnp.zeros((B, HP, WP, CP), jnp.float32)
    x_pad = x_pad.at[:, 1:H + 1, 1:W + 1, :C].set(x_nhwc)
    return run_tiny_reward(x_pad, params)


# ----------------------------------------------------------------------------
# Deterministic parameter init (PyTorch layouts) + kernel-layout conversions.
# ----------------------------------------------------------------------------
def init_params(key):
    ks = jax.random.split(key, 6)
    c1 = jax.random.normal(ks[0], (C, C, 3, 3), jnp.float32) * ((C * 9) ** -0.5)
    c2 = jax.random.normal(ks[1], (C, C, 3, 3), jnp.float32) * ((C * 9) ** -0.5)
    fin = H * W * C                                              # 2340
    w1 = jax.random.normal(ks[2], (HIDDEN, fin), jnp.float32) * (fin ** -0.5)
    b1 = 0.1 * jax.random.normal(ks[3], (HIDDEN,), jnp.float32)
    w2 = jax.random.normal(ks[4], (RSUP, HIDDEN), jnp.float32) * (HIDDEN ** -0.5)
    b2 = 0.1 * jax.random.normal(ks[5], (RSUP,), jnp.float32)

    def conv_to_col(w):
        # OIHW (65,65,3,3) -> im2col weight (9*128, 128): row = tap*128 + c_in, col = c_out
        wp = jnp.zeros((CP, CP, 3, 3), jnp.float32).at[:C, :C].set(w)
        return jnp.transpose(wp, (2, 3, 1, 0)).reshape(9 * CP, CP)

    w_col = jnp.stack([conv_to_col(c1), conv_to_col(c2)]).astype(jnp.bfloat16)

    # fc1 rows repacked to the kernel's compact pair-packed order.
    # PyTorch flatten index of NCHW is j = c*36 + s (s = h*6 + w).
    w1_ncs = w1.reshape(HIDDEN, C, NPOS)                          # [n, c, s]
    wA = jnp.transpose(w1_ncs[:, :64, :NPAIR], (2, 1, 0))         # [p, c, n] first position of pair
    wB = jnp.transpose(w1_ncs[:, :64, NPAIR:], (2, 1, 0))         # [p, c, n] second position (s = 18+p)
    w1_k = jnp.concatenate([wA, wB], axis=1).reshape(KPACK, HIDDEN).astype(jnp.bfloat16)
    w64_k = jnp.transpose(w1_ncs[:, 64, :], (1, 0))               # (36, 512) f32, channel-64 rows

    return {
        # raw PyTorch-layout params (used by the pure-JAX reference)
        "conv1_w": c1, "conv2_w": c2, "fc1_w": w1, "fc1_b": b1, "fc2_w": w2, "fc2_b": b2,
        # kernel-layout params
        "w_col": w_col, "w1_k": w1_k, "w64_k": w64_k,
        "b1_k": b1.reshape(1, -1), "w2_k": w2.T, "b2_k": b2.reshape(1, -1),
    }


# ----------------------------------------------------------------------------
# Pure-JAX f32 reference (same semantics as the PyTorch module; conv bias=False).
# ----------------------------------------------------------------------------
def reference_forward(x_nchw, p):
    def conv(x, w):
        return jax.lax.conv_general_dilated(
            x, w, (1, 1), ((1, 1), (1, 1)),
            dimension_numbers=("NCHW", "OIHW", "NCHW"))

    out = jax.nn.relu(conv(x_nchw, p["conv1_w"]))
    out = jax.nn.relu(conv(out, p["conv2_w"]) + x_nchw)
    feat = out.reshape(out.shape[0], -1)
    hid = jax.nn.relu(feat @ p["fc1_w"].T + p["fc1_b"])
    return hid @ p["fc2_w"].T + p["fc2_b"]


if __name__ == "__main__":
    key = jax.random.PRNGKey(0)
    k_x, k_p = jax.random.split(key)
    x = jax.random.normal(k_x, (B, C, H, W), jnp.float32)        # NCHW, like PyTorch
    params = init_params(k_p)

    reward = tiny_reward(x, params)
    jax.block_until_ready(reward)

    ref = reference_forward(x, params)
    assert reward.shape == (B, RSUP)
    # bf16 weights/activations vs f32 reference -> slightly looser tolerance
    assert bool(jnp.allclose(reward, ref, rtol=2e-2, atol=2.5e-2)), \
        float(jnp.max(jnp.abs(reward - ref)))
    print("KERNEL_OK")
</pallas_src>

<mosaic_0001>
module attributes {stable_mosaic.version = 11 : i64} {
  func.func @tiny_reward_kernel(%arg0: i32, %arg1: memref<2x8x8x128xf32, #tpu.memory_space<vmem>>, %arg2: memref<2x1152x128xbf16, #tpu.memory_space<vmem>>, %arg3: memref<2304x128xbf16, #tpu.memory_space<vmem>>, %arg4: memref<1x128xf32, #tpu.memory_space<vmem>>, %arg5: memref<36x128xf32, #tpu.memory_space<vmem>>, %arg6: memref<128x21xf32, #tpu.memory_space<vmem>>, %arg7: memref<1x21xf32, #tpu.memory_space<vmem>>, %arg8: memref<2x21xf32, #tpu.memory_space<vmem>>, %arg9: memref<2x8x8x128xf32, #tpu.memory_space<vmem>>, %arg10: memref<72x1152xbf16, #tpu.memory_space<vmem>>, %arg11: memref<2x2304xbf16, #tpu.memory_space<vmem>>, %arg12: memref<2x36x1xf32, #tpu.memory_space<vmem>>, %arg13: memref<2x21xf32, #tpu.memory_space<vmem>>) attributes {dimension_semantics = [#tpu.dimension_semantics<arbitrary>], iteration_bounds = array<i64: 4>, scalar_prefetch = 0 : i64, scratch_operands = 5 : i64, tpu.core_type = #tpu.core_type<tc>, window_params = [{pipeline_mode = #tpu.pipeline_mode<synchronous>, transform_indices = @transform_0, window_bounds = array<i64: 2, 8, 8, 128>}, {pipeline_mode = #tpu.pipeline_mode<synchronous>, transform_indices = @transform_1, window_bounds = array<i64: 2, 1152, 128>}, {transform_indices = @transform_2, window_bounds = array<i64: 2304, 128>}, {transform_indices = @transform_3, window_bounds = array<i64: 1, 128>}, {transform_indices = @transform_4, window_bounds = array<i64: 36, 128>}, {transform_indices = @transform_5, window_bounds = array<i64: 128, 21>}, {pipeline_mode = #tpu.pipeline_mode<synchronous>, transform_indices = @transform_6, window_bounds = array<i64: 1, 21>}, {pipeline_mode = #tpu.pipeline_mode<synchronous>, transform_indices = @transform_7, window_bounds = array<i64: 2, 21>}]} {
    %c0_i32 = arith.constant 0 : i32
    %0 = arith.cmpi eq, %arg0, %c0_i32 : i32
    %1 = arith.extui %0 : i1 to i32
    %c0_i32_0 = arith.constant 0 : i32
    %2 = arith.cmpi ne, %1, %c0_i32_0 : i32
    scf.if %2 {
      %c0_21 = arith.constant 0 : index
      %c0_22 = arith.constant 0 : index
      %c0_23 = arith.constant 0 : index
      %c0_24 = arith.constant 0 : index
      %30 = vector.load %arg1[%c0_21, %c0_22, %c0_23, %c0_24] : memref<2x8x8x128xf32, #tpu.memory_space<vmem>>, vector<2x8x8x128xf32>
      %31 = arith.truncf %30 : vector<2x8x8x128xf32> to vector<2x8x8x128xbf16>
      %32 = vector.extract_strided_slice %31 {offsets = [0, 0, 0, 0], sizes = [2, 6, 6, 128], strides = [1, 1, 1, 1]} : vector<2x8x8x128xbf16> to vector<2x6x6x128xbf16>
      %33 = vector.shape_cast %32 : vector<2x6x6x128xbf16> to vector<72x128xbf16>
      %c0_25 = arith.constant 0 : index
      %c0_26 = arith.constant 0 : index
      %34 = vector.load %arg10[%c0_25, %c0_26] : memref<72x1152xbf16, #tpu.memory_space<vmem>>, vector<72x128xbf16>
      tpu.vector_store %arg10[%c0_25, %c0_26], %33 {strides = array<i32>} : memref<72x1152xbf16, #tpu.memory_space<vmem>>, vector<72x128xbf16>,
      %35 = vector.extract_strided_slice %31 {offsets = [0, 0, 1, 0], sizes = [2, 6, 6, 128], strides = [1, 1, 1, 1]} : vector<2x8x8x128xbf16> to vector<2x6x6x128xbf16>
      %36 = vector.shape_cast %35 : vector<2x6x6x128xbf16> to vector<72x128xbf16>
      %c0_27 = arith.constant 0 : index
      %c128 = arith.constant 128 : index
      %37 = vector.load %arg10[%c0_27, %c128] : memref<72x1152xbf16, #tpu.memory_space<vmem>>, vector<72x128xbf16>
      tpu.vector_store %arg10[%c0_27, %c128], %36 {strides = array<i32>} : memref<72x1152xbf16, #tpu.memory_space<vmem>>, vector<72x128xbf16>,
      %38 = vector.extract_strided_slice %31 {offsets = [0, 0, 2, 0], sizes = [2, 6, 6, 128], strides = [1, 1, 1, 1]} : vector<2x8x8x128xbf16> to vector<2x6x6x128xbf16>
      %39 = vector.shape_cast %38 : vector<2x6x6x128xbf16> to vector<72x128xbf16>
      %c0_28 = arith.constant 0 : index
      %c256 = arith.constant 256 : index
      %40 = vector.load %arg10[%c0_28, %c256] : memref<72x1152xbf16, #tpu.memory_space<vmem>>, vector<72x128xbf16>
      tpu.vector_store %arg10[%c0_28, %c256], %39 {strides = array<i32>} : memref<72x1152xbf16, #tpu.memory_space<vmem>>, vector<72x128xbf16>,
      %41 = vector.extract_strided_slice %31 {offsets = [0, 1, 0, 0], sizes = [2, 6, 6, 128], strides = [1, 1, 1, 1]} : vector<2x8x8x128xbf16> to vector<2x6x6x128xbf16>
      %42 = vector.shape_cast %41 : vector<2x6x6x128xbf16> to vector<72x128xbf16>
      %c0_29 = arith.constant 0 : index
      %c384 = arith.constant 384 : index
      %43 = vector.load %arg10[%c0_29, %c384] : memref<72x1152xbf16, #tpu.memory_space<vmem>>, vector<72x128xbf16>
      tpu.vector_store %arg10[%c0_29, %c384], %42 {strides = array<i32>} : memref<72x1152xbf16, #tpu.memory_space<vmem>>, vector<72x128xbf16>,
      %44 = vector.extract_strided_slice %31 {offsets = [0, 1, 1, 0], sizes = [2, 6, 6, 128], strides = [1, 1, 1, 1]} : vector<2x8x8x128xbf16> to vector<2x6x6x128xbf16>
      %45 = vector.shape_cast %44 : vector<2x6x6x128xbf16> to vector<72x128xbf16>
      %c0_30 = arith.constant 0 : index
      %c512 = arith.constant 512 : index
      %46 = vector.load %arg10[%c0_30, %c512] : memref<72x1152xbf16, #tpu.memory_space<vmem>>, vector<72x128xbf16>
      tpu.vector_store %arg10[%c0_30, %c512], %45 {strides = array<i32>} : memref<72x1152xbf16, #tpu.memory_space<vmem>>, vector<72x128xbf16>,
      %47 = vector.extract_strided_slice %31 {offsets = [0, 1, 2, 0], sizes = [2, 6, 6, 128], strides = [1, 1, 1, 1]} : vector<2x8x8x128xbf16> to vector<2x6x6x128xbf16>
      %48 = vector.shape_cast %47 : vector<2x6x6x128xbf16> to vector<72x128xbf16>
      %c0_31 = arith.constant 0 : index
      %c640 = arith.constant 640 : index
      %49 = vector.load %arg10[%c0_31, %c640] : memref<72x1152xbf16, #tpu.memory_space<vmem>>, vector<72x128xbf16>
      tpu.vector_store %arg10[%c0_31, %c640], %48 {strides = array<i32>} : memref<72x1152xbf16, #tpu.memory_space<vmem>>, vector<72x128xbf16>,
      %50 = vector.extract_strided_slice %31 {offsets = [0, 2, 0, 0], sizes = [2, 6, 6, 128], strides = [1, 1, 1, 1]} : vector<2x8x8x128xbf16> to vector<2x6x6x128xbf16>
      %51 = vector.shape_cast %50 : vector<2x6x6x128xbf16> to vector<72x128xbf16>
      %c0_32 = arith.constant 0 : index
      %c768 = arith.constant 768 : index
      %52 = vector.load %arg10[%c0_32, %c768] : memref<72x1152xbf16, #tpu.memory_space<vmem>>, vector<72x128xbf16>
      tpu.vector_store %arg10[%c0_32, %c768], %51 {strides = array<i32>} : memref<72x1152xbf16, #tpu.memory_space<vmem>>, vector<72x128xbf16>,
      %53 = vector.extract_strided_slice %31 {offsets = [0, 2, 1, 0], sizes = [2, 6, 6, 128], strides = [1, 1, 1, 1]} : vector<2x8x8x128xbf16> to vector<2x6x6x128xbf16>
      %54 = vector.shape_cast %53 : vector<2x6x6x128xbf16> to vector<72x128xbf16>
      %c0_33 = arith.constant 0 : index
      %c896 = arith.constant 896 : index
      %55 = vector.load %arg10[%c0_33, %c896] : memref<72x1152xbf16, #tpu.memory_space<vmem>>, vector<72x128xbf16>
      tpu.vector_store %arg10[%c0_33, %c896], %54 {strides = array<i32>} : memref<72x1152xbf16, #tpu.memory_space<vmem>>, vector<72x128xbf16>,
      %56 = vector.extract_strided_slice %31 {offsets = [0, 2, 2, 0], sizes = [2, 6, 6, 128], strides = [1, 1, 1, 1]} : vector<2x8x8x128xbf16> to vector<2x6x6x128xbf16>
      %57 = vector.shape_cast %56 : vector<2x6x6x128xbf16> to vector<72x128xbf16>
      %c0_34 = arith.constant 0 : index
      %c1024 = arith.constant 1024 : index
      %58 = vector.load %arg10[%c0_34, %c1024] : memref<72x1152xbf16, #tpu.memory_space<vmem>>, vector<72x128xbf16>
      tpu.vector_store %arg10[%c0_34, %c1024], %57 {strides = array<i32>} : memref<72x1152xbf16, #tpu.memory_space<vmem>>, vector<72x128xbf16>,
      %c0_35 = arith.constant 0 : index
      %c0_36 = arith.constant 0 : index
      %59 = vector.load %arg10[%c0_35, %c0_36] : memref<72x1152xbf16, #tpu.memory_space<vmem>>, vector<72x1152xbf16>
      %c0_37 = arith.constant 0 : index
      %c0_38 = arith.constant 0 : index
      %c0_39 = arith.constant 0 : index
      %60 = vector.load %arg2[%c0_37, %c0_38, %c0_39] : memref<2x1152x128xbf16, #tpu.memory_space<vmem>>, vector<1x1152x128xbf16>
      %61 = vector.shape_cast %60 : vector<1x1152x128xbf16> to vector<1152x128xbf16>
      %cst_40 = arith.constant dense<0.000000e+00> : vector<72x128xf32>
      %62 = tpu.matmul %59, %61, %cst_40 {dimension_numbers = #tpu.dot_dimension_numbers<[1], [0], [0], [1], [0, 0, 1, 1], [], []>} : vector<72x1152xbf16>, vector<1152x128xbf16>, vector<72x128xf32> -> vector<72x128xf32>
      %cst_41 = arith.constant 0.000000e+00 : f32
      %63 = vector.broadcast %cst_41 : f32 to vector<72x128xf32>
      %64 = arith.maximumf %62, %63 : vector<72x128xf32>
      %cst_42 = arith.constant 0.000000e+00 : f32
      %65 = vector.broadcast %cst_42 : f32 to vector<2x1x8x128xf32>
      %c0_43 = arith.constant 0 : index
      %c0_44 = arith.constant 0 : index
      %c0_45 = arith.constant 0 : index
      %c0_46 = arith.constant 0 : index
      %66 = vector.load %arg9[%c0_43, %c0_44, %c0_45, %c0_46] : memref<2x8x8x128xf32, #tpu.memory_space<vmem>>, vector<2x1x8x128xf32>
      tpu.vector_store %arg9[%c0_43, %c0_44, %c0_45, %c0_46], %65 {strides = array<i32>} : memref<2x8x8x128xf32, #tpu.memory_space<vmem>>, vector<2x1x8x128xf32>,
      %cst_47 = arith.constant 0.000000e+00 : f32
      %67 = vector.broadcast %cst_47 : f32 to vector<2x1x8x128xf32>
      %c0_48 = arith.constant 0 : index
      %c7 = arith.constant 7 : index
      %c0_49 = arith.constant 0 : index
      %c0_50 = arith.constant 0 : index
      %68 = vector.load %arg9[%c0_48, %c7, %c0_49, %c0_50] : memref<2x8x8x128xf32, #tpu.memory_space<vmem>>, vector<2x1x8x128xf32>
      tpu.vector_store %arg9[%c0_48, %c7, %c0_49, %c0_50], %67 {strides = array<i32>} : memref<2x8x8x128xf32, #tpu.memory_space<vmem>>, vector<2x1x8x128xf32>,
      %cst_51 = arith.constant 0.000000e+00 : f32
      %69 = vector.broadcast %cst_51 : f32 to vector<2x6x1x128xf32>
      %c0_52 = arith.constant 0 : index
      %c1 = arith.constant 1 : index
      %c0_53 = arith.constant 0 : index
      %c0_54 = arith.constant 0 : index
      %70 = vector.load %arg9[%c0_52, %c1, %c0_53, %c0_54] : memref<2x8x8x128xf32, #tpu.memory_space<vmem>>, vector<2x6x1x128xf32>
      tpu.vector_store %arg9[%c0_52, %c1, %c0_53, %c0_54], %69 {strides = array<i32>} : memref<2x8x8x128xf32, #tpu.memory_space<vmem>>, vector<2x6x1x128xf32>,
      %cst_55 = arith.constant 0.000000e+00 : f32
      %71 = vector.broadcast %cst_55 : f32 to vector<2x6x1x128xf32>
      %c0_56 = arith.constant 0 : index
      %c1_57 = arith.constant 1 : index
      %c7_58 = arith.constant 7 : index
      %c0_59 = arith.constant 0 : index
      %72 = vector.load %arg9[%c0_56, %c1_57, %c7_58, %c0_59] : memref<2x8x8x128xf32, #tpu.memory_space<vmem>>, vector<2x6x1x128xf32>
      tpu.vector_store %arg9[%c0_56, %c1_57, %c7_58, %c0_59], %71 {strides = array<i32>} : memref<2x8x8x128xf32, #tpu.memory_space<vmem>>, vector<2x6x1x128xf32>,
      %73 = vector.shape_cast %64 : vector<72x128xf32> to vector<2x6x6x128xf32>
      %c0_60 = arith.constant 0 : index
      %c1_61 = arith.constant 1 : index
      %c1_62 = arith.constant 1 : index
      %c0_63 = arith.constant 0 : index
      %74 = vector.load %arg9[%c0_60, %c1_61, %c1_62, %c0_63] : memref<2x8x8x128xf32, #tpu.memory_space<vmem>>, vector<2x6x6x128xf32>
      tpu.vector_store %arg9[%c0_60, %c1_61, %c1_62, %c0_63], %73 {strides = array<i32>} : memref<2x8x8x128xf32, #tpu.memory_space<vmem>>, vector<2x6x6x128xf32>,
      %c0_64 = arith.constant 0 : index
      %c0_65 = arith.constant 0 : index
      %c0_66 = arith.constant 0 : index
      %c0_67 = arith.constant 0 : index
      %75 = vector.load %arg9[%c0_64, %c0_65, %c0_66, %c0_67] : memref<2x8x8x128xf32, #tpu.memory_space<vmem>>, vector<2x8x8x128xf32>
      %76 = arith.truncf %75 : vector<2x8x8x128xf32> to vector<2x8x8x128xbf16>
      %77 = vector.extract_strided_slice %76 {offsets = [0, 0, 0, 0], sizes = [2, 6, 6, 128], strides = [1, 1, 1, 1]} : vector<2x8x8x128xbf16> to vector<2x6x6x128xbf16>
      %78 = vector.shape_cast %77 : vector<2x6x6x128xbf16> to vector<72x128xbf16>
      %c0_68 = arith.constant 0 : index
      %c0_69 = arith.constant 0 : index
      %79 = vector.load %arg10[%c0_68, %c0_69] : memref<72x1152xbf16, #tpu.memory_space<vmem>>, vector<72x128xbf16>
      tpu.vector_store %arg10[%c0_68, %c0_69], %78 {strides = array<i32>} : memref<72x1152xbf16, #tpu.memory_space<vmem>>, vector<72x128xbf16>,
      %80 = vector.extract_strided_slice %76 {offsets = [0, 0, 1, 0], sizes = [2, 6, 6, 128], strides = [1, 1, 1, 1]} : vector<2x8x8x128xbf16> to vector<2x6x6x128xbf16>
      %81 = vector.shape_cast %80 : vector<2x6x6x128xbf16> to vector<72x128xbf16>
      %c0_70 = arith.constant 0 : index
      %c128_71 = arith.constant 128 : index
      %82 = vector.load %arg10[%c0_70, %c128_71] : memref<72x1152xbf16, #tpu.memory_space<vmem>>, vector<72x128xbf16>
      tpu.vector_store %arg10[%c0_70, %c128_71], %81 {strides = array<i32>} : memref<72x1152xbf16, #tpu.memory_space<vmem>>, vector<72x128xbf16>,
      %83 = vector.extract_strided_slice %76 {offsets = [0, 0, 2, 0], sizes = [2, 6, 6, 128], strides = [1, 1, 1, 1]} : vector<2x8x8x128xbf16> to vector<2x6x6x128xbf16>
      %84 = vector.shape_cast %83 : vector<2x6x6x128xbf16> to vector<72x128xbf16>
      %c0_72 = arith.constant 0 : index
      %c256_73 = arith.constant 256 : index
      %85 = vector.load %arg10[%c0_72, %c256_73] : memref<72x1152xbf16, #tpu.memory_space<vmem>>, vector<72x128xbf16>
      tpu.vector_store %arg10[%c0_72, %c256_73], %84 {strides = array<i32>} : memref<72x1152xbf16, #tpu.memory_space<vmem>>, vector<72x128xbf16>,
      %86 = vector.extract_strided_slice %76 {offsets = [0, 1, 0, 0], sizes = [2, 6, 6, 128], strides = [1, 1, 1, 1]} : vector<2x8x8x128xbf16> to vector<2x6x6x128xbf16>
      %87 = vector.shape_cast %86 : vector<2x6x6x128xbf16> to vector<72x128xbf16>
      %c0_74 = arith.constant 0 : index
      %c384_75 = arith.constant 384 : index
      %88 = vector.load %arg10[%c0_74, %c384_75] : memref<72x1152xbf16, #tpu.memory_space<vmem>>, vector<72x128xbf16>
      tpu.vector_store %arg10[%c0_74, %c384_75], %87 {strides = array<i32>} : memref<72x1152xbf16, #tpu.memory_space<vmem>>, vector<72x128xbf16>,
      %89 = vector.extract_strided_slice %76 {offsets = [0, 1, 1, 0], sizes = [2, 6, 6, 128], strides = [1, 1, 1, 1]} : vector<2x8x8x128xbf16> to vector<2x6x6x128xbf16>
      %90 = vector.shape_cast %89 : vector<2x6x6x128xbf16> to vector<72x128xbf16>
      %c0_76 = arith.constant 0 : index
      %c512_77 = arith.constant 512 : index
      %91 = vector.load %arg10[%c0_76, %c512_77] : memref<72x1152xbf16, #tpu.memory_space<vmem>>, vector<72x128xbf16>
      tpu.vector_store %arg10[%c0_76, %c512_77], %90 {strides = array<i32>} : memref<72x1152xbf16, #tpu.memory_space<vmem>>, vector<72x128xbf16>,
      %92 = vector.extract_strided_slice %76 {offsets = [0, 1, 2, 0], sizes = [2, 6, 6, 128], strides = [1, 1, 1, 1]} : vector<2x8x8x128xbf16> to vector<2x6x6x128xbf16>
      %93 = vector.shape_cast %92 : vector<2x6x6x128xbf16> to vector<72x128xbf16>
      %c0_78 = arith.constant 0 : index
      %c640_79 = arith.constant 640 : index
      %94 = vector.load %arg10[%c0_78, %c640_79] : memref<72x1152xbf16, #tpu.memory_space<vmem>>, vector<72x128xbf16>
      tpu.vector_store %arg10[%c0_78, %c640_79], %93 {strides = array<i32>} : memref<72x1152xbf16, #tpu.memory_space<vmem>>, vector<72x128xbf16>,
      %95 = vector.extract_strided_slice %76 {offsets = [0, 2, 0, 0], sizes = [2, 6, 6, 128], strides = [1, 1, 1, 1]} : vector<2x8x8x128xbf16> to vector<2x6x6x128xbf16>
      %96 = vector.shape_cast %95 : vector<2x6x6x128xbf16> to vector<72x128xbf16>
      %c0_80 = arith.constant 0 : index
      %c768_81 = arith.constant 768 : index
      %97 = vector.load %arg10[%c0_80, %c768_81] : memref<72x1152xbf16, #tpu.memory_space<vmem>>, vector<72x128xbf16>
      tpu.vector_store %arg10[%c0_80, %c768_81], %96 {strides = array<i32>} : memref<72x1152xbf16, #tpu.memory_space<vmem>>, vector<72x128xbf16>,
      %98 = vector.extract_strided_slice %76 {offsets = [0, 2, 1, 0], sizes = [2, 6, 6, 128], strides = [1, 1, 1, 1]} : vector<2x8x8x128xbf16> to vector<2x6x6x128xbf16>
      %99 = vector.shape_cast %98 : vector<2x6x6x128xbf16> to vector<72x128xbf16>
      %c0_82 = arith.constant 0 : index
      %c896_83 = arith.constant 896 : index
      %100 = vector.load %arg10[%c0_82, %c896_83] : memref<72x1152xbf16, #tpu.memory_space<vmem>>, vector<72x128xbf16>
      tpu.vector_store %arg10[%c0_82, %c896_83], %99 {strides = array<i32>} : memref<72x1152xbf16, #tpu.memory_space<vmem>>, vector<72x128xbf16>,
      %101 = vector.extract_strided_slice %76 {offsets = [0, 2, 2, 0], sizes = [2, 6, 6, 128], strides = [1, 1, 1, 1]} : vector<2x8x8x128xbf16> to vector<2x6x6x128xbf16>
      %102 = vector.shape_cast %101 : vector<2x6x6x128xbf16> to vector<72x128xbf16>
      %c0_84 = arith.constant 0 : index
      %c1024_85 = arith.constant 1024 : index
      %103 = vector.load %arg10[%c0_84, %c1024_85] : memref<72x1152xbf16, #tpu.memory_space<vmem>>, vector<72x128xbf16>
      tpu.vector_store %arg10[%c0_84, %c1024_85], %102 {strides = array<i32>} : memref<72x1152xbf16, #tpu.memory_space<vmem>>, vector<72x128xbf16>,
      %c0_86 = arith.constant 0 : index
      %c0_87 = arith.constant 0 : index
      %104 = vector.load %arg10[%c0_86, %c0_87] : memref<72x1152xbf16, #tpu.memory_space<vmem>>, vector<72x1152xbf16>
      %c1_88 = arith.constant 1 : index
      %c0_89 = arith.constant 0 : index
      %c0_90 = arith.constant 0 : index
      %105 = vector.load %arg2[%c1_88, %c0_89, %c0_90] : memref<2x1152x128xbf16, #tpu.memory_space<vmem>>, vector<1x1152x128xbf16>
      %106 = vector.shape_cast %105 : vector<1x1152x128xbf16> to vector<1152x128xbf16>
      %cst_91 = arith.constant dense<0.000000e+00> : vector<72x128xf32>
      %107 = tpu.matmul %104, %106, %cst_91 {dimension_numbers = #tpu.dot_dimension_numbers<[1], [0], [0], [1], [0, 0, 1, 1], [], []>} : vector<72x1152xbf16>, vector<1152x128xbf16>, vector<72x128xf32> -> vector<72x128xf32>
      %108 = vector.extract_strided_slice %30 {offsets = [0, 1, 1, 0], sizes = [2, 6, 6, 128], strides = [1, 1, 1, 1]} : vector<2x8x8x128xf32> to vector<2x6x6x128xf32>
      %109 = vector.shape_cast %108 : vector<2x6x6x128xf32> to vector<72x128xf32>
      %110 = arith.addf %107, %109 : vector<72x128xf32>
      %cst_92 = arith.constant 0.000000e+00 : f32
      %111 = vector.broadcast %cst_92 : f32 to vector<72x128xf32>
      %112 = arith.maximumf %110, %111 : vector<72x128xf32>
      %c64_i32 = arith.constant 64 : i32
      %113 = tpu.dynamic_rotate %112 by %c64_i32 dim 1 : vector<72x128xf32>, i32 -> vector<72x128xf32>
      %114 = vector.shape_cast %112 : vector<72x128xf32> to vector<2x36x128xf32>
      %115 = vector.shape_cast %113 : vector<72x128xf32> to vector<2x36x128xf32>
      %116 = tpu.iota {dimensions = array<i32: 2>} : vector<2x18x128xi32>
      %c64_i32_93 = arith.constant 64 : i32
      %117 = vector.broadcast %c64_i32_93 : i32 to vector<2x18x128xi32>
      %118 = arith.cmpi slt, %116, %117 : vector<2x18x128xi32>
      %119 = vector.extract_strided_slice %114 {offsets = [0, 0, 0], sizes = [2, 18, 128], strides = [1, 1, 1]} : vector<2x36x128xf32> to vector<2x18x128xf32>
      %120 = vector.extract_strided_slice %115 {offsets = [0, 18, 0], sizes = [2, 18, 128], strides = [1, 1, 1]} : vector<2x36x128xf32> to vector<2x18x128xf32>
      %121 = arith.select %118, %119, %120 : vector<2x18x128xi1>, vector<2x18x128xf32>
      %122 = arith.truncf %121 : vector<2x18x128xf32> to vector<2x18x128xbf16>
      %123 = vector.extract_strided_slice %122 {offsets = [0, 0, 0], sizes = [2, 1, 128], strides = [1, 1, 1]} : vector<2x18x128xbf16> to vector<2x1x128xbf16>
      %124 = vector.shape_cast %123 : vector<2x1x128xbf16> to vector<2x128xbf16>
      %c0_94 = arith.constant 0 : index
      %c0_95 = arith.constant 0 : index
      %125 = vector.load %arg11[%c0_94, %c0_95] : memref<2x2304xbf16, #tpu.memory_space<vmem>>, vector<2x128xbf16>
      tpu.vector_store %arg11[%c0_94, %c0_95], %124 {strides = array<i32>} : memref<2x2304xbf16, #tpu.memory_space<vmem>>, vector<2x128xbf16>,
      %126 = vector.extract_strided_slice %122 {offsets = [0, 1, 0], sizes = [2, 1, 128], strides = [1, 1, 1]} : vector<2x18x128xbf16> to vector<2x1x128xbf16>
      %127 = vector.shape_cast %126 : vector<2x1x128xbf16> to vector<2x128xbf16>
      %c0_96 = arith.constant 0 : index
      %c128_97 = arith.constant 128 : index
      %128 = vector.load %arg11[%c0_96, %c128_97] : memref<2x2304xbf16, #tpu.memory_space<vmem>>, vector<2x128xbf16>
      tpu.vector_store %arg11[%c0_96, %c128_97], %127 {strides = array<i32>} : memref<2x2304xbf16, #tpu.memory_space<vmem>>, vector<2x128xbf16>,
      %129 = vector.extract_strided_slice %122 {offsets = [0, 2, 0], sizes = [2, 1, 128], strides = [1, 1, 1]} : vector<2x18x128xbf16> to vector<2x1x128xbf16>
      %130 = vector.shape_cast %129 : vector<2x1x128xbf16> to vector<2x128xbf16>
      %c0_98 = arith.constant 0 : index
      %c256_99 = arith.constant 256 : index
      %131 = vector.load %arg11[%c0_98, %c256_99] : memref<2x2304xbf16, #tpu.memory_space<vmem>>, vector<2x128xbf16>
      tpu.vector_store %arg11[%c0_98, %c256_99], %130 {strides = array<i32>} : memref<2x2304xbf16, #tpu.memory_space<vmem>>, vector<2x128xbf16>,
      %132 = vector.extract_strided_slice %122 {offsets = [0, 3, 0], sizes = [2, 1, 128], strides = [1, 1, 1]} : vector<2x18x128xbf16> to vector<2x1x128xbf16>
      %133 = vector.shape_cast %132 : vector<2x1x128xbf16> to vector<2x128xbf16>
      %c0_100 = arith.constant 0 : index
      %c384_101 = arith.constant 384 : index
      %134 = vector.load %arg11[%c0_100, %c384_101] : memref<2x2304xbf16, #tpu.memory_space<vmem>>, vector<2x128xbf16>
      tpu.vector_store %arg11[%c0_100, %c384_101], %133 {strides = array<i32>} : memref<2x2304xbf16, #tpu.memory_space<vmem>>, vector<2x128xbf16>,
      %135 = vector.extract_strided_slice %122 {offsets = [0, 4, 0], sizes = [2, 1, 128], strides = [1, 1, 1]} : vector<2x18x128xbf16> to vector<2x1x128xbf16>
      %136 = vector.shape_cast %135 : vector<2x1x128xbf16> to vector<2x128xbf16>
      %c0_102 = arith.constant 0 : index
      %c512_103 = arith.constant 512 : index
      %137 = vector.load %arg11[%c0_102, %c512_103] : memref<2x2304xbf16, #tpu.memory_space<vmem>>, vector<2x128xbf16>
      tpu.vector_store %arg11[%c0_102, %c512_103], %136 {strides = array<i32>} : memref<2x2304xbf16, #tpu.memory_space<vmem>>, vector<2x128xbf16>,
      %138 = vector.extract_strided_slice %122 {offsets = [0, 5, 0], sizes = [2, 1, 128], strides = [1, 1, 1]} : vector<2x18x128xbf16> to vector<2x1x128xbf16>
      %139 = vector.shape_cast %138 : vector<2x1x128xbf16> to vector<2x128xbf16>
      %c0_104 = arith.constant 0 : index
      %c640_105 = arith.constant 640 : index
      %140 = vector.load %arg11[%c0_104, %c640_105] : memref<2x2304xbf16, #tpu.memory_space<vmem>>, vector<2x128xbf16>
      tpu.vector_store %arg11[%c0_104, %c640_105], %139 {strides = array<i32>} : memref<2x2304xbf16, #tpu.memory_space<vmem>>, vector<2x128xbf16>,
      %141 = vector.extract_strided_slice %122 {offsets = [0, 6, 0], sizes = [2, 1, 128], strides = [1, 1, 1]} : vector<2x18x128xbf16> to vector<2x1x128xbf16>
      %142 = vector.shape_cast %141 : vector<2x1x128xbf16> to vector<2x128xbf16>
      %c0_106 = arith.constant 0 : index
      %c768_107 = arith.constant 768 : index
      %143 = vector.load %arg11[%c0_106, %c768_107] : memref<2x2304xbf16, #tpu.memory_space<vmem>>, vector<2x128xbf16>
      tpu.vector_store %arg11[%c0_106, %c768_107], %142 {strides = array<i32>} : memref<2x2304xbf16, #tpu.memory_space<vmem>>, vector<2x128xbf16>,
      %144 = vector.extract_strided_slice %122 {offsets = [0, 7, 0], sizes = [2, 1, 128], strides = [1, 1, 1]} : vector<2x18x128xbf16> to vector<2x1x128xbf16>
      %145 = vector.shape_cast %144 : vector<2x1x128xbf16> to vector<2x128xbf16>
      %c0_108 = arith.constant 0 : index
      %c896_109 = arith.constant 896 : index
      %146 = vector.load %arg11[%c0_108, %c896_109] : memref<2x2304xbf16, #tpu.memory_space<vmem>>, vector<2x128xbf16>
      tpu.vector_store %arg11[%c0_108, %c896_109], %145 {strides = array<i32>} : memref<2x2304xbf16, #tpu.memory_space<vmem>>, vector<2x128xbf16>,
      %147 = vector.extract_strided_slice %122 {offsets = [0, 8, 0], sizes = [2, 1, 128], strides = [1, 1, 1]} : vector<2x18x128xbf16> to vector<2x1x128xbf16>
      %148 = vector.shape_cast %147 : vector<2x1x128xbf16> to vector<2x128xbf16>
      %c0_110 = arith.constant 0 : index
      %c1024_111 = arith.constant 1024 : index
      %149 = vector.load %arg11[%c0_110, %c1024_111] : memref<2x2304xbf16, #tpu.memory_space<vmem>>, vector<2x128xbf16>
      tpu.vector_store %arg11[%c0_110, %c1024_111], %148 {strides = array<i32>} : memref<2x2304xbf16, #tpu.memory_space<vmem>>, vector<2x128xbf16>,
      %150 = vector.extract_strided_slice %122 {offsets = [0, 9, 0], sizes = [2, 1, 128], strides = [1, 1, 1]} : vector<2x18x128xbf16> to vector<2x1x128xbf16>
      %151 = vector.shape_cast %150 : vector<2x1x128xbf16> to vector<2x128xbf16>
      %c0_112 = arith.constant 0 : index
      %c1152 = arith.constant 1152 : index
      %152 = vector.load %arg11[%c0_112, %c1152] : memref<2x2304xbf16, #tpu.memory_space<vmem>>, vector<2x128xbf16>
      tpu.vector_store %arg11[%c0_112, %c1152], %151 {strides = array<i32>} : memref<2x2304xbf16, #tpu.memory_space<vmem>>, vector<2x128xbf16>,
      %153 = vector.extract_strided_slice %122 {offsets = [0, 10, 0], sizes = [2, 1, 128], strides = [1, 1, 1]} : vector<2x18x128xbf16> to vector<2x1x128xbf16>
      %154 = vector.shape_cast %153 : vector<2x1x128xbf16> to vector<2x128xbf16>
      %c0_113 = arith.constant 0 : index
      %c1280 = arith.constant 1280 : index
      %155 = vector.load %arg11[%c0_113, %c1280] : memref<2x2304xbf16, #tpu.memory_space<vmem>>, vector<2x128xbf16>
      tpu.vector_store %arg11[%c0_113, %c1280], %154 {strides = array<i32>} : memref<2x2304xbf16, #tpu.memory_space<vmem>>, vector<2x128xbf16>,
      %156 = vector.extract_strided_slice %122 {offsets = [0, 11, 0], sizes = [2, 1, 128], strides = [1, 1, 1]} : vector<2x18x128xbf16> to vector<2x1x128xbf16>
      %157 = vector.shape_cast %156 : vector<2x1x128xbf16> to vector<2x128xbf16>
      %c0_114 = arith.constant 0 : index
      %c1408 = arith.constant 1408 : index
      %158 = vector.load %arg11[%c0_114, %c1408] : memref<2x2304xbf16, #tpu.memory_space<vmem>>, vector<2x128xbf16>
      tpu.vector_store %arg11[%c0_114, %c1408], %157 {strides = array<i32>} : memref<2x2304xbf16, #tpu.memory_space<vmem>>, vector<2x128xbf16>,
      %159 = vector.extract_strided_slice %122 {offsets = [0, 12, 0], sizes = [2, 1, 128], strides = [1, 1, 1]} : vector<2x18x128xbf16> to vector<2x1x128xbf16>
      %160 = vector.shape_cast %159 : vector<2x1x128xbf16> to vector<2x128xbf16>
      %c0_115 = arith.constant 0 : index
      %c1536 = arith.constant 1536 : index
      %161 = vector.load %arg11[%c0_115, %c1536] : memref<2x2304xbf16, #tpu.memory_space<vmem>>, vector<2x128xbf16>
      tpu.vector_store %arg11[%c0_115, %c1536], %160 {strides = array<i32>} : memref<2x2304xbf16, #tpu.memory_space<vmem>>, vector<2x128xbf16>,
      %162 = vector.extract_strided_slice %122 {offsets = [0, 13, 0], sizes = [2, 1, 128], strides = [1, 1, 1]} : vector<2x18x128xbf16> to vector<2x1x128xbf16>
      %163 = vector.shape_cast %162 : vector<2x1x128xbf16> to vector<2x128xbf16>
      %c0_116 = arith.constant 0 : index
      %c1664 = arith.constant 1664 : index
      %164 = vector.load %arg11[%c0_116, %c1664] : memref<2x2304xbf16, #tpu.memory_space<vmem>>, vector<2x128xbf16>
      tpu.vector_store %arg11[%c0_116, %c1664], %163 {strides = array<i32>} : memref<2x2304xbf16, #tpu.memory_space<vmem>>, vector<2x128xbf16>,
      %165 = vector.extract_strided_slice %122 {offsets = [0, 14, 0], sizes = [2, 1, 128], strides = [1, 1, 1]} : vector<2x18x128xbf16> to vector<2x1x128xbf16>
      %166 = vector.shape_cast %165 : vector<2x1x128xbf16> to vector<2x128xbf16>
      %c0_117 = arith.constant 0 : index
      %c1792 = arith.constant 1792 : index
      %167 = vector.load %arg11[%c0_117, %c1792] : memref<2x2304xbf16, #tpu.memory_space<vmem>>, vector<2x128xbf16>
      tpu.vector_store %arg11[%c0_117, %c1792], %166 {strides = array<i32>} : memref<2x2304xbf16, #tpu.memory_space<vmem>>, vector<2x128xbf16>,
      %168 = vector.extract_strided_slice %122 {offsets = [0, 15, 0], sizes = [2, 1, 128], strides = [1, 1, 1]} : vector<2x18x128xbf16> to vector<2x1x128xbf16>
      %169 = vector.shape_cast %168 : vector<2x1x128xbf16> to vector<2x128xbf16>
      %c0_118 = arith.constant 0 : index
      %c1920 = arith.constant 1920 : index
      %170 = vector.load %arg11[%c0_118, %c1920] : memref<2x2304xbf16, #tpu.memory_space<vmem>>, vector<2x128xbf16>
      tpu.vector_store %arg11[%c0_118, %c1920], %169 {strides = array<i32>} : memref<2x2304xbf16, #tpu.memory_space<vmem>>, vector<2x128xbf16>,
      %171 = vector.extract_strided_slice %122 {offsets = [0, 16, 0], sizes = [2, 1, 128], strides = [1, 1, 1]} : vector<2x18x128xbf16> to vector<2x1x128xbf16>
      %172 = vector.shape_cast %171 : vector<2x1x128xbf16> to vector<2x128xbf16>
      %c0_119 = arith.constant 0 : index
      %c2048 = arith.constant 2048 : index
      %173 = vector.load %arg11[%c0_119, %c2048] : memref<2x2304xbf16, #tpu.memory_space<vmem>>, vector<2x128xbf16>
      tpu.vector_store %arg11[%c0_119, %c2048], %172 {strides = array<i32>} : memref<2x2304xbf16, #tpu.memory_space<vmem>>, vector<2x128xbf16>,
      %174 = vector.extract_strided_slice %122 {offsets = [0, 17, 0], sizes = [2, 1, 128], strides = [1, 1, 1]} : vector<2x18x128xbf16> to vector<2x1x128xbf16>
      %175 = vector.shape_cast %174 : vector<2x1x128xbf16> to vector<2x128xbf16>
      %c0_120 = arith.constant 0 : index
      %c2176 = arith.constant 2176 : index
      %176 = vector.load %arg11[%c0_120, %c2176] : memref<2x2304xbf16, #tpu.memory_space<vmem>>, vector<2x128xbf16>
      tpu.vector_store %arg11[%c0_120, %c2176], %175 {strides = array<i32>} : memref<2x2304xbf16, #tpu.memory_space<vmem>>, vector<2x128xbf16>,
      %177 = vector.extract_strided_slice %115 {offsets = [0, 0, 0], sizes = [2, 36, 1], strides = [1, 1, 1]} : vector<2x36x128xf32> to vector<2x36x1xf32>
      %c0_121 = arith.constant 0 : index
      %c0_122 = arith.constant 0 : index
      %c0_123 = arith.constant 0 : index
      %178 = vector.load %arg12[%c0_121, %c0_122, %c0_123] : memref<2x36x1xf32, #tpu.memory_space<vmem>>, vector<2x36x1xf32>
      tpu.vector_store %arg12[%c0_121, %c0_122, %c0_123], %177 {strides = array<i32>} : memref<2x36x1xf32, #tpu.memory_space<vmem>>, vector<2x36x1xf32>,
    } else {
    }
    %c0 = arith.constant 0 : index
    %c0_1 = arith.constant 0 : index
    %3 = vector.load %arg11[%c0, %c0_1] : memref<2x2304xbf16, #tpu.memory_space<vmem>>, vector<2x2304xbf16>
    %c0_2 = arith.constant 0 : index
    %c0_3 = arith.constant 0 : index
    %4 = vector.load %arg3[%c0_2, %c0_3] : memref<2304x128xbf16, #tpu.memory_space<vmem>>, vector<2304x128xbf16>
    %cst = arith.constant dense<0.000000e+00> : vector<2x128xf32>
    %5 = tpu.matmul %3, %4, %cst {dimension_numbers = #tpu.dot_dimension_numbers<[1], [0], [0], [1], [0, 0, 1, 1], [], []>} : vector<2x2304xbf16>, vector<2304x128xbf16>, vector<2x128xf32> -> vector<2x128xf32>
    %c0_4 = arith.constant 0 : index
    %c0_5 = arith.constant 0 : index
    %c0_6 = arith.constant 0 : index
    %6 = vector.load %arg12[%c0_4, %c0_5, %c0_6] : memref<2x36x1xf32, #tpu.memory_space<vmem>>, vector<2x36x1xf32>
    %c0_7 = arith.constant 0 : index
    %c0_8 = arith.constant 0 : index
    %7 = vector.load %arg5[%c0_7, %c0_8] : memref<36x128xf32, #tpu.memory_space<vmem>>, vector<36x128xf32>
    %8 = vector.shape_cast %7 : vector<36x128xf32> to vector<1x36x128xf32>
    %9 = vector.broadcast %6 : vector<2x36x1xf32> to vector<2x36x128xf32>
    %10 = vector.broadcast %8 : vector<1x36x128xf32> to vector<2x36x128xf32>
    %11 = arith.mulf %9, %10 : vector<2x36x128xf32>
    %cst_9 = arith.constant dense<0.000000e+00> : vector<2x128xf32>
    %12 = vector.multi_reduction <add>, %11, %cst_9 [1] : vector<2x36x128xf32> to vector<2x128xf32>
    %13 = arith.addf %5, %12 : vector<2x128xf32>
    %c0_10 = arith.constant 0 : index
    %c0_11 = arith.constant 0 : index
    %14 = vector.load %arg4[%c0_10, %c0_11] : memref<1x128xf32, #tpu.memory_space<vmem>>, vector<1x128xf32>
    %15 = vector.broadcast %14 : vector<1x128xf32> to vector<2x128xf32>
    %16 = arith.addf %13, %15 : vector<2x128xf32>
    %cst_12 = arith.constant 0.000000e+00 : f32
    %17 = vector.broadcast %cst_12 : f32 to vector<2x128xf32>
    %18 = arith.maximumf %16, %17 : vector<2x128xf32>
    %c0_13 = arith.constant 0 : index
    %c0_14 = arith.constant 0 : index
    %19 = vector.load %arg6[%c0_13, %c0_14] : memref<128x21xf32, #tpu.memory_space<vmem>>, vector<128x21xf32>
    %cst_15 = arith.constant dense<0.000000e+00> : vector<2x21xf32>
    %20 = tpu.matmul %18, %19, %cst_15 {dimension_numbers = #tpu.dot_dimension_numbers<[1], [0], [0], [1], [0, 0, 1, 1], [], []>} : vector<2x128xf32>, vector<128x21xf32>, vector<2x21xf32> -> vector<2x21xf32>
    %c0_i32_16 = arith.constant 0 : i32
    %21 = arith.cmpi eq, %arg0, %c0_i32_16 : i32
    %22 = arith.extui %21 : i1 to i32
    %c0_i32_17 = arith.constant 0 : i32
    %23 = arith.cmpi ne, %22, %c0_i32_17 : i32
    scf.if %23 {
      %c0_21 = arith.constant 0 : index
      %c0_22 = arith.constant 0 : index
      %30 = vector.load %arg7[%c0_21, %c0_22] : memref<1x21xf32, #tpu.memory_space<vmem>>, vector<1x21xf32>
      %31 = vector.broadcast %30 : vector<1x21xf32> to vector<2x21xf32>
      %32 = arith.addf %20, %31 : vector<2x21xf32>
      %c0_23 = arith.constant 0 : index
      %c0_24 = arith.constant 0 : index
      %33 = vector.load %arg13[%c0_23, %c0_24] : memref<2x21xf32, #tpu.memory_space<vmem>>, vector<2x21xf32>
      tpu.vector_store %arg13[%c0_23, %c0_24], %32 {strides = array<i32>} : memref<2x21xf32, #tpu.memory_space<vmem>>, vector<2x21xf32>,
    } else {
    }
    %c0_i32_18 = arith.constant 0 : i32
    %24 = arith.cmpi sgt, %arg0, %c0_i32_18 : i32
    %25 = arith.extui %24 : i1 to i32
    %c0_i32_19 = arith.constant 0 : i32
    %26 = arith.cmpi ne, %25, %c0_i32_19 : i32
    scf.if %26 {
      %c0_21 = arith.constant 0 : index
      %c0_22 = arith.constant 0 : index
      %30 = vector.load %arg13[%c0_21, %c0_22] : memref<2x21xf32, #tpu.memory_space<vmem>>, vector<2x21xf32>
      %31 = arith.addf %30, %20 : vector<2x21xf32>
      %c0_23 = arith.constant 0 : index
      %c0_24 = arith.constant 0 : index
      %32 = vector.load %arg13[%c0_23, %c0_24] : memref<2x21xf32, #tpu.memory_space<vmem>>, vector<2x21xf32>
      tpu.vector_store %arg13[%c0_23, %c0_24], %31 {strides = array<i32>} : memref<2x21xf32, #tpu.memory_space<vmem>>, vector<2x21xf32>,
    } else {
    }
    %c3_i32 = arith.constant 3 : i32
    %27 = arith.cmpi eq, %arg0, %c3_i32 : i32
    %28 = arith.extui %27 : i1 to i32
    %c0_i32_20 = arith.constant 0 : i32
    %29 = arith.cmpi ne, %28, %c0_i32_20 : i32
    scf.if %29 {
      %c0_21 = arith.constant 0 : index
      %c0_22 = arith.constant 0 : index
      %30 = vector.load %arg13[%c0_21, %c0_22] : memref<2x21xf32, #tpu.memory_space<vmem>>, vector<2x21xf32>
      %c0_23 = arith.constant 0 : index
      %c0_24 = arith.constant 0 : index
      %31 = vector.load %arg8[%c0_23, %c0_24] : memref<2x21xf32, #tpu.memory_space<vmem>>, vector<2x21xf32>
      tpu.vector_store %arg8[%c0_23, %c0_24], %30 {strides = array<i32>} : memref<2x21xf32, #tpu.memory_space<vmem>>, vector<2x21xf32>,
    } else {
    }
    return
  }
  func.func @transform_0(%arg0: i32) -> (i32, i32, i32, i32) {
    %c0_i32 = arith.constant 0 : i32
    %c0_i32_0 = arith.constant 0 : i32
    %c0_i32_1 = arith.constant 0 : i32
    %c0_i32_2 = arith.constant 0 : i32
    %c0_i32_3 = arith.constant 0 : i32
    return %c0_i32, %c0_i32_0, %c0_i32_1, %c0_i32_2 : i32, i32, i32, i32
  }
  func.func @transform_1(%arg0: i32) -> (i32, i32, i32) {
    %c0_i32 = arith.constant 0 : i32
    %c0_i32_0 = arith.constant 0 : i32
    %c0_i32_1 = arith.constant 0 : i32
    %c0_i32_2 = arith.constant 0 : i32
    return %c0_i32, %c0_i32_0, %c0_i32_1 : i32, i32, i32
  }
  func.func @transform_2(%arg0: i32) -> (i32, i32) {
    %c0_i32 = arith.constant 0 : i32
    %c0_i32_0 = arith.constant 0 : i32
    return %c0_i32, %arg0 : i32, i32
  }
  func.func @transform_3(%arg0: i32) -> (i32, i32) {
    %c0_i32 = arith.constant 0 : i32
    %c0_i32_0 = arith.constant 0 : i32
    return %c0_i32, %arg0 : i32, i32
  }
  func.func @transform_4(%arg0: i32) -> (i32, i32) {
    %c0_i32 = arith.constant 0 : i32
    %c0_i32_0 = arith.constant 0 : i32
    return %c0_i32, %arg0 : i32, i32
  }
  func.func @transform_5(%arg0: i32) -> (i32, i32) {
    %c0_i32 = arith.constant 0 : i32
    %c0_i32_0 = arith.constant 0 : i32
    return %arg0, %c0_i32 : i32, i32
  }
  func.func @transform_6(%arg0: i32) -> (i32, i32) {
    %c0_i32 = arith.constant 0 : i32
    %c0_i32_0 = arith.constant 0 : i32
    %c0_i32_1 = arith.constant 0 : i32
    return %c0_i32, %c0_i32_0 : i32, i32
  }
  func.func @transform_7(%arg0: i32) -> (i32, i32) {
    %c0_i32 = arith.constant 0 : i32
    %c0_i32_0 = arith.constant 0 : i32
    %c0_i32_1 = arith.constant 0 : i32
    return %c0_i32, %c0_i32_0 : i32, i32
  }
}

</mosaic_0001>

<llo_original>
// kernel: tpu_custom_call.1
$region0: #{tpu_custom_call.1}
  #allocation0 [shape = 'u32[]', space=smem, size = 0x4, offset = 0x4, fixed_abs, tag = 'smem constant byte address 0x4 - core index']
  #allocation1 [shape = 'u32[72,128]{1,0:T(1,128)}', space=vmem, size = 0x9000, scoped, tag = 'internal scratch']
  #allocation2 [shape = 'f32[2,8,8,128]{3,2,1,0:T(8,128)}', space=vmem, size = 0x10000, scoped, tag = 'scratch operand']
  #allocation3 [shape = 'bf16[72,1152]{1,0:T(8,128)(2,1)}', space=vmem, size = 0x28800, scoped, tag = 'scratch operand']
  #allocation4 [shape = 'bf16[2,2304]{1,0:T(2,128)(2,1)}', space=vmem, size = 0x2400, scoped, tag = 'scratch operand']
  #allocation5 [shape = 'f32[2,36,1]{2,1,0:T(8,128)}', space=vmem, size = 0xa000, scoped, tag = 'scratch operand']
  #allocation6 [shape = 'f32[2,21]{1,0:T(2,128)}', space=vmem, size = 0x400, scoped, tag = 'scratch operand']
  %s0 = inlined_call_operand.hbm [shape: f32[2,8,8,128], index: 0, kind: input, shape index: {}]
  %s1 = inlined_call_operand.hbm [shape: bf16[2,1152,128], index: 1, kind: input, shape index: {}]
  %s2 = inlined_call_operand.hbm [shape: bf16[2304,512], index: 2, kind: input, shape index: {}]
  %s3 = inlined_call_operand.hbm [shape: f32[1,512], index: 3, kind: input, shape index: {}]
  %s4 = inlined_call_operand.hbm [shape: f32[36,512], index: 4, kind: input, shape index: {}]
  %s5 = inlined_call_operand.vmem [shape: f32[512,21], index: 5, kind: input, shape index: {}]
  %s6 = inlined_call_operand.hbm [shape: f32[1,21], index: 6, kind: input, shape index: {}]
  %s7 = inlined_call_operand.hbm [shape: f32[2,21], index: 7, kind: output, shape index: {}]
  %s8 = sld [smem:[#allocation0]]
  $region101: #{tpu_custom_call.1} parent=0
    _
  %s10 = ssub.s32 1, %s8
  %s11 = scalar_select 0, %s10, %s8
  $region1: #{tpu_custom_call.1} parent=0
    #allocation7 [shape = 'u8[65536]{0}', space=vmem, size = 0x10000, scoped, tag = 'input window, operand 0, single buffered']
    #allocation8 [shape = 's32[2]{0}', space=sflag, size = 0x8, scoped, tag = 'scoped memory for tpu_custom_call.1']
    #allocation9 [shape = 's32[2]{0}', space=sflag, size = 0x8, scoped, tag = 'scoped memory for tpu_custom_call.1']
    #allocation10 [shape = 'u8[589824]{0}', space=vmem, size = 0x90000, scoped, tag = 'input window, operand 1, single buffered']
    #allocation11 [shape = 's32[1]{0}', space=sflag, size = 0x4, scoped, tag = 'scoped memory for tpu_custom_call.1']
    #allocation12 [shape = 'u8[1179648]{0}', space=vmem, size = 0x120000, scoped, tag = 'input window, operand 2']
    #allocation13 [shape = 'u8[1024]{0}', space=vmem, size = 0x400, scoped, tag = 'input window, operand 3']
    #allocation14 [shape = 'u8[40960]{0}', space=vmem, size = 0xa000, scoped, tag = 'input window, operand 4']
    #allocation15 [shape = 'u8[512]{0}', space=vmem, size = 0x400, scoped, tag = 'input window, operand 6, single buffered']
    #allocation16 [shape = 'u8[1024]{0}', space=vmem, size = 0x400, scoped, tag = 'output window, operand 0, single buffered']
    %12 = vsyncpa [#allocation8], 0
    %13 = vsyncpa [#allocation11], 0
    %14 = vsyncpa [#allocation9], 0
    loop: start=0, step=1, limit=6
    $region2: #{tpu_custom_call.1} parent=1 // loop_pre_header
      _
    $region3: #{tpu_custom_call.1} parent=1 // loop_header
      %s16 = sphi 0, %s20
      %p17 = scmp.ge.s32.totalorder %s16, 6
      %s24 = sphi 0, %s24
      %s26 = sphi 0, %s24
      %s27 = sphi 0, %s26
      %s41 = sphi 0, %s27
      %s45 = sphi 0, %s45
      %s47 = sphi 0, %s45
      %s48 = sphi 0, %s47
      %s62 = sphi 0, %s48
      %s68 = sphi 0, %s70
      %s71 = sphi 0, %s68
      %s72 = sphi 0, %s71
      %s88 = sphi 0, %s72
      %s94 = sphi 0, %s96
      %s97 = sphi 0, %s94
      %s98 = sphi 0, %s97
      %s114 = sphi 0, %s98
      %s120 = sphi 0, %s122
      %s123 = sphi 0, %s120
      %s124 = sphi 0, %s123
      %s140 = sphi 0, %s124
      %s146 = sphi 0, %s148
      %s149 = sphi 0, %s146
      %s150 = sphi 0, %s149
      %s166 = sphi 0, %s150
      %s170 = sphi 0, %s170
      %s172 = sphi 0, %s170
      %s173 = sphi 0, %s172
      %s187 = sphi 0, %s173
      %s191 = sphi 0, %s191
      %s193 = sphi 0, %s191
      %s194 = sphi 0, %s193
      %s208 = sphi 0, %s194
    $region4: #{tpu_custom_call.1} parent=1 // loop_header_branch
      %19 = sbr.rel (%p17) target = $region8
    $region5: #{tpu_custom_call.1} parent=1 // loop_body
      %s21 = ssub.s32 %s16, 1
      %s22 = ssub.s32 %s16, 2
      %s23 = sadd.s32 %s16, 1
      %s25 = sadd.s32 %s24, 1
      %p28 = scmp.eq.s32.totalorder %s16, 3
      %p29 = scmp.ne.s32.totalorder %s24, %s26
      %p30 = scmp.eq.s32.totalorder %s16, 0
      %p31 = por %p29, %p30
      %p32 = scmp.ne.s32.totalorder %s24, %s26
      %p33 = scmp.eq.s32.totalorder %s21, 3
      %p34 = por %p32, %p33
      %p35 = scmp.ne.s32.totalorder %s26, %s27
      %p36 = scmp.eq.s32.totalorder %s21, 0
      %p37 = por %p35, %p36
      %p38 = scmp.ne.s32.totalorder %s26, %s27
      %p39 = scmp.eq.s32.totalorder %s22, 3
      %p40 = por %p38, %p39
      %p42 = scmp.ne.s32.totalorder %s27, %s41
      %p43 = scmp.eq.s32.totalorder %s22, 0
      %p44 = por %p42, %p43
      %s46 = sadd.s32 %s45, 1
      %p49 = scmp.eq.s32.totalorder %s16, 3
      %p50 = scmp.ne.s32.totalorder %s45, %s47
      %p51 = scmp.eq.s32.totalorder %s16, 0
      %p52 = por %p50, %p51
      %p53 = scmp.ne.s32.totalorder %s45, %s47
      %p54 = scmp.eq.s32.totalorder %s21, 3
      %p55 = por %p53, %p54
      %p56 = scmp.ne.s32.totalorder %s47, %s48
      %p57 = scmp.eq.s32.totalorder %s21, 0
      %p58 = por %p56, %p57
      %p59 = scmp.ne.s32.totalorder %s47, %s48
      %p60 = scmp.eq.s32.totalorder %s22, 3
      %p61 = por %p59, %p60
      %p63 = scmp.ne.s32.totalorder %s48, %s62
      %p64 = scmp.eq.s32.totalorder %s22, 0
      %p65 = por %p63, %p64
      %s66 = ssub.s32 %s16, %s23
      %p67 = scmp.eq.s32.totalorder %s66, 0
      %s69 = sadd.s32 %s68, 1
      %s70 = scalar_select %p67, %s68, %s69
      %p73 = pneg %p67
      %p74 = scmp.eq.s32.totalorder %s16, 3
      %p75 = por %p73, %p74
      %p76 = scmp.ne.s32.totalorder %s68, %s71
      %p77 = scmp.eq.s32.totalorder %s16, 0
      %p78 = por %p76, %p77
      %p79 = scmp.ne.s32.totalorder %s68, %s71
      %p80 = scmp.eq.s32.totalorder %s21, 3
      %p81 = por %p79, %p80
      %p82 = scmp.ne.s32.totalorder %s71, %s72
      %p83 = scmp.eq.s32.totalorder %s21, 0
      %p84 = por %p82, %p83
      %p85 = scmp.ne.s32.totalorder %s71, %s72
      %p86 = scmp.eq.s32.totalorder %s22, 3
      %p87 = por %p85, %p86
      %p89 = scmp.ne.s32.totalorder %s72, %s88
      %p90 = scmp.eq.s32.totalorder %s22, 0
      %p91 = por %p89, %p90
      %s92 = ssub.s32 %s16, %s23
      %p93 = scmp.eq.s32.totalorder %s92, 0
      %s95 = sadd.s32 %s94, 1
      %s96 = scalar_select %p93, %s94, %s95
      %p99 = pneg %p93
      %p100 = scmp.eq.s32.totalorder %s16, 3
      %p101 = por %p99, %p100
      %p102 = scmp.ne.s32.totalorder %s94, %s97
      %p103 = scmp.eq.s32.totalorder %s16, 0
      %p104 = por %p102, %p103
      %p105 = scmp.ne.s32.totalorder %s94, %s97
      %p106 = scmp.eq.s32.totalorder %s21, 3
      %p107 = por %p105, %p106
      %p108 = scmp.ne.s32.totalorder %s97, %s98
      %p109 = scmp.eq.s32.totalorder %s21, 0
      %p110 = por %p108, %p109
      %p111 = scmp.ne.s32.totalorder %s97, %s98
      %p112 = scmp.eq.s32.totalorder %s22, 3
      %p113 = por %p111, %p112
      %p115 = scmp.ne.s32.totalorder %s98, %s114
      %p116 = scmp.eq.s32.totalorder %s22, 0
      %p117 = por %p115, %p116
      %s118 = ssub.s32 %s16, %s23
      %p119 = scmp.eq.s32.totalorder %s118, 0
      %s121 = sadd.s32 %s120, 1
      %s122 = scalar_select %p119, %s120, %s121
      %p125 = pneg %p119
      %p126 = scmp.eq.s32.totalorder %s16, 3
      %p127 = por %p125, %p126
      %p128 = scmp.ne.s32.totalorder %s120, %s123
      %p129 = scmp.eq.s32.totalorder %s16, 0
      %p130 = por %p128, %p129
      %p131 = scmp.ne.s32.totalorder %s120, %s123
      %p132 = scmp.eq.s32.totalorder %s21, 3
      %p133 = por %p131, %p132
      %p134 = scmp.ne.s32.totalorder %s123, %s124
      %p135 = scmp.eq.s32.totalorder %s21, 0
      %p136 = por %p134, %p135
      %p137 = scmp.ne.s32.totalorder %s123, %s124
      %p138 = scmp.eq.s32.totalorder %s22, 3
      %p139 = por %p137, %p138
      %p141 = scmp.ne.s32.totalorder %s124, %s140
      %p142 = scmp.eq.s32.totalorder %s22, 0
      %p143 = por %p141, %p142
      %s144 = ssub.s32 %s16, %s23
      %p145 = scmp.eq.s32.totalorder %s144, 0
      %s147 = sadd.s32 %s146, 1
      %s148 = scalar_select %p145, %s146, %s147
      %p151 = pneg %p145
      %p152 = scmp.eq.s32.totalorder %s16, 3
      %p153 = por %p151, %p152
      %p154 = scmp.ne.s32.totalorder %s146, %s149
      %p155 = scmp.eq.s32.totalorder %s16, 0
      %p156 = por %p154, %p155
      %p157 = scmp.ne.s32.totalorder %s146, %s149
      %p158 = scmp.eq.s32.totalorder %s21, 3
      %p159 = por %p157, %p158
      %p160 = scmp.ne.s32.totalorder %s149, %s150
      %p161 = scmp.eq.s32.totalorder %s21, 0
      %p162 = por %p160, %p161
      %p163 = scmp.ne.s32.totalorder %s149, %s150
      %p164 = scmp.eq.s32.totalorder %s22, 3
      %p165 = por %p163, %p164
      %p167 = scmp.ne.s32.totalorder %s150, %s166
      %p168 = scmp.eq.s32.totalorder %s22, 0
      %p169 = por %p167, %p168
      %s171 = sadd.s32 %s170, 1
      %p174 = scmp.eq.s32.totalorder %s16, 3
      %p175 = scmp.ne.s32.totalorder %s170, %s172
      %p176 = scmp.eq.s32.totalorder %s16, 0
      %p177 = por %p175, %p176
      %p178 = scmp.ne.s32.totalorder %s170, %s172
      %p179 = scmp.eq.s32.totalorder %s21, 3
      %p180 = por %p178, %p179
      %p181 = scmp.ne.s32.totalorder %s172, %s173
      %p182 = scmp.eq.s32.totalorder %s21, 0
      %p183 = por %p181, %p182
      %p184 = scmp.ne.s32.totalorder %s172, %s173
      %p185 = scmp.eq.s32.totalorder %s22, 3
      %p186 = por %p184, %p185
      %p188 = scmp.ne.s32.totalorder %s173, %s187
      %p189 = scmp.eq.s32.totalorder %s22, 0
      %p190 = por %p188, %p189
      %s192 = sadd.s32 %s191, 1
      %p195 = scmp.eq.s32.totalorder %s16, 3
      %p196 = scmp.ne.s32.totalorder %s191, %s193
      %p197 = scmp.eq.s32.totalorder %s16, 0
      %p198 = por %p196, %p197
      %p199 = scmp.ne.s32.totalorder %s191, %s193
      %p200 = scmp.eq.s32.totalorder %s21, 3
      %p201 = por %p199, %p200
      %p202 = scmp.ne.s32.totalorder %s193, %s194
      %p203 = scmp.eq.s32.totalorder %s21, 0
      %p204 = por %p202, %p203
      %p205 = scmp.ne.s32.totalorder %s193, %s194
      %p206 = scmp.eq.s32.totalorder %s22, 3
      %p207 = por %p205, %p206
      %p209 = scmp.ne.s32.totalorder %s194, %s208
      %p210 = scmp.eq.s32.totalorder %s22, 0
      %p211 = por %p209, %p210
      %p212 = scmp.le.s32.totalorder 1, %s16
      %p213 = scmp.lt.s32.totalorder %s16, 5
      %p214 = pnand %p212, %p213
      %p215 = pneg %p214
      // Predicated region
      $region9: #{tpu_custom_call.1} parent=5 // pred_check
        _
      $region10: #{tpu_custom_call.1} parent=5 // pred_check_branch
        %217 = sbr.rel (%p214) target = $region12
      $region11: #{tpu_custom_call.1} parent=5 // pred_region
        %s218 = ssub.s32 %s16, 1
        // Predicated region
        $region13: #{tpu_custom_call.1} parent=11 // pred_check
          %p219 = pneg %p37
        $region14: #{tpu_custom_call.1} parent=11 // pred_check_branch
          %221 = sbr.rel (%p219) target = $region16
        $region15: #{tpu_custom_call.1} parent=11 // pred_region
          %223 = vsyncadd [#allocation8], 0
          %s224 = sshll.u32 %s0, 4
          %s225 = int_to_ptr.hbm [resolvable:$true] %s224
          %s226 = sshll.u32 [#allocation7], 4
          %s227 = int_to_ptr.vmem [resolvable:$true] %s226
          %232 = dma.hbm_to_vmem [thread:$0]  %s225, 2048, %s227, [#allocation8], 128, 128, 8
        $region16: #{tpu_custom_call.1} parent=11 // pred_fallthru
          _
        // Predicated region
        $region17: #{tpu_custom_call.1} parent=11 // pred_check
          %p233 = pneg %p58
        $region18: #{tpu_custom_call.1} parent=11 // pred_check_branch
          %235 = sbr.rel (%p233) target = $region20
        $region19: #{tpu_custom_call.1} parent=11 // pred_region
          %237 = vsyncadd [#allocation11], 0
          %s238 = sshll.u32 %s1, 4
          %s239 = int_to_ptr.hbm [resolvable:$true] %s238
          %s240 = sshll.u32 [#allocation10], 4
          %s241 = int_to_ptr.vmem [resolvable:$true] %s240
          %246 = dma.hbm_to_vmem [thread:$0]  %s239, 18432, %s241, [#allocation11], 64, 64, 4
        $region20: #{tpu_custom_call.1} parent=11 // pred_fallthru
          _
        // Predicated region
        $region21: #{tpu_custom_call.1} parent=11 // pred_check
          %p247 = pneg %p183
        $region22: #{tpu_custom_call.1} parent=11 // pred_check_branch
          %249 = sbr.rel (%p247) target = $region24
        $region23: #{tpu_custom_call.1} parent=11 // pred_region
          %251 = vsyncadd [#allocation11], 0
          %s253 = sshll.u32 %s6, 4
          %s254 = int_to_ptr.hbm [resolvable:$true] %s253
          %s255 = sshll.u32 [#allocation15], 4
          %s256 = int_to_ptr.vmem [resolvable:$true] %s255
          %258 = dma.hbm_to_vmem [thread:$0]  %s254, 16, %s256, [#allocation11]
        $region24: #{tpu_custom_call.1} parent=11 // pred_fallthru
          _
      $region12: #{tpu_custom_call.1} parent=5 // pred_fallthru
        _
      %p259 = scmp.lt.s32.totalorder %s16, 4
      // Predicated region
      $region25: #{tpu_custom_call.1} parent=5 // pred_check
        %p260 = pneg %p259
      $region26: #{tpu_custom_call.1} parent=5 // pred_check_branch
        %262 = sbr.rel (%p260) target = $region28
      $region27: #{tpu_custom_call.1} parent=5 // pred_region
        // Predicated region
        $region29: #{tpu_custom_call.1} parent=27 // pred_check
          %p263 = pneg %p78
        $region30: #{tpu_custom_call.1} parent=27 // pred_check_branch
          %265 = sbr.rel (%p263) target = $region32
        $region31: #{tpu_custom_call.1} parent=27 // pred_region
          %s266 = sand.u32 %s16, 1
          %s267 = scalar_lea.sflag [#allocation8], %s266
          %s268 = sand.u32 %s68, 1
          %s269 = smul.addr %s268, 1152
          %s270 = scalar_lea.vmem [#allocation12], %s269
          %272 = vsyncadd %s267, 0
          %s273 = smul.addr %s16, 4
          %s274 = scalar_lea.hbm %s2, %s273
          %s275 = sshll.u32 %s274, 4
          %s276 = int_to_ptr.hbm [resolvable:$true] %s275
          %s277 = sshll.u32 %s270, 4
          %s278 = int_to_ptr.vmem [resolvable:$true] %s277
          %283 = dma.hbm_to_vmem [thread:$0]  %s276, 18432, %s278, %s267, 256, 64, 4
        $region32: #{tpu_custom_call.1} parent=27 // pred_fallthru
          _
        // Predicated region
        $region33: #{tpu_custom_call.1} parent=27 // pred_check
          %p284 = pneg %p104
        $region34: #{tpu_custom_call.1} parent=27 // pred_check_branch
          %286 = sbr.rel (%p284) target = $region36
        $region35: #{tpu_custom_call.1} parent=27 // pred_region
          %s287 = sand.u32 %s16, 1
          %s288 = scalar_lea.sflag [#allocation8], %s287
          %s289 = sand.u32 %s94, 1
          %s290 = scalar_lea.vmem [#allocation13], %s289
          %292 = vsyncadd %s288, 0
          %s293 = scalar_lea.hbm %s3, %s16
          %s295 = sshll.u32 %s293, 4
          %s296 = int_to_ptr.hbm [resolvable:$true] %s295
          %s297 = sshll.u32 %s290, 4
          %s298 = int_to_ptr.vmem [resolvable:$true] %s297
          %300 = dma.hbm_to_vmem [thread:$0]  %s296, 16, %s298, %s288
        $region36: #{tpu_custom_call.1} parent=27 // pred_fallthru
          _
        // Predicated region
        $region37: #{tpu_custom_call.1} parent=27 // pred_check
          %p301 = pneg %p130
        $region38: #{tpu_custom_call.1} parent=27 // pred_check_branch
          %303 = sbr.rel (%p301) target = $region40
        $region39: #{tpu_custom_call.1} parent=27 // pred_region
          %s304 = sand.u32 %s16, 1
          %s305 = scalar_lea.sflag [#allocation8], %s304
          %s306 = sand.u32 %s120, 1
          %s307 = smul.addr %s306, 40
          %s308 = scalar_lea.vmem [#allocation14], %s307
          %310 = vsyncadd %s305, 0
          %s311 = smul.addr %s16, 8
          %s312 = scalar_lea.hbm %s4, %s311
          %s313 = sshll.u32 %s312, 4
          %s314 = int_to_ptr.hbm [resolvable:$true] %s313
          %s315 = sshll.u32 %s308, 4
          %s316 = int_to_ptr.vmem [resolvable:$true] %s315
          %321 = dma.hbm_to_vmem [thread:$0]  %s314, 640, %s316, %s305, 512, 128, 8
        $region40: #{tpu_custom_call.1} parent=27 // pred_fallthru
          _
        // Predicated region
        $region41: #{tpu_custom_call.1} parent=27 // pred_check
          %p322 = pneg %p156
        $region42: #{tpu_custom_call.1} parent=27 // pred_check_branch
          %324 = sbr.rel (%p322) target = $region44
        $region43: #{tpu_custom_call.1} parent=27 // pred_region
          %s325 = smul.u32 16, %s16
          %p326 = scmp.lt.s32.totalorder %s325, 63
          %s327 = scalar_select %p326, %s325, 63
          %s328 = smul.addr %s327, 8
          %s329 = scalar_lea.vmem %s5, %s328
          %s330 = smul.u32 16, %s16
        $region44: #{tpu_custom_call.1} parent=27 // pred_fallthru
          _
      $region28: #{tpu_custom_call.1} parent=5 // pred_fallthru
        _
      %p331 = scmp.le.s32.totalorder 1, %s16
      %p332 = scmp.lt.s32.totalorder %s16, 5
      %p333 = pnand %p331, %p332
      %p334 = pneg %p333
      // Predicated region
      $region45: #{tpu_custom_call.1} parent=5 // pred_check
        _
      $region46: #{tpu_custom_call.1} parent=5 // pred_check_branch
        %336 = sbr.rel (%p333) target = $region48
      $region47: #{tpu_custom_call.1} parent=5 // pred_region
        %s337 = ssub.s32 %s16, 1
        // Predicated region
        $region49: #{tpu_custom_call.1} parent=47 // pred_check
          %p338 = pneg %p37
        $region50: #{tpu_custom_call.1} parent=47 // pred_check_branch
          %340 = sbr.rel (%p338) target = $region52
        $region51: #{tpu_custom_call.1} parent=47 // pred_region
          %342 = dma.done [#allocation8], 2048
        $region52: #{tpu_custom_call.1} parent=47 // pred_fallthru
          _
        // Predicated region
        $region53: #{tpu_custom_call.1} parent=47 // pred_check
          %p343 = pneg %p58
        $region54: #{tpu_custom_call.1} parent=47 // pred_check_branch
          %345 = sbr.rel (%p343) target = $region56
        $region55: #{tpu_custom_call.1} parent=47 // pred_region
          %347 = dma.done [#allocation11], 18432
        $region56: #{tpu_custom_call.1} parent=47 // pred_fallthru
          _
        %s348 = sand.u32 %s21, 1
        %s349 = scalar_lea.sflag [#allocation8], %s348
        %s350 = sand.u32 %s71, 1
        %s351 = smul.addr %s350, 1152
        %s352 = scalar_lea.vmem [#allocation12], %s351
        // Predicated region
        $region57: #{tpu_custom_call.1} parent=47 // pred_check
          %p353 = pneg %p84
        $region58: #{tpu_custom_call.1} parent=47 // pred_check_branch
          %355 = sbr.rel (%p353) target = $region60
        $region59: #{tpu_custom_call.1} parent=47 // pred_region
          %357 = dma.done %s349, 18432
        $region60: #{tpu_custom_call.1} parent=47 // pred_fallthru
          _
        %s358 = sand.u32 %s21, 1
        %s359 = scalar_lea.sflag [#allocation8], %s358
        %s360 = sand.u32 %s97, 1
        %s361 = scalar_lea.vmem [#allocation13], %s360
        // Predicated region
        $region61: #{tpu_custom_call.1} parent=47 // pred_check
          %p362 = pneg %p110
        $region62: #{tpu_custom_call.1} parent=47 // pred_check_branch
          %364 = sbr.rel (%p362) target = $region64
        $region63: #{tpu_custom_call.1} parent=47 // pred_region
          %366 = dma.done %s359, 16
        $region64: #{tpu_custom_call.1} parent=47 // pred_fallthru
          _
        %s367 = sand.u32 %s21, 1
        %s368 = scalar_lea.sflag [#allocation8], %s367
        %s369 = sand.u32 %s123, 1
        %s370 = smul.addr %s369, 40
        %s371 = scalar_lea.vmem [#allocation14], %s370
        // Predicated region
        $region65: #{tpu_custom_call.1} parent=47 // pred_check
          %p372 = pneg %p136
        $region66: #{tpu_custom_call.1} parent=47 // pred_check_branch
          %374 = sbr.rel (%p372) target = $region68
        $region67: #{tpu_custom_call.1} parent=47 // pred_region
          %376 = dma.done %s368, 640
        $region68: #{tpu_custom_call.1} parent=47 // pred_fallthru
          _
        // Predicated region
        $region69: #{tpu_custom_call.1} parent=47 // pred_check
          %p377 = pneg %p183
        $region70: #{tpu_custom_call.1} parent=47 // pred_check_branch
          %379 = sbr.rel (%p377) target = $region72
        $region71: #{tpu_custom_call.1} parent=47 // pred_region
          %381 = dma.done [#allocation11], 16
        $region72: #{tpu_custom_call.1} parent=47 // pred_fallthru
          _
        %p382 = pneg %p37
        %p383 = pneg %p34
        %p384 = pneg %p58
        %p385 = pneg %p55
        %s386 = sand.u32 %s21, 1
        %s387 = scalar_lea.sflag [#allocation8], %s386
        %s388 = sand.u32 %s71, 1
        %s389 = smul.addr %s388, 1152
        %s390 = scalar_lea.vmem [#allocation12], %s389
        %p391 = pneg %p84
        %p392 = pneg %p81
        %s393 = sand.u32 %s21, 1
        %s394 = scalar_lea.sflag [#allocation8], %s393
        %s395 = sand.u32 %s97, 1
        %s396 = scalar_lea.vmem [#allocation13], %s395
        %p397 = pneg %p110
        %p398 = pneg %p107
        %s399 = sand.u32 %s21, 1
        %s400 = scalar_lea.sflag [#allocation8], %s399
        %s401 = sand.u32 %s123, 1
        %s402 = smul.addr %s401, 40
        %s403 = scalar_lea.vmem [#allocation14], %s402
        %p404 = pneg %p136
        %p405 = pneg %p133
        %s406 = smul.u32 16, %s21
        %p407 = scmp.lt.s32.totalorder %s406, 63
        %s408 = scalar_select %p407, %s406, 63
        %s409 = smul.addr %s408, 8
        %s410 = scalar_lea.vmem %s5, %s409
        %p411 = pneg %p162
        %p412 = pneg %p159
        %p413 = pneg %p183
        %p414 = pneg %p180
        %p415 = pneg %p204
        %p416 = pneg %p201
        %s417 = smul.u32 16, %s21
        %p418 = scmp.lt.s32.totalorder %s417, 63
        %s419 = scalar_select %p418, %s417, 63
        %s420 = smul.addr %s419, 8
        %s421 = scalar_lea.vmem %s5, %s420
        %s422 = smul.u32 16, %s21
        %p423 = scmp.eq.s32.totalorder %s21, 0
        // Predicated region
        $region73: #{tpu_custom_call.1} parent=47 // pred_check
          %p424 = pneg %p423
        $region74: #{tpu_custom_call.1} parent=47 // pred_check_branch
          %426 = sbr.rel (%p424) target = $region76
        $region75: #{tpu_custom_call.1} parent=47 // pred_region
          %v427 = vld [vmem:[#allocation7] sm:$0xff]
          %v428 = vld [vmem:[#allocation7 + $0x8] sm:$0xff]
          %v429 = vld [vmem:[#allocation7 + $0x10] sm:$0xff]
          %v430 = vld [vmem:[#allocation7 + $0x18] sm:$0xff]
          %v431 = vld [vmem:[#allocation7 + $0x20] sm:$0xff]
          %v432 = vld [vmem:[#allocation7 + $0x28] sm:$0xff]
          %v433 = vld [vmem:[#allocation7 + $0x30] sm:$0xff]
          %v434 = vld [vmem:[#allocation7 + $0x38] sm:$0xff]
          %v435 = vld [vmem:[#allocation7 + $0x40] sm:$0xff]
          %v436 = vld [vmem:[#allocation7 + $0x48] sm:$0xff]
          %v437 = vld [vmem:[#allocation7 + $0x50] sm:$0xff]
          %v438 = vld [vmem:[#allocation7 + $0x58] sm:$0xff]
          %v439 = vld [vmem:[#allocation7 + $0x60] sm:$0xff]
          %v440 = vld [vmem:[#allocation7 + $0x68] sm:$0xff]
          %v441 = vld [vmem:[#allocation7 + $0x70] sm:$0xff]
          %v442 = vld [vmem:[#allocation7 + $0x78] sm:$0xff]
          %v443 = vpack.c.bf16 %v427, %v427
          %v444 = vpack.c.bf16 %v428, %v428
          %v445 = vpack.c.bf16 %v429, %v429
          %v446 = vpack.c.bf16 %v430, %v430
          %v447 = vpack.c.bf16 %v431, %v431
          %v448 = vpack.c.bf16 %v432, %v432
          %v449 = vpack.c.bf16 %v433, %v433
          %v450 = vpack.c.bf16 %v434, %v434
          %v451 = vpack.c.bf16 %v435, %v435
          %v452 = vpack.c.bf16 %v436, %v436
          %v453 = vpack.c.bf16 %v437, %v437
          %v454 = vpack.c.bf16 %v438, %v438
          %v455 = vpack.c.bf16 %v439, %v439
          %v456 = vpack.c.bf16 %v440, %v440
          %v457 = vpack.c.bf16 %v441, %v441
          %v458 = vpack.c.bf16 %v442, %v442
          %v471 = vrot.slane %v443, 3
          %v472 = vrot.slane %v444, 3
          %v473 = vrot.slane %v445, 3
          %v474 = vrot.slane %v446, 3
          %v475 = vrot.slane %v447, 3
          %v476 = vrot.slane %v448, 3
          %v477 = vrot.slane %v451, 3
          %v478 = vrot.slane %v452, 3
          %v479 = vrot.slane %v453, 3
          %v480 = vrot.slane %v454, 3
          %v481 = vrot.slane %v455, 3
          %v482 = vrot.slane %v456, 3
          %vm483 = vcmask 1040384
          %v486 = vsel %vm483, %v443, %v471
          %vm487 = vcmask 1041409
          %v488 = vsel %vm487, %v443, %v471
          %v490 = vrot.slane %v488, 1
          %vm491 = vcmask 1042434
          %v492 = vsel %vm491, %v443, %v471
          %v494 = vrot.slane %v492, 2
          %v497 = vsel %vm483, %v444, %v472
          %v498 = vsel %vm487, %v444, %v472
          %v500 = vrot.slane %v498, 1
          %v501 = vsel %vm491, %v444, %v472
          %v503 = vrot.slane %v501, 2
          %v506 = vsel %vm483, %v445, %v473
          %v507 = vsel %vm487, %v445, %v473
          %v509 = vrot.slane %v507, 1
          %v510 = vsel %vm491, %v445, %v473
          %v512 = vrot.slane %v510, 2
          %v515 = vsel %vm483, %v446, %v474
          %v516 = vsel %vm487, %v446, %v474
          %v518 = vrot.slane %v516, 1
          %v519 = vsel %vm491, %v446, %v474
          %v521 = vrot.slane %v519, 2
          %v524 = vsel %vm483, %v447, %v475
          %v525 = vsel %vm487, %v447, %v475
          %v527 = vrot.slane %v525, 1
          %v528 = vsel %vm491, %v447, %v475
          %v530 = vrot.slane %v528, 2
          %v533 = vsel %vm483, %v448, %v476
          %v534 = vsel %vm487, %v448, %v476
          %v536 = vrot.slane %v534, 1
          %v537 = vsel %vm491, %v448, %v476
          %v539 = vrot.slane %v537, 2
          %v542 = vsel %vm483, %v451, %v477
          %v543 = vsel %vm487, %v451, %v477
          %v545 = vrot.slane %v543, 1
          %v546 = vsel %vm491, %v451, %v477
          %v548 = vrot.slane %v546, 2
          %v551 = vsel %vm483, %v452, %v478
          %v552 = vsel %vm487, %v452, %v478
          %v554 = vrot.slane %v552, 1
          %v555 = vsel %vm491, %v452, %v478
          %v557 = vrot.slane %v555, 2
          %v560 = vsel %vm483, %v453, %v479
          %v561 = vsel %vm487, %v453, %v479
          %v563 = vrot.slane %v561, 1
          %v564 = vsel %vm491, %v453, %v479
          %v566 = vrot.slane %v564, 2
          %v569 = vsel %vm483, %v454, %v480
          %v570 = vsel %vm487, %v454, %v480
          %v572 = vrot.slane %v570, 1
          %v573 = vsel %vm491, %v454, %v480
          %v575 = vrot.slane %v573, 2
          %v578 = vsel %vm483, %v455, %v481
          %v579 = vsel %vm487, %v455, %v481
          %v581 = vrot.slane %v579, 1
          %v582 = vsel %vm491, %v455, %v481
          %v584 = vrot.slane %v582, 2
          %v587 = vsel %vm483, %v456, %v482
          %v588 = vsel %vm487, %v456, %v482
          %v590 = vrot.slane %v588, 1
          %v591 = vsel %vm491, %v456, %v482
          %v593 = vrot.slane %v591, 2
          %594 = vst [vmem:[#allocation1] ss:$4 sm:$0xff] %v486
          %s596 = scalar_lea.vmem [#allocation1], 1
          %597 = vst [vmem:[%s596] ss:$4 sm:$0xff] %v490
          %s599 = scalar_lea.vmem [#allocation1], 2
          %600 = vst [vmem:[%s599] ss:$4 sm:$0xff] %v494
          %s601 = scalar_lea.vmem [#allocation1], 3
          %602 = vst [vmem:[%s601] ss:$4 sm:$0xff] %v497
          %s604 = scalar_lea.vmem [#allocation1], 32
          %605 = vst [vmem:[%s604] ss:$4 sm:$0xff] %v500
          %s607 = scalar_lea.vmem [#allocation1], 33
          %608 = vst [vmem:[%s607] ss:$4 sm:$0xff] %v503
          %s609 = scalar_lea.vmem [#allocation1], 34
          %610 = vst [vmem:[%s609] ss:$4 sm:$0xff] %v506
          %s612 = scalar_lea.vmem [#allocation1], 35
          %613 = vst [vmem:[%s612] ss:$4 sm:$0xff] %v509
          %v614 = vld [vmem:[#allocation1] sm:$0xff]
          %v615 = vld [vmem:[#allocation1 + $0x20] sm:$0xff]
          %617 = vst [vmem:[#allocation1] ss:$4 sm:$0xff] %v512
          %618 = vst [vmem:[%s596] ss:$4 sm:$0xff] %v515
          %620 = vst [vmem:[%s599] ss:$4 sm:$0xff] %v518
          %622 = vst [vmem:[%s601] ss:$4 sm:$0xff] %v521
          %623 = vst [vmem:[%s604] ss:$4 sm:$0xff] %v524
          %625 = vst [vmem:[%s607] ss:$4 sm:$0xff] %v527
          %627 = vst [vmem:[%s609] ss:$4 sm:$0xff] %v530
          %628 = vst [vmem:[%s612] ss:$4 sm:$0xff] %v533
          %v629 = vld [vmem:[#allocation1] sm:$0xff]
          %v630 = vld [vmem:[#allocation1 + $0x20] sm:$0xff]
          %632 = vst [vmem:[#allocation1] ss:$4 sm:$0xff] %v536
          %634 = vst [vmem:[%s596] ss:$4 sm:$0xff] %v539
          %635 = vst [vmem:[%s599] ss:$4 sm:$0xff] %v542
          %637 = vst [vmem:[%s601] ss:$4 sm:$0xff] %v545
          %639 = vst [vmem:[%s604] ss:$4 sm:$0xff] %v548
          %640 = vst [vmem:[%s607] ss:$4 sm:$0xff] %v551
          %642 = vst [vmem:[%s609] ss:$4 sm:$0xff] %v554
          %644 = vst [vmem:[%s612] ss:$4 sm:$0xff] %v557
          %v645 = vld [vmem:[#allocation1] sm:$0xff]
          %v646 = vld [vmem:[#allocation1 + $0x20] sm:$0xff]
          %647 = vst [vmem:[#allocation1] ss:$4 sm:$0xff] %v560
          %649 = vst [vmem:[%s596] ss:$4 sm:$0xff] %v563
          %651 = vst [vmem:[%s599] ss:$4 sm:$0xff] %v566
          %652 = vst [vmem:[%s601] ss:$4 sm:$0xff] %v569
          %654 = vst [vmem:[%s604] ss:$4 sm:$0xff] %v572
          %656 = vst [vmem:[%s607] ss:$4 sm:$0xff] %v575
          %657 = vst [vmem:[%s609] ss:$4 sm:$0xff] %v578
          %659 = vst [vmem:[%s612] ss:$4 sm:$0xff] %v581
          %v660 = vld [vmem:[#allocation1] sm:$0xff]
          %v661 = vld [vmem:[#allocation1 + $0x20] sm:$0xff]
          %663 = vst [vmem:[#allocation1] ss:$4 sm:$0xff] %v584
          %664 = vst [vmem:[%s596] ss:$4 sm:$0xff] %v587
          %666 = vst [vmem:[%s599] ss:$4 sm:$0xff] %v590
          %668 = vst [vmem:[%s601] ss:$4 sm:$0xff] %v593
          %v669 = vld [vmem:[#allocation1] sm:$0xff]
          %679 = vst [vmem:[#allocation3] sm:$0xf] %v614
          %680 = vst [vmem:[#allocation3 + $0x24] sm:$0xf] %v615
          %681 = vst [vmem:[#allocation3 + $0x48] sm:$0xf] %v629
          %682 = vst [vmem:[#allocation3 + $0x6c] sm:$0xf] %v630
          %683 = vst [vmem:[#allocation3 + $0x90] sm:$0xf] %v645
          %684 = vst [vmem:[#allocation3 + $0xb4] sm:$0xf] %v646
          %685 = vst [vmem:[#allocation3 + $0xd8] sm:$0xf] %v660
          %686 = vst [vmem:[#allocation3 + $0xfc] sm:$0xf] %v661
          %687 = vst [vmem:[#allocation3 + $0x120] sm:$0xf] %v669
          %vm688 = vcmask 1043459
          %v689 = vsel %vm688, %v443, %v471
          %v691 = vrot.slane %v689, 3
          %v692 = vsel %vm688, %v444, %v472
          %v694 = vrot.slane %v692, 3
          %v695 = vsel %vm688, %v445, %v473
          %v697 = vrot.slane %v695, 3
          %v698 = vsel %vm688, %v446, %v474
          %v700 = vrot.slane %v698, 3
          %v701 = vsel %vm688, %v447, %v475
          %v703 = vrot.slane %v701, 3
          %v704 = vsel %vm688, %v448, %v476
          %v706 = vrot.slane %v704, 3
          %v707 = vsel %vm688, %v451, %v477
          %v709 = vrot.slane %v707, 3
          %v710 = vsel %vm688, %v452, %v478
          %v712 = vrot.slane %v710, 3
          %v713 = vsel %vm688, %v453, %v479
          %v715 = vrot.slane %v713, 3
          %v716 = vsel %vm688, %v454, %v480
          %v718 = vrot.slane %v716, 3
          %v719 = vsel %vm688, %v455, %v481
          %v721 = vrot.slane %v719, 3
          %v722 = vsel %vm688, %v456, %v482
          %v724 = vrot.slane %v722, 3
          %vm725 = vsmask.f32 256
          %vm726 = vsmask.f32 1284
          %vm727 = vmor %vm725, %vm726
          %vm728 = vsmask.f32 2312
          %vm729 = vmor %vm727, %vm728
          %vm730 = vsmask.f32 3340
          %vm731 = vmor %vm729, %vm730
          %vm732 = vsmask.f32 4368
          %vm733 = vmor %vm731, %vm732
          %vm734 = vsmask.f32 5396
          %vm735 = vmor %vm733, %vm734
          %vm736 = vsmask.f32 6424
          %vm737 = vmor %vm735, %vm736
          %vm738 = vsmask.f32 7452
          %vm739 = vmor %vm737, %vm738
          %v740 = vshrl.u32 %v486, 16
          %v742 = vrot.slane %v740, 7
          %v743 = vrot.slane %v742, 1
          %v744 = vshll.u32 %v490, 16
          %v746 = vsel %vm739, %v743, %v744
          %v747 = vshrl.u32 %v490, 16
          %v749 = vrot.slane %v747, 7
          %v750 = vrot.slane %v749, 1
          %v751 = vshll.u32 %v494, 16
          %v753 = vsel %vm739, %v750, %v751
          %v754 = vshrl.u32 %v494, 16
          %v756 = vrot.slane %v754, 7
          %v757 = vrot.slane %v756, 1
          %v759 = vshll.u32 %v691, 16
          %v761 = vsel %vm739, %v757, %v759
          %v762 = vshrl.u32 %v497, 16
          %v764 = vrot.slane %v762, 7
          %v765 = vrot.slane %v764, 1
          %v766 = vshll.u32 %v500, 16
          %v768 = vsel %vm739, %v765, %v766
          %v769 = vshrl.u32 %v500, 16
          %v771 = vrot.slane %v769, 7
          %v772 = vrot.slane %v771, 1
          %v773 = vshll.u32 %v503, 16
          %v775 = vsel %vm739, %v772, %v773
          %v776 = vshrl.u32 %v503, 16
          %v778 = vrot.slane %v776, 7
          %v779 = vrot.slane %v778, 1
          %v781 = vshll.u32 %v694, 16
          %v783 = vsel %vm739, %v779, %v781
          %v784 = vshrl.u32 %v506, 16
          %v786 = vrot.slane %v784, 7
          %v787 = vrot.slane %v786, 1
          %v788 = vshll.u32 %v509, 16
          %v790 = vsel %vm739, %v787, %v788
          %v791 = vshrl.u32 %v509, 16
          %v793 = vrot.slane %v791, 7
          %v794 = vrot.slane %v793, 1
          %v795 = vshll.u32 %v512, 16
          %v797 = vsel %vm739, %v794, %v795
          %v798 = vshrl.u32 %v512, 16
          %v800 = vrot.slane %v798, 7
          %v801 = vrot.slane %v800, 1
          %v803 = vshll.u32 %v697, 16
          %v805 = vsel %vm739, %v801, %v803
          %v806 = vshrl.u32 %v515, 16
          %v808 = vrot.slane %v806, 7
          %v809 = vrot.slane %v808, 1
          %v810 = vshll.u32 %v518, 16
          %v812 = vsel %vm739, %v809, %v810
          %v813 = vshrl.u32 %v518, 16
          %v815 = vrot.slane %v813, 7
          %v816 = vrot.slane %v815, 1
          %v817 = vshll.u32 %v521, 16
          %v819 = vsel %vm739, %v816, %v817
          %v820 = vshrl.u32 %v521, 16
          %v822 = vrot.slane %v820, 7
          %v823 = vrot.slane %v822, 1
          %v825 = vshll.u32 %v700, 16
          %v827 = vsel %vm739, %v823, %v825
          %v828 = vshrl.u32 %v524, 16
          %v830 = vrot.slane %v828, 7
          %v831 = vrot.slane %v830, 1
          %v832 = vshll.u32 %v527, 16
          %v834 = vsel %vm739, %v831, %v832
          %v835 = vshrl.u32 %v527, 16
          %v837 = vrot.slane %v835, 7
          %v838 = vrot.slane %v837, 1
          %v839 = vshll.u32 %v530, 16
          %v841 = vsel %vm739, %v838, %v839
          %v842 = vshrl.u32 %v530, 16
          %v844 = vrot.slane %v842, 7
          %v845 = vrot.slane %v844, 1
          %v847 = vshll.u32 %v703, 16
          %v849 = vsel %vm739, %v845, %v847
          %v850 = vshrl.u32 %v533, 16
          %v852 = vrot.slane %v850, 7
          %v853 = vrot.slane %v852, 1
          %v854 = vshll.u32 %v536, 16
          %v856 = vsel %vm739, %v853, %v854
          %v857 = vshrl.u32 %v536, 16
          %v859 = vrot.slane %v857, 7
          %v860 = vrot.slane %v859, 1
          %v861 = vshll.u32 %v539, 16
          %v863 = vsel %vm739, %v860, %v861
          %v864 = vshrl.u32 %v539, 16
          %v866 = vrot.slane %v864, 7
          %v867 = vrot.slane %v866, 1
          %v869 = vshll.u32 %v706, 16
          %v871 = vsel %vm739, %v867, %v869
          %v872 = vshrl.u32 %v542, 16
          %v874 = vrot.slane %v872, 7
          %v875 = vrot.slane %v874, 1
          %v876 = vshll.u32 %v545, 16
          %v878 = vsel %vm739, %v875, %v876
          %v879 = vshrl.u32 %v545, 16
          %v881 = vrot.slane %v879, 7
          %v882 = vrot.slane %v881, 1
          %v883 = vshll.u32 %v548, 16
          %v885 = vsel %vm739, %v882, %v883
          %v886 = vshrl.u32 %v548, 16
          %v888 = vrot.slane %v886, 7
          %v889 = vrot.slane %v888, 1
          %v891 = vshll.u32 %v709, 16
          %v893 = vsel %vm739, %v889, %v891
          %v894 = vshrl.u32 %v551, 16
          %v896 = vrot.slane %v894, 7
          %v897 = vrot.slane %v896, 1
          %v898 = vshll.u32 %v554, 16
          %v900 = vsel %vm739, %v897, %v898
          %v901 = vshrl.u32 %v554, 16
          %v903 = vrot.slane %v901, 7
          %v904 = vrot.slane %v903, 1
          %v905 = vshll.u32 %v557, 16
          %v907 = vsel %vm739, %v904, %v905
          %v908 = vshrl.u32 %v557, 16
          %v910 = vrot.slane %v908, 7
          %v911 = vrot.slane %v910, 1
          %v913 = vshll.u32 %v712, 16
          %v915 = vsel %vm739, %v911, %v913
          %v916 = vshrl.u32 %v560, 16
          %v918 = vrot.slane %v916, 7
          %v919 = vrot.slane %v918, 1
          %v920 = vshll.u32 %v563, 16
          %v922 = vsel %vm739, %v919, %v920
          %v923 = vshrl.u32 %v563, 16
          %v925 = vrot.slane %v923, 7
          %v926 = vrot.slane %v925, 1
          %v927 = vshll.u32 %v566, 16
          %v929 = vsel %vm739, %v926, %v927
          %v930 = vshrl.u32 %v566, 16
          %v932 = vrot.slane %v930, 7
          %v933 = vrot.slane %v932, 1
          %v935 = vshll.u32 %v715, 16
          %v937 = vsel %vm739, %v933, %v935
          %v938 = vshrl.u32 %v569, 16
          %v940 = vrot.slane %v938, 7
          %v941 = vrot.slane %v940, 1
          %v942 = vshll.u32 %v572, 16
          %v944 = vsel %vm739, %v941, %v942
          %v945 = vshrl.u32 %v572, 16
          %v947 = vrot.slane %v945, 7
          %v948 = vrot.slane %v947, 1
          %v949 = vshll.u32 %v575, 16
          %v951 = vsel %vm739, %v948, %v949
          %v952 = vshrl.u32 %v575, 16
          %v954 = vrot.slane %v952, 7
          %v955 = vrot.slane %v954, 1
          %v957 = vshll.u32 %v718, 16
          %v959 = vsel %vm739, %v955, %v957
          %v960 = vshrl.u32 %v578, 16
          %v962 = vrot.slane %v960, 7
          %v963 = vrot.slane %v962, 1
          %v964 = vshll.u32 %v581, 16
          %v966 = vsel %vm739, %v963, %v964
          %v967 = vshrl.u32 %v581, 16
          %v969 = vrot.slane %v967, 7
          %v970 = vrot.slane %v969, 1
          %v971 = vshll.u32 %v584, 16
          %v973 = vsel %vm739, %v970, %v971
          %v974 = vshrl.u32 %v584, 16
          %v976 = vrot.slane %v974, 7
          %v977 = vrot.slane %v976, 1
          %v979 = vshll.u32 %v721, 16
          %v981 = vsel %vm739, %v977, %v979
          %v982 = vshrl.u32 %v587, 16
          %v984 = vrot.slane %v982, 7
          %v985 = vrot.slane %v984, 1
          %v986 = vshll.u32 %v590, 16
          %v988 = vsel %vm739, %v985, %v986
          %v989 = vshrl.u32 %v590, 16
          %v991 = vrot.slane %v989, 7
          %v992 = vrot.slane %v991, 1
          %v993 = vshll.u32 %v593, 16
          %v995 = vsel %vm739, %v992, %v993
          %v996 = vshrl.u32 %v593, 16
          %v998 = vrot.slane %v996, 7
          %v999 = vrot.slane %v998, 1
          %v1001 = vshll.u32 %v724, 16
          %v1003 = vsel %vm739, %v999, %v1001
          %1005 = vst [vmem:[#allocation1] ss:$4 sm:$0xff] %v746
          %s1007 = scalar_lea.vmem [#allocation1], 1
          %1008 = vst [vmem:[%s1007] ss:$4 sm:$0xff] %v753
          %s1010 = scalar_lea.vmem [#allocation1], 2
          %1011 = vst [vmem:[%s1010] ss:$4 sm:$0xff] %v761
          %s1013 = scalar_lea.vmem [#allocation1], 3
          %1014 = vst [vmem:[%s1013] ss:$4 sm:$0xff] %v768
          %s1016 = scalar_lea.vmem [#allocation1], 32
          %1017 = vst [vmem:[%s1016] ss:$4 sm:$0xff] %v775
          %s1019 = scalar_lea.vmem [#allocation1], 33
          %1020 = vst [vmem:[%s1019] ss:$4 sm:$0xff] %v783
          %s1022 = scalar_lea.vmem [#allocation1], 34
          %1023 = vst [vmem:[%s1022] ss:$4 sm:$0xff] %v790
          %s1025 = scalar_lea.vmem [#allocation1], 35
          %1026 = vst [vmem:[%s1025] ss:$4 sm:$0xff] %v797
          %v1027 = vld [vmem:[#allocation1] sm:$0xff]
          %v1028 = vld [vmem:[#allocation1 + $0x20] sm:$0xff]
          %1030 = vst [vmem:[#allocation1] ss:$4 sm:$0xff] %v805
          %1032 = vst [vmem:[%s1007] ss:$4 sm:$0xff] %v812
          %1034 = vst [vmem:[%s1010] ss:$4 sm:$0xff] %v819
          %1036 = vst [vmem:[%s1013] ss:$4 sm:$0xff] %v827
          %1038 = vst [vmem:[%s1016] ss:$4 sm:$0xff] %v834
          %1040 = vst [vmem:[%s1019] ss:$4 sm:$0xff] %v841
          %1042 = vst [vmem:[%s1022] ss:$4 sm:$0xff] %v849
          %1044 = vst [vmem:[%s1025] ss:$4 sm:$0xff] %v856
          %v1045 = vld [vmem:[#allocation1] sm:$0xff]
          %v1046 = vld [vmem:[#allocation1 + $0x20] sm:$0xff]
          %1048 = vst [vmem:[#allocation1] ss:$4 sm:$0xff] %v863
          %1050 = vst [vmem:[%s1007] ss:$4 sm:$0xff] %v871
          %1052 = vst [vmem:[%s1010] ss:$4 sm:$0xff] %v878
          %1054 = vst [vmem:[%s1013] ss:$4 sm:$0xff] %v885
          %1056 = vst [vmem:[%s1016] ss:$4 sm:$0xff] %v893
          %1058 = vst [vmem:[%s1019] ss:$4 sm:$0xff] %v900
          %1060 = vst [vmem:[%s1022] ss:$4 sm:$0xff] %v907
          %1062 = vst [vmem:[%s1025] ss:$4 sm:$0xff] %v915
          %v1063 = vld [vmem:[#allocation1] sm:$0xff]
          %v1064 = vld [vmem:[#allocation1 + $0x20] sm:$0xff]
          %1066 = vst [vmem:[#allocation1] ss:$4 sm:$0xff] %v922
          %1068 = vst [vmem:[%s1007] ss:$4 sm:$0xff] %v929
          %1070 = vst [vmem:[%s1010] ss:$4 sm:$0xff] %v937
          %1072 = vst [vmem:[%s1013] ss:$4 sm:$0xff] %v944
          %1074 = vst [vmem:[%s1016] ss:$4 sm:$0xff] %v951
          %1076 = vst [vmem:[%s1019] ss:$4 sm:$0xff] %v959
          %1078 = vst [vmem:[%s1022] ss:$4 sm:$0xff] %v966
          %1080 = vst [vmem:[%s1025] ss:$4 sm:$0xff] %v973
          %v1081 = vld [vmem:[#allocation1] sm:$0xff]
          %v1082 = vld [vmem:[#allocation1 + $0x20] sm:$0xff]
          %1084 = vst [vmem:[#allocation1] ss:$4 sm:$0xff] %v981
          %1086 = vst [vmem:[%s1007] ss:$4 sm:$0xff] %v988
          %1088 = vst [vmem:[%s1010] ss:$4 sm:$0xff] %v995
          %1090 = vst [vmem:[%s1013] ss:$4 sm:$0xff] %v1003
          %v1091 = vld [vmem:[#allocation1] sm:$0xff]
          %1101 = vst [vmem:[#allocation3 + $0x4] sm:$0xf] %v1027
          %1102 = vst [vmem:[#allocation3 + $0x28] sm:$0xf] %v1028
          %1103 = vst [vmem:[#allocation3 + $0x4c] sm:$0xf] %v1045
          %1104 = vst [vmem:[#allocation3 + $0x70] sm:$0xf] %v1046
          %1105 = vst [vmem:[#allocation3 + $0x94] sm:$0xf] %v1063
          %1106 = vst [vmem:[#allocation3 + $0xb8] sm:$0xf] %v1064
          %1107 = vst [vmem:[#allocation3 + $0xdc] sm:$0xf] %v1081
          %1108 = vst [vmem:[#allocation3 + $0x100] sm:$0xf] %v1082
          %1109 = vst [vmem:[#allocation3 + $0x124] sm:$0xf] %v1091
          %1110 = vst [vmem:[#allocation1] sm:$0xff] %v443
          %s1111 = scalar_lea.vmem [#allocation1], 1
          %v1112 = vld [vmem:[%s1111] ss:$4 sm:$0xff]
          %s1113 = scalar_lea.vmem [#allocation1], 2
          %v1114 = vld [vmem:[%s1113] ss:$4 sm:$0xff]
          %s1115 = scalar_lea.vmem [#allocation1], 3
          %v1116 = vld [vmem:[%s1115] ss:$4 sm:$0xff]
          %1117 = vst [vmem:[#allocation1 + $0x20] sm:$0xff] %v444
          %s1118 = scalar_lea.vmem [#allocation1], 33
          %v1119 = vld [vmem:[%s1118] ss:$4 sm:$0xff]
          %s1120 = scalar_lea.vmem [#allocation1], 34
          %v1121 = vld [vmem:[%s1120] ss:$4 sm:$0xff]
          %s1122 = scalar_lea.vmem [#allocation1], 35
          %v1123 = vld [vmem:[%s1122] ss:$4 sm:$0xff]
          %1124 = vst [vmem:[#allocation1] sm:$0xff] %v445
          %v1125 = vld [vmem:[%s1111] ss:$4 sm:$0xff]
          %v1126 = vld [vmem:[%s1113] ss:$4 sm:$0xff]
          %v1127 = vld [vmem:[%s1115] ss:$4 sm:$0xff]
          %1128 = vst [vmem:[#allocation1 + $0x20] sm:$0xff] %v446
          %v1129 = vld [vmem:[%s1118] ss:$4 sm:$0xff]
          %v1130 = vld [vmem:[%s1120] ss:$4 sm:$0xff]
          %v1131 = vld [vmem:[%s1122] ss:$4 sm:$0xff]
          %1132 = vst [vmem:[#allocation1] sm:$0xff] %v447
          %v1133 = vld [vmem:[%s1111] ss:$4 sm:$0xff]
          %v1134 = vld [vmem:[%s1113] ss:$4 sm:$0xff]
          %v1135 = vld [vmem:[%s1115] ss:$4 sm:$0xff]
          %1136 = vst [vmem:[#allocation1 + $0x20] sm:$0xff] %v448
          %v1137 = vld [vmem:[%s1118] ss:$4 sm:$0xff]
          %v1138 = vld [vmem:[%s1120] ss:$4 sm:$0xff]
          %v1139 = vld [vmem:[%s1122] ss:$4 sm:$0xff]
          %1140 = vst [vmem:[#allocation1] sm:$0xff] %v451
          %v1141 = vld [vmem:[%s1111] ss:$4 sm:$0xff]
          %v1142 = vld [vmem:[%s1113] ss:$4 sm:$0xff]
          %v1143 = vld [vmem:[%s1115] ss:$4 sm:$0xff]
          %1144 = vst [vmem:[#allocation1 + $0x20] sm:$0xff] %v452
          %v1145 = vld [vmem:[%s1118] ss:$4 sm:$0xff]
          %v1146 = vld [vmem:[%s1120] ss:$4 sm:$0xff]
          %v1147 = vld [vmem:[%s1122] ss:$4 sm:$0xff]
          %1148 = vst [vmem:[#allocation1] sm:$0xff] %v453
          %v1149 = vld [vmem:[%s1111] ss:$4 sm:$0xff]
          %v1150 = vld [vmem:[%s1113] ss:$4 sm:$0xff]
          %v1151 = vld [vmem:[%s1115] ss:$4 sm:$0xff]
          %1152 = vst [vmem:[#allocation1 + $0x20] sm:$0xff] %v454
          %v1153 = vld [vmem:[%s1118] ss:$4 sm:$0xff]
          %v1154 = vld [vmem:[%s1120] ss:$4 sm:$0xff]
          %v1155 = vld [vmem:[%s1122] ss:$4 sm:$0xff]
          %1156 = vst [vmem:[#allocation1] sm:$0xff] %v455
          %v1157 = vld [vmem:[%s1111] ss:$4 sm:$0xff]
          %v1158 = vld [vmem:[%s1113] ss:$4 sm:$0xff]
          %v1159 = vld [vmem:[%s1115] ss:$4 sm:$0xff]
          %1160 = vst [vmem:[#allocation1 + $0x20] sm:$0xff] %v456
          %v1161 = vld [vmem:[%s1118] ss:$4 sm:$0xff]
          %v1162 = vld [vmem:[%s1120] ss:$4 sm:$0xff]
          %v1163 = vld [vmem:[%s1122] ss:$4 sm:$0xff]
          %1164 = vst [vmem:[#allocation1] ss:$4 sm:$0xff] %v1112
          %s1165 = scalar_lea.vmem [#allocation1], 1
          %1166 = vst [vmem:[%s1165] ss:$4 sm:$0xff] %v1114
          %s1167 = scalar_lea.vmem [#allocation1], 2
          %1168 = vst [vmem:[%s1167] ss:$4 sm:$0xff] %v1116
          %s1169 = scalar_lea.vmem [#allocation1], 3
          %1170 = vst [vmem:[%s1169] ss:$4 sm:$0xff] %v1119
          %s1171 = scalar_lea.vmem [#allocation1], 32
          %1172 = vst [vmem:[%s1171] ss:$4 sm:$0xff] %v1121
          %s1173 = scalar_lea.vmem [#allocation1], 33
          %1174 = vst [vmem:[%s1173] ss:$4 sm:$0xff] %v1123
          %s1175 = scalar_lea.vmem [#allocation1], 34
          %1176 = vst [vmem:[%s1175] ss:$4 sm:$0xff] %v1125
          %s1177 = scalar_lea.vmem [#allocation1], 35
          %1178 = vst [vmem:[%s1177] ss:$4 sm:$0xff] %v1126
          %v1179 = vld [vmem:[#allocation1] sm:$0xff]
          %v1180 = vld [vmem:[#allocation1 + $0x20] sm:$0xff]
          %1181 = vst [vmem:[#allocation1] ss:$4 sm:$0xff] %v1127
          %1182 = vst [vmem:[%s1165] ss:$4 sm:$0xff] %v1129
          %1183 = vst [vmem:[%s1167] ss:$4 sm:$0xff] %v1130
          %1184 = vst [vmem:[%s1169] ss:$4 sm:$0xff] %v1131
          %1185 = vst [vmem:[%s1171] ss:$4 sm:$0xff] %v1133
          %1186 = vst [vmem:[%s1173] ss:$4 sm:$0xff] %v1134
          %1187 = vst [vmem:[%s1175] ss:$4 sm:$0xff] %v1135
          %1188 = vst [vmem:[%s1177] ss:$4 sm:$0xff] %v1137
          %v1189 = vld [vmem:[#allocation1] sm:$0xff]
          %v1190 = vld [vmem:[#allocation1 + $0x20] sm:$0xff]
          %1191 = vst [vmem:[#allocation1] ss:$4 sm:$0xff] %v1138
          %1192 = vst [vmem:[%s1165] ss:$4 sm:$0xff] %v1139
          %1193 = vst [vmem:[%s1167] ss:$4 sm:$0xff] %v1141
          %1194 = vst [vmem:[%s1169] ss:$4 sm:$0xff] %v1142
          %1195 = vst [vmem:[%s1171] ss:$4 sm:$0xff] %v1143
          %1196 = vst [vmem:[%s1173] ss:$4 sm:$0xff] %v1145
          %1197 = vst [vmem:[%s1175] ss:$4 sm:$0xff] %v1146
          %1198 = vst [vmem:[%s1177] ss:$4 sm:$0xff] %v1147
          %v1199 = vld [vmem:[#allocation1] sm:$0xff]
          %v1200 = vld [vmem:[#allocation1 + $0x20] sm:$0xff]
          %1201 = vst [vmem:[#allocation1] ss:$4 sm:$0xff] %v1149
          %1202 = vst [vmem:[%s1165] ss:$4 sm:$0xff] %v1150
          %1203 = vst [vmem:[%s1167] ss:$4 sm:$0xff] %v1151
          %1204 = vst [vmem:[%s1169] ss:$4 sm:$0xff] %v1153
          %1205 = vst [vmem:[%s1171] ss:$4 sm:$0xff] %v1154
          %1206 = vst [vmem:[%s1173] ss:$4 sm:$0xff] %v1155
          %1207 = vst [vmem:[%s1175] ss:$4 sm:$0xff] %v1157
          %1208 = vst [vmem:[%s1177] ss:$4 sm:$0xff] %v1158
          %v1209 = vld [vmem:[#allocation1] sm:$0xff]
          %v1210 = vld [vmem:[#allocation1 + $0x20] sm:$0xff]
          %1211 = vst [vmem:[#allocation1] ss:$4 sm:$0xff] %v1159
          %1212 = vst [vmem:[%s1165] ss:$4 sm:$0xff] %v1161
          %1213 = vst [vmem:[%s1167] ss:$4 sm:$0xff] %v1162
          %1214 = vst [vmem:[%s1169] ss:$4 sm:$0xff] %v1163
          %v1215 = vld [vmem:[#allocation1] sm:$0xff]
          %1225 = vst [vmem:[#allocation3 + $0x8] sm:$0xf] %v1179
          %1226 = vst [vmem:[#allocation3 + $0x2c] sm:$0xf] %v1180
          %1227 = vst [vmem:[#allocation3 + $0x50] sm:$0xf] %v1189
          %1228 = vst [vmem:[#allocation3 + $0x74] sm:$0xf] %v1190
          %1229 = vst [vmem:[#allocation3 + $0x98] sm:$0xf] %v1199
          %1230 = vst [vmem:[#allocation3 + $0xbc] sm:$0xf] %v1200
          %1231 = vst [vmem:[#allocation3 + $0xe0] sm:$0xf] %v1209
          %1232 = vst [vmem:[#allocation3 + $0x104] sm:$0xf] %v1210
          %1233 = vst [vmem:[#allocation3 + $0x128] sm:$0xf] %v1215
          %v1236 = vrot.slane %v449, 3
          %v1237 = vrot.slane %v457, 3
          %v1240 = vsel %vm483, %v449, %v1236
          %v1241 = vsel %vm487, %v449, %v1236
          %v1243 = vrot.slane %v1241, 1
          %v1244 = vsel %vm491, %v449, %v1236
          %v1246 = vrot.slane %v1244, 2
          %v1249 = vsel %vm483, %v457, %v1237
          %v1250 = vsel %vm487, %v457, %v1237
          %v1252 = vrot.slane %v1250, 1
          %v1253 = vsel %vm491, %v457, %v1237
          %v1255 = vrot.slane %v1253, 2
          %1256 = vst [vmem:[#allocation1] ss:$4 sm:$0xff] %v497
          %s1257 = scalar_lea.vmem [#allocation1], 1
          %1258 = vst [vmem:[%s1257] ss:$4 sm:$0xff] %v500
          %s1259 = scalar_lea.vmem [#allocation1], 2
          %1260 = vst [vmem:[%s1259] ss:$4 sm:$0xff] %v503
          %s1261 = scalar_lea.vmem [#allocation1], 3
          %1262 = vst [vmem:[%s1261] ss:$4 sm:$0xff] %v506
          %s1263 = scalar_lea.vmem [#allocation1], 32
          %1264 = vst [vmem:[%s1263] ss:$4 sm:$0xff] %v509
          %s1265 = scalar_lea.vmem [#allocation1], 33
          %1266 = vst [vmem:[%s1265] ss:$4 sm:$0xff] %v512
          %s1267 = scalar_lea.vmem [#allocation1], 34
          %1268 = vst [vmem:[%s1267] ss:$4 sm:$0xff] %v515
          %s1269 = scalar_lea.vmem [#allocation1], 35
          %1270 = vst [vmem:[%s1269] ss:$4 sm:$0xff] %v518
          %v1271 = vld [vmem:[#allocation1] sm:$0xff]
          %v1272 = vld [vmem:[#allocation1 + $0x20] sm:$0xff]
          %1273 = vst [vmem:[#allocation1] ss:$4 sm:$0xff] %v521
          %1274 = vst [vmem:[%s1257] ss:$4 sm:$0xff] %v524
          %1275 = vst [vmem:[%s1259] ss:$4 sm:$0xff] %v527
          %1276 = vst [vmem:[%s1261] ss:$4 sm:$0xff] %v530
          %1277 = vst [vmem:[%s1263] ss:$4 sm:$0xff] %v533
          %1278 = vst [vmem:[%s1265] ss:$4 sm:$0xff] %v536
          %1279 = vst [vmem:[%s1267] ss:$4 sm:$0xff] %v539
          %1280 = vst [vmem:[%s1269] ss:$4 sm:$0xff] %v1240
          %v1281 = vld [vmem:[#allocation1] sm:$0xff]
          %v1282 = vld [vmem:[#allocation1 + $0x20] sm:$0xff]
          %1284 = vst [vmem:[#allocation1] ss:$4 sm:$0xff] %v1243
          %1286 = vst [vmem:[%s1257] ss:$4 sm:$0xff] %v1246
          %1287 = vst [vmem:[%s1259] ss:$4 sm:$0xff] %v551
          %1288 = vst [vmem:[%s1261] ss:$4 sm:$0xff] %v554
          %1289 = vst [vmem:[%s1263] ss:$4 sm:$0xff] %v557
          %1290 = vst [vmem:[%s1265] ss:$4 sm:$0xff] %v560
          %1291 = vst [vmem:[%s1267] ss:$4 sm:$0xff] %v563
          %1292 = vst [vmem:[%s1269] ss:$4 sm:$0xff] %v566
          %v1293 = vld [vmem:[#allocation1] sm:$0xff]
          %v1294 = vld [vmem:[#allocation1 + $0x20] sm:$0xff]
          %1295 = vst [vmem:[#allocation1] ss:$4 sm:$0xff] %v569
          %1296 = vst [vmem:[%s1257] ss:$4 sm:$0xff] %v572
          %1297 = vst [vmem:[%s1259] ss:$4 sm:$0xff] %v575
          %1298 = vst [vmem:[%s1261] ss:$4 sm:$0xff] %v578
          %1299 = vst [vmem:[%s1263] ss:$4 sm:$0xff] %v581
          %1300 = vst [vmem:[%s1265] ss:$4 sm:$0xff] %v584
          %1301 = vst [vmem:[%s1267] ss:$4 sm:$0xff] %v587
          %1302 = vst [vmem:[%s1269] ss:$4 sm:$0xff] %v590
          %v1303 = vld [vmem:[#allocation1] sm:$0xff]
          %v1304 = vld [vmem:[#allocation1 + $0x20] sm:$0xff]
          %1305 = vst [vmem:[#allocation1] ss:$4 sm:$0xff] %v593
          %1306 = vst [vmem:[%s1257] ss:$4 sm:$0xff] %v1249
          %1308 = vst [vmem:[%s1259] ss:$4 sm:$0xff] %v1252
          %1310 = vst [vmem:[%s1261] ss:$4 sm:$0xff] %v1255
          %v1311 = vld [vmem:[#allocation1] sm:$0xff]
          %1321 = vst [vmem:[#allocation3 + $0xc] sm:$0xf] %v1271
          %1322 = vst [vmem:[#allocation3 + $0x30] sm:$0xf] %v1272
          %1323 = vst [vmem:[#allocation3 + $0x54] sm:$0xf] %v1281
          %1324 = vst [vmem:[#allocation3 + $0x78] sm:$0xf] %v1282
          %1325 = vst [vmem:[#allocation3 + $0x9c] sm:$0xf] %v1293
          %1326 = vst [vmem:[#allocation3 + $0xc0] sm:$0xf] %v1294
          %1327 = vst [vmem:[#allocation3 + $0xe4] sm:$0xf] %v1303
          %1328 = vst [vmem:[#allocation3 + $0x108] sm:$0xf] %v1304
          %1329 = vst [vmem:[#allocation3 + $0x12c] sm:$0xf] %v1311
          %v1330 = vsel %vm688, %v449, %v1236
          %v1332 = vrot.slane %v1330, 3
          %v1333 = vsel %vm688, %v457, %v1237
          %v1335 = vrot.slane %v1333, 3
          %v1336 = vshrl.u32 %v1240, 16
          %v1338 = vrot.slane %v1336, 7
          %v1339 = vrot.slane %v1338, 1
          %v1340 = vshll.u32 %v1243, 16
          %v1342 = vsel %vm739, %v1339, %v1340
          %v1343 = vshrl.u32 %v1243, 16
          %v1345 = vrot.slane %v1343, 7
          %v1346 = vrot.slane %v1345, 1
          %v1347 = vshll.u32 %v1246, 16
          %v1349 = vsel %vm739, %v1346, %v1347
          %v1350 = vshrl.u32 %v1246, 16
          %v1352 = vrot.slane %v1350, 7
          %v1353 = vrot.slane %v1352, 1
          %v1355 = vshll.u32 %v1332, 16
          %v1357 = vsel %vm739, %v1353, %v1355
          %v1358 = vshrl.u32 %v1249, 16
          %v1360 = vrot.slane %v1358, 7
          %v1361 = vrot.slane %v1360, 1
          %v1362 = vshll.u32 %v1252, 16
          %v1364 = vsel %vm739, %v1361, %v1362
          %v1365 = vshrl.u32 %v1252, 16
          %v1367 = vrot.slane %v1365, 7
          %v1368 = vrot.slane %v1367, 1
          %v1369 = vshll.u32 %v1255, 16
          %v1371 = vsel %vm739, %v1368, %v1369
          %v1372 = vshrl.u32 %v1255, 16
          %v1374 = vrot.slane %v1372, 7
          %v1375 = vrot.slane %v1374, 1
          %v1377 = vshll.u32 %v1335, 16
          %v1379 = vsel %vm739, %v1375, %v1377
          %1380 = vst [vmem:[#allocation1] ss:$4 sm:$0xff] %v768
          %s1381 = scalar_lea.vmem [#allocation1], 1
          %1382 = vst [vmem:[%s1381] ss:$4 sm:$0xff] %v775
          %s1383 = scalar_lea.vmem [#allocation1], 2
          %1384 = vst [vmem:[%s1383] ss:$4 sm:$0xff] %v783
          %s1385 = scalar_lea.vmem [#allocation1], 3
          %1386 = vst [vmem:[%s1385] ss:$4 sm:$0xff] %v790
          %s1387 = scalar_lea.vmem [#allocation1], 32
          %1388 = vst [vmem:[%s1387] ss:$4 sm:$0xff] %v797
          %s1389 = scalar_lea.vmem [#allocation1], 33
          %1390 = vst [vmem:[%s1389] ss:$4 sm:$0xff] %v805
          %s1391 = scalar_lea.vmem [#allocation1], 34
          %1392 = vst [vmem:[%s1391] ss:$4 sm:$0xff] %v812
          %s1393 = scalar_lea.vmem [#allocation1], 35
          %1394 = vst [vmem:[%s1393] ss:$4 sm:$0xff] %v819
          %v1395 = vld [vmem:[#allocation1] sm:$0xff]
          %v1396 = vld [vmem:[#allocation1 + $0x20] sm:$0xff]
          %1397 = vst [vmem:[#allocation1] ss:$4 sm:$0xff] %v827
          %1398 = vst [vmem:[%s1381] ss:$4 sm:$0xff] %v834
          %1399 = vst [vmem:[%s1383] ss:$4 sm:$0xff] %v841
          %1400 = vst [vmem:[%s1385] ss:$4 sm:$0xff] %v849
          %1401 = vst [vmem:[%s1387] ss:$4 sm:$0xff] %v856
          %1402 = vst [vmem:[%s1389] ss:$4 sm:$0xff] %v863
          %1403 = vst [vmem:[%s1391] ss:$4 sm:$0xff] %v871
          %1405 = vst [vmem:[%s1393] ss:$4 sm:$0xff] %v1342
          %v1406 = vld [vmem:[#allocation1] sm:$0xff]
          %v1407 = vld [vmem:[#allocation1 + $0x20] sm:$0xff]
          %1409 = vst [vmem:[#allocation1] ss:$4 sm:$0xff] %v1349
          %1411 = vst [vmem:[%s1381] ss:$4 sm:$0xff] %v1357
          %1412 = vst [vmem:[%s1383] ss:$4 sm:$0xff] %v900
          %1413 = vst [vmem:[%s1385] ss:$4 sm:$0xff] %v907
          %1414 = vst [vmem:[%s1387] ss:$4 sm:$0xff] %v915
          %1415 = vst [vmem:[%s1389] ss:$4 sm:$0xff] %v922
          %1416 = vst [vmem:[%s1391] ss:$4 sm:$0xff] %v929
          %1417 = vst [vmem:[%s1393] ss:$4 sm:$0xff] %v937
          %v1418 = vld [vmem:[#allocation1] sm:$0xff]
          %v1419 = vld [vmem:[#allocation1 + $0x20] sm:$0xff]
          %1420 = vst [vmem:[#allocation1] ss:$4 sm:$0xff] %v944
          %1421 = vst [vmem:[%s1381] ss:$4 sm:$0xff] %v951
          %1422 = vst [vmem:[%s1383] ss:$4 sm:$0xff] %v959
          %1423 = vst [vmem:[%s1385] ss:$4 sm:$0xff] %v966
          %1424 = vst [vmem:[%s1387] ss:$4 sm:$0xff] %v973
          %1425 = vst [vmem:[%s1389] ss:$4 sm:$0xff] %v981
          %1426 = vst [vmem:[%s1391] ss:$4 sm:$0xff] %v988
          %1427 = vst [vmem:[%s1393] ss:$4 sm:$0xff] %v995
          %v1428 = vld [vmem:[#allocation1] sm:$0xff]
          %v1429 = vld [vmem:[#allocation1 + $0x20] sm:$0xff]
          %1430 = vst [vmem:[#allocation1] ss:$4 sm:$0xff] %v1003
          %1432 = vst [vmem:[%s1381] ss:$4 sm:$0xff] %v1364
          %1434 = vst [vmem:[%s1383] ss:$4 sm:$0xff] %v1371
          %1436 = vst [vmem:[%s1385] ss:$4 sm:$0xff] %v1379
          %v1437 = vld [vmem:[#allocation1] sm:$0xff]
          %1447 = vst [vmem:[#allocation3 + $0x10] sm:$0xf] %v1395
          %1448 = vst [vmem:[#allocation3 + $0x34] sm:$0xf] %v1396
          %1449 = vst [vmem:[#allocation3 + $0x58] sm:$0xf] %v1406
          %1450 = vst [vmem:[#allocation3 + $0x7c] sm:$0xf] %v1407
          %1451 = vst [vmem:[#allocation3 + $0xa0] sm:$0xf] %v1418
          %1452 = vst [vmem:[#allocation3 + $0xc4] sm:$0xf] %v1419
          %1453 = vst [vmem:[#allocation3 + $0xe8] sm:$0xf] %v1428
          %1454 = vst [vmem:[#allocation3 + $0x10c] sm:$0xf] %v1429
          %1455 = vst [vmem:[#allocation3 + $0x130] sm:$0xf] %v1437
          %1456 = vst [vmem:[#allocation1] sm:$0xff] %v444
          %s1457 = scalar_lea.vmem [#allocation1], 1
          %v1458 = vld [vmem:[%s1457] ss:$4 sm:$0xff]
          %s1459 = scalar_lea.vmem [#allocation1], 2
          %v1460 = vld [vmem:[%s1459] ss:$4 sm:$0xff]
          %s1461 = scalar_lea.vmem [#allocation1], 3
          %v1462 = vld [vmem:[%s1461] ss:$4 sm:$0xff]
          %1463 = vst [vmem:[#allocation1 + $0x20] sm:$0xff] %v445
          %s1464 = scalar_lea.vmem [#allocation1], 33
          %v1465 = vld [vmem:[%s1464] ss:$4 sm:$0xff]
          %s1466 = scalar_lea.vmem [#allocation1], 34
          %v1467 = vld [vmem:[%s1466] ss:$4 sm:$0xff]
          %s1468 = scalar_lea.vmem [#allocation1], 35
          %v1469 = vld [vmem:[%s1468] ss:$4 sm:$0xff]
          %1470 = vst [vmem:[#allocation1] sm:$0xff] %v446
          %v1471 = vld [vmem:[%s1457] ss:$4 sm:$0xff]
          %v1472 = vld [vmem:[%s1459] ss:$4 sm:$0xff]
          %v1473 = vld [vmem:[%s1461] ss:$4 sm:$0xff]
          %1474 = vst [vmem:[#allocation1 + $0x20] sm:$0xff] %v447
          %v1475 = vld [vmem:[%s1464] ss:$4 sm:$0xff]
          %v1476 = vld [vmem:[%s1466] ss:$4 sm:$0xff]
          %v1477 = vld [vmem:[%s1468] ss:$4 sm:$0xff]
          %1478 = vst [vmem:[#allocation1] sm:$0xff] %v448
          %v1479 = vld [vmem:[%s1457] ss:$4 sm:$0xff]
          %v1480 = vld [vmem:[%s1459] ss:$4 sm:$0xff]
          %v1481 = vld [vmem:[%s1461] ss:$4 sm:$0xff]
          %1482 = vst [vmem:[#allocation1 + $0x20] sm:$0xff] %v449
          %v1483 = vld [vmem:[%s1464] ss:$4 sm:$0xff]
          %v1484 = vld [vmem:[%s1466] ss:$4 sm:$0xff]
          %v1485 = vld [vmem:[%s1468] ss:$4 sm:$0xff]
          %1486 = vst [vmem:[#allocation1] sm:$0xff] %v452
          %v1487 = vld [vmem:[%s1457] ss:$4 sm:$0xff]
          %v1488 = vld [vmem:[%s1459] ss:$4 sm:$0xff]
          %v1489 = vld [vmem:[%s1461] ss:$4 sm:$0xff]
          %1490 = vst [vmem:[#allocation1 + $0x20] sm:$0xff] %v453
          %v1491 = vld [vmem:[%s1464] ss:$4 sm:$0xff]
          %v1492 = vld [vmem:[%s1466] ss:$4 sm:$0xff]
          %v1493 = vld [vmem:[%s1468] ss:$4 sm:$0xff]
          %1494 = vst [vmem:[#allocation1] sm:$0xff] %v454
          %v1495 = vld [vmem:[%s1457] ss:$4 sm:$0xff]
          %v1496 = vld [vmem:[%s1459] ss:$4 sm:$0xff]
          %v1497 = vld [vmem:[%s1461] ss:$4 sm:$0xff]
          %1498 = vst [vmem:[#allocation1 + $0x20] sm:$0xff] %v455
          %v1499 = vld [vmem:[%s1464] ss:$4 sm:$0xff]
          %v1500 = vld [vmem:[%s1466] ss:$4 sm:$0xff]
          %v1501 = vld [vmem:[%s1468] ss:$4 sm:$0xff]
          %1502 = vst [vmem:[#allocation1] sm:$0xff] %v456
          %v1503 = vld [vmem:[%s1457] ss:$4 sm:$0xff]
          %v1504 = vld [vmem:[%s1459] ss:$4 sm:$0xff]
          %v1505 = vld [vmem:[%s1461] ss:$4 sm:$0xff]
          %1506 = vst [vmem:[#allocation1 + $0x20] sm:$0xff] %v457
          %v1507 = vld [vmem:[%s1464] ss:$4 sm:$0xff]
          %v1508 = vld [vmem:[%s1466] ss:$4 sm:$0xff]
          %v1509 = vld [vmem:[%s1468] ss:$4 sm:$0xff]
          %1510 = vst [vmem:[#allocation1] ss:$4 sm:$0xff] %v1458
          %s1511 = scalar_lea.vmem [#allocation1], 1
          %1512 = vst [vmem:[%s1511] ss:$4 sm:$0xff] %v1460
          %s1513 = scalar_lea.vmem [#allocation1], 2
          %1514 = vst [vmem:[%s1513] ss:$4 sm:$0xff] %v1462
          %s1515 = scalar_lea.vmem [#allocation1], 3
          %1516 = vst [vmem:[%s1515] ss:$4 sm:$0xff] %v1465
          %s1517 = scalar_lea.vmem [#allocation1], 32
          %1518 = vst [vmem:[%s1517] ss:$4 sm:$0xff] %v1467
          %s1519 = scalar_lea.vmem [#allocation1], 33
          %1520 = vst [vmem:[%s1519] ss:$4 sm:$0xff] %v1469
          %s1521 = scalar_lea.vmem [#allocation1], 34
          %1522 = vst [vmem:[%s1521] ss:$4 sm:$0xff] %v1471
          %s1523 = scalar_lea.vmem [#allocation1], 35
          %1524 = vst [vmem:[%s1523] ss:$4 sm:$0xff] %v1472
          %v1525 = vld [vmem:[#allocation1] sm:$0xff]
          %v1526 = vld [vmem:[#allocation1 + $0x20] sm:$0xff]
          %1527 = vst [vmem:[#allocation1] ss:$4 sm:$0xff] %v1473
          %1528 = vst [vmem:[%s1511] ss:$4 sm:$0xff] %v1475
          %1529 = vst [vmem:[%s1513] ss:$4 sm:$0xff] %v1476
          %1530 = vst [vmem:[%s1515] ss:$4 sm:$0xff] %v1477
          %1531 = vst [vmem:[%s1517] ss:$4 sm:$0xff] %v1479
          %1532 = vst [vmem:[%s1519] ss:$4 sm:$0xff] %v1480
          %1533 = vst [vmem:[%s1521] ss:$4 sm:$0xff] %v1481
          %1534 = vst [vmem:[%s1523] ss:$4 sm:$0xff] %v1483
          %v1535 = vld [vmem:[#allocation1] sm:$0xff]
          %v1536 = vld [vmem:[#allocation1 + $0x20] sm:$0xff]
          %1537 = vst [vmem:[#allocation1] ss:$4 sm:$0xff] %v1484
          %1538 = vst [vmem:[%s1511] ss:$4 sm:$0xff] %v1485
          %1539 = vst [vmem:[%s1513] ss:$4 sm:$0xff] %v1487
          %1540 = vst [vmem:[%s1515] ss:$4 sm:$0xff] %v1488
          %1541 = vst [vmem:[%s1517] ss:$4 sm:$0xff] %v1489
          %1542 = vst [vmem:[%s1519] ss:$4 sm:$0xff] %v1491
          %1543 = vst [vmem:[%s1521] ss:$4 sm:$0xff] %v1492
          %1544 = vst [vmem:[%s1523] ss:$4 sm:$0xff] %v1493
          %v1545 = vld [vmem:[#allocation1] sm:$0xff]
          %v1546 = vld [vmem:[#allocation1 + $0x20] sm:$0xff]
          %1547 = vst [vmem:[#allocation1] ss:$4 sm:$0xff] %v1495
          %1548 = vst [vmem:[%s1511] ss:$4 sm:$0xff] %v1496
          %1549 = vst [vmem:[%s1513] ss:$4 sm:$0xff] %v1497
          %1550 = vst [vmem:[%s1515] ss:$4 sm:$0xff] %v1499
          %1551 = vst [vmem:[%s1517] ss:$4 sm:$0xff] %v1500
          %1552 = vst [vmem:[%s1519] ss:$4 sm:$0xff] %v1501
          %1553 = vst [vmem:[%s1521] ss:$4 sm:$0xff] %v1503
          %1554 = vst [vmem:[%s1523] ss:$4 sm:$0xff] %v1504
          %v1555 = vld [vmem:[#allocation1] sm:$0xff]
          %v1556 = vld [vmem:[#allocation1 + $0x20] sm:$0xff]
          %1557 = vst [vmem:[#allocation1] ss:$4 sm:$0xff] %v1505
          %1558 = vst [vmem:[%s1511] ss:$4 sm:$0xff] %v1507
          %1559 = vst [vmem:[%s1513] ss:$4 sm:$0xff] %v1508
          %1560 = vst [vmem:[%s1515] ss:$4 sm:$0xff] %v1509
          %v1561 = vld [vmem:[#allocation1] sm:$0xff]
          %1571 = vst [vmem:[#allocation3 + $0x14] sm:$0xf] %v1525
          %1572 = vst [vmem:[#allocation3 + $0x38] sm:$0xf] %v1526
          %1573 = vst [vmem:[#allocation3 + $0x5c] sm:$0xf] %v1535
          %1574 = vst [vmem:[#allocation3 + $0x80] sm:$0xf] %v1536
          %1575 = vst [vmem:[#allocation3 + $0xa4] sm:$0xf] %v1545
          %1576 = vst [vmem:[#allocation3 + $0xc8] sm:$0xf] %v1546
          %1577 = vst [vmem:[#allocation3 + $0xec] sm:$0xf] %v1555
          %1578 = vst [vmem:[#allocation3 + $0x110] sm:$0xf] %v1556
          %1579 = vst [vmem:[#allocation3 + $0x134] sm:$0xf] %v1561
          %v1582 = vrot.slane %v450, 3
          %v1583 = vrot.slane %v458, 3
          %v1586 = vsel %vm483, %v450, %v1582
          %v1587 = vsel %vm487, %v450, %v1582
          %v1589 = vrot.slane %v1587, 1
          %v1590 = vsel %vm491, %v450, %v1582
          %v1592 = vrot.slane %v1590, 2
          %v1595 = vsel %vm483, %v458, %v1583
          %v1596 = vsel %vm487, %v458, %v1583
          %v1598 = vrot.slane %v1596, 1
          %v1599 = vsel %vm491, %v458, %v1583
          %v1601 = vrot.slane %v1599, 2
          %1602 = vst [vmem:[#allocation1] ss:$4 sm:$0xff] %v506
          %s1603 = scalar_lea.vmem [#allocation1], 1
          %1604 = vst [vmem:[%s1603] ss:$4 sm:$0xff] %v509
          %s1605 = scalar_lea.vmem [#allocation1], 2
          %1606 = vst [vmem:[%s1605] ss:$4 sm:$0xff] %v512
          %s1607 = scalar_lea.vmem [#allocation1], 3
          %1608 = vst [vmem:[%s1607] ss:$4 sm:$0xff] %v515
          %s1609 = scalar_lea.vmem [#allocation1], 32
          %1610 = vst [vmem:[%s1609] ss:$4 sm:$0xff] %v518
          %s1611 = scalar_lea.vmem [#allocation1], 33
          %1612 = vst [vmem:[%s1611] ss:$4 sm:$0xff] %v521
          %s1613 = scalar_lea.vmem [#allocation1], 34
          %1614 = vst [vmem:[%s1613] ss:$4 sm:$0xff] %v524
          %s1615 = scalar_lea.vmem [#allocation1], 35
          %1616 = vst [vmem:[%s1615] ss:$4 sm:$0xff] %v527
          %v1617 = vld [vmem:[#allocation1] sm:$0xff]
          %v1618 = vld [vmem:[#allocation1 + $0x20] sm:$0xff]
          %1619 = vst [vmem:[#allocation1] ss:$4 sm:$0xff] %v530
          %1620 = vst [vmem:[%s1603] ss:$4 sm:$0xff] %v533
          %1621 = vst [vmem:[%s1605] ss:$4 sm:$0xff] %v536
          %1622 = vst [vmem:[%s1607] ss:$4 sm:$0xff] %v539
          %1623 = vst [vmem:[%s1609] ss:$4 sm:$0xff] %v1240
          %1624 = vst [vmem:[%s1611] ss:$4 sm:$0xff] %v1243
          %1625 = vst [vmem:[%s1613] ss:$4 sm:$0xff] %v1246
          %1626 = vst [vmem:[%s1615] ss:$4 sm:$0xff] %v1586
          %v1627 = vld [vmem:[#allocation1] sm:$0xff]
          %v1628 = vld [vmem:[#allocation1 + $0x20] sm:$0xff]
          %1630 = vst [vmem:[#allocation1] ss:$4 sm:$0xff] %v1589
          %1632 = vst [vmem:[%s1603] ss:$4 sm:$0xff] %v1592
          %1633 = vst [vmem:[%s1605] ss:$4 sm:$0xff] %v560
          %1634 = vst [vmem:[%s1607] ss:$4 sm:$0xff] %v563
          %1635 = vst [vmem:[%s1609] ss:$4 sm:$0xff] %v566
          %1636 = vst [vmem:[%s1611] ss:$4 sm:$0xff] %v569
          %1637 = vst [vmem:[%s1613] ss:$4 sm:$0xff] %v572
          %1638 = vst [vmem:[%s1615] ss:$4 sm:$0xff] %v575
          %v1639 = vld [vmem:[#allocation1] sm:$0xff]
          %v1640 = vld [vmem:[#allocation1 + $0x20] sm:$0xff]
          %1641 = vst [vmem:[#allocation1] ss:$4 sm:$0xff] %v578
          %1642 = vst [vmem:[%s1603] ss:$4 sm:$0xff] %v581
          %1643 = vst [vmem:[%s1605] ss:$4 sm:$0xff] %v584
          %1644 = vst [vmem:[%s1607] ss:$4 sm:$0xff] %v587
          %1645 = vst [vmem:[%s1609] ss:$4 sm:$0xff] %v590
          %1646 = vst [vmem:[%s1611] ss:$4 sm:$0xff] %v593
          %1647 = vst [vmem:[%s1613] ss:$4 sm:$0xff] %v1249
          %1648 = vst [vmem:[%s1615] ss:$4 sm:$0xff] %v1252
          %v1649 = vld [vmem:[#allocation1] sm:$0xff]
          %v1650 = vld [vmem:[#allocation1 + $0x20] sm:$0xff]
          %1651 = vst [vmem:[#allocation1] ss:$4 sm:$0xff] %v1255
          %1652 = vst [vmem:[%s1603] ss:$4 sm:$0xff] %v1595
          %1654 = vst [vmem:[%s1605] ss:$4 sm:$0xff] %v1598
          %1656 = vst [vmem:[%s1607] ss:$4 sm:$0xff] %v1601
          %v1657 = vld [vmem:[#allocation1] sm:$0xff]
          %1667 = vst [vmem:[#allocation3 + $0x18] sm:$0xf] %v1617
          %1668 = vst [vmem:[#allocation3 + $0x3c] sm:$0xf] %v1618
          %1669 = vst [vmem:[#allocation3 + $0x60] sm:$0xf] %v1627
          %1670 = vst [vmem:[#allocation3 + $0x84] sm:$0xf] %v1628
          %1671 = vst [vmem:[#allocation3 + $0xa8] sm:$0xf] %v1639
          %1672 = vst [vmem:[#allocation3 + $0xcc] sm:$0xf] %v1640
          %1673 = vst [vmem:[#allocation3 + $0xf0] sm:$0xf] %v1649
          %1674 = vst [vmem:[#allocation3 + $0x114] sm:$0xf] %v1650
          %1675 = vst [vmem:[#allocation3 + $0x138] sm:$0xf] %v1657
          %v1676 = vsel %vm688, %v450, %v1582
          %v1678 = vrot.slane %v1676, 3
          %v1679 = vsel %vm688, %v458, %v1583
          %v1681 = vrot.slane %v1679, 3
          %v1682 = vshrl.u32 %v1586, 16
          %v1684 = vrot.slane %v1682, 7
          %v1685 = vrot.slane %v1684, 1
          %v1686 = vshll.u32 %v1589, 16
          %v1688 = vsel %vm739, %v1685, %v1686
          %v1689 = vshrl.u32 %v1589, 16
          %v1691 = vrot.slane %v1689, 7
          %v1692 = vrot.slane %v1691, 1
          %v1693 = vshll.u32 %v1592, 16
          %v1695 = vsel %vm739, %v1692, %v1693
          %v1696 = vshrl.u32 %v1592, 16
          %v1698 = vrot.slane %v1696, 7
          %v1699 = vrot.slane %v1698, 1
          %v1701 = vshll.u32 %v1678, 16
          %v1703 = vsel %vm739, %v1699, %v1701
          %v1704 = vshrl.u32 %v1595, 16
          %v1706 = vrot.slane %v1704, 7
          %v1707 = vrot.slane %v1706, 1
          %v1708 = vshll.u32 %v1598, 16
          %v1710 = vsel %vm739, %v1707, %v1708
          %v1711 = vshrl.u32 %v1598, 16
          %v1713 = vrot.slane %v1711, 7
          %v1714 = vrot.slane %v1713, 1
          %v1715 = vshll.u32 %v1601, 16
          %v1717 = vsel %vm739, %v1714, %v1715
          %v1718 = vshrl.u32 %v1601, 16
          %v1720 = vrot.slane %v1718, 7
          %v1721 = vrot.slane %v1720, 1
          %v1723 = vshll.u32 %v1681, 16
          %v1725 = vsel %vm739, %v1721, %v1723
          %1726 = vst [vmem:[#allocation1] ss:$4 sm:$0xff] %v790
          %s1727 = scalar_lea.vmem [#allocation1], 1
          %1728 = vst [vmem:[%s1727] ss:$4 sm:$0xff] %v797
          %s1729 = scalar_lea.vmem [#allocation1], 2
          %1730 = vst [vmem:[%s1729] ss:$4 sm:$0xff] %v805
          %s1731 = scalar_lea.vmem [#allocation1], 3
          %1732 = vst [vmem:[%s1731] ss:$4 sm:$0xff] %v812
          %s1733 = scalar_lea.vmem [#allocation1], 32
          %1734 = vst [vmem:[%s1733] ss:$4 sm:$0xff] %v819
          %s1735 = scalar_lea.vmem [#allocation1], 33
          %1736 = vst [vmem:[%s1735] ss:$4 sm:$0xff] %v827
          %s1737 = scalar_lea.vmem [#allocation1], 34
          %1738 = vst [vmem:[%s1737] ss:$4 sm:$0xff] %v834
          %s1739 = scalar_lea.vmem [#allocation1], 35
          %1740 = vst [vmem:[%s1739] ss:$4 sm:$0xff] %v841
          %v1741 = vld [vmem:[#allocation1] sm:$0xff]
          %v1742 = vld [vmem:[#allocation1 + $0x20] sm:$0xff]
          %1743 = vst [vmem:[#allocation1] ss:$4 sm:$0xff] %v849
          %1744 = vst [vmem:[%s1727] ss:$4 sm:$0xff] %v856
          %1745 = vst [vmem:[%s1729] ss:$4 sm:$0xff] %v863
          %1746 = vst [vmem:[%s1731] ss:$4 sm:$0xff] %v871
          %1747 = vst [vmem:[%s1733] ss:$4 sm:$0xff] %v1342
          %1748 = vst [vmem:[%s1735] ss:$4 sm:$0xff] %v1349
          %1749 = vst [vmem:[%s1737] ss:$4 sm:$0xff] %v1357
          %1751 = vst [vmem:[%s1739] ss:$4 sm:$0xff] %v1688
          %v1752 = vld [vmem:[#allocation1] sm:$0xff]
          %v1753 = vld [vmem:[#allocation1 + $0x20] sm:$0xff]
          %1755 = vst [vmem:[#allocation1] ss:$4 sm:$0xff] %v1695
          %1757 = vst [vmem:[%s1727] ss:$4 sm:$0xff] %v1703
          %1758 = vst [vmem:[%s1729] ss:$4 sm:$0xff] %v922
          %1759 = vst [vmem:[%s1731] ss:$4 sm:$0xff] %v929
          %1760 = vst [vmem:[%s1733] ss:$4 sm:$0xff] %v937
          %1761 = vst [vmem:[%s1735] ss:$4 sm:$0xff] %v944
          %1762 = vst [vmem:[%s1737] ss:$4 sm:$0xff] %v951
          %1763 = vst [vmem:[%s1739] ss:$4 sm:$0xff] %v959
          %v1764 = vld [vmem:[#allocation1] sm:$0xff]
          %v1765 = vld [vmem:[#allocation1 + $0x20] sm:$0xff]
          %1766 = vst [vmem:[#allocation1] ss:$4 sm:$0xff] %v966
          %1767 = vst [vmem:[%s1727] ss:$4 sm:$0xff] %v973
          %1768 = vst [vmem:[%s1729] ss:$4 sm:$0xff] %v981
          %1769 = vst [vmem:[%s1731] ss:$4 sm:$0xff] %v988
          %1770 = vst [vmem:[%s1733] ss:$4 sm:$0xff] %v995
          %1771 = vst [vmem:[%s1735] ss:$4 sm:$0xff] %v1003
          %1772 = vst [vmem:[%s1737] ss:$4 sm:$0xff] %v1364
          %1773 = vst [vmem:[%s1739] ss:$4 sm:$0xff] %v1371
          %v1774 = vld [vmem:[#allocation1] sm:$0xff]
          %v1775 = vld [vmem:[#allocation1 + $0x20] sm:$0xff]
          %1776 = vst [vmem:[#allocation1] ss:$4 sm:$0xff] %v1379
          %1778 = vst [vmem:[%s1727] ss:$4 sm:$0xff] %v1710
          %1780 = vst [vmem:[%s1729] ss:$4 sm:$0xff] %v1717
          %1782 = vst [vmem:[%s1731] ss:$4 sm:$0xff] %v1725
          %v1783 = vld [vmem:[#allocation1] sm:$0xff]
          %1793 = vst [vmem:[#allocation3 + $0x1c] sm:$0xf] %v1741
          %1794 = vst [vmem:[#allocation3 + $0x40] sm:$0xf] %v1742
          %1795 = vst [vmem:[#allocation3 + $0x64] sm:$0xf] %v1752
          %1796 = vst [vmem:[#allocation3 + $0x88] sm:$0xf] %v1753
          %1797 = vst [vmem:[#allocation3 + $0xac] sm:$0xf] %v1764
          %1798 = vst [vmem:[#allocation3 + $0xd0] sm:$0xf] %v1765
          %1799 = vst [vmem:[#allocation3 + $0xf4] sm:$0xf] %v1774
          %1800 = vst [vmem:[#allocation3 + $0x118] sm:$0xf] %v1775
          %1801 = vst [vmem:[#allocation3 + $0x13c] sm:$0xf] %v1783
          %1802 = vst [vmem:[#allocation1] sm:$0xff] %v445
          %s1803 = scalar_lea.vmem [#allocation1], 1
          %v1804 = vld [vmem:[%s1803] ss:$4 sm:$0xff]
          %s1805 = scalar_lea.vmem [#allocation1], 2
          %v1806 = vld [vmem:[%s1805] ss:$4 sm:$0xff]
          %s1807 = scalar_lea.vmem [#allocation1], 3
          %v1808 = vld [vmem:[%s1807] ss:$4 sm:$0xff]
          %1809 = vst [vmem:[#allocation1 + $0x20] sm:$0xff] %v446
          %s1810 = scalar_lea.vmem [#allocation1], 33
          %v1811 = vld [vmem:[%s1810] ss:$4 sm:$0xff]
          %s1812 = scalar_lea.vmem [#allocation1], 34
          %v1813 = vld [vmem:[%s1812] ss:$4 sm:$0xff]
          %s1814 = scalar_lea.vmem [#allocation1], 35
          %v1815 = vld [vmem:[%s1814] ss:$4 sm:$0xff]
          %1816 = vst [vmem:[#allocation1] sm:$0xff] %v447
          %v1817 = vld [vmem:[%s1803] ss:$4 sm:$0xff]
          %v1818 = vld [vmem:[%s1805] ss:$4 sm:$0xff]
          %v1819 = vld [vmem:[%s1807] ss:$4 sm:$0xff]
          %1820 = vst [vmem:[#allocation1 + $0x20] sm:$0xff] %v448
          %v1821 = vld [vmem:[%s1810] ss:$4 sm:$0xff]
          %v1822 = vld [vmem:[%s1812] ss:$4 sm:$0xff]
          %v1823 = vld [vmem:[%s1814] ss:$4 sm:$0xff]
          %1824 = vst [vmem:[#allocation1] sm:$0xff] %v449
          %v1825 = vld [vmem:[%s1803] ss:$4 sm:$0xff]
          %v1826 = vld [vmem:[%s1805] ss:$4 sm:$0xff]
          %v1827 = vld [vmem:[%s1807] ss:$4 sm:$0xff]
          %1828 = vst [vmem:[#allocation1 + $0x20] sm:$0xff] %v450
          %v1829 = vld [vmem:[%s1810] ss:$4 sm:$0xff]
          %v1830 = vld [vmem:[%s1812] ss:$4 sm:$0xff]
          %v1831 = vld [vmem:[%s1814] ss:$4 sm:$0xff]
          %1832 = vst [vmem:[#allocation1] sm:$0xff] %v453
          %v1833 = vld [vmem:[%s1803] ss:$4 sm:$0xff]
          %v1834 = vld [vmem:[%s1805] ss:$4 sm:$0xff]
          %v1835 = vld [vmem:[%s1807] ss:$4 sm:$0xff]
          %1836 = vst [vmem:[#allocation1 + $0x20] sm:$0xff] %v454
          %v1837 = vld [vmem:[%s1810] ss:$4 sm:$0xff]
          %v1838 = vld [vmem:[%s1812] ss:$4 sm:$0xff]
          %v1839 = vld [vmem:[%s1814] ss:$4 sm:$0xff]
          %1840 = vst [vmem:[#allocation1] sm:$0xff] %v455
          %v1841 = vld [vmem:[%s1803] ss:$4 sm:$0xff]
          %v1842 = vld [vmem:[%s1805] ss:$4 sm:$0xff]
          %v1843 = vld [vmem:[%s1807] ss:$4 sm:$0xff]
          %1844 = vst [vmem:[#allocation1 + $0x20] sm:$0xff] %v456
          %v1845 = vld [vmem:[%s1810] ss:$4 sm:$0xff]
          %v1846 = vld [vmem:[%s1812] ss:$4 sm:$0xff]
          %v1847 = vld [vmem:[%s1814] ss:$4 sm:$0xff]
          %1848 = vst [vmem:[#allocation1] sm:$0xff] %v457
          %v1849 = vld [vmem:[%s1803] ss:$4 sm:$0xff]
          %v1850 = vld [vmem:[%s1805] ss:$4 sm:$0xff]
          %v1851 = vld [vmem:[%s1807] ss:$4 sm:$0xff]
          %1852 = vst [vmem:[#allocation1 + $0x20] sm:$0xff] %v458
          %v1853 = vld [vmem:[%s1810] ss:$4 sm:$0xff]
          %v1854 = vld [vmem:[%s1812] ss:$4 sm:$0xff]
          %v1855 = vld [vmem:[%s1814] ss:$4 sm:$0xff]
          %1856 = vst [vmem:[#allocation1] ss:$4 sm:$0xff] %v1804
          %s1857 = scalar_lea.vmem [#allocation1], 1
          %1858 = vst [vmem:[%s1857] ss:$4 sm:$0xff] %v1806
          %s1859 = scalar_lea.vmem [#allocation1], 2
          %1860 = vst [vmem:[%s1859] ss:$4 sm:$0xff] %v1808
          %s1861 = scalar_lea.vmem [#allocation1], 3
          %1862 = vst [vmem:[%s1861] ss:$4 sm:$0xff] %v1811
          %s1863 = scalar_lea.vmem [#allocation1], 32
          %1864 = vst [vmem:[%s1863] ss:$4 sm:$0xff] %v1813
          %s1865 = scalar_lea.vmem [#allocation1], 33
          %1866 = vst [vmem:[%s1865] ss:$4 sm:$0xff] %v1815
          %s1867 = scalar_lea.vmem [#allocation1], 34
          %1868 = vst [vmem:[%s1867] ss:$4 sm:$0xff] %v1817
          %s1869 = scalar_lea.vmem [#allocation1], 35
          %1870 = vst [vmem:[%s1869] ss:$4 sm:$0xff] %v1818
          %v1871 = vld [vmem:[#allocation1] sm:$0xff]
          %v1872 = vld [vmem:[#allocation1 + $0x20] sm:$0xff]
          %1873 = vst [vmem:[#allocation1] ss:$4 sm:$0xff] %v1819
          %1874 = vst [vmem:[%s1857] ss:$4 sm:$0xff] %v1821
          %1875 = vst [vmem:[%s1859] ss:$4 sm:$0xff] %v1822
          %1876 = vst [vmem:[%s1861] ss:$4 sm:$0xff] %v1823
          %1877 = vst [vmem:[%s1863] ss:$4 sm:$0xff] %v1825
          %1878 = vst [vmem:[%s1865] ss:$4 sm:$0xff] %v1826
          %1879 = vst [vmem:[%s1867] ss:$4 sm:$0xff] %v1827
          %1880 = vst [vmem:[%s1869] ss:$4 sm:$0xff] %v1829
          %v1881 = vld [vmem:[#allocation1] sm:$0xff]
          %v1882 = vld [vmem:[#allocation1 + $0x20] sm:$0xff]
          %1883 = vst [vmem:[#allocation1] ss:$4 sm:$0xff] %v1830
          %1884 = vst [vmem:[%s1857] ss:$4 sm:$0xff] %v1831
          %1885 = vst [vmem:[%s1859] ss:$4 sm:$0xff] %v1833
          %1886 = vst [vmem:[%s1861] ss:$4 sm:$0xff] %v1834
          %1887 = vst [vmem:[%s1863] ss:$4 sm:$0xff] %v1835
          %1888 = vst [vmem:[%s1865] ss:$4 sm:$0xff] %v1837
          %1889 = vst [vmem:[%s1867] ss:$4 sm:$0xff] %v1838
          %1890 = vst [vmem:[%s1869] ss:$4 sm:$0xff] %v1839
          %v1891 = vld [vmem:[#allocation1] sm:$0xff]
          %v1892 = vld [vmem:[#allocation1 + $0x20] sm:$0xff]
          %1893 = vst [vmem:[#allocation1] ss:$4 sm:$0xff] %v1841
          %1894 = vst [vmem:[%s1857] ss:$4 sm:$0xff] %v1842
          %1895 = vst [vmem:[%s1859] ss:$4 sm:$0xff] %v1843
          %1896 = vst [vmem:[%s1861] ss:$4 sm:$0xff] %v1845
          %1897 = vst [vmem:[%s1863] ss:$4 sm:$0xff] %v1846
          %1898 = vst [vmem:[%s1865] ss:$4 sm:$0xff] %v1847
          %1899 = vst [vmem:[%s1867] ss:$4 sm:$0xff] %v1849
          %1900 = vst [vmem:[%s1869] ss:$4 sm:$0xff] %v1850
          %v1901 = vld [vmem:[#allocation1] sm:$0xff]
          %v1902 = vld [vmem:[#allocation1 + $0x20] sm:$0xff]
          %1903 = vst [vmem:[#allocation1] ss:$4 sm:$0xff] %v1851
          %1904 = vst [vmem:[%s1857] ss:$4 sm:$0xff] %v1853
          %1905 = vst [vmem:[%s1859] ss:$4 sm:$0xff] %v1854
          %1906 = vst [vmem:[%s1861] ss:$4 sm:$0xff] %v1855
          %v1907 = vld [vmem:[#allocation1] sm:$0xff]
          %1917 = vst [vmem:[#allocation3 + $0x20] sm:$0xf] %v1871
          %1918 = vst [vmem:[#allocation3 + $0x44] sm:$0xf] %v1872
          %1919 = vst [vmem:[#allocation3 + $0x68] sm:$0xf] %v1881
          %1920 = vst [vmem:[#allocation3 + $0x8c] sm:$0xf] %v1882
          %1921 = vst [vmem:[#allocation3 + $0xb0] sm:$0xf] %v1891
          %1922 = vst [vmem:[#allocation3 + $0xd4] sm:$0xf] %v1892
          %1923 = vst [vmem:[#allocation3 + $0xf8] sm:$0xf] %v1901
          %1924 = vst [vmem:[#allocation3 + $0x11c] sm:$0xf] %v1902
          %1925 = vst [vmem:[#allocation3 + $0x140] sm:$0xf] %v1907
          %v1926 = vld [vmem:[#allocation3] sm:$0xff]
          %v1927 = vld [vmem:[#allocation3 + $0x8] sm:$0xff]
          %v1928 = vld [vmem:[#allocation3 + $0x10] sm:$0xff]
          %v1929 = vld [vmem:[#allocation3 + $0x18] sm:$0xff]
          %v1930 = vld [vmem:[#allocation3 + $0x20] sm:$0xf]
          %v1931 = vld [vmem:[#allocation3 + $0x24] sm:$0xff]
          %v1932 = vld [vmem:[#allocation3 + $0x2c] sm:$0xff]
          %v1933 = vld [vmem:[#allocation3 + $0x34] sm:$0xff]
          %v1934 = vld [vmem:[#allocation3 + $0x3c] sm:$0xff]
          %v1935 = vld [vmem:[#allocation3 + $0x44] sm:$0xf]
          %v1936 = vld [vmem:[#allocation3 + $0x48] sm:$0xff]
          %v1937 = vld [vmem:[#allocation3 + $0x50] sm:$0xff]
          %v1938 = vld [vmem:[#allocation3 + $0x58] sm:$0xff]
          %v1939 = vld [vmem:[#allocation3 + $0x60] sm:$0xff]
          %v1940 = vld [vmem:[#allocation3 + $0x68] sm:$0xf]
          %v1941 = vld [vmem:[#allocation3 + $0x6c] sm:$0xff]
          %v1942 = vld [vmem:[#allocation3 + $0x74] sm:$0xff]
          %v1943 = vld [vmem:[#allocation3 + $0x7c] sm:$0xff]
          %v1944 = vld [vmem:[#allocation3 + $0x84] sm:$0xff]
          %v1945 = vld [vmem:[#allocation3 + $0x8c] sm:$0xf]
          %v1946 = vld [vmem:[#allocation3 + $0x90] sm:$0xff]
          %v1947 = vld [vmem:[#allocation3 + $0x98] sm:$0xff]
          %v1948 = vld [vmem:[#allocation3 + $0xa0] sm:$0xff]
          %v1949 = vld [vmem:[#allocation3 + $0xa8] sm:$0xff]
          %v1950 = vld [vmem:[#allocation3 + $0xb0] sm:$0xf]
          %v1951 = vld [vmem:[#allocation3 + $0xb4] sm:$0xff]
          %v1952 = vld [vmem:[#allocation3 + $0xbc] sm:$0xff]
          %v1953 = vld [vmem:[#allocation3 + $0xc4] sm:$0xff]
          %v1954 = vld [vmem:[#allocation3 + $0xcc] sm:$0xff]
          %v1955 = vld [vmem:[#allocation3 + $0xd4] sm:$0xf]
          %v1956 = vld [vmem:[#allocation3 + $0xd8] sm:$0xff]
          %v1957 = vld [vmem:[#allocation3 + $0xe0] sm:$0xff]
          %v1958 = vld [vmem:[#allocation3 + $0xe8] sm:$0xff]
          %v1959 = vld [vmem:[#allocation3 + $0xf0] sm:$0xff]
          %v1960 = vld [vmem:[#allocation3 + $0xf8] sm:$0xf]
          %v1961 = vld [vmem:[#allocation3 + $0xfc] sm:$0xff]
          %v1962 = vld [vmem:[#allocation3 + $0x104] sm:$0xff]
          %v1963 = vld [vmem:[#allocation3 + $0x10c] sm:$0xff]
          %v1964 = vld [vmem:[#allocation3 + $0x114] sm:$0xff]
          %v1965 = vld [vmem:[#allocation3 + $0x11c] sm:$0xf]
          %v1966 = vld [vmem:[#allocation3 + $0x120] sm:$0xff]
          %v1967 = vld [vmem:[#allocation3 + $0x128] sm:$0xff]
          %v1968 = vld [vmem:[#allocation3 + $0x130] sm:$0xff]
          %v1969 = vld [vmem:[#allocation3 + $0x138] sm:$0xff]
          %v1970 = vld [vmem:[#allocation3 + $0x140] sm:$0xf]
          %v1971 = vld [vmem:[#allocation10] sm:$0xf]
          %v1972 = vld [vmem:[#allocation10 + $0x4] sm:$0xf]
          %v1973 = vld [vmem:[#allocation10 + $0x8] sm:$0xf]
          %v1974 = vld [vmem:[#allocation10 + $0xc] sm:$0xf]
          %v1975 = vld [vmem:[#allocation10 + $0x10] sm:$0xf]
          %v1976 = vld [vmem:[#allocation10 + $0x14] sm:$0xf]
          %v1977 = vld [vmem:[#allocation10 + $0x18] sm:$0xf]
          %v1978 = vld [vmem:[#allocation10 + $0x1c] sm:$0xf]
          %v1979 = vld [vmem:[#allocation10 + $0x20] sm:$0xf]
          %v1980 = vld [vmem:[#allocation10 + $0x24] sm:$0xf]
          %v1981 = vld [vmem:[#allocation10 + $0x28] sm:$0xf]
          %v1982 = vld [vmem:[#allocation10 + $0x2c] sm:$0xf]
          %v1983 = vld [vmem:[#allocation10 + $0x30] sm:$0xf]
          %v1984 = vld [vmem:[#allocation10 + $0x34] sm:$0xf]
          %v1985 = vld [vmem:[#allocation10 + $0x38] sm:$0xf]
          %v1986 = vld [vmem:[#allocation10 + $0x3c] sm:$0xf]
          %v1987 = vld [vmem:[#allocation10 + $0x40] sm:$0xf]
          %v1988 = vld [vmem:[#allocation10 + $0x44] sm:$0xf]
          %v1989 = vld [vmem:[#allocation10 + $0x48] sm:$0xf]
          %v1990 = vld [vmem:[#allocation10 + $0x4c] sm:$0xf]
          %v1991 = vld [vmem:[#allocation10 + $0x50] sm:$0xf]
          %v1992 = vld [vmem:[#allocation10 + $0x54] sm:$0xf]
          %v1993 = vld [vmem:[#allocation10 + $0x58] sm:$0xf]
          %v1994 = vld [vmem:[#allocation10 + $0x5c] sm:$0xf]
          %v1995 = vld [vmem:[#allocation10 + $0x60] sm:$0xf]
          %v1996 = vld [vmem:[#allocation10 + $0x64] sm:$0xf]
          %v1997 = vld [vmem:[#allocation10 + $0x68] sm:$0xf]
          %v1998 = vld [vmem:[#allocation10 + $0x6c] sm:$0xf]
          %v1999 = vld [vmem:[#allocation10 + $0x70] sm:$0xf]
          %v2000 = vld [vmem:[#allocation10 + $0x74] sm:$0xf]
          %v2001 = vld [vmem:[#allocation10 + $0x78] sm:$0xf]
          %v2002 = vld [vmem:[#allocation10 + $0x7c] sm:$0xf]
          %v2003 = vld [vmem:[#allocation10 + $0x80] sm:$0xf]
          %v2004 = vld [vmem:[#allocation10 + $0x84] sm:$0xf]
          %v2005 = vld [vmem:[#allocation10 + $0x88] sm:$0xf]
          %v2006 = vld [vmem:[#allocation10 + $0x8c] sm:$0xf]
          %v2007 = vld [vmem:[#allocation10 + $0x90] sm:$0xf]
          %v2008 = vld [vmem:[#allocation10 + $0x94] sm:$0xf]
          %v2009 = vld [vmem:[#allocation10 + $0x98] sm:$0xf]
          %v2010 = vld [vmem:[#allocation10 + $0x9c] sm:$0xf]
          %v2011 = vld [vmem:[#allocation10 + $0xa0] sm:$0xf]
          %v2012 = vld [vmem:[#allocation10 + $0xa4] sm:$0xf]
          %v2013 = vld [vmem:[#allocation10 + $0xa8] sm:$0xf]
          %v2014 = vld [vmem:[#allocation10 + $0xac] sm:$0xf]
          %v2015 = vld [vmem:[#allocation10 + $0xb0] sm:$0xf]
          %v2016 = vld [vmem:[#allocation10 + $0xb4] sm:$0xf]
          %v2017 = vld [vmem:[#allocation10 + $0xb8] sm:$0xf]
          %v2018 = vld [vmem:[#allocation10 + $0xbc] sm:$0xf]
          %v2019 = vld [vmem:[#allocation10 + $0xc0] sm:$0xf]
          %v2020 = vld [vmem:[#allocation10 + $0xc4] sm:$0xf]
          %v2021 = vld [vmem:[#allocation10 + $0xc8] sm:$0xf]
          %v2022 = vld [vmem:[#allocation10 + $0xcc] sm:$0xf]
          %v2023 = vld [vmem:[#allocation10 + $0xd0] sm:$0xf]
          %v2024 = vld [vmem:[#allocation10 + $0xd4] sm:$0xf]
          %v2025 = vld [vmem:[#allocation10 + $0xd8] sm:$0xf]
          %v2026 = vld [vmem:[#allocation10 + $0xdc] sm:$0xf]
          %v2027 = vld [vmem:[#allocation10 + $0xe0] sm:$0xf]
          %v2028 = vld [vmem:[#allocation10 + $0xe4] sm:$0xf]
          %v2029 = vld [vmem:[#allocation10 + $0xe8] sm:$0xf]
          %v2030 = vld [vmem:[#allocation10 + $0xec] sm:$0xf]
          %v2031 = vld [vmem:[#allocation10 + $0xf0] sm:$0xf]
          %v2032 = vld [vmem:[#allocation10 + $0xf4] sm:$0xf]
          %v2033 = vld [vmem:[#allocation10 + $0xf8] sm:$0xf]
          %v2034 = vld [vmem:[#allocation10 + $0xfc] sm:$0xf]
          %v2035 = vld [vmem:[#allocation10 + $0x100] sm:$0xf]
          %v2036 = vld [vmem:[#allocation10 + $0x104] sm:$0xf]
          %v2037 = vld [vmem:[#allocation10 + $0x108] sm:$0xf]
          %v2038 = vld [vmem:[#allocation10 + $0x10c] sm:$0xf]
          %v2039 = vld [vmem:[#allocation10 + $0x110] sm:$0xf]
          %v2040 = vld [vmem:[#allocation10 + $0x114] sm:$0xf]
          %v2041 = vld [vmem:[#allocation10 + $0x118] sm:$0xf]
          %v2042 = vld [vmem:[#allocation10 + $0x11c] sm:$0xf]
          %v2043 = vld [vmem:[#allocation10 + $0x120] sm:$0xf]
          %v2044 = vld [vmem:[#allocation10 + $0x124] sm:$0xf]
          %v2045 = vld [vmem:[#allocation10 + $0x128] sm:$0xf]
          %v2046 = vld [vmem:[#allocation10 + $0x12c] sm:$0xf]
          %v2047 = vld [vmem:[#allocation10 + $0x130] sm:$0xf]
          %v2048 = vld [vmem:[#allocation10 + $0x134] sm:$0xf]
          %v2049 = vld [vmem:[#allocation10 + $0x138] sm:$0xf]
          %v2050 = vld [vmem:[#allocation10 + $0x13c] sm:$0xf]
          %v2051 = vld [vmem:[#allocation10 + $0x140] sm:$0xf]
          %v2052 = vld [vmem:[#allocation10 + $0x144] sm:$0xf]
          %v2053 = vld [vmem:[#allocation10 + $0x148] sm:$0xf]
          %v2054 = vld [vmem:[#allocation10 + $0x14c] sm:$0xf]
          %v2055 = vld [vmem:[#allocation10 + $0x150] sm:$0xf]
          %v2056 = vld [vmem:[#allocation10 + $0x154] sm:$0xf]
          %v2057 = vld [vmem:[#allocation10 + $0x158] sm:$0xf]
          %v2058 = vld [vmem:[#allocation10 + $0x15c] sm:$0xf]
          %v2059 = vld [vmem:[#allocation10 + $0x160] sm:$0xf]
          %v2060 = vld [vmem:[#allocation10 + $0x164] sm:$0xf]
          %v2061 = vld [vmem:[#allocation10 + $0x168] sm:$0xf]
          %v2062 = vld [vmem:[#allocation10 + $0x16c] sm:$0xf]
          %v2063 = vld [vmem:[#allocation10 + $0x170] sm:$0xf]
          %v2064 = vld [vmem:[#allocation10 + $0x174] sm:$0xf]
          %v2065 = vld [vmem:[#allocation10 + $0x178] sm:$0xf]
          %v2066 = vld [vmem:[#allocation10 + $0x17c] sm:$0xf]
          %v2067 = vld [vmem:[#allocation10 + $0x180] sm:$0xf]
          %v2068 = vld [vmem:[#allocation10 + $0x184] sm:$0xf]
          %v2069 = vld [vmem:[#allocation10 + $0x188] sm:$0xf]
          %v2070 = vld [vmem:[#allocation10 + $0x18c] sm:$0xf]
          %v2071 = vld [vmem:[#allocation10 + $0x190] sm:$0xf]
          %v2072 = vld [vmem:[#allocation10 + $0x194] sm:$0xf]
          %v2073 = vld [vmem:[#allocation10 + $0x198] sm:$0xf]
          %v2074 = vld [vmem:[#allocation10 + $0x19c] sm:$0xf]
          %v2075 = vld [vmem:[#allocation10 + $0x1a0] sm:$0xf]
          %v2076 = vld [vmem:[#allocation10 + $0x1a4] sm:$0xf]
          %v2077 = vld [vmem:[#allocation10 + $0x1a8] sm:$0xf]
          %v2078 = vld [vmem:[#allocation10 + $0x1ac] sm:$0xf]
          %v2079 = vld [vmem:[#allocation10 + $0x1b0] sm:$0xf]
          %v2080 = vld [vmem:[#allocation10 + $0x1b4] sm:$0xf]
          %v2081 = vld [vmem:[#allocation10 + $0x1b8] sm:$0xf]
          %v2082 = vld [vmem:[#allocation10 + $0x1bc] sm:$0xf]
          %v2083 = vld [vmem:[#allocation10 + $0x1c0] sm:$0xf]
          %v2084 = vld [vmem:[#allocation10 + $0x1c4] sm:$0xf]
          %v2085 = vld [vmem:[#allocation10 + $0x1c8] sm:$0xf]
          %v2086 = vld [vmem:[#allocation10 + $0x1cc] sm:$0xf]
          %v2087 = vld [vmem:[#allocation10 + $0x1d0] sm:$0xf]
          %v2088 = vld [vmem:[#allocation10 + $0x1d4] sm:$0xf]
          %v2089 = vld [vmem:[#allocation10 + $0x1d8] sm:$0xf]
          %v2090 = vld [vmem:[#allocation10 + $0x1dc] sm:$0xf]
          %v2091 = vld [vmem:[#allocation10 + $0x1e0] sm:$0xf]
          %v2092 = vld [vmem:[#allocation10 + $0x1e4] sm:$0xf]
          %v2093 = vld [vmem:[#allocation10 + $0x1e8] sm:$0xf]
          %v2094 = vld [vmem:[#allocation10 + $0x1ec] sm:$0xf]
          %v2095 = vld [vmem:[#allocation10 + $0x1f0] sm:$0xf]
          %v2096 = vld [vmem:[#allocation10 + $0x1f4] sm:$0xf]
          %v2097 = vld [vmem:[#allocation10 + $0x1f8] sm:$0xf]
          %v2098 = vld [vmem:[#allocation10 + $0x1fc] sm:$0xf]
          %v2099 = vld [vmem:[#allocation10 + $0x200] sm:$0xf]
          %v2100 = vld [vmem:[#allocation10 + $0x204] sm:$0xf]
          %v2101 = vld [vmem:[#allocation10 + $0x208] sm:$0xf]
          %v2102 = vld [vmem:[#allocation10 + $0x20c] sm:$0xf]
          %v2103 = vld [vmem:[#allocation10 + $0x210] sm:$0xf]
          %v2104 = vld [vmem:[#allocation10 + $0x214] sm:$0xf]
          %v2105 = vld [vmem:[#allocation10 + $0x218] sm:$0xf]
          %v2106 = vld [vmem:[#allocation10 + $0x21c] sm:$0xf]
          %v2107 = vld [vmem:[#allocation10 + $0x220] sm:$0xf]
          %v2108 = vld [vmem:[#allocation10 + $0x224] sm:$0xf]
          %v2109 = vld [vmem:[#allocation10 + $0x228] sm:$0xf]
          %v2110 = vld [vmem:[#allocation10 + $0x22c] sm:$0xf]
          %v2111 = vld [vmem:[#allocation10 + $0x230] sm:$0xf]
          %v2112 = vld [vmem:[#allocation10 + $0x234] sm:$0xf]
          %v2113 = vld [vmem:[#allocation10 + $0x238] sm:$0xf]
          %v2114 = vld [vmem:[#allocation10 + $0x23c] sm:$0xf]
          %v2160 = vunpack.c.l.b16 %v1926
          %v2161 = vunpack.c.h.b16 %v1926
          %v2162 = vunpack.c.l.b16 %v1927
          %v2163 = vunpack.c.h.b16 %v1927
          %v2164 = vunpack.c.l.b16 %v1928
          %v2165 = vunpack.c.h.b16 %v1928
          %v2166 = vunpack.c.l.b16 %v1929
          %v2167 = vunpack.c.h.b16 %v1929
          %v2168 = vunpack.c.l.b16 %v1930
          %v2169 = vunpack.c.l.b16 %v1931
          %v2170 = vunpack.c.h.b16 %v1931
          %v2171 = vunpack.c.l.b16 %v1932
          %v2172 = vunpack.c.h.b16 %v1932
          %v2173 = vunpack.c.l.b16 %v1933
          %v2174 = vunpack.c.h.b16 %v1933
          %v2175 = vunpack.c.l.b16 %v1934
          %v2176 = vunpack.c.h.b16 %v1934
          %v2177 = vunpack.c.l.b16 %v1935
          %v2178 = vunpack.c.l.b16 %v1936
          %v2179 = vunpack.c.h.b16 %v1936
          %v2180 = vunpack.c.l.b16 %v1937
          %v2181 = vunpack.c.h.b16 %v1937
          %v2182 = vunpack.c.l.b16 %v1938
          %v2183 = vunpack.c.h.b16 %v1938
          %v2184 = vunpack.c.l.b16 %v1939
          %v2185 = vunpack.c.h.b16 %v1939
          %v2186 = vunpack.c.l.b16 %v1940
          %v2187 = vunpack.c.l.b16 %v1941
          %v2188 = vunpack.c.h.b16 %v1941
          %v2189 = vunpack.c.l.b16 %v1942
          %v2190 = vunpack.c.h.b16 %v1942
          %v2191 = vunpack.c.l.b16 %v1943
          %v2192 = vunpack.c.h.b16 %v1943
          %v2193 = vunpack.c.l.b16 %v1944
          %v2194 = vunpack.c.h.b16 %v1944
          %v2195 = vunpack.c.l.b16 %v1945
          %v2196 = vunpack.c.l.b16 %v1946
          %v2197 = vunpack.c.h.b16 %v1946
          %v2198 = vunpack.c.l.b16 %v1947
          %v2199 = vunpack.c.h.b16 %v1947
          %v2200 = vunpack.c.l.b16 %v1948
          %v2201 = vunpack.c.h.b16 %v1948
          %v2202 = vunpack.c.l.b16 %v1949
          %v2203 = vunpack.c.h.b16 %v1949
          %v2204 = vunpack.c.l.b16 %v1950
          %v2205 = vunpack.c.l.b16 %v1951
          %v2206 = vunpack.c.h.b16 %v1951
          %v2207 = vunpack.c.l.b16 %v1952
          %v2208 = vunpack.c.h.b16 %v1952
          %v2209 = vunpack.c.l.b16 %v1953
          %v2210 = vunpack.c.h.b16 %v1953
          %v2211 = vunpack.c.l.b16 %v1954
          %v2212 = vunpack.c.h.b16 %v1954
          %v2213 = vunpack.c.l.b16 %v1955
          %v2214 = vunpack.c.l.b16 %v1956
          %v2215 = vunpack.c.h.b16 %v1956
          %v2216 = vunpack.c.l.b16 %v1957
          %v2217 = vunpack.c.h.b16 %v1957
          %v2218 = vunpack.c.l.b16 %v1958
          %v2219 = vunpack.c.h.b16 %v1958
          %v2220 = vunpack.c.l.b16 %v1959
          %v2221 = vunpack.c.h.b16 %v1959
          %v2222 = vunpack.c.l.b16 %v1960
          %v2223 = vunpack.c.l.b16 %v1961
          %v2224 = vunpack.c.h.b16 %v1961
          %v2225 = vunpack.c.l.b16 %v1962
          %v2226 = vunpack.c.h.b16 %v1962
          %v2227 = vunpack.c.l.b16 %v1963
          %v2228 = vunpack.c.h.b16 %v1963
          %v2229 = vunpack.c.l.b16 %v1964
          %v2230 = vunpack.c.h.b16 %v1964
          %v2231 = vunpack.c.l.b16 %v1965
          %v2232 = vunpack.c.l.b16 %v1966
          %v2233 = vunpack.c.h.b16 %v1966
          %v2234 = vunpack.c.l.b16 %v1967
          %v2235 = vunpack.c.h.b16 %v1967
          %v2236 = vunpack.c.l.b16 %v1968
          %v2237 = vunpack.c.h.b16 %v1968
          %v2238 = vunpack.c.l.b16 %v1969
          %v2239 = vunpack.c.h.b16 %v1969
          %v2240 = vunpack.c.l.b16 %v1970
          %v2241 = vpack.c.b16 %v2169, %v2160
          %v2242 = vpack.c.b16 %v2170, %v2161
          %v2243 = vpack.c.b16 %v2171, %v2162
          %v2244 = vpack.c.b16 %v2172, %v2163
          %v2245 = vpack.c.b16 %v2173, %v2164
          %v2246 = vpack.c.b16 %v2174, %v2165
          %v2247 = vpack.c.b16 %v2175, %v2166
          %v2248 = vpack.c.b16 %v2176, %v2167
          %v2249 = vpack.c.b16 %v2177, %v2168
          %v2250 = vpack.c.b16 %v2187, %v2178
          %v2251 = vpack.c.b16 %v2188, %v2179
          %v2252 = vpack.c.b16 %v2189, %v2180
          %v2253 = vpack.c.b16 %v2190, %v2181
          %v2254 = vpack.c.b16 %v2191, %v2182
          %v2255 = vpack.c.b16 %v2192, %v2183
          %v2256 = vpack.c.b16 %v2193, %v2184
          %v2257 = vpack.c.b16 %v2194, %v2185
          %v2258 = vpack.c.b16 %v2195, %v2186
          %v2259 = vpack.c.b16 %v2205, %v2196
          %v2260 = vpack.c.b16 %v2206, %v2197
          %v2261 = vpack.c.b16 %v2207, %v2198
          %v2262 = vpack.c.b16 %v2208, %v2199
          %v2263 = vpack.c.b16 %v2209, %v2200
          %v2264 = vpack.c.b16 %v2210, %v2201
          %v2265 = vpack.c.b16 %v2211, %v2202
          %v2266 = vpack.c.b16 %v2212, %v2203
          %v2267 = vpack.c.b16 %v2213, %v2204
          %v2268 = vpack.c.b16 %v2223, %v2214
          %v2269 = vpack.c.b16 %v2224, %v2215
          %v2270 = vpack.c.b16 %v2225, %v2216
          %v2271 = vpack.c.b16 %v2226, %v2217
          %v2272 = vpack.c.b16 %v2227, %v2218
          %v2273 = vpack.c.b16 %v2228, %v2219
          %v2274 = vpack.c.b16 %v2229, %v2220
          %v2275 = vpack.c.b16 %v2230, %v2221
          %v2276 = vpack.c.b16 %v2231, %v2222
          %v2277 = vpack.c.b16 %v2232, %v2232
          %v2278 = vpack.c.b16 %v2233, %v2233
          %v2279 = vpack.c.b16 %v2234, %v2234
          %v2280 = vpack.c.b16 %v2235, %v2235
          %v2281 = vpack.c.b16 %v2236, %v2236
          %v2282 = vpack.c.b16 %v2237, %v2237
          %v2283 = vpack.c.b16 %v2238, %v2238
          %v2284 = vpack.c.b16 %v2239, %v2239
          %v2285 = vpack.c.b16 %v2240, %v2240
          %v2475 = vunpack.c.l.b16 %v1971
          %v2476 = vunpack.c.l.b16 %v1972
          %v2477 = vunpack.c.l.b16 %v1973
          %v2478 = vunpack.c.l.b16 %v1974
          %v2479 = vunpack.c.l.b16 %v1975
          %v2480 = vunpack.c.l.b16 %v1976
          %v2481 = vunpack.c.l.b16 %v1977
          %v2482 = vunpack.c.l.b16 %v1978
          %v2483 = vunpack.c.l.b16 %v1979
          %v2484 = vunpack.c.l.b16 %v1980
          %v2485 = vunpack.c.l.b16 %v1981
          %v2486 = vunpack.c.l.b16 %v1982
          %v2487 = vunpack.c.l.b16 %v1983
          %v2488 = vunpack.c.l.b16 %v1984
          %v2489 = vunpack.c.l.b16 %v1985
          %v2490 = vunpack.c.l.b16 %v1986
          %v2491 = vunpack.c.l.b16 %v1987
          %v2492 = vunpack.c.l.b16 %v1988
          %v2493 = vunpack.c.l.b16 %v1989
          %v2494 = vunpack.c.l.b16 %v1990
          %v2495 = vunpack.c.l.b16 %v1991
          %v2496 = vunpack.c.l.b16 %v1992
          %v2497 = vunpack.c.l.b16 %v1993
          %v2498 = vunpack.c.l.b16 %v1994
          %v2499 = vunpack.c.l.b16 %v1995
          %v2500 = vunpack.c.l.b16 %v1996
          %v2501 = vunpack.c.l.b16 %v1997
          %v2502 = vunpack.c.l.b16 %v1998
          %v2503 = vunpack.c.l.b16 %v1999
          %v2504 = vunpack.c.l.b16 %v2000
          %v2505 = vunpack.c.l.b16 %v2001
          %v2506 = vunpack.c.l.b16 %v2002
          %v2507 = vunpack.c.l.b16 %v2003
          %v2508 = vunpack.c.l.b16 %v2004
          %v2509 = vunpack.c.l.b16 %v2005
          %v2510 = vunpack.c.l.b16 %v2006
          %v2511 = vunpack.c.l.b16 %v2007
          %v2512 = vunpack.c.l.b16 %v2008
          %v2513 = vunpack.c.l.b16 %v2009
          %v2514 = vunpack.c.l.b16 %v2010
          %v2515 = vunpack.c.l.b16 %v2011
          %v2516 = vunpack.c.l.b16 %v2012
          %v2517 = vunpack.c.l.b16 %v2013
          %v2518 = vunpack.c.l.b16 %v2014
          %v2519 = vunpack.c.l.b16 %v2015
          %v2520 = vunpack.c.l.b16 %v2016
          %v2521 = vunpack.c.l.b16 %v2017
          %v2522 = vunpack.c.l.b16 %v2018
          %v2523 = vunpack.c.l.b16 %v2019
          %v2524 = vunpack.c.l.b16 %v2020
          %v2525 = vunpack.c.l.b16 %v2021
          %v2526 = vunpack.c.l.b16 %v2022
          %v2527 = vunpack.c.l.b16 %v2023
          %v2528 = vunpack.c.l.b16 %v2024
          %v2529 = vunpack.c.l.b16 %v2025
          %v2530 = vunpack.c.l.b16 %v2026
          %v2531 = vunpack.c.l.b16 %v2027
          %v2532 = vunpack.c.l.b16 %v2028
          %v2533 = vunpack.c.l.b16 %v2029
          %v2534 = vunpack.c.l.b16 %v2030
          %v2535 = vunpack.c.l.b16 %v2031
          %v2536 = vunpack.c.l.b16 %v2032
          %v2537 = vunpack.c.l.b16 %v2033
          %v2538 = vunpack.c.l.b16 %v2034
          %v2539 = vunpack.c.l.b16 %v2035
          %v2540 = vunpack.c.l.b16 %v2036
          %v2541 = vunpack.c.l.b16 %v2037
          %v2542 = vunpack.c.l.b16 %v2038
          %v2543 = vunpack.c.l.b16 %v2039
          %v2544 = vunpack.c.l.b16 %v2040
          %v2545 = vunpack.c.l.b16 %v2041
          %v2546 = vunpack.c.l.b16 %v2042
          %v2547 = vunpack.c.l.b16 %v2043
          %v2548 = vunpack.c.l.b16 %v2044
          %v2549 = vunpack.c.l.b16 %v2045
          %v2550 = vunpack.c.l.b16 %v2046
          %v2551 = vunpack.c.l.b16 %v2047
          %v2552 = vunpack.c.l.b16 %v2048
          %v2553 = vunpack.c.l.b16 %v2049
          %v2554 = vunpack.c.l.b16 %v2050
          %v2555 = vunpack.c.l.b16 %v2051
          %v2556 = vunpack.c.l.b16 %v2052
          %v2557 = vunpack.c.l.b16 %v2053
          %v2558 = vunpack.c.l.b16 %v2054
          %v2559 = vunpack.c.l.b16 %v2055
          %v2560 = vunpack.c.l.b16 %v2056
          %v2561 = vunpack.c.l.b16 %v2057
          %v2562 = vunpack.c.l.b16 %v2058
          %v2563 = vunpack.c.l.b16 %v2059
          %v2564 = vunpack.c.l.b16 %v2060
          %v2565 = vunpack.c.l.b16 %v2061
          %v2566 = vunpack.c.l.b16 %v2062
          %v2567 = vunpack.c.l.b16 %v2063
          %v2568 = vunpack.c.l.b16 %v2064
          %v2569 = vunpack.c.l.b16 %v2065
          %v2570 = vunpack.c.l.b16 %v2066
          %v2571 = vunpack.c.l.b16 %v2067
          %v2572 = vunpack.c.l.b16 %v2068
          %v2573 = vunpack.c.l.b16 %v2069
          %v2574 = vunpack.c.l.b16 %v2070
          %v2575 = vunpack.c.l.b16 %v2071
          %v2576 = vunpack.c.l.b16 %v2072
          %v2577 = vunpack.c.l.b16 %v2073
          %v2578 = vunpack.c.l.b16 %v2074
          %v2579 = vunpack.c.l.b16 %v2075
          %v2580 = vunpack.c.l.b16 %v2076
          %v2581 = vunpack.c.l.b16 %v2077
          %v2582 = vunpack.c.l.b16 %v2078
          %v2583 = vunpack.c.l.b16 %v2079
          %v2584 = vunpack.c.l.b16 %v2080
          %v2585 = vunpack.c.l.b16 %v2081
          %v2586 = vunpack.c.l.b16 %v2082
          %v2587 = vunpack.c.l.b16 %v2083
          %v2588 = vunpack.c.l.b16 %v2084
          %v2589 = vunpack.c.l.b16 %v2085
          %v2590 = vunpack.c.l.b16 %v2086
          %v2591 = vunpack.c.l.b16 %v2087
          %v2592 = vunpack.c.l.b16 %v2088
          %v2593 = vunpack.c.l.b16 %v2089
          %v2594 = vunpack.c.l.b16 %v2090
          %v2595 = vunpack.c.l.b16 %v2091
          %v2596 = vunpack.c.l.b16 %v2092
          %v2597 = vunpack.c.l.b16 %v2093
          %v2598 = vunpack.c.l.b16 %v2094
          %v2599 = vunpack.c.l.b16 %v2095
          %v2600 = vunpack.c.l.b16 %v2096
          %v2601 = vunpack.c.l.b16 %v2097
          %v2602 = vunpack.c.l.b16 %v2098
          %v2603 = vunpack.c.l.b16 %v2099
          %v2604 = vunpack.c.l.b16 %v2100
          %v2605 = vunpack.c.l.b16 %v2101
          %v2606 = vunpack.c.l.b16 %v2102
          %v2607 = vunpack.c.l.b16 %v2103
          %v2608 = vunpack.c.l.b16 %v2104
          %v2609 = vunpack.c.l.b16 %v2105
          %v2610 = vunpack.c.l.b16 %v2106
          %v2611 = vunpack.c.l.b16 %v2107
          %v2612 = vunpack.c.l.b16 %v2108
          %v2613 = vunpack.c.l.b16 %v2109
          %v2614 = vunpack.c.l.b16 %v2110
          %v2615 = vunpack.c.l.b16 %v2111
          %v2616 = vunpack.c.l.b16 %v2112
          %v2617 = vunpack.c.l.b16 %v2113
          %v2618 = vunpack.c.l.b16 %v2114
          %v2619 = vpack.c.b16 %v2476, %v2475
          %v2620 = vpack.c.b16 %v2478, %v2477
          %v2621 = vpack.c.b16 %v2480, %v2479
          %v2622 = vpack.c.b16 %v2482, %v2481
          %v2623 = vpack.c.b16 %v2484, %v2483
          %v2624 = vpack.c.b16 %v2486, %v2485
          %v2625 = vpack.c.b16 %v2488, %v2487
          %v2626 = vpack.c.b16 %v2490, %v2489
          %v2627 = vpack.c.b16 %v2492, %v2491
          %v2628 = vpack.c.b16 %v2494, %v2493
          %v2629 = vpack.c.b16 %v2496, %v2495
          %v2630 = vpack.c.b16 %v2498, %v2497
          %v2631 = vpack.c.b16 %v2500, %v2499
          %v2632 = vpack.c.b16 %v2502, %v2501
          %v2633 = vpack.c.b16 %v2504, %v2503
          %v2634 = vpack.c.b16 %v2506, %v2505
          %v2635 = vpack.c.b16 %v2508, %v2507
          %v2636 = vpack.c.b16 %v2510, %v2509
          %v2637 = vpack.c.b16 %v2512, %v2511
          %v2638 = vpack.c.b16 %v2514, %v2513
          %v2639 = vpack.c.b16 %v2516, %v2515
          %v2640 = vpack.c.b16 %v2518, %v2517
          %v2641 = vpack.c.b16 %v2520, %v2519
          %v2642 = vpack.c.b16 %v2522, %v2521
          %v2643 = vpack.c.b16 %v2524, %v2523
          %v2644 = vpack.c.b16 %v2526, %v2525
          %v2645 = vpack.c.b16 %v2528, %v2527
          %v2646 = vpack.c.b16 %v2530, %v2529
          %v2647 = vpack.c.b16 %v2532, %v2531
          %v2648 = vpack.c.b16 %v2534, %v2533
          %v2649 = vpack.c.b16 %v2536, %v2535
          %v2650 = vpack.c.b16 %v2538, %v2537
          %v2651 = vpack.c.b16 %v2540, %v2539
          %v2652 = vpack.c.b16 %v2542, %v2541
          %v2653 = vpack.c.b16 %v2544, %v2543
          %v2654 = vpack.c.b16 %v2546, %v2545
          %v2655 = vpack.c.b16 %v2548, %v2547
          %v2656 = vpack.c.b16 %v2550, %v2549
          %v2657 = vpack.c.b16 %v2552, %v2551
          %v2658 = vpack.c.b16 %v2554, %v2553
          %v2659 = vpack.c.b16 %v2556, %v2555
          %v2660 = vpack.c.b16 %v2558, %v2557
          %v2661 = vpack.c.b16 %v2560, %v2559
          %v2662 = vpack.c.b16 %v2562, %v2561
          %v2663 = vpack.c.b16 %v2564, %v2563
          %v2664 = vpack.c.b16 %v2566, %v2565
          %v2665 = vpack.c.b16 %v2568, %v2567
          %v2666 = vpack.c.b16 %v2570, %v2569
          %v2667 = vpack.c.b16 %v2572, %v2571
          %v2668 = vpack.c.b16 %v2574, %v2573
          %v2669 = vpack.c.b16 %v2576, %v2575
          %v2670 = vpack.c.b16 %v2578, %v2577
          %v2671 = vpack.c.b16 %v2580, %v2579
          %v2672 = vpack.c.b16 %v2582, %v2581
          %v2673 = vpack.c.b16 %v2584, %v2583
          %v2674 = vpack.c.b16 %v2586, %v2585
          %v2675 = vpack.c.b16 %v2588, %v2587
          %v2676 = vpack.c.b16 %v2590, %v2589
          %v2677 = vpack.c.b16 %v2592, %v2591
          %v2678 = vpack.c.b16 %v2594, %v2593
          %v2679 = vpack.c.b16 %v2596, %v2595
          %v2680 = vpack.c.b16 %v2598, %v2597
          %v2681 = vpack.c.b16 %v2600, %v2599
          %v2682 = vpack.c.b16 %v2602, %v2601
          %v2683 = vpack.c.b16 %v2604, %v2603
          %v2684 = vpack.c.b16 %v2606, %v2605
          %v2685 = vpack.c.b16 %v2608, %v2607
          %v2686 = vpack.c.b16 %v2610, %v2609
          %v2687 = vpack.c.b16 %v2612, %v2611
          %v2688 = vpack.c.b16 %v2614, %v2613
          %v2689 = vpack.c.b16 %v2616, %v2615
          %v2690 = vpack.c.b16 %v2618, %v2617
          %2763 = vmatpush.bf16.msra.mxu0 %v2626
          %2764 = vmatpush.bf16.msra.mxu0 %v2625
          %2765 = vmatpush.bf16.msra.mxu0 %v2624
          %2766 = vmatpush.bf16.msra.mxu0 %v2623
          %2767 = vmatpush.bf16.msra.mxu0 %v2622
          %2768 = vmatpush.bf16.msra.mxu0 %v2621
          %2769 = vmatpush.bf16.msra.mxu0 %v2620
          %2770 = vmatpush.bf16.msra.mxu0 %v2619
          %2771 = vmatmul.bf16.gmra.mxu0 %v2241
          %v2772 = vpop.f32.mrf.mxu0
          %v2773 = vadd.f32 0.0, %v2772
          %v2774 = vpop.f32.mrf.mxu0
          %v2775 = vadd.f32 0.0, %v2774
          %2776 = vmatmul.bf16.gmra.mxu0 %v2250
          %v2777 = vpop.f32.mrf.mxu0
          %v2778 = vadd.f32 0.0, %v2777
          %v2779 = vpop.f32.mrf.mxu0
          %v2780 = vadd.f32 0.0, %v2779
          %2781 = vmatmul.bf16.gmra.mxu0 %v2259
          %v2782 = vpop.f32.mrf.mxu0
          %v2783 = vadd.f32 0.0, %v2782
          %v2784 = vpop.f32.mrf.mxu0
          %v2785 = vadd.f32 0.0, %v2784
          %2786 = vmatmul.bf16.gmra.mxu0 %v2268
          %v2787 = vpop.f32.mrf.mxu0
          %v2788 = vadd.f32 0.0, %v2787
          %v2789 = vpop.f32.mrf.mxu0
          %v2790 = vadd.f32 0.0, %v2789
          %2791 = vmatmul.bf16.gmra.mxu0 %v2277
          %v2792 = vpop.f32.mrf.mxu0
          %v2793 = vadd.f32 0.0, %v2792
          %v2794 = vpop.f32.mrf.mxu0
          %2795 = vdwg.mxu0
          %2796 = vmatpush.bf16.msra.mxu0 %v2634
          %2797 = vmatpush.bf16.msra.mxu0 %v2633
          %2798 = vmatpush.bf16.msra.mxu0 %v2632
          %2799 = vmatpush.bf16.msra.mxu0 %v2631
          %2800 = vmatpush.bf16.msra.mxu0 %v2630
          %2801 = vmatpush.bf16.msra.mxu0 %v2629
          %2802 = vmatpush.bf16.msra.mxu0 %v2628
          %2803 = vmatpush.bf16.msra.mxu0 %v2627
          %2804 = vmatmul.bf16.gmra.mxu0 %v2242
          %v2805 = vpop.f32.mrf.mxu0
          %v2806 = vadd.f32 %v2773, %v2805
          %v2807 = vpop.f32.mrf.mxu0
          %v2808 = vadd.f32 %v2775, %v2807
          %2809 = vmatmul.bf16.gmra.mxu0 %v2251
          %v2810 = vpop.f32.mrf.mxu0
          %v2811 = vadd.f32 %v2778, %v2810
          %v2812 = vpop.f32.mrf.mxu0
          %v2813 = vadd.f32 %v2780, %v2812
          %2814 = vmatmul.bf16.gmra.mxu0 %v2260
          %v2815 = vpop.f32.mrf.mxu0
          %v2816 = vadd.f32 %v2783, %v2815
          %v2817 = vpop.f32.mrf.mxu0
          %v2818 = vadd.f32 %v2785, %v2817
          %2819 = vmatmul.bf16.gmra.mxu0 %v2269
          %v2820 = vpop.f32.mrf.mxu0
          %v2821 = vadd.f32 %v2788, %v2820
          %v2822 = vpop.f32.mrf.mxu0
          %v2823 = vadd.f32 %v2790, %v2822
          %2824 = vmatmul.bf16.gmra.mxu0 %v2278
          %v2825 = vpop.f32.mrf.mxu0
          %v2826 = vadd.f32 %v2793, %v2825
          %v2827 = vpop.f32.mrf.mxu0
          %2828 = vdwg.mxu0
          %2829 = vmatpush.bf16.msra.mxu0 %v2642
          %2830 = vmatpush.bf16.msra.mxu0 %v2641
          %2831 = vmatpush.bf16.msra.mxu0 %v2640
          %2832 = vmatpush.bf16.msra.mxu0 %v2639
          %2833 = vmatpush.bf16.msra.mxu0 %v2638
          %2834 = vmatpush.bf16.msra.mxu0 %v2637
          %2835 = vmatpush.bf16.msra.mxu0 %v2636
          %2836 = vmatpush.bf16.msra.mxu0 %v2635
          %2837 = vmatmul.bf16.gmra.mxu0 %v2243
          %v2838 = vpop.f32.mrf.mxu0
          %v2839 = vadd.f32 %v2806, %v2838
          %v2840 = vpop.f32.mrf.mxu0
          %v2841 = vadd.f32 %v2808, %v2840
          %2842 = vmatmul.bf16.gmra.mxu0 %v2252
          %v2843 = vpop.f32.mrf.mxu0
          %v2844 = vadd.f32 %v2811, %v2843
          %v2845 = vpop.f32.mrf.mxu0
          %v2846 = vadd.f32 %v2813, %v2845
          %2847 = vmatmul.bf16.gmra.mxu0 %v2261
          %v2848 = vpop.f32.mrf.mxu0
          %v2849 = vadd.f32 %v2816, %v2848
          %v2850 = vpop.f32.mrf.mxu0
          %v2851 = vadd.f32 %v2818, %v2850
          %2852 = vmatmul.bf16.gmra.mxu0 %v2270
          %v2853 = vpop.f32.mrf.mxu0
          %v2854 = vadd.f32 %v2821, %v2853
          %v2855 = vpop.f32.mrf.mxu0
          %v2856 = vadd.f32 %v2823, %v2855
          %2857 = vmatmul.bf16.gmra.mxu0 %v2279
          %v2858 = vpop.f32.mrf.mxu0
          %v2859 = vadd.f32 %v2826, %v2858
          %v2860 = vpop.f32.mrf.mxu0
          %2861 = vdwg.mxu0
          %2862 = vmatpush.bf16.msra.mxu0 %v2650
          %2863 = vmatpush.bf16.msra.mxu0 %v2649
          %2864 = vmatpush.bf16.msra.mxu0 %v2648
          %2865 = vmatpush.bf16.msra.mxu0 %v2647
          %2866 = vmatpush.bf16.msra.mxu0 %v2646
          %2867 = vmatpush.bf16.msra.mxu0 %v2645
          %2868 = vmatpush.bf16.msra.mxu0 %v2644
          %2869 = vmatpush.bf16.msra.mxu0 %v2643
          %2870 = vmatmul.bf16.gmra.mxu0 %v2244
          %v2871 = vpop.f32.mrf.mxu0
          %v2872 = vadd.f32 %v2839, %v2871
          %v2873 = vpop.f32.mrf.mxu0
          %v2874 = vadd.f32 %v2841, %v2873
          %2875 = vmatmul.bf16.gmra.mxu0 %v2253
          %v2876 = vpop.f32.mrf.mxu0
          %v2877 = vadd.f32 %v2844, %v2876
          %v2878 = vpop.f32.mrf.mxu0
          %v2879 = vadd.f32 %v2846, %v2878
          %2880 = vmatmul.bf16.gmra.mxu0 %v2262
          %v2881 = vpop.f32.mrf.mxu0
          %v2882 = vadd.f32 %v2849, %v2881
          %v2883 = vpop.f32.mrf.mxu0
          %v2884 = vadd.f32 %v2851, %v2883
          %2885 = vmatmul.bf16.gmra.mxu0 %v2271
          %v2886 = vpop.f32.mrf.mxu0
          %v2887 = vadd.f32 %v2854, %v2886
          %v2888 = vpop.f32.mrf.mxu0
          %v2889 = vadd.f32 %v2856, %v2888
          %2890 = vmatmul.bf16.gmra.mxu0 %v2280
          %v2891 = vpop.f32.mrf.mxu0
          %v2892 = vadd.f32 %v2859, %v2891
          %v2893 = vpop.f32.mrf.mxu0
          %2894 = vdwg.mxu0
          %2895 = vmatpush.bf16.msra.mxu0 %v2658
          %2896 = vmatpush.bf16.msra.mxu0 %v2657
          %2897 = vmatpush.bf16.msra.mxu0 %v2656
          %2898 = vmatpush.bf16.msra.mxu0 %v2655
          %2899 = vmatpush.bf16.msra.mxu0 %v2654
          %2900 = vmatpush.bf16.msra.mxu0 %v2653
          %2901 = vmatpush.bf16.msra.mxu0 %v2652
          %2902 = vmatpush.bf16.msra.mxu0 %v2651
          %2903 = vmatmul.bf16.gmra.mxu0 %v2245
          %v2904 = vpop.f32.mrf.mxu0
          %v2905 = vadd.f32 %v2872, %v2904
          %v2906 = vpop.f32.mrf.mxu0
          %v2907 = vadd.f32 %v2874, %v2906
          %2908 = vmatmul.bf16.gmra.mxu0 %v2254
          %v2909 = vpop.f32.mrf.mxu0
          %v2910 = vadd.f32 %v2877, %v2909
          %v2911 = vpop.f32.mrf.mxu0
          %v2912 = vadd.f32 %v2879, %v2911
          %2913 = vmatmul.bf16.gmra.mxu0 %v2263
          %v2914 = vpop.f32.mrf.mxu0
          %v2915 = vadd.f32 %v2882, %v2914
          %v2916 = vpop.f32.mrf.mxu0
          %v2917 = vadd.f32 %v2884, %v2916
          %2918 = vmatmul.bf16.gmra.mxu0 %v2272
          %v2919 = vpop.f32.mrf.mxu0
          %v2920 = vadd.f32 %v2887, %v2919
          %v2921 = vpop.f32.mrf.mxu0
          %v2922 = vadd.f32 %v2889, %v2921
          %2923 = vmatmul.bf16.gmra.mxu0 %v2281
          %v2924 = vpop.f32.mrf.mxu0
          %v2925 = vadd.f32 %v2892, %v2924
          %v2926 = vpop.f32.mrf.mxu0
          %2927 = vdwg.mxu0
          %2928 = vmatpush.bf16.msra.mxu0 %v2666
          %2929 = vmatpush.bf16.msra.mxu0 %v2665
          %2930 = vmatpush.bf16.msra.mxu0 %v2664
          %2931 = vmatpush.bf16.msra.mxu0 %v2663
          %2932 = vmatpush.bf16.msra.mxu0 %v2662
          %2933 = vmatpush.bf16.msra.mxu0 %v2661
          %2934 = vmatpush.bf16.msra.mxu0 %v2660
          %2935 = vmatpush.bf16.msra.mxu0 %v2659
          %2936 = vmatmul.bf16.gmra.mxu0 %v2246
          %v2937 = vpop.f32.mrf.mxu0
          %v2938 = vadd.f32 %v2905, %v2937
          %v2939 = vpop.f32.mrf.mxu0
          %v2940 = vadd.f32 %v2907, %v2939
          %2941 = vmatmul.bf16.gmra.mxu0 %v2255
          %v2942 = vpop.f32.mrf.mxu0
          %v2943 = vadd.f32 %v2910, %v2942
          %v2944 = vpop.f32.mrf.mxu0
          %v2945 = vadd.f32 %v2912, %v2944
          %2946 = vmatmul.bf16.gmra.mxu0 %v2264
          %v2947 = vpop.f32.mrf.mxu0
          %v2948 = vadd.f32 %v2915, %v2947
          %v2949 = vpop.f32.mrf.mxu0
          %v2950 = vadd.f32 %v2917, %v2949
          %2951 = vmatmul.bf16.gmra.mxu0 %v2273
          %v2952 = vpop.f32.mrf.mxu0
          %v2953 = vadd.f32 %v2920, %v2952
          %v2954 = vpop.f32.mrf.mxu0
          %v2955 = vadd.f32 %v2922, %v2954
          %2956 = vmatmul.bf16.gmra.mxu0 %v2282
          %v2957 = vpop.f32.mrf.mxu0
          %v2958 = vadd.f32 %v2925, %v2957
          %v2959 = vpop.f32.mrf.mxu0
          %2960 = vdwg.mxu0
          %2961 = vmatpush.bf16.msra.mxu0 %v2674
          %2962 = vmatpush.bf16.msra.mxu0 %v2673
          %2963 = vmatpush.bf16.msra.mxu0 %v2672
          %2964 = vmatpush.bf16.msra.mxu0 %v2671
          %2965 = vmatpush.bf16.msra.mxu0 %v2670
          %2966 = vmatpush.bf16.msra.mxu0 %v2669
          %2967 = vmatpush.bf16.msra.mxu0 %v2668
          %2968 = vmatpush.bf16.msra.mxu0 %v2667
          %2969 = vmatmul.bf16.gmra.mxu0 %v2247
          %v2970 = vpop.f32.mrf.mxu0
          %v2971 = vadd.f32 %v2938, %v2970
          %v2972 = vpop.f32.mrf.mxu0
          %v2973 = vadd.f32 %v2940, %v2972
          %2974 = vmatmul.bf16.gmra.mxu0 %v2256
          %v2975 = vpop.f32.mrf.mxu0
          %v2976 = vadd.f32 %v2943, %v2975
          %v2977 = vpop.f32.mrf.mxu0
          %v2978 = vadd.f32 %v2945, %v2977
          %2979 = vmatmul.bf16.gmra.mxu0 %v2265
          %v2980 = vpop.f32.mrf.mxu0
          %v2981 = vadd.f32 %v2948, %v2980
          %v2982 = vpop.f32.mrf.mxu0
          %v2983 = vadd.f32 %v2950, %v2982
          %2984 = vmatmul.bf16.gmra.mxu0 %v2274
          %v2985 = vpop.f32.mrf.mxu0
          %v2986 = vadd.f32 %v2953, %v2985
          %v2987 = vpop.f32.mrf.mxu0
          %v2988 = vadd.f32 %v2955, %v2987
          %2989 = vmatmul.bf16.gmra.mxu0 %v2283
          %v2990 = vpop.f32.mrf.mxu0
          %v2991 = vadd.f32 %v2958, %v2990
          %v2992 = vpop.f32.mrf.mxu0
          %2993 = vdwg.mxu0
          %2994 = vmatpush.bf16.msra.mxu0 %v2682
          %2995 = vmatpush.bf16.msra.mxu0 %v2681
          %2996 = vmatpush.bf16.msra.mxu0 %v2680
          %2997 = vmatpush.bf16.msra.mxu0 %v2679
          %2998 = vmatpush.bf16.msra.mxu0 %v2678
          %2999 = vmatpush.bf16.msra.mxu0 %v2677
          %3000 = vmatpush.bf16.msra.mxu0 %v2676
          %3001 = vmatpush.bf16.msra.mxu0 %v2675
          %3002 = vmatmul.bf16.gmra.mxu0 %v2248
          %v3003 = vpop.f32.mrf.mxu0
          %v3004 = vadd.f32 %v2971, %v3003
          %v3005 = vpop.f32.mrf.mxu0
          %v3006 = vadd.f32 %v2973, %v3005
          %3007 = vmatmul.bf16.gmra.mxu0 %v2257
          %v3008 = vpop.f32.mrf.mxu0
          %v3009 = vadd.f32 %v2976, %v3008
          %v3010 = vpop.f32.mrf.mxu0
          %v3011 = vadd.f32 %v2978, %v3010
          %3012 = vmatmul.bf16.gmra.mxu0 %v2266
          %v3013 = vpop.f32.mrf.mxu0
          %v3014 = vadd.f32 %v2981, %v3013
          %v3015 = vpop.f32.mrf.mxu0
          %v3016 = vadd.f32 %v2983, %v3015
          %3017 = vmatmul.bf16.gmra.mxu0 %v2275
          %v3018 = vpop.f32.mrf.mxu0
          %v3019 = vadd.f32 %v2986, %v3018
          %v3020 = vpop.f32.mrf.mxu0
          %v3021 = vadd.f32 %v2988, %v3020
          %3022 = vmatmul.bf16.gmra.mxu0 %v2284
          %v3023 = vpop.f32.mrf.mxu0
          %v3024 = vadd.f32 %v2991, %v3023
          %v3025 = vpop.f32.mrf.mxu0
          %3026 = vdwg.mxu0
          %3027 = vmatpush.bf16.msra.mxu0 %v2690
          %3028 = vmatpush.bf16.msra.mxu0 %v2689
          %3029 = vmatpush.bf16.msra.mxu0 %v2688
          %3030 = vmatpush.bf16.msra.mxu0 %v2687
          %3031 = vmatpush.bf16.msra.mxu0 %v2686
          %3032 = vmatpush.bf16.msra.mxu0 %v2685
          %3033 = vmatpush.bf16.msra.mxu0 %v2684
          %3034 = vmatpush.bf16.msra.mxu0 %v2683
          %3035 = vmatmul.bf16.gmra.mxu0 %v2249
          %v3036 = vpop.f32.mrf.mxu0
          %v3037 = vadd.f32 %v3004, %v3036
          %v3038 = vpop.f32.mrf.mxu0
          %v3039 = vadd.f32 %v3006, %v3038
          %3040 = vmatmul.bf16.gmra.mxu0 %v2258
          %v3041 = vpop.f32.mrf.mxu0
          %v3042 = vadd.f32 %v3009, %v3041
          %v3043 = vpop.f32.mrf.mxu0
          %v3044 = vadd.f32 %v3011, %v3043
          %3045 = vmatmul.bf16.gmra.mxu0 %v2267
          %v3046 = vpop.f32.mrf.mxu0
          %v3047 = vadd.f32 %v3014, %v3046
          %v3048 = vpop.f32.mrf.mxu0
          %v3049 = vadd.f32 %v3016, %v3048
          %3050 = vmatmul.bf16.gmra.mxu0 %v2276
          %v3051 = vpop.f32.mrf.mxu0
          %v3052 = vadd.f32 %v3019, %v3051
          %v3053 = vpop.f32.mrf.mxu0
          %v3054 = vadd.f32 %v3021, %v3053
          %3055 = vmatmul.bf16.gmra.mxu0 %v2285
          %v3056 = vpop.f32.mrf.mxu0
          %v3057 = vadd.f32 %v3024, %v3056
          %v3058 = vpop.f32.mrf.mxu0
          %3059 = vdwg.mxu0
          %v3060 = vmax.f32 %v3037, 0.0
          %v3061 = vmax.f32 %v3039, 0.0
          %v3062 = vmax.f32 %v3042, 0.0
          %v3063 = vmax.f32 %v3044, 0.0
          %v3064 = vmax.f32 %v3047, 0.0
          %v3065 = vmax.f32 %v3049, 0.0
          %v3066 = vmax.f32 %v3052, 0.0
          %v3067 = vmax.f32 %v3054, 0.0
          %v3068 = vmax.f32 %v3057, 0.0
          %3069 = vst [vmem:[#allocation2] sm:$0xff] 0.0
          %3070 = vst [vmem:[#allocation2 + $0x40] sm:$0xff] 0.0
          %s3071 = scalar_lea.vmem [#allocation2], 56
          %3072 = vst [vmem:[%s3071] sm:$0xff] 0.0
          %3073 = vst [vmem:[%s3071 + $0x40] sm:$0xff] 0.0
          %s3074 = scalar_lea.vmem [#allocation2], 8
          %3075 = vst [vmem:[%s3074] sm:$0x1] 0.0
          %3076 = vst [vmem:[%s3074 + $0x8] sm:$0x1] 0.0
          %3077 = vst [vmem:[%s3074 + $0x10] sm:$0x1] 0.0
          %3078 = vst [vmem:[%s3074 + $0x18] sm:$0x1] 0.0
          %3079 = vst [vmem:[%s3074 + $0x20] sm:$0x1] 0.0
          %3080 = vst [vmem:[%s3074 + $0x28] sm:$0x1] 0.0
          %3081 = vst [vmem:[%s3074 + $0x40] sm:$0x1] 0.0
          %3082 = vst [vmem:[%s3074 + $0x48] sm:$0x1] 0.0
          %3083 = vst [vmem:[%s3074 + $0x50] sm:$0x1] 0.0
          %3084 = vst [vmem:[%s3074 + $0x58] sm:$0x1] 0.0
          %3085 = vst [vmem:[%s3074 + $0x60] sm:$0x1] 0.0
          %3086 = vst [vmem:[%s3074 + $0x68] sm:$0x1] 0.0
          %3087 = vst [vmem:[%s3074 + $0x7] sm:$0x1] 0.0
          %3088 = vst [vmem:[%s3074 + $0xf] sm:$0x1] 0.0
          %3089 = vst [vmem:[%s3074 + $0x17] sm:$0x1] 0.0
          %3090 = vst [vmem:[%s3074 + $0x1f] sm:$0x1] 0.0
          %3091 = vst [vmem:[%s3074 + $0x27] sm:$0x1] 0.0
          %3092 = vst [vmem:[%s3074 + $0x2f] sm:$0x1] 0.0
          %3093 = vst [vmem:[%s3074 + $0x47] sm:$0x1] 0.0
          %3094 = vst [vmem:[%s3074 + $0x4f] sm:$0x1] 0.0
          %3095 = vst [vmem:[%s3074 + $0x57] sm:$0x1] 0.0
          %3096 = vst [vmem:[%s3074 + $0x5f] sm:$0x1] 0.0
          %3097 = vst [vmem:[%s3074 + $0x67] sm:$0x1] 0.0
          %3098 = vst [vmem:[%s3074 + $0x6f] sm:$0x1] 0.0
          %v3108 = vrot.slane %v3060, 2
          %v3109 = vrot.slane %v3060, 4
          %v3110 = vrot.slane %v3060, 6
          %v3111 = vrot.slane %v3061, 2
          %v3112 = vrot.slane %v3061, 4
          %v3113 = vrot.slane %v3061, 6
          %v3114 = vrot.slane %v3062, 2
          %v3115 = vrot.slane %v3062, 4
          %v3116 = vrot.slane %v3062, 6
          %v3117 = vrot.slane %v3063, 2
          %v3118 = vrot.slane %v3063, 4
          %v3119 = vrot.slane %v3063, 6
          %v3120 = vrot.slane %v3064, 2
          %v3121 = vrot.slane %v3064, 4
          %v3122 = vrot.slane %v3064, 6
          %v3123 = vrot.slane %v3065, 2
          %v3124 = vrot.slane %v3065, 4
          %v3125 = vrot.slane %v3065, 6
          %v3126 = vrot.slane %v3066, 2
          %v3127 = vrot.slane %v3066, 4
          %v3128 = vrot.slane %v3066, 6
          %v3129 = vrot.slane %v3067, 2
          %v3130 = vrot.slane %v3067, 4
          %v3131 = vrot.slane %v3067, 6
          %v3132 = vrot.slane %v3068, 2
          %v3133 = vrot.slane %v3068, 4
          %v3134 = vrot.slane %v3068, 6
          %3135 = vst [vmem:[#allocation1] ss:$4 sm:$0xff] %v3060
          %s3136 = scalar_lea.vmem [#allocation1], 1
          %3137 = vst [vmem:[%s3136] ss:$4 sm:$0xff] %v3108
          %s3138 = scalar_lea.vmem [#allocation1], 2
          %3139 = vst [vmem:[%s3138] ss:$4 sm:$0xff] %v3109
          %v3140 = vld.sshfl [vmem:[#allocation1] sm:$0xff pattern:$0x73625140]
          %s3141 = scalar_lea.vmem [#allocation1], 32
          %3142 = vst [vmem:[%s3141] ss:$4 sm:$0xff] %v3110
          %s3143 = scalar_lea.vmem [#allocation1], 33
          %3144 = vst [vmem:[%s3143] ss:$4 sm:$0xff] %v3061
          %s3145 = scalar_lea.vmem [#allocation1], 34
          %3146 = vst [vmem:[%s3145] ss:$4 sm:$0xff] %v3111
          %v3147 = vld.sshfl [vmem:[#allocation1 + $0x20] sm:$0xff pattern:$0x73625140]
          %3148 = vst [vmem:[#allocation1] ss:$4 sm:$0xff] %v3112
          %3149 = vst [vmem:[%s3136] ss:$4 sm:$0xff] %v3113
          %3150 = vst [vmem:[%s3138] ss:$4 sm:$0xff] %v3062
          %v3151 = vld.sshfl [vmem:[#allocation1] sm:$0xff pattern:$0x73625140]
          %3152 = vst [vmem:[%s3141] ss:$4 sm:$0xff] %v3114
          %3153 = vst [vmem:[%s3143] ss:$4 sm:$0xff] %v3115
          %3154 = vst [vmem:[%s3145] ss:$4 sm:$0xff] %v3116
          %v3155 = vld.sshfl [vmem:[#allocation1 + $0x20] sm:$0xff pattern:$0x73625140]
          %3156 = vst [vmem:[#allocation1] ss:$4 sm:$0xff] %v3063
          %3157 = vst [vmem:[%s3136] ss:$4 sm:$0xff] %v3117
          %3158 = vst [vmem:[%s3138] ss:$4 sm:$0xff] %v3118
          %v3159 = vld.sshfl [vmem:[#allocation1] sm:$0xff pattern:$0x73625140]
          %3160 = vst [vmem:[%s3141] ss:$4 sm:$0xff] %v3119
          %3161 = vst [vmem:[%s3143] ss:$4 sm:$0xff] %v3064
          %3162 = vst [vmem:[%s3145] ss:$4 sm:$0xff] %v3120
          %v3163 = vld.sshfl [vmem:[#allocation1 + $0x20] sm:$0xff pattern:$0x73625140]
          %3164 = vst [vmem:[#allocation1] ss:$4 sm:$0xff] %v3121
          %3165 = vst [vmem:[%s3136] ss:$4 sm:$0xff] %v3122
          %3166 = vst [vmem:[%s3138] ss:$4 sm:$0xff] %v3065
          %v3167 = vld.sshfl [vmem:[#allocation1] sm:$0xff pattern:$0x73625140]
          %3168 = vst [vmem:[%s3141] ss:$4 sm:$0xff] %v3123
          %3169 = vst [vmem:[%s3143] ss:$4 sm:$0xff] %v3124
          %3170 = vst [vmem:[%s3145] ss:$4 sm:$0xff] %v3125
          %v3171 = vld.sshfl [vmem:[#allocation1 + $0x20] sm:$0xff pattern:$0x73625140]
          %3172 = vst [vmem:[#allocation1] ss:$4 sm:$0xff] %v3066
          %3173 = vst [vmem:[%s3136] ss:$4 sm:$0xff] %v3126
          %3174 = vst [vmem:[%s3138] ss:$4 sm:$0xff] %v3127
          %v3175 = vld.sshfl [vmem:[#allocation1] sm:$0xff pattern:$0x73625140]
          %3176 = vst [vmem:[%s3141] ss:$4 sm:$0xff] %v3128
          %3177 = vst [vmem:[%s3143] ss:$4 sm:$0xff] %v3067
          %3178 = vst [vmem:[%s3145] ss:$4 sm:$0xff] %v3129
          %v3179 = vld.sshfl [vmem:[#allocation1 + $0x20] sm:$0xff pattern:$0x73625140]
          %3180 = vst [vmem:[#allocation1] ss:$4 sm:$0xff] %v3130
          %3181 = vst [vmem:[%s3136] ss:$4 sm:$0xff] %v3131
          %3182 = vst [vmem:[%s3138] ss:$4 sm:$0xff] %v3068
          %v3183 = vld.sshfl [vmem:[#allocation1] sm:$0xff pattern:$0x73625140]
          %3184 = vst [vmem:[%s3141] ss:$4 sm:$0xff] %v3132
          %3185 = vst [vmem:[%s3143] ss:$4 sm:$0xff] %v3133
          %3186 = vst [vmem:[%s3145] ss:$4 sm:$0xff] %v3134
          %v3187 = vld.sshfl [vmem:[#allocation1 + $0x20] sm:$0xff pattern:$0x73625140]
          %3200 = vst [vmem:[%s3074 + $0x1] sm:$0x3f] %v3140
          %3201 = vst [vmem:[%s3074 + $0x9] sm:$0x3f] %v3147
          %3202 = vst [vmem:[%s3074 + $0x11] sm:$0x3f] %v3151
          %3203 = vst [vmem:[%s3074 + $0x19] sm:$0x3f] %v3155
          %3204 = vst [vmem:[%s3074 + $0x21] sm:$0x3f] %v3159
          %3205 = vst [vmem:[%s3074 + $0x29] sm:$0x3f] %v3163
          %3206 = vst [vmem:[%s3074 + $0x41] sm:$0x3f] %v3167
          %3207 = vst [vmem:[%s3074 + $0x49] sm:$0x3f] %v3171
          %3208 = vst [vmem:[%s3074 + $0x51] sm:$0x3f] %v3175
          %3209 = vst [vmem:[%s3074 + $0x59] sm:$0x3f] %v3179
          %3210 = vst [vmem:[%s3074 + $0x61] sm:$0x3f] %v3183
          %3211 = vst [vmem:[%s3074 + $0x69] sm:$0x3f] %v3187
          %v3212 = vld [vmem:[#allocation2] sm:$0xff]
          %v3213 = vld [vmem:[#allocation2 + $0x8] sm:$0xff]
          %v3214 = vld [vmem:[#allocation2 + $0x10] sm:$0xff]
          %v3215 = vld [vmem:[#allocation2 + $0x18] sm:$0xff]
          %v3216 = vld [vmem:[#allocation2 + $0x20] sm:$0xff]
          %v3217 = vld [vmem:[#allocation2 + $0x28] sm:$0xff]
          %v3218 = vld [vmem:[#allocation2 + $0x30] sm:$0xff]
          %v3219 = vld [vmem:[#allocation2 + $0x38] sm:$0xff]
          %v3220 = vld [vmem:[#allocation2 + $0x40] sm:$0xff]
          %v3221 = vld [vmem:[#allocation2 + $0x48] sm:$0xff]
          %v3222 = vld [vmem:[#allocation2 + $0x50] sm:$0xff]
          %v3223 = vld [vmem:[#allocation2 + $0x58] sm:$0xff]
          %v3224 = vld [vmem:[#allocation2 + $0x60] sm:$0xff]
          %v3225 = vld [vmem:[#allocation2 + $0x68] sm:$0xff]
          %v3226 = vld [vmem:[#allocation2 + $0x70] sm:$0xff]
          %v3227 = vld [vmem:[#allocation2 + $0x78] sm:$0xff]
          %v3228 = vpack.c.bf16 %v3212, %v3212
          %v3229 = vpack.c.bf16 %v3213, %v3213
          %v3230 = vpack.c.bf16 %v3214, %v3214
          %v3231 = vpack.c.bf16 %v3215, %v3215
          %v3232 = vpack.c.bf16 %v3216, %v3216
          %v3233 = vpack.c.bf16 %v3217, %v3217
          %v3234 = vpack.c.bf16 %v3218, %v3218
          %v3235 = vpack.c.bf16 %v3219, %v3219
          %v3236 = vpack.c.bf16 %v3220, %v3220
          %v3237 = vpack.c.bf16 %v3221, %v3221
          %v3238 = vpack.c.bf16 %v3222, %v3222
          %v3239 = vpack.c.bf16 %v3223, %v3223
          %v3240 = vpack.c.bf16 %v3224, %v3224
          %v3241 = vpack.c.bf16 %v3225, %v3225
          %v3242 = vpack.c.bf16 %v3226, %v3226
          %v3243 = vpack.c.bf16 %v3227, %v3227
          %v3256 = vrot.slane %v3228, 3
          %v3257 = vrot.slane %v3229, 3
          %v3258 = vrot.slane %v3230, 3
          %v3259 = vrot.slane %v3231, 3
          %v3260 = vrot.slane %v3232, 3
          %v3261 = vrot.slane %v3233, 3
          %v3262 = vrot.slane %v3236, 3
          %v3263 = vrot.slane %v3237, 3
          %v3264 = vrot.slane %v3238, 3
          %v3265 = vrot.slane %v3239, 3
          %v3266 = vrot.slane %v3240, 3
          %v3267 = vrot.slane %v3241, 3
          %v3270 = vsel %vm483, %v3228, %v3256
          %v3271 = vsel %vm487, %v3228, %v3256
          %v3273 = vrot.slane %v3271, 1
          %v3274 = vsel %vm491, %v3228, %v3256
          %v3276 = vrot.slane %v3274, 2
          %v3279 = vsel %vm483, %v3229, %v3257
          %v3280 = vsel %vm487, %v3229, %v3257
          %v3282 = vrot.slane %v3280, 1
          %v3283 = vsel %vm491, %v3229, %v3257
          %v3285 = vrot.slane %v3283, 2
          %v3288 = vsel %vm483, %v3230, %v3258
          %v3289 = vsel %vm487, %v3230, %v3258
          %v3291 = vrot.slane %v3289, 1
          %v3292 = vsel %vm491, %v3230, %v3258
          %v3294 = vrot.slane %v3292, 2
          %v3297 = vsel %vm483, %v3231, %v3259
          %v3298 = vsel %vm487, %v3231, %v3259
          %v3300 = vrot.slane %v3298, 1
          %v3301 = vsel %vm491, %v3231, %v3259
          %v3303 = vrot.slane %v3301, 2
          %v3306 = vsel %vm483, %v3232, %v3260
          %v3307 = vsel %vm487, %v3232, %v3260
          %v3309 = vrot.slane %v3307, 1
          %v3310 = vsel %vm491, %v3232, %v3260
          %v3312 = vrot.slane %v3310, 2
          %v3315 = vsel %vm483, %v3233, %v3261
          %v3316 = vsel %vm487, %v3233, %v3261
          %v3318 = vrot.slane %v3316, 1
          %v3319 = vsel %vm491, %v3233, %v3261
          %v3321 = vrot.slane %v3319, 2
          %v3324 = vsel %vm483, %v3236, %v3262
          %v3325 = vsel %vm487, %v3236, %v3262
          %v3327 = vrot.slane %v3325, 1
          %v3328 = vsel %vm491, %v3236, %v3262
          %v3330 = vrot.slane %v3328, 2
          %v3333 = vsel %vm483, %v3237, %v3263
          %v3334 = vsel %vm487, %v3237, %v3263
          %v3336 = vrot.slane %v3334, 1
          %v3337 = vsel %vm491, %v3237, %v3263
          %v3339 = vrot.slane %v3337, 2
          %v3342 = vsel %vm483, %v3238, %v3264
          %v3343 = vsel %vm487, %v3238, %v3264
          %v3345 = vrot.slane %v3343, 1
          %v3346 = vsel %vm491, %v3238, %v3264
          %v3348 = vrot.slane %v3346, 2
          %v3351 = vsel %vm483, %v3239, %v3265
          %v3352 = vsel %vm487, %v3239, %v3265
          %v3354 = vrot.slane %v3352, 1
          %v3355 = vsel %vm491, %v3239, %v3265
          %v3357 = vrot.slane %v3355, 2
          %v3360 = vsel %vm483, %v3240, %v3266
          %v3361 = vsel %vm487, %v3240, %v3266
          %v3363 = vrot.slane %v3361, 1
          %v3364 = vsel %vm491, %v3240, %v3266
          %v3366 = vrot.slane %v3364, 2
          %v3369 = vsel %vm483, %v3241, %v3267
          %v3370 = vsel %vm487, %v3241, %v3267
          %v3372 = vrot.slane %v3370, 1
          %v3373 = vsel %vm491, %v3241, %v3267
          %v3375 = vrot.slane %v3373, 2
          %3376 = vst [vmem:[#allocation1] ss:$4 sm:$0xff] %v3270
          %s3378 = scalar_lea.vmem [#allocation1], 1
          %3379 = vst [vmem:[%s3378] ss:$4 sm:$0xff] %v3273
          %s3381 = scalar_lea.vmem [#allocation1], 2
          %3382 = vst [vmem:[%s3381] ss:$4 sm:$0xff] %v3276
          %s3383 = scalar_lea.vmem [#allocation1], 3
          %3384 = vst [vmem:[%s3383] ss:$4 sm:$0xff] %v3279
          %s3386 = scalar_lea.vmem [#allocation1], 32
          %3387 = vst [vmem:[%s3386] ss:$4 sm:$0xff] %v3282
          %s3389 = scalar_lea.vmem [#allocation1], 33
          %3390 = vst [vmem:[%s3389] ss:$4 sm:$0xff] %v3285
          %s3391 = scalar_lea.vmem [#allocation1], 34
          %3392 = vst [vmem:[%s3391] ss:$4 sm:$0xff] %v3288
          %s3394 = scalar_lea.vmem [#allocation1], 35
          %3395 = vst [vmem:[%s3394] ss:$4 sm:$0xff] %v3291
          %v3396 = vld [vmem:[#allocation1] sm:$0xff]
          %v3397 = vld [vmem:[#allocation1 + $0x20] sm:$0xff]
          %3399 = vst [vmem:[#allocation1] ss:$4 sm:$0xff] %v3294
          %3400 = vst [vmem:[%s3378] ss:$4 sm:$0xff] %v3297
          %3402 = vst [vmem:[%s3381] ss:$4 sm:$0xff] %v3300
          %3404 = vst [vmem:[%s3383] ss:$4 sm:$0xff] %v3303
          %3405 = vst [vmem:[%s3386] ss:$4 sm:$0xff] %v3306
          %3407 = vst [vmem:[%s3389] ss:$4 sm:$0xff] %v3309
          %3409 = vst [vmem:[%s3391] ss:$4 sm:$0xff] %v3312
          %3410 = vst [vmem:[%s3394] ss:$4 sm:$0xff] %v3315
          %v3411 = vld [vmem:[#allocation1] sm:$0xff]
          %v3412 = vld [vmem:[#allocation1 + $0x20] sm:$0xff]
          %3414 = vst [vmem:[#allocation1] ss:$4 sm:$0xff] %v3318
          %3416 = vst [vmem:[%s3378] ss:$4 sm:$0xff] %v3321
          %3417 = vst [vmem:[%s3381] ss:$4 sm:$0xff] %v3324
          %3419 = vst [vmem:[%s3383] ss:$4 sm:$0xff] %v3327
          %3421 = vst [vmem:[%s3386] ss:$4 sm:$0xff] %v3330
          %3422 = vst [vmem:[%s3389] ss:$4 sm:$0xff] %v3333
          %3424 = vst [vmem:[%s3391] ss:$4 sm:$0xff] %v3336
          %3426 = vst [vmem:[%s3394] ss:$4 sm:$0xff] %v3339
          %v3427 = vld [vmem:[#allocation1] sm:$0xff]
          %v3428 = vld [vmem:[#allocation1 + $0x20] sm:$0xff]
          %3429 = vst [vmem:[#allocation1] ss:$4 sm:$0xff] %v3342
          %3431 = vst [vmem:[%s3378] ss:$4 sm:$0xff] %v3345
          %3433 = vst [vmem:[%s3381] ss:$4 sm:$0xff] %v3348
          %3434 = vst [vmem:[%s3383] ss:$4 sm:$0xff] %v3351
          %3436 = vst [vmem:[%s3386] ss:$4 sm:$0xff] %v3354
          %3438 = vst [vmem:[%s3389] ss:$4 sm:$0xff] %v3357
          %3439 = vst [vmem:[%s3391] ss:$4 sm:$0xff] %v3360
          %3441 = vst [vmem:[%s3394] ss:$4 sm:$0xff] %v3363
          %v3442 = vld [vmem:[#allocation1] sm:$0xff]
          %v3443 = vld [vmem:[#allocation1 + $0x20] sm:$0xff]
          %3445 = vst [vmem:[#allocation1] ss:$4 sm:$0xff] %v3366
          %3446 = vst [vmem:[%s3378] ss:$4 sm:$0xff] %v3369
          %3448 = vst [vmem:[%s3381] ss:$4 sm:$0xff] %v3372
          %3450 = vst [vmem:[%s3383] ss:$4 sm:$0xff] %v3375
          %v3451 = vld [vmem:[#allocation1] sm:$0xff]
          %3461 = vst [vmem:[#allocation3] sm:$0xf] %v3396
          %3462 = vst [vmem:[#allocation3 + $0x24] sm:$0xf] %v3397
          %3463 = vst [vmem:[#allocation3 + $0x48] sm:$0xf] %v3411
          %3464 = vst [vmem:[#allocation3 + $0x6c] sm:$0xf] %v3412
          %3465 = vst [vmem:[#allocation3 + $0x90] sm:$0xf] %v3427
          %3466 = vst [vmem:[#allocation3 + $0xb4] sm:$0xf] %v3428
          %3467 = vst [vmem:[#allocation3 + $0xd8] sm:$0xf] %v3442
          %3468 = vst [vmem:[#allocation3 + $0xfc] sm:$0xf] %v3443
          %3469 = vst [vmem:[#allocation3 + $0x120] sm:$0xf] %v3451
          %v3470 = vsel %vm688, %v3228, %v3256
          %v3472 = vrot.slane %v3470, 3
          %v3473 = vsel %vm688, %v3229, %v3257
          %v3475 = vrot.slane %v3473, 3
          %v3476 = vsel %vm688, %v3230, %v3258
          %v3478 = vrot.slane %v3476, 3
          %v3479 = vsel %vm688, %v3231, %v3259
          %v3481 = vrot.slane %v3479, 3
          %v3482 = vsel %vm688, %v3232, %v3260
          %v3484 = vrot.slane %v3482, 3
          %v3485 = vsel %vm688, %v3233, %v3261
          %v3487 = vrot.slane %v3485, 3
          %v3488 = vsel %vm688, %v3236, %v3262
          %v3490 = vrot.slane %v3488, 3
          %v3491 = vsel %vm688, %v3237, %v3263
          %v3493 = vrot.slane %v3491, 3
          %v3494 = vsel %vm688, %v3238, %v3264
          %v3496 = vrot.slane %v3494, 3
          %v3497 = vsel %vm688, %v3239, %v3265
          %v3499 = vrot.slane %v3497, 3
          %v3500 = vsel %vm688, %v3240, %v3266
          %v3502 = vrot.slane %v3500, 3
          %v3503 = vsel %vm688, %v3241, %v3267
          %v3505 = vrot.slane %v3503, 3
          %v3506 = vshrl.u32 %v3270, 16
          %v3508 = vrot.slane %v3506, 7
          %v3509 = vrot.slane %v3508, 1
          %v3510 = vshll.u32 %v3273, 16
          %v3512 = vsel %vm739, %v3509, %v3510
          %v3513 = vshrl.u32 %v3273, 16
          %v3515 = vrot.slane %v3513, 7
          %v3516 = vrot.slane %v3515, 1
          %v3517 = vshll.u32 %v3276, 16
          %v3519 = vsel %vm739, %v3516, %v3517
          %v3520 = vshrl.u32 %v3276, 16
          %v3522 = vrot.slane %v3520, 7
          %v3523 = vrot.slane %v3522, 1
          %v3525 = vshll.u32 %v3472, 16
          %v3527 = vsel %vm739, %v3523, %v3525
          %v3528 = vshrl.u32 %v3279, 16
          %v3530 = vrot.slane %v3528, 7
          %v3531 = vrot.slane %v3530, 1
          %v3532 = vshll.u32 %v3282, 16
          %v3534 = vsel %vm739, %v3531, %v3532
          %v3535 = vshrl.u32 %v3282, 16
          %v3537 = vrot.slane %v3535, 7
          %v3538 = vrot.slane %v3537, 1
          %v3539 = vshll.u32 %v3285, 16
          %v3541 = vsel %vm739, %v3538, %v3539
          %v3542 = vshrl.u32 %v3285, 16
          %v3544 = vrot.slane %v3542, 7
          %v3545 = vrot.slane %v3544, 1
          %v3547 = vshll.u32 %v3475, 16
          %v3549 = vsel %vm739, %v3545, %v3547
          %v3550 = vshrl.u32 %v3288, 16
          %v3552 = vrot.slane %v3550, 7
          %v3553 = vrot.slane %v3552, 1
          %v3554 = vshll.u32 %v3291, 16
          %v3556 = vsel %vm739, %v3553, %v3554
          %v3557 = vshrl.u32 %v3291, 16
          %v3559 = vrot.slane %v3557, 7
          %v3560 = vrot.slane %v3559, 1
          %v3561 = vshll.u32 %v3294, 16
          %v3563 = vsel %vm739, %v3560, %v3561
          %v3564 = vshrl.u32 %v3294, 16
          %v3566 = vrot.slane %v3564, 7
          %v3567 = vrot.slane %v3566, 1
          %v3569 = vshll.u32 %v3478, 16
          %v3571 = vsel %vm739, %v3567, %v3569
          %v3572 = vshrl.u32 %v3297, 16
          %v3574 = vrot.slane %v3572, 7
          %v3575 = vrot.slane %v3574, 1
          %v3576 = vshll.u32 %v3300, 16
          %v3578 = vsel %vm739, %v3575, %v3576
          %v3579 = vshrl.u32 %v3300, 16
          %v3581 = vrot.slane %v3579, 7
          %v3582 = vrot.slane %v3581, 1
          %v3583 = vshll.u32 %v3303, 16
          %v3585 = vsel %vm739, %v3582, %v3583
          %v3586 = vshrl.u32 %v3303, 16
          %v3588 = vrot.slane %v3586, 7
          %v3589 = vrot.slane %v3588, 1
          %v3591 = vshll.u32 %v3481, 16
          %v3593 = vsel %vm739, %v3589, %v3591
          %v3594 = vshrl.u32 %v3306, 16
          %v3596 = vrot.slane %v3594, 7
          %v3597 = vrot.slane %v3596, 1
          %v3598 = vshll.u32 %v3309, 16
          %v3600 = vsel %vm739, %v3597, %v3598
          %v3601 = vshrl.u32 %v3309, 16
          %v3603 = vrot.slane %v3601, 7
          %v3604 = vrot.slane %v3603, 1
          %v3605 = vshll.u32 %v3312, 16
          %v3607 = vsel %vm739, %v3604, %v3605
          %v3608 = vshrl.u32 %v3312, 16
          %v3610 = vrot.slane %v3608, 7
          %v3611 = vrot.slane %v3610, 1
          %v3613 = vshll.u32 %v3484, 16
          %v3615 = vsel %vm739, %v3611, %v3613
          %v3616 = vshrl.u32 %v3315, 16
          %v3618 = vrot.slane %v3616, 7
          %v3619 = vrot.slane %v3618, 1
          %v3620 = vshll.u32 %v3318, 16
          %v3622 = vsel %vm739, %v3619, %v3620
          %v3623 = vshrl.u32 %v3318, 16
          %v3625 = vrot.slane %v3623, 7
          %v3626 = vrot.slane %v3625, 1
          %v3627 = vshll.u32 %v3321, 16
          %v3629 = vsel %vm739, %v3626, %v3627
          %v3630 = vshrl.u32 %v3321, 16
          %v3632 = vrot.slane %v3630, 7
          %v3633 = vrot.slane %v3632, 1
          %v3635 = vshll.u32 %v3487, 16
          %v3637 = vsel %vm739, %v3633, %v3635
          %v3638 = vshrl.u32 %v3324, 16
          %v3640 = vrot.slane %v3638, 7
          %v3641 = vrot.slane %v3640, 1
          %v3642 = vshll.u32 %v3327, 16
          %v3644 = vsel %vm739, %v3641, %v3642
          %v3645 = vshrl.u32 %v3327, 16
          %v3647 = vrot.slane %v3645, 7
          %v3648 = vrot.slane %v3647, 1
          %v3649 = vshll.u32 %v3330, 16
          %v3651 = vsel %vm739, %v3648, %v3649
          %v3652 = vshrl.u32 %v3330, 16
          %v3654 = vrot.slane %v3652, 7
          %v3655 = vrot.slane %v3654, 1
          %v3657 = vshll.u32 %v3490, 16
          %v3659 = vsel %vm739, %v3655, %v3657
          %v3660 = vshrl.u32 %v3333, 16
          %v3662 = vrot.slane %v3660, 7
          %v3663 = vrot.slane %v3662, 1
          %v3664 = vshll.u32 %v3336, 16
          %v3666 = vsel %vm739, %v3663, %v3664
          %v3667 = vshrl.u32 %v3336, 16
          %v3669 = vrot.slane %v3667, 7
          %v3670 = vrot.slane %v3669, 1
          %v3671 = vshll.u32 %v3339, 16
          %v3673 = vsel %vm739, %v3670, %v3671
          %v3674 = vshrl.u32 %v3339, 16
          %v3676 = vrot.slane %v3674, 7
          %v3677 = vrot.slane %v3676, 1
          %v3679 = vshll.u32 %v3493, 16
          %v3681 = vsel %vm739, %v3677, %v3679
          %v3682 = vshrl.u32 %v3342, 16
          %v3684 = vrot.slane %v3682, 7
          %v3685 = vrot.slane %v3684, 1
          %v3686 = vshll.u32 %v3345, 16
          %v3688 = vsel %vm739, %v3685, %v3686
          %v3689 = vshrl.u32 %v3345, 16
          %v3691 = vrot.slane %v3689, 7
          %v3692 = vrot.slane %v3691, 1
          %v3693 = vshll.u32 %v3348, 16
          %v3695 = vsel %vm739, %v3692, %v3693
          %v3696 = vshrl.u32 %v3348, 16
          %v3698 = vrot.slane %v3696, 7
          %v3699 = vrot.slane %v3698, 1
          %v3701 = vshll.u32 %v3496, 16
          %v3703 = vsel %vm739, %v3699, %v3701
          %v3704 = vshrl.u32 %v3351, 16
          %v3706 = vrot.slane %v3704, 7
          %v3707 = vrot.slane %v3706, 1
          %v3708 = vshll.u32 %v3354, 16
          %v3710 = vsel %vm739, %v3707, %v3708
          %v3711 = vshrl.u32 %v3354, 16
          %v3713 = vrot.slane %v3711, 7
          %v3714 = vrot.slane %v3713, 1
          %v3715 = vshll.u32 %v3357, 16
          %v3717 = vsel %vm739, %v3714, %v3715
          %v3718 = vshrl.u32 %v3357, 16
          %v3720 = vrot.slane %v3718, 7
          %v3721 = vrot.slane %v3720, 1
          %v3723 = vshll.u32 %v3499, 16
          %v3725 = vsel %vm739, %v3721, %v3723
          %v3726 = vshrl.u32 %v3360, 16
          %v3728 = vrot.slane %v3726, 7
          %v3729 = vrot.slane %v3728, 1
          %v3730 = vshll.u32 %v3363, 16
          %v3732 = vsel %vm739, %v3729, %v3730
          %v3733 = vshrl.u32 %v3363, 16
          %v3735 = vrot.slane %v3733, 7
          %v3736 = vrot.slane %v3735, 1
          %v3737 = vshll.u32 %v3366, 16
          %v3739 = vsel %vm739, %v3736, %v3737
          %v3740 = vshrl.u32 %v3366, 16
          %v3742 = vrot.slane %v3740, 7
          %v3743 = vrot.slane %v3742, 1
          %v3745 = vshll.u32 %v3502, 16
          %v3747 = vsel %vm739, %v3743, %v3745
          %v3748 = vshrl.u32 %v3369, 16
          %v3750 = vrot.slane %v3748, 7
          %v3751 = vrot.slane %v3750, 1
          %v3752 = vshll.u32 %v3372, 16
          %v3754 = vsel %vm739, %v3751, %v3752
          %v3755 = vshrl.u32 %v3372, 16
          %v3757 = vrot.slane %v3755, 7
          %v3758 = vrot.slane %v3757, 1
          %v3759 = vshll.u32 %v3375, 16
          %v3761 = vsel %vm739, %v3758, %v3759
          %v3762 = vshrl.u32 %v3375, 16
          %v3764 = vrot.slane %v3762, 7
          %v3765 = vrot.slane %v3764, 1
          %v3767 = vshll.u32 %v3505, 16
          %v3769 = vsel %vm739, %v3765, %v3767
          %3771 = vst [vmem:[#allocation1] ss:$4 sm:$0xff] %v3512
          %s3773 = scalar_lea.vmem [#allocation1], 1
          %3774 = vst [vmem:[%s3773] ss:$4 sm:$0xff] %v3519
          %s3776 = scalar_lea.vmem [#allocation1], 2
          %3777 = vst [vmem:[%s3776] ss:$4 sm:$0xff] %v3527
          %s3779 = scalar_lea.vmem [#allocation1], 3
          %3780 = vst [vmem:[%s3779] ss:$4 sm:$0xff] %v3534
          %s3782 = scalar_lea.vmem [#allocation1], 32
          %3783 = vst [vmem:[%s3782] ss:$4 sm:$0xff] %v3541
          %s3785 = scalar_lea.vmem [#allocation1], 33
          %3786 = vst [vmem:[%s3785] ss:$4 sm:$0xff] %v3549
          %s3788 = scalar_lea.vmem [#allocation1], 34
          %3789 = vst [vmem:[%s3788] ss:$4 sm:$0xff] %v3556
          %s3791 = scalar_lea.vmem [#allocation1], 35
          %3792 = vst [vmem:[%s3791] ss:$4 sm:$0xff] %v3563
          %v3793 = vld [vmem:[#allocation1] sm:$0xff]
          %v3794 = vld [vmem:[#allocation1 + $0x20] sm:$0xff]
          %3796 = vst [vmem:[#allocation1] ss:$4 sm:$0xff] %v3571
          %3798 = vst [vmem:[%s3773] ss:$4 sm:$0xff] %v3578
          %3800 = vst [vmem:[%s3776] ss:$4 sm:$0xff] %v3585
          %3802 = vst [vmem:[%s3779] ss:$4 sm:$0xff] %v3593
          %3804 = vst [vmem:[%s3782] ss:$4 sm:$0xff] %v3600
          %3806 = vst [vmem:[%s3785] ss:$4 sm:$0xff] %v3607
          %3808 = vst [vmem:[%s3788] ss:$4 sm:$0xff] %v3615
          %3810 = vst [vmem:[%s3791] ss:$4 sm:$0xff] %v3622
          %v3811 = vld [vmem:[#allocation1] sm:$0xff]
          %v3812 = vld [vmem:[#allocation1 + $0x20] sm:$0xff]
          %3814 = vst [vmem:[#allocation1] ss:$4 sm:$0xff] %v3629
          %3816 = vst [vmem:[%s3773] ss:$4 sm:$0xff] %v3637
          %3818 = vst [vmem:[%s3776] ss:$4 sm:$0xff] %v3644
          %3820 = vst [vmem:[%s3779] ss:$4 sm:$0xff] %v3651
          %3822 = vst [vmem:[%s3782] ss:$4 sm:$0xff] %v3659
          %3824 = vst [vmem:[%s3785] ss:$4 sm:$0xff] %v3666
          %3826 = vst [vmem:[%s3788] ss:$4 sm:$0xff] %v3673
          %3828 = vst [vmem:[%s3791] ss:$4 sm:$0xff] %v3681
          %v3829 = vld [vmem:[#allocation1] sm:$0xff]
          %v3830 = vld [vmem:[#allocation1 + $0x20] sm:$0xff]
          %3832 = vst [vmem:[#allocation1] ss:$4 sm:$0xff] %v3688
          %3834 = vst [vmem:[%s3773] ss:$4 sm:$0xff] %v3695
          %3836 = vst [vmem:[%s3776] ss:$4 sm:$0xff] %v3703
          %3838 = vst [vmem:[%s3779] ss:$4 sm:$0xff] %v3710
          %3840 = vst [vmem:[%s3782] ss:$4 sm:$0xff] %v3717
          %3842 = vst [vmem:[%s3785] ss:$4 sm:$0xff] %v3725
          %3844 = vst [vmem:[%s3788] ss:$4 sm:$0xff] %v3732
          %3846 = vst [vmem:[%s3791] ss:$4 sm:$0xff] %v3739
          %v3847 = vld [vmem:[#allocation1] sm:$0xff]
          %v3848 = vld [vmem:[#allocation1 + $0x20] sm:$0xff]
          %3850 = vst [vmem:[#allocation1] ss:$4 sm:$0xff] %v3747
          %3852 = vst [vmem:[%s3773] ss:$4 sm:$0xff] %v3754
          %3854 = vst [vmem:[%s3776] ss:$4 sm:$0xff] %v3761
          %3856 = vst [vmem:[%s3779] ss:$4 sm:$0xff] %v3769
          %v3857 = vld [vmem:[#allocation1] sm:$0xff]
          %3867 = vst [vmem:[#allocation3 + $0x4] sm:$0xf] %v3793
          %3868 = vst [vmem:[#allocation3 + $0x28] sm:$0xf] %v3794
          %3869 = vst [vmem:[#allocation3 + $0x4c] sm:$0xf] %v3811
          %3870 = vst [vmem:[#allocation3 + $0x70] sm:$0xf] %v3812
          %3871 = vst [vmem:[#allocation3 + $0x94] sm:$0xf] %v3829
          %3872 = vst [vmem:[#allocation3 + $0xb8] sm:$0xf] %v3830
          %3873 = vst [vmem:[#allocation3 + $0xdc] sm:$0xf] %v3847
          %3874 = vst [vmem:[#allocation3 + $0x100] sm:$0xf] %v3848
          %3875 = vst [vmem:[#allocation3 + $0x124] sm:$0xf] %v3857
          %3876 = vst [vmem:[#allocation1] sm:$0xff] %v3228
          %s3877 = scalar_lea.vmem [#allocation1], 1
          %v3878 = vld [vmem:[%s3877] ss:$4 sm:$0xff]
          %s3879 = scalar_lea.vmem [#allocation1], 2
          %v3880 = vld [vmem:[%s3879] ss:$4 sm:$0xff]
          %s3881 = scalar_lea.vmem [#allocation1], 3
          %v3882 = vld [vmem:[%s3881] ss:$4 sm:$0xff]
          %3883 = vst [vmem:[#allocation1 + $0x20] sm:$0xff] %v3229
          %s3884 = scalar_lea.vmem [#allocation1], 33
          %v3885 = vld [vmem:[%s3884] ss:$4 sm:$0xff]
          %s3886 = scalar_lea.vmem [#allocation1], 34
          %v3887 = vld [vmem:[%s3886] ss:$4 sm:$0xff]
          %s3888 = scalar_lea.vmem [#allocation1], 35
          %v3889 = vld [vmem:[%s3888] ss:$4 sm:$0xff]
          %3890 = vst [vmem:[#allocation1] sm:$0xff] %v3230
          %v3891 = vld [vmem:[%s3877] ss:$4 sm:$0xff]
          %v3892 = vld [vmem:[%s3879] ss:$4 sm:$0xff]
          %v3893 = vld [vmem:[%s3881] ss:$4 sm:$0xff]
          %3894 = vst [vmem:[#allocation1 + $0x20] sm:$0xff] %v3231
          %v3895 = vld [vmem:[%s3884] ss:$4 sm:$0xff]
          %v3896 = vld [vmem:[%s3886] ss:$4 sm:$0xff]
          %v3897 = vld [vmem:[%s3888] ss:$4 sm:$0xff]
          %3898 = vst [vmem:[#allocation1] sm:$0xff] %v3232
          %v3899 = vld [vmem:[%s3877] ss:$4 sm:$0xff]
          %v3900 = vld [vmem:[%s3879] ss:$4 sm:$0xff]
          %v3901 = vld [vmem:[%s3881] ss:$4 sm:$0xff]
          %3902 = vst [vmem:[#allocation1 + $0x20] sm:$0xff] %v3233
          %v3903 = vld [vmem:[%s3884] ss:$4 sm:$0xff]
          %v3904 = vld [vmem:[%s3886] ss:$4 sm:$0xff]
          %v3905 = vld [vmem:[%s3888] ss:$4 sm:$0xff]
          %3906 = vst [vmem:[#allocation1] sm:$0xff] %v3236
          %v3907 = vld [vmem:[%s3877] ss:$4 sm:$0xff]
          %v3908 = vld [vmem:[%s3879] ss:$4 sm:$0xff]
          %v3909 = vld [vmem:[%s3881] ss:$4 sm:$0xff]
          %3910 = vst [vmem:[#allocation1 + $0x20] sm:$0xff] %v3237
          %v3911 = vld [vmem:[%s3884] ss:$4 sm:$0xff]
          %v3912 = vld [vmem:[%s3886] ss:$4 sm:$0xff]
          %v3913 = vld [vmem:[%s3888] ss:$4 sm:$0xff]
          %3914 = vst [vmem:[#allocation1] sm:$0xff] %v3238
          %v3915 = vld [vmem:[%s3877] ss:$4 sm:$0xff]
          %v3916 = vld [vmem:[%s3879] ss:$4 sm:$0xff]
          %v3917 = vld [vmem:[%s3881] ss:$4 sm:$0xff]
          %3918 = vst [vmem:[#allocation1 + $0x20] sm:$0xff] %v3239
          %v3919 = vld [vmem:[%s3884] ss:$4 sm:$0xff]
          %v3920 = vld [vmem:[%s3886] ss:$4 sm:$0xff]
          %v3921 = vld [vmem:[%s3888] ss:$4 sm:$0xff]
          %3922 = vst [vmem:[#allocation1] sm:$0xff] %v3240
          %v3923 = vld [vmem:[%s3877] ss:$4 sm:$0xff]
          %v3924 = vld [vmem:[%s3879] ss:$4 sm:$0xff]
          %v3925 = vld [vmem:[%s3881] ss:$4 sm:$0xff]
          %3926 = vst [vmem:[#allocation1 + $0x20] sm:$0xff] %v3241
          %v3927 = vld [vmem:[%s3884] ss:$4 sm:$0xff]
          %v3928 = vld [vmem:[%s3886] ss:$4 sm:$0xff]
          %v3929 = vld [vmem:[%s3888] ss:$4 sm:$0xff]
          %3930 = vst [vmem:[#allocation1] ss:$4 sm:$0xff] %v3878
          %s3931 = scalar_lea.vmem [#allocation1], 1
          %3932 = vst [vmem:[%s3931] ss:$4 sm:$0xff] %v3880
          %s3933 = scalar_lea.vmem [#allocation1], 2
          %3934 = vst [vmem:[%s3933] ss:$4 sm:$0xff] %v3882
          %s3935 = scalar_lea.vmem [#allocation1], 3
          %3936 = vst [vmem:[%s3935] ss:$4 sm:$0xff] %v3885
          %s3937 = scalar_lea.vmem [#allocation1], 32
          %3938 = vst [vmem:[%s3937] ss:$4 sm:$0xff] %v3887
          %s3939 = scalar_lea.vmem [#allocation1], 33
          %3940 = vst [vmem:[%s3939] ss:$4 sm:$0xff] %v3889
          %s3941 = scalar_lea.vmem [#allocation1], 34
          %3942 = vst [vmem:[%s3941] ss:$4 sm:$0xff] %v3891
          %s3943 = scalar_lea.vmem [#allocation1], 35
          %3944 = vst [vmem:[%s3943] ss:$4 sm:$0xff] %v3892
          %v3945 = vld [vmem:[#allocation1] sm:$0xff]
          %v3946 = vld [vmem:[#allocation1 + $0x20] sm:$0xff]
          %3947 = vst [vmem:[#allocation1] ss:$4 sm:$0xff] %v3893
          %3948 = vst [vmem:[%s3931] ss:$4 sm:$0xff] %v3895
          %3949 = vst [vmem:[%s3933] ss:$4 sm:$0xff] %v3896
          %3950 = vst [vmem:[%s3935] ss:$4 sm:$0xff] %v3897
          %3951 = vst [vmem:[%s3937] ss:$4 sm:$0xff] %v3899
          %3952 = vst [vmem:[%s3939] ss:$4 sm:$0xff] %v3900
          %3953 = vst [vmem:[%s3941] ss:$4 sm:$0xff] %v3901
          %3954 = vst [vmem:[%s3943] ss:$4 sm:$0xff] %v3903
          %v3955 = vld [vmem:[#allocation1] sm:$0xff]
          %v3956 = vld [vmem:[#allocation1 + $0x20] sm:$0xff]
          %3957 = vst [vmem:[#allocation1] ss:$4 sm:$0xff] %v3904
          %3958 = vst [vmem:[%s3931] ss:$4 sm:$0xff] %v3905
          %3959 = vst [vmem:[%s3933] ss:$4 sm:$0xff] %v3907
          %3960 = vst [vmem:[%s3935] ss:$4 sm:$0xff] %v3908
          %3961 = vst [vmem:[%s3937] ss:$4 sm:$0xff] %v3909
          %3962 = vst [vmem:[%s3939] ss:$4 sm:$0xff] %v3911
          %3963 = vst [vmem:[%s3941] ss:$4 sm:$0xff] %v3912
          %3964 = vst [vmem:[%s3943] ss:$4 sm:$0xff] %v3913
          %v3965 = vld [vmem:[#allocation1] sm:$0xff]
          %v3966 = vld [vmem:[#allocation1 + $0x20] sm:$0xff]
          %3967 = vst [vmem:[#allocation1] ss:$4 sm:$0xff] %v3915
          %3968 = vst [vmem:[%s3931] ss:$4 sm:$0xff] %v3916
          %3969 = vst [vmem:[%s3933] ss:$4 sm:$0xff] %v3917
          %3970 = vst [vmem:[%s3935] ss:$4 sm:$0xff] %v3919
          %3971 = vst [vmem:[%s3937] ss:$4 sm:$0xff] %v3920
          %3972 = vst [vmem:[%s3939] ss:$4 sm:$0xff] %v3921
          %3973 = vst [vmem:[%s3941] ss:$4 sm:$0xff] %v3923
          %3974 = vst [vmem:[%s3943] ss:$4 sm:$0xff] %v3924
          %v3975 = vld [vmem:[#allocation1] sm:$0xff]
          %v3976 = vld [vmem:[#allocation1 + $0x20] sm:$0xff]
          %3977 = vst [vmem:[#allocation1] ss:$4 sm:$0xff] %v3925
          %3978 = vst [vmem:[%s3931] ss:$4 sm:$0xff] %v3927
          %3979 = vst [vmem:[%s3933] ss:$4 sm:$0xff] %v3928
          %3980 = vst [vmem:[%s3935] ss:$4 sm:$0xff] %v3929
          %v3981 = vld [vmem:[#allocation1] sm:$0xff]
          %3991 = vst [vmem:[#allocation3 + $0x8] sm:$0xf] %v3945
          %3992 = vst [vmem:[#allocation3 + $0x2c] sm:$0xf] %v3946
          %3993 = vst [vmem:[#allocation3 + $0x50] sm:$0xf] %v3955
          %3994 = vst [vmem:[#allocation3 + $0x74] sm:$0xf] %v3956
          %3995 = vst [vmem:[#allocation3 + $0x98] sm:$0xf] %v3965
          %3996 = vst [vmem:[#allocation3 + $0xbc] sm:$0xf] %v3966
          %3997 = vst [vmem:[#allocation3 + $0xe0] sm:$0xf] %v3975
          %3998 = vst [vmem:[#allocation3 + $0x104] sm:$0xf] %v3976
          %3999 = vst [vmem:[#allocation3 + $0x128] sm:$0xf] %v3981
          %v4002 = vrot.slane %v3234, 3
          %v4003 = vrot.slane %v3242, 3
          %v4006 = vsel %vm483, %v3234, %v4002
          %v4007 = vsel %vm487, %v3234, %v4002
          %v4009 = vrot.slane %v4007, 1
          %v4010 = vsel %vm491, %v3234, %v4002
          %v4012 = vrot.slane %v4010, 2
          %v4015 = vsel %vm483, %v3242, %v4003
          %v4016 = vsel %vm487, %v3242, %v4003
          %v4018 = vrot.slane %v4016, 1
          %v4019 = vsel %vm491, %v3242, %v4003
          %v4021 = vrot.slane %v4019, 2
          %4022 = vst [vmem:[#allocation1] ss:$4 sm:$0xff] %v3279
          %s4023 = scalar_lea.vmem [#allocation1], 1
          %4024 = vst [vmem:[%s4023] ss:$4 sm:$0xff] %v3282
          %s4025 = scalar_lea.vmem [#allocation1], 2
          %4026 = vst [vmem:[%s4025] ss:$4 sm:$0xff] %v3285
          %s4027 = scalar_lea.vmem [#allocation1], 3
          %4028 = vst [vmem:[%s4027] ss:$4 sm:$0xff] %v3288
          %s4029 = scalar_lea.vmem [#allocation1], 32
          %4030 = vst [vmem:[%s4029] ss:$4 sm:$0xff] %v3291
          %s4031 = scalar_lea.vmem [#allocation1], 33
          %4032 = vst [vmem:[%s4031] ss:$4 sm:$0xff] %v3294
          %s4033 = scalar_lea.vmem [#allocation1], 34
          %4034 = vst [vmem:[%s4033] ss:$4 sm:$0xff] %v3297
          %s4035 = scalar_lea.vmem [#allocation1], 35
          %4036 = vst [vmem:[%s4035] ss:$4 sm:$0xff] %v3300
          %v4037 = vld [vmem:[#allocation1] sm:$0xff]
          %v4038 = vld [vmem:[#allocation1 + $0x20] sm:$0xff]
          %4039 = vst [vmem:[#allocation1] ss:$4 sm:$0xff] %v3303
          %4040 = vst [vmem:[%s4023] ss:$4 sm:$0xff] %v3306
          %4041 = vst [vmem:[%s4025] ss:$4 sm:$0xff] %v3309
          %4042 = vst [vmem:[%s4027] ss:$4 sm:$0xff] %v3312
          %4043 = vst [vmem:[%s4029] ss:$4 sm:$0xff] %v3315
          %4044 = vst [vmem:[%s4031] ss:$4 sm:$0xff] %v3318
          %4045 = vst [vmem:[%s4033] ss:$4 sm:$0xff] %v3321
          %4046 = vst [vmem:[%s4035] ss:$4 sm:$0xff] %v4006
          %v4047 = vld [vmem:[#allocation1] sm:$0xff]
          %v4048 = vld [vmem:[#allocation1 + $0x20] sm:$0xff]
          %4050 = vst [vmem:[#allocation1] ss:$4 sm:$0xff] %v4009
          %4052 = vst [vmem:[%s4023] ss:$4 sm:$0xff] %v4012
          %4053 = vst [vmem:[%s4025] ss:$4 sm:$0xff] %v3333
          %4054 = vst [vmem:[%s4027] ss:$4 sm:$0xff] %v3336
          %4055 = vst [vmem:[%s4029] ss:$4 sm:$0xff] %v3339
          %4056 = vst [vmem:[%s4031] ss:$4 sm:$0xff] %v3342
          %4057 = vst [vmem:[%s4033] ss:$4 sm:$0xff] %v3345
          %4058 = vst [vmem:[%s4035] ss:$4 sm:$0xff] %v3348
          %v4059 = vld [vmem:[#allocation1] sm:$0xff]
          %v4060 = vld [vmem:[#allocation1 + $0x20] sm:$0xff]
          %4061 = vst [vmem:[#allocation1] ss:$4 sm:$0xff] %v3351
          %4062 = vst [vmem:[%s4023] ss:$4 sm:$0xff] %v3354
          %4063 = vst [vmem:[%s4025] ss:$4 sm:$0xff] %v3357
          %4064 = vst [vmem:[%s4027] ss:$4 sm:$0xff] %v3360
          %4065 = vst [vmem:[%s4029] ss:$4 sm:$0xff] %v3363
          %4066 = vst [vmem:[%s4031] ss:$4 sm:$0xff] %v3366
          %4067 = vst [vmem:[%s4033] ss:$4 sm:$0xff] %v3369
          %4068 = vst [vmem:[%s4035] ss:$4 sm:$0xff] %v3372
          %v4069 = vld [vmem:[#allocation1] sm:$0xff]
          %v4070 = vld [vmem:[#allocation1 + $0x20] sm:$0xff]
          %4071 = vst [vmem:[#allocation1] ss:$4 sm:$0xff] %v3375
          %4072 = vst [vmem:[%s4023] ss:$4 sm:$0xff] %v4015
          %4074 = vst [vmem:[%s4025] ss:$4 sm:$0xff] %v4018
          %4076 = vst [vmem:[%s4027] ss:$4 sm:$0xff] %v4021
          %v4077 = vld [vmem:[#allocation1] sm:$0xff]
          %4087 = vst [vmem:[#allocation3 + $0xc] sm:$0xf] %v4037
          %4088 = vst [vmem:[#allocation3 + $0x30] sm:$0xf] %v4038
          %4089 = vst [vmem:[#allocation3 + $0x54] sm:$0xf] %v4047
          %4090 = vst [vmem:[#allocation3 + $0x78] sm:$0xf] %v4048
          %4091 = vst [vmem:[#allocation3 + $0x9c] sm:$0xf] %v4059
          %4092 = vst [vmem:[#allocation3 + $0xc0] sm:$0xf] %v4060
          %4093 = vst [vmem:[#allocation3 + $0xe4] sm:$0xf] %v4069
          %4094 = vst [vmem:[#allocation3 + $0x108] sm:$0xf] %v4070
          %4095 = vst [vmem:[#allocation3 + $0x12c] sm:$0xf] %v4077
          %v4096 = vsel %vm688, %v3234, %v4002
          %v4098 = vrot.slane %v4096, 3
          %v4099 = vsel %vm688, %v3242, %v4003
          %v4101 = vrot.slane %v4099, 3
          %v4102 = vshrl.u32 %v4006, 16
          %v4104 = vrot.slane %v4102, 7
          %v4105 = vrot.slane %v4104, 1
          %v4106 = vshll.u32 %v4009, 16
          %v4108 = vsel %vm739, %v4105, %v4106
          %v4109 = vshrl.u32 %v4009, 16
          %v4111 = vrot.slane %v4109, 7
          %v4112 = vrot.slane %v4111, 1
          %v4113 = vshll.u32 %v4012, 16
          %v4115 = vsel %vm739, %v4112, %v4113
          %v4116 = vshrl.u32 %v4012, 16
          %v4118 = vrot.slane %v4116, 7
          %v4119 = vrot.slane %v4118, 1
          %v4121 = vshll.u32 %v4098, 16
          %v4123 = vsel %vm739, %v4119, %v4121
          %v4124 = vshrl.u32 %v4015, 16
          %v4126 = vrot.slane %v4124, 7
          %v4127 = vrot.slane %v4126, 1
          %v4128 = vshll.u32 %v4018, 16
          %v4130 = vsel %vm739, %v4127, %v4128
          %v4131 = vshrl.u32 %v4018, 16
          %v4133 = vrot.slane %v4131, 7
          %v4134 = vrot.slane %v4133, 1
          %v4135 = vshll.u32 %v4021, 16
          %v4137 = vsel %vm739, %v4134, %v4135
          %v4138 = vshrl.u32 %v4021, 16
          %v4140 = vrot.slane %v4138, 7
          %v4141 = vrot.slane %v4140, 1
          %v4143 = vshll.u32 %v4101, 16
          %v4145 = vsel %vm739, %v4141, %v4143
          %4146 = vst [vmem:[#allocation1] ss:$4 sm:$0xff] %v3534
          %s4147 = scalar_lea.vmem [#allocation1], 1
          %4148 = vst [vmem:[%s4147] ss:$4 sm:$0xff] %v3541
          %s4149 = scalar_lea.vmem [#allocation1], 2
          %4150 = vst [vmem:[%s4149] ss:$4 sm:$0xff] %v3549
          %s4151 = scalar_lea.vmem [#allocation1], 3
          %4152 = vst [vmem:[%s4151] ss:$4 sm:$0xff] %v3556
          %s4153 = scalar_lea.vmem [#allocation1], 32
          %4154 = vst [vmem:[%s4153] ss:$4 sm:$0xff] %v3563
          %s4155 = scalar_lea.vmem [#allocation1], 33
          %4156 = vst [vmem:[%s4155] ss:$4 sm:$0xff] %v3571
          %s4157 = scalar_lea.vmem [#allocation1], 34
          %4158 = vst [vmem:[%s4157] ss:$4 sm:$0xff] %v3578
          %s4159 = scalar_lea.vmem [#allocation1], 35
          %4160 = vst [vmem:[%s4159] ss:$4 sm:$0xff] %v3585
          %v4161 = vld [vmem:[#allocation1] sm:$0xff]
          %v4162 = vld [vmem:[#allocation1 + $0x20] sm:$0xff]
          %4163 = vst [vmem:[#allocation1] ss:$4 sm:$0xff] %v3593
          %4164 = vst [vmem:[%s4147] ss:$4 sm:$0xff] %v3600
          %4165 = vst [vmem:[%s4149] ss:$4 sm:$0xff] %v3607
          %4166 = vst [vmem:[%s4151] ss:$4 sm:$0xff] %v3615
          %4167 = vst [vmem:[%s4153] ss:$4 sm:$0xff] %v3622
          %4168 = vst [vmem:[%s4155] ss:$4 sm:$0xff] %v3629
          %4169 = vst [vmem:[%s4157] ss:$4 sm:$0xff] %v3637
          %4171 = vst [vmem:[%s4159] ss:$4 sm:$0xff] %v4108
          %v4172 = vld [vmem:[#allocation1] sm:$0xff]
          %v4173 = vld [vmem:[#allocation1 + $0x20] sm:$0xff]
          %4175 = vst [vmem:[#allocation1] ss:$4 sm:$0xff] %v4115
          %4177 = vst [vmem:[%s4147] ss:$4 sm:$0xff] %v4123
          %4178 = vst [vmem:[%s4149] ss:$4 sm:$0xff] %v3666
          %4179 = vst [vmem:[%s4151] ss:$4 sm:$0xff] %v3673
          %4180 = vst [vmem:[%s4153] ss:$4 sm:$0xff] %v3681
          %4181 = vst [vmem:[%s4155] ss:$4 sm:$0xff] %v3688
          %4182 = vst [vmem:[%s4157] ss:$4 sm:$0xff] %v3695
          %4183 = vst [vmem:[%s4159] ss:$4 sm:$0xff] %v3703
          %v4184 = vld [vmem:[#allocation1] sm:$0xff]
          %v4185 = vld [vmem:[#allocation1 + $0x20] sm:$0xff]
          %4186 = vst [vmem:[#allocation1] ss:$4 sm:$0xff] %v3710
          %4187 = vst [vmem:[%s4147] ss:$4 sm:$0xff] %v3717
          %4188 = vst [vmem:[%s4149] ss:$4 sm:$0xff] %v3725
          %4189 = vst [vmem:[%s4151] ss:$4 sm:$0xff] %v3732
          %4190 = vst [vmem:[%s4153] ss:$4 sm:$0xff] %v3739
          %4191 = vst [vmem:[%s4155] ss:$4 sm:$0xff] %v3747
          %4192 = vst [vmem:[%s4157] ss:$4 sm:$0xff] %v3754
          %4193 = vst [vmem:[%s4159] ss:$4 sm:$0xff] %v3761
          %v4194 = vld [vmem:[#allocation1] sm:$0xff]
          %v4195 = vld [vmem:[#allocation1 + $0x20] sm:$0xff]
          %4196 = vst [vmem:[#allocation1] ss:$4 sm:$0xff] %v3769
          %4198 = vst [vmem:[%s4147] ss:$4 sm:$0xff] %v4130
          %4200 = vst [vmem:[%s4149] ss:$4 sm:$0xff] %v4137
          %4202 = vst [vmem:[%s4151] ss:$4 sm:$0xff] %v4145
          %v4203 = vld [vmem:[#allocation1] sm:$0xff]
          %4213 = vst [vmem:[#allocation3 + $0x10] sm:$0xf] %v4161
          %4214 = vst [vmem:[#allocation3 + $0x34] sm:$0xf] %v4162
          %4215 = vst [vmem:[#allocation3 + $0x58] sm:$0xf] %v4172
          %4216 = vst [vmem:[#allocation3 + $0x7c] sm:$0xf] %v4173
          %4217 = vst [vmem:[#allocation3 + $0xa0] sm:$0xf] %v4184
          %4218 = vst [vmem:[#allocation3 + $0xc4] sm:$0xf] %v4185
          %4219 = vst [vmem:[#allocation3 + $0xe8] sm:$0xf] %v4194
          %4220 = vst [vmem:[#allocation3 + $0x10c] sm:$0xf] %v4195
          %4221 = vst [vmem:[#allocation3 + $0x130] sm:$0xf] %v4203
          %4222 = vst [vmem:[#allocation1] sm:$0xff] %v3229
          %s4223 = scalar_lea.vmem [#allocation1], 1
          %v4224 = vld [vmem:[%s4223] ss:$4 sm:$0xff]
          %s4225 = scalar_lea.vmem [#allocation1], 2
          %v4226 = vld [vmem:[%s4225] ss:$4 sm:$0xff]
          %s4227 = scalar_lea.vmem [#allocation1], 3
          %v4228 = vld [vmem:[%s4227] ss:$4 sm:$0xff]
          %4229 = vst [vmem:[#allocation1 + $0x20] sm:$0xff] %v3230
          %s4230 = scalar_lea.vmem [#allocation1], 33
          %v4231 = vld [vmem:[%s4230] ss:$4 sm:$0xff]
          %s4232 = scalar_lea.vmem [#allocation1], 34
          %v4233 = vld [vmem:[%s4232] ss:$4 sm:$0xff]
          %s4234 = scalar_lea.vmem [#allocation1], 35
          %v4235 = vld [vmem:[%s4234] ss:$4 sm:$0xff]
          %4236 = vst [vmem:[#allocation1] sm:$0xff] %v3231
          %v4237 = vld [vmem:[%s4223] ss:$4 sm:$0xff]
          %v4238 = vld [vmem:[%s4225] ss:$4 sm:$0xff]
          %v4239 = vld [vmem:[%s4227] ss:$4 sm:$0xff]
          %4240 = vst [vmem:[#allocation1 + $0x20] sm:$0xff] %v3232
          %v4241 = vld [vmem:[%s4230] ss:$4 sm:$0xff]
          %v4242 = vld [vmem:[%s4232] ss:$4 sm:$0xff]
          %v4243 = vld [vmem:[%s4234] ss:$4 sm:$0xff]
          %4244 = vst [vmem:[#allocation1] sm:$0xff] %v3233
          %v4245 = vld [vmem:[%s4223] ss:$4 sm:$0xff]
          %v4246 = vld [vmem:[%s4225] ss:$4 sm:$0xff]
          %v4247 = vld [vmem:[%s4227] ss:$4 sm:$0xff]
          %4248 = vst [vmem:[#allocation1 + $0x20] sm:$0xff] %v3234
          %v4249 = vld [vmem:[%s4230] ss:$4 sm:$0xff]
          %v4250 = vld [vmem:[%s4232] ss:$4 sm:$0xff]
          %v4251 = vld [vmem:[%s4234] ss:$4 sm:$0xff]
          %4252 = vst [vmem:[#allocation1] sm:$0xff] %v3237
          %v4253 = vld [vmem:[%s4223] ss:$4 sm:$0xff]
          %v4254 = vld [vmem:[%s4225] ss:$4 sm:$0xff]
          %v4255 = vld [vmem:[%s4227] ss:$4 sm:$0xff]
          %4256 = vst [vmem:[#allocation1 + $0x20] sm:$0xff] %v3238
          %v4257 = vld [vmem:[%s4230] ss:$4 sm:$0xff]
          %v4258 = vld [vmem:[%s4232] ss:$4 sm:$0xff]
          %v4259 = vld [vmem:[%s4234] ss:$4 sm:$0xff]
          %4260 = vst [vmem:[#allocation1] sm:$0xff] %v3239
          %v4261 = vld [vmem:[%s4223] ss:$4 sm:$0xff]
          %v4262 = vld [vmem:[%s4225] ss:$4 sm:$0xff]
          %v4263 = vld [vmem:[%s4227] ss:$4 sm:$0xff]
          %4264 = vst [vmem:[#allocation1 + $0x20] sm:$0xff] %v3240
          %v4265 = vld [vmem:[%s4230] ss:$4 sm:$0xff]
          %v4266 = vld [vmem:[%s4232] ss:$4 sm:$0xff]
          %v4267 = vld [vmem:[%s4234] ss:$4 sm:$0xff]
          %4268 = vst [vmem:[#allocation1] sm:$0xff] %v3241
          %v4269 = vld [vmem:[%s4223] ss:$4 sm:$0xff]
          %v4270 = vld [vmem:[%s4225] ss:$4 sm:$0xff]
          %v4271 = vld [vmem:[%s4227] ss:$4 sm:$0xff]
          %4272 = vst [vmem:[#allocation1 + $0x20] sm:$0xff] %v3242
          %v4273 = vld [vmem:[%s4230] ss:$4 sm:$0xff]
          %v4274 = vld [vmem:[%s4232] ss:$4 sm:$0xff]
          %v4275 = vld [vmem:[%s4234] ss:$4 sm:$0xff]
          %4276 = vst [vmem:[#allocation1] ss:$4 sm:$0xff] %v4224
          %s4277 = scalar_lea.vmem [#allocation1], 1
          %4278 = vst [vmem:[%s4277] ss:$4 sm:$0xff] %v4226
          %s4279 = scalar_lea.vmem [#allocation1], 2
          %4280 = vst [vmem:[%s4279] ss:$4 sm:$0xff] %v4228
          %s4281 = scalar_lea.vmem [#allocation1], 3
          %4282 = vst [vmem:[%s4281] ss:$4 sm:$0xff] %v4231
          %s4283 = scalar_lea.vmem [#allocation1], 32
          %4284 = vst [vmem:[%s4283] ss:$4 sm:$0xff] %v4233
          %s4285 = scalar_lea.vmem [#allocation1], 33
          %4286 = vst [vmem:[%s4285] ss:$4 sm:$0xff] %v4235
          %s4287 = scalar_lea.vmem [#allocation1], 34
          %4288 = vst [vmem:[%s4287] ss:$4 sm:$0xff] %v4237
          %s4289 = scalar_lea.vmem [#allocation1], 35
          %4290 = vst [vmem:[%s4289] ss:$4 sm:$0xff] %v4238
          %v4291 = vld [vmem:[#allocation1] sm:$0xff]
          %v4292 = vld [vmem:[#allocation1 + $0x20] sm:$0xff]
          %4293 = vst [vmem:[#allocation1] ss:$4 sm:$0xff] %v4239
          %4294 = vst [vmem:[%s4277] ss:$4 sm:$0xff] %v4241
          %4295 = vst [vmem:[%s4279] ss:$4 sm:$0xff] %v4242
          %4296 = vst [vmem:[%s4281] ss:$4 sm:$0xff] %v4243
          %4297 = vst [vmem:[%s4283] ss:$4 sm:$0xff] %v4245
          %4298 = vst [vmem:[%s4285] ss:$4 sm:$0xff] %v4246
          %4299 = vst [vmem:[%s4287] ss:$4 sm:$0xff] %v4247
          %4300 = vst [vmem:[%s4289] ss:$4 sm:$0xff] %v4249
          %v4301 = vld [vmem:[#allocation1] sm:$0xff]
          %v4302 = vld [vmem:[#allocation1 + $0x20] sm:$0xff]
          %4303 = vst [vmem:[#allocation1] ss:$4 sm:$0xff] %v4250
          %4304 = vst [vmem:[%s4277] ss:$4 sm:$0xff] %v4251
          %4305 = vst [vmem:[%s4279] ss:$4 sm:$0xff] %v4253
          %4306 = vst [vmem:[%s4281] ss:$4 sm:$0xff] %v4254
          %4307 = vst [vmem:[%s4283] ss:$4 sm:$0xff] %v4255
          %4308 = vst [vmem:[%s4285] ss:$4 sm:$0xff] %v4257
          %4309 = vst [vmem:[%s4287] ss:$4 sm:$0xff] %v4258
          %4310 = vst [vmem:[%s4289] ss:$4 sm:$0xff] %v4259
          %v4311 = vld [vmem:[#allocation1] sm:$0xff]
          %v4312 = vld [vmem:[#allocation1 + $0x20] sm:$0xff]
          %4313 = vst [vmem:[#allocation1] ss:$4 sm:$0xff] %v4261
          %4314 = vst [vmem:[%s4277] ss:$4 sm:$0xff] %v4262
          %4315 = vst [vmem:[%s4279] ss:$4 sm:$0xff] %v4263
          %4316 = vst [vmem:[%s4281] ss:$4 sm:$0xff] %v4265
          %4317 = vst [vmem:[%s4283] ss:$4 sm:$0xff] %v4266
          %4318 = vst [vmem:[%s4285] ss:$4 sm:$0xff] %v4267
          %4319 = vst [vmem:[%s4287] ss:$4 sm:$0xff] %v4269
          %4320 = vst [vmem:[%s4289] ss:$4 sm:$0xff] %v4270
          %v4321 = vld [vmem:[#allocation1] sm:$0xff]
          %v4322 = vld [vmem:[#allocation1 + $0x20] sm:$0xff]
          %4323 = vst [vmem:[#allocation1] ss:$4 sm:$0xff] %v4271
          %4324 = vst [vmem:[%s4277] ss:$4 sm:$0xff] %v4273
          %4325 = vst [vmem:[%s4279] ss:$4 sm:$0xff] %v4274
          %4326 = vst [vmem:[%s4281] ss:$4 sm:$0xff] %v4275
          %v4327 = vld [vmem:[#allocation1] sm:$0xff]
          %4337 = vst [vmem:[#allocation3 + $0x14] sm:$0xf] %v4291
          %4338 = vst [vmem:[#allocation3 + $0x38] sm:$0xf] %v4292
          %4339 = vst [vmem:[#allocation3 + $0x5c] sm:$0xf] %v4301
          %4340 = vst [vmem:[#allocation3 + $0x80] sm:$0xf] %v4302
          %4341 = vst [vmem:[#allocation3 + $0xa4] sm:$0xf] %v4311
          %4342 = vst [vmem:[#allocation3 + $0xc8] sm:$0xf] %v4312
          %4343 = vst [vmem:[#allocation3 + $0xec] sm:$0xf] %v4321
          %4344 = vst [vmem:[#allocation3 + $0x110] sm:$0xf] %v4322
          %4345 = vst [vmem:[#allocation3 + $0x134] sm:$0xf] %v4327
          %v4348 = vrot.slane %v3235, 3
          %v4349 = vrot.slane %v3243, 3
          %v4352 = vsel %vm483, %v3235, %v4348
          %v4353 = vsel %vm487, %v3235, %v4348
          %v4355 = vrot.slane %v4353, 1
          %v4356 = vsel %vm491, %v3235, %v4348
          %v4358 = vrot.slane %v4356, 2
          %v4361 = vsel %vm483, %v3243, %v4349
          %v4362 = vsel %vm487, %v3243, %v4349
          %v4364 = vrot.slane %v4362, 1
          %v4365 = vsel %vm491, %v3243, %v4349
          %v4367 = vrot.slane %v4365, 2
          %4368 = vst [vmem:[#allocation1] ss:$4 sm:$0xff] %v3288
          %s4369 = scalar_lea.vmem [#allocation1], 1
          %4370 = vst [vmem:[%s4369] ss:$4 sm:$0xff] %v3291
          %s4371 = scalar_lea.vmem [#allocation1], 2
          %4372 = vst [vmem:[%s4371] ss:$4 sm:$0xff] %v3294
          %s4373 = scalar_lea.vmem [#allocation1], 3
          %4374 = vst [vmem:[%s4373] ss:$4 sm:$0xff] %v3297
          %s4375 = scalar_lea.vmem [#allocation1], 32
          %4376 = vst [vmem:[%s4375] ss:$4 sm:$0xff] %v3300
          %s4377 = scalar_lea.vmem [#allocation1], 33
          %4378 = vst [vmem:[%s4377] ss:$4 sm:$0xff] %v3303
          %s4379 = scalar_lea.vmem [#allocation1], 34
          %4380 = vst [vmem:[%s4379] ss:$4 sm:$0xff] %v3306
          %s4381 = scalar_lea.vmem [#allocation1], 35
          %4382 = vst [vmem:[%s4381] ss:$4 sm:$0xff] %v3309
          %v4383 = vld [vmem:[#allocation1] sm:$0xff]
          %v4384 = vld [vmem:[#allocation1 + $0x20] sm:$0xff]
          %4385 = vst [vmem:[#allocation1] ss:$4 sm:$0xff] %v3312
          %4386 = vst [vmem:[%s4369] ss:$4 sm:$0xff] %v3315
          %4387 = vst [vmem:[%s4371] ss:$4 sm:$0xff] %v3318
          %4388 = vst [vmem:[%s4373] ss:$4 sm:$0xff] %v3321
          %4389 = vst [vmem:[%s4375] ss:$4 sm:$0xff] %v4006
          %4390 = vst [vmem:[%s4377] ss:$4 sm:$0xff] %v4009
          %4391 = vst [vmem:[%s4379] ss:$4 sm:$0xff] %v4012
          %4392 = vst [vmem:[%s4381] ss:$4 sm:$0xff] %v4352
          %v4393 = vld [vmem:[#allocation1] sm:$0xff]
          %v4394 = vld [vmem:[#allocation1 + $0x20] sm:$0xff]
          %4396 = vst [vmem:[#allocation1] ss:$4 sm:$0xff] %v4355
          %4398 = vst [vmem:[%s4369] ss:$4 sm:$0xff] %v4358
          %4399 = vst [vmem:[%s4371] ss:$4 sm:$0xff] %v3342
          %4400 = vst [vmem:[%s4373] ss:$4 sm:$0xff] %v3345
          %4401 = vst [vmem:[%s4375] ss:$4 sm:$0xff] %v3348
          %4402 = vst [vmem:[%s4377] ss:$4 sm:$0xff] %v3351
          %4403 = vst [vmem:[%s4379] ss:$4 sm:$0xff] %v3354
          %4404 = vst [vmem:[%s4381] ss:$4 sm:$0xff] %v3357
          %v4405 = vld [vmem:[#allocation1] sm:$0xff]
          %v4406 = vld [vmem:[#allocation1 + $0x20] sm:$0xff]
          %4407 = vst [vmem:[#allocation1] ss:$4 sm:$0xff] %v3360
          %4408 = vst [vmem:[%s4369] ss:$4 sm:$0xff] %v3363
          %4409 = vst [vmem:[%s4371] ss:$4 sm:$0xff] %v3366
          %4410 = vst [vmem:[%s4373] ss:$4 sm:$0xff] %v3369
          %4411 = vst [vmem:[%s4375] ss:$4 sm:$0xff] %v3372
          %4412 = vst [vmem:[%s4377] ss:$4 sm:$0xff] %v3375
          %4413 = vst [vmem:[%s4379] ss:$4 sm:$0xff] %v4015
          %4414 = vst [vmem:[%s4381] ss:$4 sm:$0xff] %v4018
          %v4415 = vld [vmem:[#allocation1] sm:$0xff]
          %v4416 = vld [vmem:[#allocation1 + $0x20] sm:$0xff]
          %4417 = vst [vmem:[#allocation1] ss:$4 sm:$0xff] %v4021
          %4418 = vst [vmem:[%s4369] ss:$4 sm:$0xff] %v4361
          %4420 = vst [vmem:[%s4371] ss:$4 sm:$0xff] %v4364
          %4422 = vst [vmem:[%s4373] ss:$4 sm:$0xff] %v4367
          %v4423 = vld [vmem:[#allocation1] sm:$0xff]
          %4433 = vst [vmem:[#allocation3 + $0x18] sm:$0xf] %v4383
          %4434 = vst [vmem:[#allocation3 + $0x3c] sm:$0xf] %v4384
          %4435 = vst [vmem:[#allocation3 + $0x60] sm:$0xf] %v4393
          %4436 = vst [vmem:[#allocation3 + $0x84] sm:$0xf] %v4394
          %4437 = vst [vmem:[#allocation3 + $0xa8] sm:$0xf] %v4405
          %4438 = vst [vmem:[#allocation3 + $0xcc] sm:$0xf] %v4406
          %4439 = vst [vmem:[#allocation3 + $0xf0] sm:$0xf] %v4415
          %4440 = vst [vmem:[#allocation3 + $0x114] sm:$0xf] %v4416
          %4441 = vst [vmem:[#allocation3 + $0x138] sm:$0xf] %v4423
          %v4442 = vsel %vm688, %v3235, %v4348
          %v4444 = vrot.slane %v4442, 3
          %v4445 = vsel %vm688, %v3243, %v4349
          %v4447 = vrot.slane %v4445, 3
          %v4448 = vshrl.u32 %v4352, 16
          %v4450 = vrot.slane %v4448, 7
          %v4451 = vrot.slane %v4450, 1
          %v4452 = vshll.u32 %v4355, 16
          %v4454 = vsel %vm739, %v4451, %v4452
          %v4455 = vshrl.u32 %v4355, 16
          %v4457 = vrot.slane %v4455, 7
          %v4458 = vrot.slane %v4457, 1
          %v4459 = vshll.u32 %v4358, 16
          %v4461 = vsel %vm739, %v4458, %v4459
          %v4462 = vshrl.u32 %v4358, 16
          %v4464 = vrot.slane %v4462, 7
          %v4465 = vrot.slane %v4464, 1
          %v4467 = vshll.u32 %v4444, 16
          %v4469 = vsel %vm739, %v4465, %v4467
          %v4470 = vshrl.u32 %v4361, 16
          %v4472 = vrot.slane %v4470, 7
          %v4473 = vrot.slane %v4472, 1
          %v4474 = vshll.u32 %v4364, 16
          %v4476 = vsel %vm739, %v4473, %v4474
          %v4477 = vshrl.u32 %v4364, 16
          %v4479 = vrot.slane %v4477, 7
          %v4480 = vrot.slane %v4479, 1
          %v4481 = vshll.u32 %v4367, 16
          %v4483 = vsel %vm739, %v4480, %v4481
          %v4484 = vshrl.u32 %v4367, 16
          %v4486 = vrot.slane %v4484, 7
          %v4487 = vrot.slane %v4486, 1
          %v4489 = vshll.u32 %v4447, 16
          %v4491 = vsel %vm739, %v4487, %v4489
          %4492 = vst [vmem:[#allocation1] ss:$4 sm:$0xff] %v3556
          %s4493 = scalar_lea.vmem [#allocation1], 1
          %4494 = vst [vmem:[%s4493] ss:$4 sm:$0xff] %v3563
          %s4495 = scalar_lea.vmem [#allocation1], 2
          %4496 = vst [vmem:[%s4495] ss:$4 sm:$0xff] %v3571
          %s4497 = scalar_lea.vmem [#allocation1], 3
          %4498 = vst [vmem:[%s4497] ss:$4 sm:$0xff] %v3578
          %s4499 = scalar_lea.vmem [#allocation1], 32
          %4500 = vst [vmem:[%s4499] ss:$4 sm:$0xff] %v3585
          %s4501 = scalar_lea.vmem [#allocation1], 33
          %4502 = vst [vmem:[%s4501] ss:$4 sm:$0xff] %v3593
          %s4503 = scalar_lea.vmem [#allocation1], 34
          %4504 = vst [vmem:[%s4503] ss:$4 sm:$0xff] %v3600
          %s4505 = scalar_lea.vmem [#allocation1], 35
          %4506 = vst [vmem:[%s4505] ss:$4 sm:$0xff] %v3607
          %v4507 = vld [vmem:[#allocation1] sm:$0xff]
          %v4508 = vld [vmem:[#allocation1 + $0x20] sm:$0xff]
          %4509 = vst [vmem:[#allocation1] ss:$4 sm:$0xff] %v3615
          %4510 = vst [vmem:[%s4493] ss:$4 sm:$0xff] %v3622
          %4511 = vst [vmem:[%s4495] ss:$4 sm:$0xff] %v3629
          %4512 = vst [vmem:[%s4497] ss:$4 sm:$0xff] %v3637
          %4513 = vst [vmem:[%s4499] ss:$4 sm:$0xff] %v4108
          %4514 = vst [vmem:[%s4501] ss:$4 sm:$0xff] %v4115
          %4515 = vst [vmem:[%s4503] ss:$4 sm:$0xff] %v4123
          %4517 = vst [vmem:[%s4505] ss:$4 sm:$0xff] %v4454
          %v4518 = vld [vmem:[#allocation1] sm:$0xff]
          %v4519 = vld [vmem:[#allocation1 + $0x20] sm:$0xff]
          %4521 = vst [vmem:[#allocation1] ss:$4 sm:$0xff] %v4461
          %4523 = vst [vmem:[%s4493] ss:$4 sm:$0xff] %v4469
          %4524 = vst [vmem:[%s4495] ss:$4 sm:$0xff] %v3688
          %4525 = vst [vmem:[%s4497] ss:$4 sm:$0xff] %v3695
          %4526 = vst [vmem:[%s4499] ss:$4 sm:$0xff] %v3703
          %4527 = vst [vmem:[%s4501] ss:$4 sm:$0xff] %v3710
          %4528 = vst [vmem:[%s4503] ss:$4 sm:$0xff] %v3717
          %4529 = vst [vmem:[%s4505] ss:$4 sm:$0xff] %v3725
          %v4530 = vld [vmem:[#allocation1] sm:$0xff]
          %v4531 = vld [vmem:[#allocation1 + $0x20] sm:$0xff]
          %4532 = vst [vmem:[#allocation1] ss:$4 sm:$0xff] %v3732
          %4533 = vst [vmem:[%s4493] ss:$4 sm:$0xff] %v3739
          %4534 = vst [vmem:[%s4495] ss:$4 sm:$0xff] %v3747
          %4535 = vst [vmem:[%s4497] ss:$4 sm:$0xff] %v3754
          %4536 = vst [vmem:[%s4499] ss:$4 sm:$0xff] %v3761
          %4537 = vst [vmem:[%s4501] ss:$4 sm:$0xff] %v3769
          %4538 = vst [vmem:[%s4503] ss:$4 sm:$0xff] %v4130
          %4539 = vst [vmem:[%s4505] ss:$4 sm:$0xff] %v4137
          %v4540 = vld [vmem:[#allocation1] sm:$0xff]
          %v4541 = vld [vmem:[#allocation1 + $0x20] sm:$0xff]
          %4542 = vst [vmem:[#allocation1] ss:$4 sm:$0xff] %v4145
          %4544 = vst [vmem:[%s4493] ss:$4 sm:$0xff] %v4476
          %4546 = vst [vmem:[%s4495] ss:$4 sm:$0xff] %v4483
          %4548 = vst [vmem:[%s4497] ss:$4 sm:$0xff] %v4491
          %v4549 = vld [vmem:[#allocation1] sm:$0xff]
          %4559 = vst [vmem:[#allocation3 + $0x1c] sm:$0xf] %v4507
          %4560 = vst [vmem:[#allocation3 + $0x40] sm:$0xf] %v4508
          %4561 = vst [vmem:[#allocation3 + $0x64] sm:$0xf] %v4518
          %4562 = vst [vmem:[#allocation3 + $0x88] sm:$0xf] %v4519
          %4563 = vst [vmem:[#allocation3 + $0xac] sm:$0xf] %v4530
          %4564 = vst [vmem:[#allocation3 + $0xd0] sm:$0xf] %v4531
          %4565 = vst [vmem:[#allocation3 + $0xf4] sm:$0xf] %v4540
          %4566 = vst [vmem:[#allocation3 + $0x118] sm:$0xf] %v4541
          %4567 = vst [vmem:[#allocation3 + $0x13c] sm:$0xf] %v4549
          %4568 = vst [vmem:[#allocation1] sm:$0xff] %v3230
          %s4569 = scalar_lea.vmem [#allocation1], 1
          %v4570 = vld [vmem:[%s4569] ss:$4 sm:$0xff]
          %s4571 = scalar_lea.vmem [#allocation1], 2
          %v4572 = vld [vmem:[%s4571] ss:$4 sm:$0xff]
          %s4573 = scalar_lea.vmem [#allocation1], 3
          %v4574 = vld [vmem:[%s4573] ss:$4 sm:$0xff]
          %4575 = vst [vmem:[#allocation1 + $0x20] sm:$0xff] %v3231
          %s4576 = scalar_lea.vmem [#allocation1], 33
          %v4577 = vld [vmem:[%s4576] ss:$4 sm:$0xff]
          %s4578 = scalar_lea.vmem [#allocation1], 34
          %v4579 = vld [vmem:[%s4578] ss:$4 sm:$0xff]
          %s4580 = scalar_lea.vmem [#allocation1], 35
          %v4581 = vld [vmem:[%s4580] ss:$4 sm:$0xff]
          %4582 = vst [vmem:[#allocation1] sm:$0xff] %v3232
          %v4583 = vld [vmem:[%s4569] ss:$4 sm:$0xff]
          %v4584 = vld [vmem:[%s4571] ss:$4 sm:$0xff]
          %v4585 = vld [vmem:[%s4573] ss:$4 sm:$0xff]
          %4586 = vst [vmem:[#allocation1 + $0x20] sm:$0xff] %v3233
          %v4587 = vld [vmem:[%s4576] ss:$4 sm:$0xff]
          %v4588 = vld [vmem:[%s4578] ss:$4 sm:$0xff]
          %v4589 = vld [vmem:[%s4580] ss:$4 sm:$0xff]
          %4590 = vst [vmem:[#allocation1] sm:$0xff] %v3234
          %v4591 = vld [vmem:[%s4569] ss:$4 sm:$0xff]
          %v4592 = vld [vmem:[%s4571] ss:$4 sm:$0xff]
          %v4593 = vld [vmem:[%s4573] ss:$4 sm:$0xff]
          %4594 = vst [vmem:[#allocation1 + $0x20] sm:$0xff] %v3235
          %v4595 = vld [vmem:[%s4576] ss:$4 sm:$0xff]
          %v4596 = vld [vmem:[%s4578] ss:$4 sm:$0xff]
          %v4597 = vld [vmem:[%s4580] ss:$4 sm:$0xff]
          %4598 = vst [vmem:[#allocation1] sm:$0xff] %v3238
          %v4599 = vld [vmem:[%s4569] ss:$4 sm:$0xff]
          %v4600 = vld [vmem:[%s4571] ss:$4 sm:$0xff]
          %v4601 = vld [vmem:[%s4573] ss:$4 sm:$0xff]
          %4602 = vst [vmem:[#allocation1 + $0x20] sm:$0xff] %v3239
          %v4603 = vld [vmem:[%s4576] ss:$4 sm:$0xff]
          %v4604 = vld [vmem:[%s4578] ss:$4 sm:$0xff]
          %v4605 = vld [vmem:[%s4580] ss:$4 sm:$0xff]
          %4606 = vst [vmem:[#allocation1] sm:$0xff] %v3240
          %v4607 = vld [vmem:[%s4569] ss:$4 sm:$0xff]
          %v4608 = vld [vmem:[%s4571] ss:$4 sm:$0xff]
          %v4609 = vld [vmem:[%s4573] ss:$4 sm:$0xff]
          %4610 = vst [vmem:[#allocation1 + $0x20] sm:$0xff] %v3241
          %v4611 = vld [vmem:[%s4576] ss:$4 sm:$0xff]
          %v4612 = vld [vmem:[%s4578] ss:$4 sm:$0xff]
          %v4613 = vld [vmem:[%s4580] ss:$4 sm:$0xff]
          %4614 = vst [vmem:[#allocation1] sm:$0xff] %v3242
          %v4615 = vld [vmem:[%s4569] ss:$4 sm:$0xff]
          %v4616 = vld [vmem:[%s4571] ss:$4 sm:$0xff]
          %v4617 = vld [vmem:[%s4573] ss:$4 sm:$0xff]
          %4618 = vst [vmem:[#allocation1 + $0x20] sm:$0xff] %v3243
          %v4619 = vld [vmem:[%s4576] ss:$4 sm:$0xff]
          %v4620 = vld [vmem:[%s4578] ss:$4 sm:$0xff]
          %v4621 = vld [vmem:[%s4580] ss:$4 sm:$0xff]
          %4622 = vst [vmem:[#allocation1] ss:$4 sm:$0xff] %v4570
          %s4623 = scalar_lea.vmem [#allocation1], 1
          %4624 = vst [vmem:[%s4623] ss:$4 sm:$0xff] %v4572
          %s4625 = scalar_lea.vmem [#allocation1], 2
          %4626 = vst [vmem:[%s4625] ss:$4 sm:$0xff] %v4574
          %s4627 = scalar_lea.vmem [#allocation1], 3
          %4628 = vst [vmem:[%s4627] ss:$4 sm:$0xff] %v4577
          %s4629 = scalar_lea.vmem [#allocation1], 32
          %4630 = vst [vmem:[%s4629] ss:$4 sm:$0xff] %v4579
          %s4631 = scalar_lea.vmem [#allocation1], 33
          %4632 = vst [vmem:[%s4631] ss:$4 sm:$0xff] %v4581
          %s4633 = scalar_lea.vmem [#allocation1], 34
          %4634 = vst [vmem:[%s4633] ss:$4 sm:$0xff] %v4583
          %s4635 = scalar_lea.vmem [#allocation1], 35
          %4636 = vst [vmem:[%s4635] ss:$4 sm:$0xff] %v4584
          %v4637 = vld [vmem:[#allocation1] sm:$0xff]
          %v4638 = vld [vmem:[#allocation1 + $0x20] sm:$0xff]
          %4639 = vst [vmem:[#allocation1] ss:$4 sm:$0xff] %v4585
          %4640 = vst [vmem:[%s4623] ss:$4 sm:$0xff] %v4587
          %4641 = vst [vmem:[%s4625] ss:$4 sm:$0xff] %v4588
          %4642 = vst [vmem:[%s4627] ss:$4 sm:$0xff] %v4589
          %4643 = vst [vmem:[%s4629] ss:$4 sm:$0xff] %v4591
          %4644 = vst [vmem:[%s4631] ss:$4 sm:$0xff] %v4592
          %4645 = vst [vmem:[%s4633] ss:$4 sm:$0xff] %v4593
          %4646 = vst [vmem:[%s4635] ss:$4 sm:$0xff] %v4595
          %v4647 = vld [vmem:[#allocation1] sm:$0xff]
          %v4648 = vld [vmem:[#allocation1 + $0x20] sm:$0xff]
          %4649 = vst [vmem:[#allocation1] ss:$4 sm:$0xff] %v4596
          %4650 = vst [vmem:[%s4623] ss:$4 sm:$0xff] %v4597
          %4651 = vst [vmem:[%s4625] ss:$4 sm:$0xff] %v4599
          %4652 = vst [vmem:[%s4627] ss:$4 sm:$0xff] %v4600
          %4653 = vst [vmem:[%s4629] ss:$4 sm:$0xff] %v4601
          %4654 = vst [vmem:[%s4631] ss:$4 sm:$0xff] %v4603
          %4655 = vst [vmem:[%s4633] ss:$4 sm:$0xff] %v4604
          %4656 = vst [vmem:[%s4635] ss:$4 sm:$0xff] %v4605
          %v4657 = vld [vmem:[#allocation1] sm:$0xff]
          %v4658 = vld [vmem:[#allocation1 + $0x20] sm:$0xff]
          %4659 = vst [vmem:[#allocation1] ss:$4 sm:$0xff] %v4607
          %4660 = vst [vmem:[%s4623] ss:$4 sm:$0xff] %v4608
          %4661 = vst [vmem:[%s4625] ss:$4 sm:$0xff] %v4609
          %4662 = vst [vmem:[%s4627] ss:$4 sm:$0xff] %v4611
          %4663 = vst [vmem:[%s4629] ss:$4 sm:$0xff] %v4612
          %4664 = vst [vmem:[%s4631] ss:$4 sm:$0xff] %v4613
          %4665 = vst [vmem:[%s4633] ss:$4 sm:$0xff] %v4615
          %4666 = vst [vmem:[%s4635] ss:$4 sm:$0xff] %v4616
          %v4667 = vld [vmem:[#allocation1] sm:$0xff]
          %v4668 = vld [vmem:[#allocation1 + $0x20] sm:$0xff]
          %4669 = vst [vmem:[#allocation1] ss:$4 sm:$0xff] %v4617
          %4670 = vst [vmem:[%s4623] ss:$4 sm:$0xff] %v4619
          %4671 = vst [vmem:[%s4625] ss:$4 sm:$0xff] %v4620
          %4672 = vst [vmem:[%s4627] ss:$4 sm:$0xff] %v4621
          %v4673 = vld [vmem:[#allocation1] sm:$0xff]
          %4683 = vst [vmem:[#allocation3 + $0x20] sm:$0xf] %v4637
          %4684 = vst [vmem:[#allocation3 + $0x44] sm:$0xf] %v4638
          %4685 = vst [vmem:[#allocation3 + $0x68] sm:$0xf] %v4647
          %4686 = vst [vmem:[#allocation3 + $0x8c] sm:$0xf] %v4648
          %4687 = vst [vmem:[#allocation3 + $0xb0] sm:$0xf] %v4657
          %4688 = vst [vmem:[#allocation3 + $0xd4] sm:$0xf] %v4658
          %4689 = vst [vmem:[#allocation3 + $0xf8] sm:$0xf] %v4667
          %4690 = vst [vmem:[#allocation3 + $0x11c] sm:$0xf] %v4668
          %4691 = vst [vmem:[#allocation3 + $0x140] sm:$0xf] %v4673
          %v4692 = vld [vmem:[#allocation3] sm:$0xff]
          %v4693 = vld [vmem:[#allocation3 + $0x8] sm:$0xff]
          %v4694 = vld [vmem:[#allocation3 + $0x10] sm:$0xff]
          %v4695 = vld [vmem:[#allocation3 + $0x18] sm:$0xff]
          %v4696 = vld [vmem:[#allocation3 + $0x20] sm:$0xf]
          %v4697 = vld [vmem:[#allocation3 + $0x24] sm:$0xff]
          %v4698 = vld [vmem:[#allocation3 + $0x2c] sm:$0xff]
          %v4699 = vld [vmem:[#allocation3 + $0x34] sm:$0xff]
          %v4700 = vld [vmem:[#allocation3 + $0x3c] sm:$0xff]
          %v4701 = vld [vmem:[#allocation3 + $0x44] sm:$0xf]
          %v4702 = vld [vmem:[#allocation3 + $0x48] sm:$0xff]
          %v4703 = vld [vmem:[#allocation3 + $0x50] sm:$0xff]
          %v4704 = vld [vmem:[#allocation3 + $0x58] sm:$0xff]
          %v4705 = vld [vmem:[#allocation3 + $0x60] sm:$0xff]
          %v4706 = vld [vmem:[#allocation3 + $0x68] sm:$0xf]
          %v4707 = vld [vmem:[#allocation3 + $0x6c] sm:$0xff]
          %v4708 = vld [vmem:[#allocation3 + $0x74] sm:$0xff]
          %v4709 = vld [vmem:[#allocation3 + $0x7c] sm:$0xff]
          %v4710 = vld [vmem:[#allocation3 + $0x84] sm:$0xff]
          %v4711 = vld [vmem:[#allocation3 + $0x8c] sm:$0xf]
          %v4712 = vld [vmem:[#allocation3 + $0x90] sm:$0xff]
          %v4713 = vld [vmem:[#allocation3 + $0x98] sm:$0xff]
          %v4714 = vld [vmem:[#allocation3 + $0xa0] sm:$0xff]
          %v4715 = vld [vmem:[#allocation3 + $0xa8] sm:$0xff]
          %v4716 = vld [vmem:[#allocation3 + $0xb0] sm:$0xf]
          %v4717 = vld [vmem:[#allocation3 + $0xb4] sm:$0xff]
          %v4718 = vld [vmem:[#allocation3 + $0xbc] sm:$0xff]
          %v4719 = vld [vmem:[#allocation3 + $0xc4] sm:$0xff]
          %v4720 = vld [vmem:[#allocation3 + $0xcc] sm:$0xff]
          %v4721 = vld [vmem:[#allocation3 + $0xd4] sm:$0xf]
          %v4722 = vld [vmem:[#allocation3 + $0xd8] sm:$0xff]
          %v4723 = vld [vmem:[#allocation3 + $0xe0] sm:$0xff]
          %v4724 = vld [vmem:[#allocation3 + $0xe8] sm:$0xff]
          %v4725 = vld [vmem:[#allocation3 + $0xf0] sm:$0xff]
          %v4726 = vld [vmem:[#allocation3 + $0xf8] sm:$0xf]
          %v4727 = vld [vmem:[#allocation3 + $0xfc] sm:$0xff]
          %v4728 = vld [vmem:[#allocation3 + $0x104] sm:$0xff]
          %v4729 = vld [vmem:[#allocation3 + $0x10c] sm:$0xff]
          %v4730 = vld [vmem:[#allocation3 + $0x114] sm:$0xff]
          %v4731 = vld [vmem:[#allocation3 + $0x11c] sm:$0xf]
          %v4732 = vld [vmem:[#allocation3 + $0x120] sm:$0xff]
          %v4733 = vld [vmem:[#allocation3 + $0x128] sm:$0xff]
          %v4734 = vld [vmem:[#allocation3 + $0x130] sm:$0xff]
          %v4735 = vld [vmem:[#allocation3 + $0x138] sm:$0xff]
          %v4736 = vld [vmem:[#allocation3 + $0x140] sm:$0xf]
          %s4737 = scalar_lea.vmem [#allocation10], 576
          %v4738 = vld [vmem:[%s4737] sm:$0xf]
          %v4739 = vld [vmem:[%s4737 + $0x4] sm:$0xf]
          %v4740 = vld [vmem:[%s4737 + $0x8] sm:$0xf]
          %v4741 = vld [vmem:[%s4737 + $0xc] sm:$0xf]
          %v4742 = vld [vmem:[%s4737 + $0x10] sm:$0xf]
          %v4743 = vld [vmem:[%s4737 + $0x14] sm:$0xf]
          %v4744 = vld [vmem:[%s4737 + $0x18] sm:$0xf]
          %v4745 = vld [vmem:[%s4737 + $0x1c] sm:$0xf]
          %v4746 = vld [vmem:[%s4737 + $0x20] sm:$0xf]
          %v4747 = vld [vmem:[%s4737 + $0x24] sm:$0xf]
          %v4748 = vld [vmem:[%s4737 + $0x28] sm:$0xf]
          %v4749 = vld [vmem:[%s4737 + $0x2c] sm:$0xf]
          %v4750 = vld [vmem:[%s4737 + $0x30] sm:$0xf]
          %v4751 = vld [vmem:[%s4737 + $0x34] sm:$0xf]
          %v4752 = vld [vmem:[%s4737 + $0x38] sm:$0xf]
          %v4753 = vld [vmem:[%s4737 + $0x3c] sm:$0xf]
          %v4754 = vld [vmem:[%s4737 + $0x40] sm:$0xf]
          %v4755 = vld [vmem:[%s4737 + $0x44] sm:$0xf]
          %v4756 = vld [vmem:[%s4737 + $0x48] sm:$0xf]
          %v4757 = vld [vmem:[%s4737 + $0x4c] sm:$0xf]
          %v4758 = vld [vmem:[%s4737 + $0x50] sm:$0xf]
          %v4759 = vld [vmem:[%s4737 + $0x54] sm:$0xf]
          %v4760 = vld [vmem:[%s4737 + $0x58] sm:$0xf]
          %v4761 = vld [vmem:[%s4737 + $0x5c] sm:$0xf]
          %v4762 = vld [vmem:[%s4737 + $0x60] sm:$0xf]
          %v4763 = vld [vmem:[%s4737 + $0x64] sm:$0xf]
          %v4764 = vld [vmem:[%s4737 + $0x68] sm:$0xf]
          %v4765 = vld [vmem:[%s4737 + $0x6c] sm:$0xf]
          %v4766 = vld [vmem:[%s4737 + $0x70] sm:$0xf]
          %v4767 = vld [vmem:[%s4737 + $0x74] sm:$0xf]
          %v4768 = vld [vmem:[%s4737 + $0x78] sm:$0xf]
          %v4769 = vld [vmem:[%s4737 + $0x7c] sm:$0xf]
          %v4770 = vld [vmem:[%s4737 + $0x80] sm:$0xf]
          %v4771 = vld [vmem:[%s4737 + $0x84] sm:$0xf]
          %v4772 = vld [vmem:[%s4737 + $0x88] sm:$0xf]
          %v4773 = vld [vmem:[%s4737 + $0x8c] sm:$0xf]
          %v4774 = vld [vmem:[%s4737 + $0x90] sm:$0xf]
          %v4775 = vld [vmem:[%s4737 + $0x94] sm:$0xf]
          %v4776 = vld [vmem:[%s4737 + $0x98] sm:$0xf]
          %v4777 = vld [vmem:[%s4737 + $0x9c] sm:$0xf]
          %v4778 = vld [vmem:[%s4737 + $0xa0] sm:$0xf]
          %v4779 = vld [vmem:[%s4737 + $0xa4] sm:$0xf]
          %v4780 = vld [vmem:[%s4737 + $0xa8] sm:$0xf]
          %v4781 = vld [vmem:[%s4737 + $0xac] sm:$0xf]
          %v4782 = vld [vmem:[%s4737 + $0xb0] sm:$0xf]
          %v4783 = vld [vmem:[%s4737 + $0xb4] sm:$0xf]
          %v4784 = vld [vmem:[%s4737 + $0xb8] sm:$0xf]
          %v4785 = vld [vmem:[%s4737 + $0xbc] sm:$0xf]
          %v4786 = vld [vmem:[%s4737 + $0xc0] sm:$0xf]
          %v4787 = vld [vmem:[%s4737 + $0xc4] sm:$0xf]
          %v4788 = vld [vmem:[%s4737 + $0xc8] sm:$0xf]
          %v4789 = vld [vmem:[%s4737 + $0xcc] sm:$0xf]
          %v4790 = vld [vmem:[%s4737 + $0xd0] sm:$0xf]
          %v4791 = vld [vmem:[%s4737 + $0xd4] sm:$0xf]
          %v4792 = vld [vmem:[%s4737 + $0xd8] sm:$0xf]
          %v4793 = vld [vmem:[%s4737 + $0xdc] sm:$0xf]
          %v4794 = vld [vmem:[%s4737 + $0xe0] sm:$0xf]
          %v4795 = vld [vmem:[%s4737 + $0xe4] sm:$0xf]
          %v4796 = vld [vmem:[%s4737 + $0xe8] sm:$0xf]
          %v4797 = vld [vmem:[%s4737 + $0xec] sm:$0xf]
          %v4798 = vld [vmem:[%s4737 + $0xf0] sm:$0xf]
          %v4799 = vld [vmem:[%s4737 + $0xf4] sm:$0xf]
          %v4800 = vld [vmem:[%s4737 + $0xf8] sm:$0xf]
          %v4801 = vld [vmem:[%s4737 + $0xfc] sm:$0xf]
          %v4802 = vld [vmem:[%s4737 + $0x100] sm:$0xf]
          %v4803 = vld [vmem:[%s4737 + $0x104] sm:$0xf]
          %v4804 = vld [vmem:[%s4737 + $0x108] sm:$0xf]
          %v4805 = vld [vmem:[%s4737 + $0x10c] sm:$0xf]
          %v4806 = vld [vmem:[%s4737 + $0x110] sm:$0xf]
          %v4807 = vld [vmem:[%s4737 + $0x114] sm:$0xf]
          %v4808 = vld [vmem:[%s4737 + $0x118] sm:$0xf]
          %v4809 = vld [vmem:[%s4737 + $0x11c] sm:$0xf]
          %v4810 = vld [vmem:[%s4737 + $0x120] sm:$0xf]
          %v4811 = vld [vmem:[%s4737 + $0x124] sm:$0xf]
          %v4812 = vld [vmem:[%s4737 + $0x128] sm:$0xf]
          %v4813 = vld [vmem:[%s4737 + $0x12c] sm:$0xf]
          %v4814 = vld [vmem:[%s4737 + $0x130] sm:$0xf]
          %v4815 = vld [vmem:[%s4737 + $0x134] sm:$0xf]
          %v4816 = vld [vmem:[%s4737 + $0x138] sm:$0xf]
          %v4817 = vld [vmem:[%s4737 + $0x13c] sm:$0xf]
          %v4818 = vld [vmem:[%s4737 + $0x140] sm:$0xf]
          %v4819 = vld [vmem:[%s4737 + $0x144] sm:$0xf]
          %v4820 = vld [vmem:[%s4737 + $0x148] sm:$0xf]
          %v4821 = vld [vmem:[%s4737 + $0x14c] sm:$0xf]
          %v4822 = vld [vmem:[%s4737 + $0x150] sm:$0xf]
          %v4823 = vld [vmem:[%s4737 + $0x154] sm:$0xf]
          %v4824 = vld [vmem:[%s4737 + $0x158] sm:$0xf]
          %v4825 = vld [vmem:[%s4737 + $0x15c] sm:$0xf]
          %v4826 = vld [vmem:[%s4737 + $0x160] sm:$0xf]
          %v4827 = vld [vmem:[%s4737 + $0x164] sm:$0xf]
          %v4828 = vld [vmem:[%s4737 + $0x168] sm:$0xf]
          %v4829 = vld [vmem:[%s4737 + $0x16c] sm:$0xf]
          %v4830 = vld [vmem:[%s4737 + $0x170] sm:$0xf]
          %v4831 = vld [vmem:[%s4737 + $0x174] sm:$0xf]
          %v4832 = vld [vmem:[%s4737 + $0x178] sm:$0xf]
          %v4833 = vld [vmem:[%s4737 + $0x17c] sm:$0xf]
          %v4834 = vld [vmem:[%s4737 + $0x180] sm:$0xf]
          %v4835 = vld [vmem:[%s4737 + $0x184] sm:$0xf]
          %v4836 = vld [vmem:[%s4737 + $0x188] sm:$0xf]
          %v4837 = vld [vmem:[%s4737 + $0x18c] sm:$0xf]
          %v4838 = vld [vmem:[%s4737 + $0x190] sm:$0xf]
          %v4839 = vld [vmem:[%s4737 + $0x194] sm:$0xf]
          %v4840 = vld [vmem:[%s4737 + $0x198] sm:$0xf]
          %v4841 = vld [vmem:[%s4737 + $0x19c] sm:$0xf]
          %v4842 = vld [vmem:[%s4737 + $0x1a0] sm:$0xf]
          %v4843 = vld [vmem:[%s4737 + $0x1a4] sm:$0xf]
          %v4844 = vld [vmem:[%s4737 + $0x1a8] sm:$0xf]
          %v4845 = vld [vmem:[%s4737 + $0x1ac] sm:$0xf]
          %v4846 = vld [vmem:[%s4737 + $0x1b0] sm:$0xf]
          %v4847 = vld [vmem:[%s4737 + $0x1b4] sm:$0xf]
          %v4848 = vld [vmem:[%s4737 + $0x1b8] sm:$0xf]
          %v4849 = vld [vmem:[%s4737 + $0x1bc] sm:$0xf]
          %v4850 = vld [vmem:[%s4737 + $0x1c0] sm:$0xf]
          %v4851 = vld [vmem:[%s4737 + $0x1c4] sm:$0xf]
          %v4852 = vld [vmem:[%s4737 + $0x1c8] sm:$0xf]
          %v4853 = vld [vmem:[%s4737 + $0x1cc] sm:$0xf]
          %v4854 = vld [vmem:[%s4737 + $0x1d0] sm:$0xf]
          %v4855 = vld [vmem:[%s4737 + $0x1d4] sm:$0xf]
          %v4856 = vld [vmem:[%s4737 + $0x1d8] sm:$0xf]
          %v4857 = vld [vmem:[%s4737 + $0x1dc] sm:$0xf]
          %v4858 = vld [vmem:[%s4737 + $0x1e0] sm:$0xf]
          %v4859 = vld [vmem:[%s4737 + $0x1e4] sm:$0xf]
          %v4860 = vld [vmem:[%s4737 + $0x1e8] sm:$0xf]
          %v4861 = vld [vmem:[%s4737 + $0x1ec] sm:$0xf]
          %v4862 = vld [vmem:[%s4737 + $0x1f0] sm:$0xf]
          %v4863 = vld [vmem:[%s4737 + $0x1f4] sm:$0xf]
          %v4864 = vld [vmem:[%s4737 + $0x1f8] sm:$0xf]
          %v4865 = vld [vmem:[%s4737 + $0x1fc] sm:$0xf]
          %v4866 = vld [vmem:[%s4737 + $0x200] sm:$0xf]
          %v4867 = vld [vmem:[%s4737 + $0x204] sm:$0xf]
          %v4868 = vld [vmem:[%s4737 + $0x208] sm:$0xf]
          %v4869 = vld [vmem:[%s4737 + $0x20c] sm:$0xf]
          %v4870 = vld [vmem:[%s4737 + $0x210] sm:$0xf]
          %v4871 = vld [vmem:[%s4737 + $0x214] sm:$0xf]
          %v4872 = vld [vmem:[%s4737 + $0x218] sm:$0xf]
          %v4873 = vld [vmem:[%s4737 + $0x21c] sm:$0xf]
          %v4874 = vld [vmem:[%s4737 + $0x220] sm:$0xf]
          %v4875 = vld [vmem:[%s4737 + $0x224] sm:$0xf]
          %v4876 = vld [vmem:[%s4737 + $0x228] sm:$0xf]
          %v4877 = vld [vmem:[%s4737 + $0x22c] sm:$0xf]
          %v4878 = vld [vmem:[%s4737 + $0x230] sm:$0xf]
          %v4879 = vld [vmem:[%s4737 + $0x234] sm:$0xf]
          %v4880 = vld [vmem:[%s4737 + $0x238] sm:$0xf]
          %v4881 = vld [vmem:[%s4737 + $0x23c] sm:$0xf]
          %v4894 = vrot.slane %v428, 2
          %v4895 = vrot.slane %v428, 4
          %v4896 = vrot.slane %v428, 6
          %v4897 = vrot.slane %v429, 2
          %v4898 = vrot.slane %v429, 4
          %v4899 = vrot.slane %v429, 6
          %v4900 = vrot.slane %v430, 2
          %v4901 = vrot.slane %v430, 4
          %v4902 = vrot.slane %v430, 6
          %v4903 = vrot.slane %v431, 2
          %v4904 = vrot.slane %v431, 4
          %v4905 = vrot.slane %v431, 6
          %v4906 = vrot.slane %v432, 2
          %v4907 = vrot.slane %v432, 4
          %v4908 = vrot.slane %v432, 6
          %v4909 = vrot.slane %v433, 2
          %v4910 = vrot.slane %v433, 4
          %v4911 = vrot.slane %v433, 6
          %v4912 = vrot.slane %v436, 2
          %v4913 = vrot.slane %v436, 4
          %v4914 = vrot.slane %v436, 6
          %v4915 = vrot.slane %v437, 2
          %v4916 = vrot.slane %v437, 4
          %v4917 = vrot.slane %v437, 6
          %v4918 = vrot.slane %v438, 2
          %v4919 = vrot.slane %v438, 4
          %v4920 = vrot.slane %v438, 6
          %v4921 = vrot.slane %v439, 2
          %v4922 = vrot.slane %v439, 4
          %v4923 = vrot.slane %v439, 6
          %v4924 = vrot.slane %v440, 2
          %v4925 = vrot.slane %v440, 4
          %v4926 = vrot.slane %v440, 6
          %v4927 = vrot.slane %v441, 2
          %v4928 = vrot.slane %v441, 4
          %v4929 = vrot.slane %v441, 6
          %vm4930 = vmor %vm483, %vm491
          %vm4931 = vcmask 1044484
          %vm4932 = vmor %vm4930, %vm4931
          %vm4933 = vcmask 1046534
          %vm4934 = vmor %vm4932, %vm4933
          %v4935 = vrot.slane %v428, 7
          %v4936 = vrot.slane %v4935, 2
          %v4937 = vrot.slane %v4894, 7
          %v4938 = vsel %vm4934, %v4936, %v4937
          %v4939 = vrot.slane %v4937, 2
          %v4940 = vrot.slane %v4895, 7
          %v4941 = vsel %vm4934, %v4939, %v4940
          %v4942 = vrot.slane %v4940, 2
          %v4943 = vrot.slane %v4896, 7
          %v4944 = vsel %vm4934, %v4942, %v4943
          %v4945 = vrot.slane %v429, 7
          %v4946 = vrot.slane %v4945, 2
          %v4947 = vrot.slane %v4897, 7
          %v4948 = vsel %vm4934, %v4946, %v4947
          %v4949 = vrot.slane %v4947, 2
          %v4950 = vrot.slane %v4898, 7
          %v4951 = vsel %vm4934, %v4949, %v4950
          %v4952 = vrot.slane %v4950, 2
          %v4953 = vrot.slane %v4899, 7
          %v4954 = vsel %vm4934, %v4952, %v4953
          %v4955 = vrot.slane %v430, 7
          %v4956 = vrot.slane %v4955, 2
          %v4957 = vrot.slane %v4900, 7
          %v4958 = vsel %vm4934, %v4956, %v4957
          %v4959 = vrot.slane %v4957, 2
          %v4960 = vrot.slane %v4901, 7
          %v4961 = vsel %vm4934, %v4959, %v4960
          %v4962 = vrot.slane %v4960, 2
          %v4963 = vrot.slane %v4902, 7
          %v4964 = vsel %vm4934, %v4962, %v4963
          %v4965 = vrot.slane %v431, 7
          %v4966 = vrot.slane %v4965, 2
          %v4967 = vrot.slane %v4903, 7
          %v4968 = vsel %vm4934, %v4966, %v4967
          %v4969 = vrot.slane %v4967, 2
          %v4970 = vrot.slane %v4904, 7
          %v4971 = vsel %vm4934, %v4969, %v4970
          %v4972 = vrot.slane %v4970, 2
          %v4973 = vrot.slane %v4905, 7
          %v4974 = vsel %vm4934, %v4972, %v4973
          %v4975 = vrot.slane %v432, 7
          %v4976 = vrot.slane %v4975, 2
          %v4977 = vrot.slane %v4906, 7
          %v4978 = vsel %vm4934, %v4976, %v4977
          %v4979 = vrot.slane %v4977, 2
          %v4980 = vrot.slane %v4907, 7
          %v4981 = vsel %vm4934, %v4979, %v4980
          %v4982 = vrot.slane %v4980, 2
          %v4983 = vrot.slane %v4908, 7
          %v4984 = vsel %vm4934, %v4982, %v4983
          %v4985 = vrot.slane %v433, 7
          %v4986 = vrot.slane %v4985, 2
          %v4987 = vrot.slane %v4909, 7
          %v4988 = vsel %vm4934, %v4986, %v4987
          %v4989 = vrot.slane %v4987, 2
          %v4990 = vrot.slane %v4910, 7
          %v4991 = vsel %vm4934, %v4989, %v4990
          %v4992 = vrot.slane %v4990, 2
          %v4993 = vrot.slane %v4911, 7
          %v4994 = vsel %vm4934, %v4992, %v4993
          %v4995 = vrot.slane %v436, 7
          %v4996 = vrot.slane %v4995, 2
          %v4997 = vrot.slane %v4912, 7
          %v4998 = vsel %vm4934, %v4996, %v4997
          %v4999 = vrot.slane %v4997, 2
          %v5000 = vrot.slane %v4913, 7
          %v5001 = vsel %vm4934, %v4999, %v5000
          %v5002 = vrot.slane %v5000, 2
          %v5003 = vrot.slane %v4914, 7
          %v5004 = vsel %vm4934, %v5002, %v5003
          %v5005 = vrot.slane %v437, 7
          %v5006 = vrot.slane %v5005, 2
          %v5007 = vrot.slane %v4915, 7
          %v5008 = vsel %vm4934, %v5006, %v5007
          %v5009 = vrot.slane %v5007, 2
          %v5010 = vrot.slane %v4916, 7
          %v5011 = vsel %vm4934, %v5009, %v5010
          %v5012 = vrot.slane %v5010, 2
          %v5013 = vrot.slane %v4917, 7
          %v5014 = vsel %vm4934, %v5012, %v5013
          %v5015 = vrot.slane %v438, 7
          %v5016 = vrot.slane %v5015, 2
          %v5017 = vrot.slane %v4918, 7
          %v5018 = vsel %vm4934, %v5016, %v5017
          %v5019 = vrot.slane %v5017, 2
          %v5020 = vrot.slane %v4919, 7
          %v5021 = vsel %vm4934, %v5019, %v5020
          %v5022 = vrot.slane %v5020, 2
          %v5023 = vrot.slane %v4920, 7
          %v5024 = vsel %vm4934, %v5022, %v5023
          %v5025 = vrot.slane %v439, 7
          %v5026 = vrot.slane %v5025, 2
          %v5027 = vrot.slane %v4921, 7
          %v5028 = vsel %vm4934, %v5026, %v5027
          %v5029 = vrot.slane %v5027, 2
          %v5030 = vrot.slane %v4922, 7
          %v5031 = vsel %vm4934, %v5029, %v5030
          %v5032 = vrot.slane %v5030, 2
          %v5033 = vrot.slane %v4923, 7
          %v5034 = vsel %vm4934, %v5032, %v5033
          %v5035 = vrot.slane %v440, 7
          %v5036 = vrot.slane %v5035, 2
          %v5037 = vrot.slane %v4924, 7
          %v5038 = vsel %vm4934, %v5036, %v5037
          %v5039 = vrot.slane %v5037, 2
          %v5040 = vrot.slane %v4925, 7
          %v5041 = vsel %vm4934, %v5039, %v5040
          %v5042 = vrot.slane %v5040, 2
          %v5043 = vrot.slane %v4926, 7
          %v5044 = vsel %vm4934, %v5042, %v5043
          %v5045 = vrot.slane %v441, 7
          %v5046 = vrot.slane %v5045, 2
          %v5047 = vrot.slane %v4927, 7
          %v5048 = vsel %vm4934, %v5046, %v5047
          %v5049 = vrot.slane %v5047, 2
          %v5050 = vrot.slane %v4928, 7
          %v5051 = vsel %vm4934, %v5049, %v5050
          %v5052 = vrot.slane %v5050, 2
          %v5053 = vrot.slane %v4929, 7
          %v5054 = vsel %vm4934, %v5052, %v5053
          %v5100 = vunpack.c.l.b16 %v4692
          %v5101 = vunpack.c.h.b16 %v4692
          %v5102 = vunpack.c.l.b16 %v4693
          %v5103 = vunpack.c.h.b16 %v4693
          %v5104 = vunpack.c.l.b16 %v4694
          %v5105 = vunpack.c.h.b16 %v4694
          %v5106 = vunpack.c.l.b16 %v4695
          %v5107 = vunpack.c.h.b16 %v4695
          %v5108 = vunpack.c.l.b16 %v4696
          %v5109 = vunpack.c.l.b16 %v4697
          %v5110 = vunpack.c.h.b16 %v4697
          %v5111 = vunpack.c.l.b16 %v4698
          %v5112 = vunpack.c.h.b16 %v4698
          %v5113 = vunpack.c.l.b16 %v4699
          %v5114 = vunpack.c.h.b16 %v4699
          %v5115 = vunpack.c.l.b16 %v4700
          %v5116 = vunpack.c.h.b16 %v4700
          %v5117 = vunpack.c.l.b16 %v4701
          %v5118 = vunpack.c.l.b16 %v4702
          %v5119 = vunpack.c.h.b16 %v4702
          %v5120 = vunpack.c.l.b16 %v4703
          %v5121 = vunpack.c.h.b16 %v4703
          %v5122 = vunpack.c.l.b16 %v4704
          %v5123 = vunpack.c.h.b16 %v4704
          %v5124 = vunpack.c.l.b16 %v4705
          %v5125 = vunpack.c.h.b16 %v4705
          %v5126 = vunpack.c.l.b16 %v4706
          %v5127 = vunpack.c.l.b16 %v4707
          %v5128 = vunpack.c.h.b16 %v4707
          %v5129 = vunpack.c.l.b16 %v4708
          %v5130 = vunpack.c.h.b16 %v4708
          %v5131 = vunpack.c.l.b16 %v4709
          %v5132 = vunpack.c.h.b16 %v4709
          %v5133 = vunpack.c.l.b16 %v4710
          %v5134 = vunpack.c.h.b16 %v4710
          %v5135 = vunpack.c.l.b16 %v4711
          %v5136 = vunpack.c.l.b16 %v4712
          %v5137 = vunpack.c.h.b16 %v4712
          %v5138 = vunpack.c.l.b16 %v4713
          %v5139 = vunpack.c.h.b16 %v4713
          %v5140 = vunpack.c.l.b16 %v4714
          %v5141 = vunpack.c.h.b16 %v4714
          %v5142 = vunpack.c.l.b16 %v4715
          %v5143 = vunpack.c.h.b16 %v4715
          %v5144 = vunpack.c.l.b16 %v4716
          %v5145 = vunpack.c.l.b16 %v4717
          %v5146 = vunpack.c.h.b16 %v4717
          %v5147 = vunpack.c.l.b16 %v4718
          %v5148 = vunpack.c.h.b16 %v4718
          %v5149 = vunpack.c.l.b16 %v4719
          %v5150 = vunpack.c.h.b16 %v4719
          %v5151 = vunpack.c.l.b16 %v4720
          %v5152 = vunpack.c.h.b16 %v4720
          %v5153 = vunpack.c.l.b16 %v4721
          %v5154 = vunpack.c.l.b16 %v4722
          %v5155 = vunpack.c.h.b16 %v4722
          %v5156 = vunpack.c.l.b16 %v4723
          %v5157 = vunpack.c.h.b16 %v4723
          %v5158 = vunpack.c.l.b16 %v4724
          %v5159 = vunpack.c.h.b16 %v4724
          %v5160 = vunpack.c.l.b16 %v4725
          %v5161 = vunpack.c.h.b16 %v4725
          %v5162 = vunpack.c.l.b16 %v4726
          %v5163 = vunpack.c.l.b16 %v4727
          %v5164 = vunpack.c.h.b16 %v4727
          %v5165 = vunpack.c.l.b16 %v4728
          %v5166 = vunpack.c.h.b16 %v4728
          %v5167 = vunpack.c.l.b16 %v4729
          %v5168 = vunpack.c.h.b16 %v4729
          %v5169 = vunpack.c.l.b16 %v4730
          %v5170 = vunpack.c.h.b16 %v4730
          %v5171 = vunpack.c.l.b16 %v4731
          %v5172 = vunpack.c.l.b16 %v4732
          %v5173 = vunpack.c.h.b16 %v4732
          %v5174 = vunpack.c.l.b16 %v4733
          %v5175 = vunpack.c.h.b16 %v4733
          %v5176 = vunpack.c.l.b16 %v4734
          %v5177 = vunpack.c.h.b16 %v4734
          %v5178 = vunpack.c.l.b16 %v4735
          %v5179 = vunpack.c.h.b16 %v4735
          %v5180 = vunpack.c.l.b16 %v4736
          %v5181 = vpack.c.b16 %v5109, %v5100
          %v5182 = vpack.c.b16 %v5110, %v5101
          %v5183 = vpack.c.b16 %v5111, %v5102
          %v5184 = vpack.c.b16 %v5112, %v5103
          %v5185 = vpack.c.b16 %v5113, %v5104
          %v5186 = vpack.c.b16 %v5114, %v5105
          %v5187 = vpack.c.b16 %v5115, %v5106
          %v5188 = vpack.c.b16 %v5116, %v5107
          %v5189 = vpack.c.b16 %v5117, %v5108
          %v5190 = vpack.c.b16 %v5127, %v5118
          %v5191 = vpack.c.b16 %v5128, %v5119
          %v5192 = vpack.c.b16 %v5129, %v5120
          %v5193 = vpack.c.b16 %v5130, %v5121
          %v5194 = vpack.c.b16 %v5131, %v5122
          %v5195 = vpack.c.b16 %v5132, %v5123
          %v5196 = vpack.c.b16 %v5133, %v5124
          %v5197 = vpack.c.b16 %v5134, %v5125
          %v5198 = vpack.c.b16 %v5135, %v5126
          %v5199 = vpack.c.b16 %v5145, %v5136
          %v5200 = vpack.c.b16 %v5146, %v5137
          %v5201 = vpack.c.b16 %v5147, %v5138
          %v5202 = vpack.c.b16 %v5148, %v5139
          %v5203 = vpack.c.b16 %v5149, %v5140
          %v5204 = vpack.c.b16 %v5150, %v5141
          %v5205 = vpack.c.b16 %v5151, %v5142
          %v5206 = vpack.c.b16 %v5152, %v5143
          %v5207 = vpack.c.b16 %v5153, %v5144
          %v5208 = vpack.c.b16 %v5163, %v5154
          %v5209 = vpack.c.b16 %v5164, %v5155
          %v5210 = vpack.c.b16 %v5165, %v5156
          %v5211 = vpack.c.b16 %v5166, %v5157
          %v5212 = vpack.c.b16 %v5167, %v5158
          %v5213 = vpack.c.b16 %v5168, %v5159
          %v5214 = vpack.c.b16 %v5169, %v5160
          %v5215 = vpack.c.b16 %v5170, %v5161
          %v5216 = vpack.c.b16 %v5171, %v5162
          %v5217 = vpack.c.b16 %v5172, %v5172
          %v5218 = vpack.c.b16 %v5173, %v5173
          %v5219 = vpack.c.b16 %v5174, %v5174
          %v5220 = vpack.c.b16 %v5175, %v5175
          %v5221 = vpack.c.b16 %v5176, %v5176
          %v5222 = vpack.c.b16 %v5177, %v5177
          %v5223 = vpack.c.b16 %v5178, %v5178
          %v5224 = vpack.c.b16 %v5179, %v5179
          %v5225 = vpack.c.b16 %v5180, %v5180
          %v5415 = vunpack.c.l.b16 %v4738
          %v5416 = vunpack.c.l.b16 %v4739
          %v5417 = vunpack.c.l.b16 %v4740
          %v5418 = vunpack.c.l.b16 %v4741
          %v5419 = vunpack.c.l.b16 %v4742
          %v5420 = vunpack.c.l.b16 %v4743
          %v5421 = vunpack.c.l.b16 %v4744
          %v5422 = vunpack.c.l.b16 %v4745
          %v5423 = vunpack.c.l.b16 %v4746
          %v5424 = vunpack.c.l.b16 %v4747
          %v5425 = vunpack.c.l.b16 %v4748
          %v5426 = vunpack.c.l.b16 %v4749
          %v5427 = vunpack.c.l.b16 %v4750
          %v5428 = vunpack.c.l.b16 %v4751
          %v5429 = vunpack.c.l.b16 %v4752
          %v5430 = vunpack.c.l.b16 %v4753
          %v5431 = vunpack.c.l.b16 %v4754
          %v5432 = vunpack.c.l.b16 %v4755
          %v5433 = vunpack.c.l.b16 %v4756
          %v5434 = vunpack.c.l.b16 %v4757
          %v5435 = vunpack.c.l.b16 %v4758
          %v5436 = vunpack.c.l.b16 %v4759
          %v5437 = vunpack.c.l.b16 %v4760
          %v5438 = vunpack.c.l.b16 %v4761
          %v5439 = vunpack.c.l.b16 %v4762
          %v5440 = vunpack.c.l.b16 %v4763
          %v5441 = vunpack.c.l.b16 %v4764
          %v5442 = vunpack.c.l.b16 %v4765
          %v5443 = vunpack.c.l.b16 %v4766
          %v5444 = vunpack.c.l.b16 %v4767
          %v5445 = vunpack.c.l.b16 %v4768
          %v5446 = vunpack.c.l.b16 %v4769
          %v5447 = vunpack.c.l.b16 %v4770
          %v5448 = vunpack.c.l.b16 %v4771
          %v5449 = vunpack.c.l.b16 %v4772
          %v5450 = vunpack.c.l.b16 %v4773
          %v5451 = vunpack.c.l.b16 %v4774
          %v5452 = vunpack.c.l.b16 %v4775
          %v5453 = vunpack.c.l.b16 %v4776
          %v5454 = vunpack.c.l.b16 %v4777
          %v5455 = vunpack.c.l.b16 %v4778
          %v5456 = vunpack.c.l.b16 %v4779
          %v5457 = vunpack.c.l.b16 %v4780
          %v5458 = vunpack.c.l.b16 %v4781
          %v5459 = vunpack.c.l.b16 %v4782
          %v5460 = vunpack.c.l.b16 %v4783
          %v5461 = vunpack.c.l.b16 %v4784
          %v5462 = vunpack.c.l.b16 %v4785
          %v5463 = vunpack.c.l.b16 %v4786
          %v5464 = vunpack.c.l.b16 %v4787
          %v5465 = vunpack.c.l.b16 %v4788
          %v5466 = vunpack.c.l.b16 %v4789
          %v5467 = vunpack.c.l.b16 %v4790
          %v5468 = vunpack.c.l.b16 %v4791
          %v5469 = vunpack.c.l.b16 %v4792
          %v5470 = vunpack.c.l.b16 %v4793
          %v5471 = vunpack.c.l.b16 %v4794
          %v5472 = vunpack.c.l.b16 %v4795
          %v5473 = vunpack.c.l.b16 %v4796
          %v5474 = vunpack.c.l.b16 %v4797
          %v5475 = vunpack.c.l.b16 %v4798
          %v5476 = vunpack.c.l.b16 %v4799
          %v5477 = vunpack.c.l.b16 %v4800
          %v5478 = vunpack.c.l.b16 %v4801
          %v5479 = vunpack.c.l.b16 %v4802
          %v5480 = vunpack.c.l.b16 %v4803
          %v5481 = vunpack.c.l.b16 %v4804
          %v5482 = vunpack.c.l.b16 %v4805
          %v5483 = vunpack.c.l.b16 %v4806
          %v5484 = vunpack.c.l.b16 %v4807
          %v5485 = vunpack.c.l.b16 %v4808
          %v5486 = vunpack.c.l.b16 %v4809
          %v5487 = vunpack.c.l.b16 %v4810
          %v5488 = vunpack.c.l.b16 %v4811
          %v5489 = vunpack.c.l.b16 %v4812
          %v5490 = vunpack.c.l.b16 %v4813
          %v5491 = vunpack.c.l.b16 %v4814
          %v5492 = vunpack.c.l.b16 %v4815
          %v5493 = vunpack.c.l.b16 %v4816
          %v5494 = vunpack.c.l.b16 %v4817
          %v5495 = vunpack.c.l.b16 %v4818
          %v5496 = vunpack.c.l.b16 %v4819
          %v5497 = vunpack.c.l.b16 %v4820
          %v5498 = vunpack.c.l.b16 %v4821
          %v5499 = vunpack.c.l.b16 %v4822
          %v5500 = vunpack.c.l.b16 %v4823
          %v5501 = vunpack.c.l.b16 %v4824
          %v5502 = vunpack.c.l.b16 %v4825
          %v5503 = vunpack.c.l.b16 %v4826
          %v5504 = vunpack.c.l.b16 %v4827
          %v5505 = vunpack.c.l.b16 %v4828
          %v5506 = vunpack.c.l.b16 %v4829
          %v5507 = vunpack.c.l.b16 %v4830
          %v5508 = vunpack.c.l.b16 %v4831
          %v5509 = vunpack.c.l.b16 %v4832
          %v5510 = vunpack.c.l.b16 %v4833
          %v5511 = vunpack.c.l.b16 %v4834
          %v5512 = vunpack.c.l.b16 %v4835
          %v5513 = vunpack.c.l.b16 %v4836
          %v5514 = vunpack.c.l.b16 %v4837
          %v5515 = vunpack.c.l.b16 %v4838
          %v5516 = vunpack.c.l.b16 %v4839
          %v5517 = vunpack.c.l.b16 %v4840
          %v5518 = vunpack.c.l.b16 %v4841
          %v5519 = vunpack.c.l.b16 %v4842
          %v5520 = vunpack.c.l.b16 %v4843
          %v5521 = vunpack.c.l.b16 %v4844
          %v5522 = vunpack.c.l.b16 %v4845
          %v5523 = vunpack.c.l.b16 %v4846
          %v5524 = vunpack.c.l.b16 %v4847
          %v5525 = vunpack.c.l.b16 %v4848
          %v5526 = vunpack.c.l.b16 %v4849
          %v5527 = vunpack.c.l.b16 %v4850
          %v5528 = vunpack.c.l.b16 %v4851
          %v5529 = vunpack.c.l.b16 %v4852
          %v5530 = vunpack.c.l.b16 %v4853
          %v5531 = vunpack.c.l.b16 %v4854
          %v5532 = vunpack.c.l.b16 %v4855
          %v5533 = vunpack.c.l.b16 %v4856
          %v5534 = vunpack.c.l.b16 %v4857
          %v5535 = vunpack.c.l.b16 %v4858
          %v5536 = vunpack.c.l.b16 %v4859
          %v5537 = vunpack.c.l.b16 %v4860
          %v5538 = vunpack.c.l.b16 %v4861
          %v5539 = vunpack.c.l.b16 %v4862
          %v5540 = vunpack.c.l.b16 %v4863
          %v5541 = vunpack.c.l.b16 %v4864
          %v5542 = vunpack.c.l.b16 %v4865
          %v5543 = vunpack.c.l.b16 %v4866
          %v5544 = vunpack.c.l.b16 %v4867
          %v5545 = vunpack.c.l.b16 %v4868
          %v5546 = vunpack.c.l.b16 %v4869
          %v5547 = vunpack.c.l.b16 %v4870
          %v5548 = vunpack.c.l.b16 %v4871
          %v5549 = vunpack.c.l.b16 %v4872
          %v5550 = vunpack.c.l.b16 %v4873
          %v5551 = vunpack.c.l.b16 %v4874
          %v5552 = vunpack.c.l.b16 %v4875
          %v5553 = vunpack.c.l.b16 %v4876
          %v5554 = vunpack.c.l.b16 %v4877
          %v5555 = vunpack.c.l.b16 %v4878
          %v5556 = vunpack.c.l.b16 %v4879
          %v5557 = vunpack.c.l.b16 %v4880
          %v5558 = vunpack.c.l.b16 %v4881
          %v5559 = vpack.c.b16 %v5416, %v5415
          %v5560 = vpack.c.b16 %v5418, %v5417
          %v5561 = vpack.c.b16 %v5420, %v5419
          %v5562 = vpack.c.b16 %v5422, %v5421
          %v5563 = vpack.c.b16 %v5424, %v5423
          %v5564 = vpack.c.b16 %v5426, %v5425
          %v5565 = vpack.c.b16 %v5428, %v5427
          %v5566 = vpack.c.b16 %v5430, %v5429
          %v5567 = vpack.c.b16 %v5432, %v5431
          %v5568 = vpack.c.b16 %v5434, %v5433
          %v5569 = vpack.c.b16 %v5436, %v5435
          %v5570 = vpack.c.b16 %v5438, %v5437
          %v5571 = vpack.c.b16 %v5440, %v5439
          %v5572 = vpack.c.b16 %v5442, %v5441
          %v5573 = vpack.c.b16 %v5444, %v5443
          %v5574 = vpack.c.b16 %v5446, %v5445
          %v5575 = vpack.c.b16 %v5448, %v5447
          %v5576 = vpack.c.b16 %v5450, %v5449
          %v5577 = vpack.c.b16 %v5452, %v5451
          %v5578 = vpack.c.b16 %v5454, %v5453
          %v5579 = vpack.c.b16 %v5456, %v5455
          %v5580 = vpack.c.b16 %v5458, %v5457
          %v5581 = vpack.c.b16 %v5460, %v5459
          %v5582 = vpack.c.b16 %v5462, %v5461
          %v5583 = vpack.c.b16 %v5464, %v5463
          %v5584 = vpack.c.b16 %v5466, %v5465
          %v5585 = vpack.c.b16 %v5468, %v5467
          %v5586 = vpack.c.b16 %v5470, %v5469
          %v5587 = vpack.c.b16 %v5472, %v5471
          %v5588 = vpack.c.b16 %v5474, %v5473
          %v5589 = vpack.c.b16 %v5476, %v5475
          %v5590 = vpack.c.b16 %v5478, %v5477
          %v5591 = vpack.c.b16 %v5480, %v5479
          %v5592 = vpack.c.b16 %v5482, %v5481
          %v5593 = vpack.c.b16 %v5484, %v5483
          %v5594 = vpack.c.b16 %v5486, %v5485
          %v5595 = vpack.c.b16 %v5488, %v5487
          %v5596 = vpack.c.b16 %v5490, %v5489
          %v5597 = vpack.c.b16 %v5492, %v5491
          %v5598 = vpack.c.b16 %v5494, %v5493
          %v5599 = vpack.c.b16 %v5496, %v5495
          %v5600 = vpack.c.b16 %v5498, %v5497
          %v5601 = vpack.c.b16 %v5500, %v5499
          %v5602 = vpack.c.b16 %v5502, %v5501
          %v5603 = vpack.c.b16 %v5504, %v5503
          %v5604 = vpack.c.b16 %v5506, %v5505
          %v5605 = vpack.c.b16 %v5508, %v5507
          %v5606 = vpack.c.b16 %v5510, %v5509
          %v5607 = vpack.c.b16 %v5512, %v5511
          %v5608 = vpack.c.b16 %v5514, %v5513
          %v5609 = vpack.c.b16 %v5516, %v5515
          %v5610 = vpack.c.b16 %v5518, %v5517
          %v5611 = vpack.c.b16 %v5520, %v5519
          %v5612 = vpack.c.b16 %v5522, %v5521
          %v5613 = vpack.c.b16 %v5524, %v5523
          %v5614 = vpack.c.b16 %v5526, %v5525
          %v5615 = vpack.c.b16 %v5528, %v5527
          %v5616 = vpack.c.b16 %v5530, %v5529
          %v5617 = vpack.c.b16 %v5532, %v5531
          %v5618 = vpack.c.b16 %v5534, %v5533
          %v5619 = vpack.c.b16 %v5536, %v5535
          %v5620 = vpack.c.b16 %v5538, %v5537
          %v5621 = vpack.c.b16 %v5540, %v5539
          %v5622 = vpack.c.b16 %v5542, %v5541
          %v5623 = vpack.c.b16 %v5544, %v5543
          %v5624 = vpack.c.b16 %v5546, %v5545
          %v5625 = vpack.c.b16 %v5548, %v5547
          %v5626 = vpack.c.b16 %v5550, %v5549
          %v5627 = vpack.c.b16 %v5552, %v5551
          %v5628 = vpack.c.b16 %v5554, %v5553
          %v5629 = vpack.c.b16 %v5556, %v5555
          %v5630 = vpack.c.b16 %v5558, %v5557
          %5703 = vst [vmem:[#allocation1] ss:$4 sm:$0xff] %v4938
          %s5704 = scalar_lea.vmem [#allocation1], 1
          %5705 = vst [vmem:[%s5704] ss:$4 sm:$0xff] %v4941
          %s5706 = scalar_lea.vmem [#allocation1], 2
          %5707 = vst [vmem:[%s5706] ss:$4 sm:$0xff] %v4944
          %s5708 = scalar_lea.vmem [#allocation1], 3
          %5709 = vst [vmem:[%s5708] ss:$4 sm:$0xff] %v4948
          %s5710 = scalar_lea.vmem [#allocation1], 32
          %5711 = vst [vmem:[%s5710] ss:$4 sm:$0xff] %v4951
          %s5712 = scalar_lea.vmem [#allocation1], 33
          %5713 = vst [vmem:[%s5712] ss:$4 sm:$0xff] %v4954
          %s5714 = scalar_lea.vmem [#allocation1], 34
          %5715 = vst [vmem:[%s5714] ss:$4 sm:$0xff] %v4958
          %s5716 = scalar_lea.vmem [#allocation1], 35
          %5717 = vst [vmem:[%s5716] ss:$4 sm:$0xff] %v4961
          %v5718 = vld.sshfl [vmem:[#allocation1] sm:$0xff pattern:$0x73625140]
          %v5719 = vld.sshfl [vmem:[#allocation1 + $0x20] sm:$0xff pattern:$0x73625140]
          %5720 = vst [vmem:[#allocation1] ss:$4 sm:$0xff] %v4964
          %5721 = vst [vmem:[%s5704] ss:$4 sm:$0xff] %v4968
          %5722 = vst [vmem:[%s5706] ss:$4 sm:$0xff] %v4971
          %5723 = vst [vmem:[%s5708] ss:$4 sm:$0xff] %v4974
          %5724 = vst [vmem:[%s5710] ss:$4 sm:$0xff] %v4978
          %5725 = vst [vmem:[%s5712] ss:$4 sm:$0xff] %v4981
          %5726 = vst [vmem:[%s5714] ss:$4 sm:$0xff] %v4984
          %5727 = vst [vmem:[%s5716] ss:$4 sm:$0xff] %v4988
          %v5728 = vld.sshfl [vmem:[#allocation1] sm:$0xff pattern:$0x73625140]
          %v5729 = vld.sshfl [vmem:[#allocation1 + $0x20] sm:$0xff pattern:$0x73625140]
          %5730 = vst [vmem:[#allocation1] ss:$4 sm:$0xff] %v4991
          %5731 = vst [vmem:[%s5704] ss:$4 sm:$0xff] %v4994
          %5732 = vst [vmem:[%s5706] ss:$4 sm:$0xff] %v4998
          %5733 = vst [vmem:[%s5708] ss:$4 sm:$0xff] %v5001
          %5734 = vst [vmem:[%s5710] ss:$4 sm:$0xff] %v5004
          %5735 = vst [vmem:[%s5712] ss:$4 sm:$0xff] %v5008
          %5736 = vst [vmem:[%s5714] ss:$4 sm:$0xff] %v5011
          %5737 = vst [vmem:[%s5716] ss:$4 sm:$0xff] %v5014
          %v5738 = vld.sshfl [vmem:[#allocation1] sm:$0xff pattern:$0x73625140]
          %v5739 = vld.sshfl [vmem:[#allocation1 + $0x20] sm:$0xff pattern:$0x73625140]
          %5740 = vst [vmem:[#allocation1] ss:$4 sm:$0xff] %v5018
          %5741 = vst [vmem:[%s5704] ss:$4 sm:$0xff] %v5021
          %5742 = vst [vmem:[%s5706] ss:$4 sm:$0xff] %v5024
          %5743 = vst [vmem:[%s5708] ss:$4 sm:$0xff] %v5028
          %5744 = vst [vmem:[%s5710] ss:$4 sm:$0xff] %v5031
          %5745 = vst [vmem:[%s5712] ss:$4 sm:$0xff] %v5034
          %5746 = vst [vmem:[%s5714] ss:$4 sm:$0xff] %v5038
          %5747 = vst [vmem:[%s5716] ss:$4 sm:$0xff] %v5041
          %v5748 = vld.sshfl [vmem:[#allocation1] sm:$0xff pattern:$0x73625140]
          %v5749 = vld.sshfl [vmem:[#allocation1 + $0x20] sm:$0xff pattern:$0x73625140]
          %5750 = vst [vmem:[#allocation1] ss:$4 sm:$0xff] %v5044
          %5751 = vst [vmem:[%s5704] ss:$4 sm:$0xff] %v5048
          %5752 = vst [vmem:[%s5706] ss:$4 sm:$0xff] %v5051
          %5753 = vst [vmem:[%s5708] ss:$4 sm:$0xff] %v5054
          %v5754 = vld.sshfl [vmem:[#allocation1] sm:$0xff pattern:$0x73625140]
          %5764 = vmatpush.bf16.msra.mxu0 %v5566
          %5765 = vmatpush.bf16.msra.mxu0 %v5565
          %5766 = vmatpush.bf16.msra.mxu0 %v5564
          %5767 = vmatpush.bf16.msra.mxu0 %v5563
          %5768 = vmatpush.bf16.msra.mxu0 %v5562
          %5769 = vmatpush.bf16.msra.mxu0 %v5561
          %5770 = vmatpush.bf16.msra.mxu0 %v5560
          %5771 = vmatpush.bf16.msra.mxu0 %v5559
          %5772 = vmatmul.bf16.gmra.mxu0 %v5181
          %v5773 = vpop.f32.mrf.mxu0
          %v5774 = vadd.f32 %v5718, %v5773
          %v5775 = vpop.f32.mrf.mxu0
          %v5776 = vadd.f32 %v5719, %v5775
          %5777 = vmatmul.bf16.gmra.mxu0 %v5190
          %v5778 = vpop.f32.mrf.mxu0
          %v5779 = vadd.f32 %v5728, %v5778
          %v5780 = vpop.f32.mrf.mxu0
          %v5781 = vadd.f32 %v5729, %v5780
          %5782 = vmatmul.bf16.gmra.mxu0 %v5199
          %v5783 = vpop.f32.mrf.mxu0
          %v5784 = vadd.f32 %v5738, %v5783
          %v5785 = vpop.f32.mrf.mxu0
          %v5786 = vadd.f32 %v5739, %v5785
          %5787 = vmatmul.bf16.gmra.mxu0 %v5208
          %v5788 = vpop.f32.mrf.mxu0
          %v5789 = vadd.f32 %v5748, %v5788
          %v5790 = vpop.f32.mrf.mxu0
          %v5791 = vadd.f32 %v5749, %v5790
          %5792 = vmatmul.bf16.gmra.mxu0 %v5217
          %v5793 = vpop.f32.mrf.mxu0
          %v5794 = vadd.f32 %v5754, %v5793
          %v5795 = vpop.f32.mrf.mxu0
          %5796 = vdwg.mxu0
          %5797 = vmatpush.bf16.msra.mxu0 %v5574
          %5798 = vmatpush.bf16.msra.mxu0 %v5573
          %5799 = vmatpush.bf16.msra.mxu0 %v5572
          %5800 = vmatpush.bf16.msra.mxu0 %v5571
          %5801 = vmatpush.bf16.msra.mxu0 %v5570
          %5802 = vmatpush.bf16.msra.mxu0 %v5569
          %5803 = vmatpush.bf16.msra.mxu0 %v5568
          %5804 = vmatpush.bf16.msra.mxu0 %v5567
          %5805 = vmatmul.bf16.gmra.mxu0 %v5182
          %v5806 = vpop.f32.mrf.mxu0
          %v5807 = vadd.f32 %v5774, %v5806
          %v5808 = vpop.f32.mrf.mxu0
          %v5809 = vadd.f32 %v5776, %v5808
          %5810 = vmatmul.bf16.gmra.mxu0 %v5191
          %v5811 = vpop.f32.mrf.mxu0
          %v5812 = vadd.f32 %v5779, %v5811
          %v5813 = vpop.f32.mrf.mxu0
          %v5814 = vadd.f32 %v5781, %v5813
          %5815 = vmatmul.bf16.gmra.mxu0 %v5200
          %v5816 = vpop.f32.mrf.mxu0
          %v5817 = vadd.f32 %v5784, %v5816
          %v5818 = vpop.f32.mrf.mxu0
          %v5819 = vadd.f32 %v5786, %v5818
          %5820 = vmatmul.bf16.gmra.mxu0 %v5209
          %v5821 = vpop.f32.mrf.mxu0
          %v5822 = vadd.f32 %v5789, %v5821
          %v5823 = vpop.f32.mrf.mxu0
          %v5824 = vadd.f32 %v5791, %v5823
          %5825 = vmatmul.bf16.gmra.mxu0 %v5218
          %v5826 = vpop.f32.mrf.mxu0
          %v5827 = vadd.f32 %v5794, %v5826
          %v5828 = vpop.f32.mrf.mxu0
          %5829 = vdwg.mxu0
          %5830 = vmatpush.bf16.msra.mxu0 %v5582
          %5831 = vmatpush.bf16.msra.mxu0 %v5581
          %5832 = vmatpush.bf16.msra.mxu0 %v5580
          %5833 = vmatpush.bf16.msra.mxu0 %v5579
          %5834 = vmatpush.bf16.msra.mxu0 %v5578
          %5835 = vmatpush.bf16.msra.mxu0 %v5577
          %5836 = vmatpush.bf16.msra.mxu0 %v5576
          %5837 = vmatpush.bf16.msra.mxu0 %v5575
          %5838 = vmatmul.bf16.gmra.mxu0 %v5183
          %v5839 = vpop.f32.mrf.mxu0
          %v5840 = vadd.f32 %v5807, %v5839
          %v5841 = vpop.f32.mrf.mxu0
          %v5842 = vadd.f32 %v5809, %v5841
          %5843 = vmatmul.bf16.gmra.mxu0 %v5192
          %v5844 = vpop.f32.mrf.mxu0
          %v5845 = vadd.f32 %v5812, %v5844
          %v5846 = vpop.f32.mrf.mxu0
          %v5847 = vadd.f32 %v5814, %v5846
          %5848 = vmatmul.bf16.gmra.mxu0 %v5201
          %v5849 = vpop.f32.mrf.mxu0
          %v5850 = vadd.f32 %v5817, %v5849
          %v5851 = vpop.f32.mrf.mxu0
          %v5852 = vadd.f32 %v5819, %v5851
          %5853 = vmatmul.bf16.gmra.mxu0 %v5210
          %v5854 = vpop.f32.mrf.mxu0
          %v5855 = vadd.f32 %v5822, %v5854
          %v5856 = vpop.f32.mrf.mxu0
          %v5857 = vadd.f32 %v5824, %v5856
          %5858 = vmatmul.bf16.gmra.mxu0 %v5219
          %v5859 = vpop.f32.mrf.mxu0
          %v5860 = vadd.f32 %v5827, %v5859
          %v5861 = vpop.f32.mrf.mxu0
          %5862 = vdwg.mxu0
          %5863 = vmatpush.bf16.msra.mxu0 %v5590
          %5864 = vmatpush.bf16.msra.mxu0 %v5589
          %5865 = vmatpush.bf16.msra.mxu0 %v5588
          %5866 = vmatpush.bf16.msra.mxu0 %v5587
          %5867 = vmatpush.bf16.msra.mxu0 %v5586
          %5868 = vmatpush.bf16.msra.mxu0 %v5585
          %5869 = vmatpush.bf16.msra.mxu0 %v5584
          %5870 = vmatpush.bf16.msra.mxu0 %v5583
          %5871 = vmatmul.bf16.gmra.mxu0 %v5184
          %v5872 = vpop.f32.mrf.mxu0
          %v5873 = vadd.f32 %v5840, %v5872
          %v5874 = vpop.f32.mrf.mxu0
          %v5875 = vadd.f32 %v5842, %v5874
          %5876 = vmatmul.bf16.gmra.mxu0 %v5193
          %v5877 = vpop.f32.mrf.mxu0
          %v5878 = vadd.f32 %v5845, %v5877
          %v5879 = vpop.f32.mrf.mxu0
          %v5880 = vadd.f32 %v5847, %v5879
          %5881 = vmatmul.bf16.gmra.mxu0 %v5202
          %v5882 = vpop.f32.mrf.mxu0
          %v5883 = vadd.f32 %v5850, %v5882
          %v5884 = vpop.f32.mrf.mxu0
          %v5885 = vadd.f32 %v5852, %v5884
          %5886 = vmatmul.bf16.gmra.mxu0 %v5211
          %v5887 = vpop.f32.mrf.mxu0
          %v5888 = vadd.f32 %v5855, %v5887
          %v5889 = vpop.f32.mrf.mxu0
          %v5890 = vadd.f32 %v5857, %v5889
          %5891 = vmatmul.bf16.gmra.mxu0 %v5220
          %v5892 = vpop.f32.mrf.mxu0
          %v5893 = vadd.f32 %v5860, %v5892
          %v5894 = vpop.f32.mrf.mxu0
          %5895 = vdwg.mxu0
          %5896 = vmatpush.bf16.msra.mxu0 %v5598
          %5897 = vmatpush.bf16.msra.mxu0 %v5597
          %5898 = vmatpush.bf16.msra.mxu0 %v5596
          %5899 = vmatpush.bf16.msra.mxu0 %v5595
          %5900 = vmatpush.bf16.msra.mxu0 %v5594
          %5901 = vmatpush.bf16.msra.mxu0 %v5593
          %5902 = vmatpush.bf16.msra.mxu0 %v5592
          %5903 = vmatpush.bf16.msra.mxu0 %v5591
          %5904 = vmatmul.bf16.gmra.mxu0 %v5185
          %v5905 = vpop.f32.mrf.mxu0
          %v5906 = vadd.f32 %v5873, %v5905
          %v5907 = vpop.f32.mrf.mxu0
          %v5908 = vadd.f32 %v5875, %v5907
          %5909 = vmatmul.bf16.gmra.mxu0 %v5194
          %v5910 = vpop.f32.mrf.mxu0
          %v5911 = vadd.f32 %v5878, %v5910
          %v5912 = vpop.f32.mrf.mxu0
          %v5913 = vadd.f32 %v5880, %v5912
          %5914 = vmatmul.bf16.gmra.mxu0 %v5203
          %v5915 = vpop.f32.mrf.mxu0
          %v5916 = vadd.f32 %v5883, %v5915
          %v5917 = vpop.f32.mrf.mxu0
          %v5918 = vadd.f32 %v5885, %v5917
          %5919 = vmatmul.bf16.gmra.mxu0 %v5212
          %v5920 = vpop.f32.mrf.mxu0
          %v5921 = vadd.f32 %v5888, %v5920
          %v5922 = vpop.f32.mrf.mxu0
          %v5923 = vadd.f32 %v5890, %v5922
          %5924 = vmatmul.bf16.gmra.mxu0 %v5221
          %v5925 = vpop.f32.mrf.mxu0
          %v5926 = vadd.f32 %v5893, %v5925
          %v5927 = vpop.f32.mrf.mxu0
          %5928 = vdwg.mxu0
          %5929 = vmatpush.bf16.msra.mxu0 %v5606
          %5930 = vmatpush.bf16.msra.mxu0 %v5605
          %5931 = vmatpush.bf16.msra.mxu0 %v5604
          %5932 = vmatpush.bf16.msra.mxu0 %v5603
          %5933 = vmatpush.bf16.msra.mxu0 %v5602
          %5934 = vmatpush.bf16.msra.mxu0 %v5601
          %5935 = vmatpush.bf16.msra.mxu0 %v5600
          %5936 = vmatpush.bf16.msra.mxu0 %v5599
          %5937 = vmatmul.bf16.gmra.mxu0 %v5186
          %v5938 = vpop.f32.mrf.mxu0
          %v5939 = vadd.f32 %v5906, %v5938
          %v5940 = vpop.f32.mrf.mxu0
          %v5941 = vadd.f32 %v5908, %v5940
          %5942 = vmatmul.bf16.gmra.mxu0 %v5195
          %v5943 = vpop.f32.mrf.mxu0
          %v5944 = vadd.f32 %v5911, %v5943
          %v5945 = vpop.f32.mrf.mxu0
          %v5946 = vadd.f32 %v5913, %v5945
          %5947 = vmatmul.bf16.gmra.mxu0 %v5204
          %v5948 = vpop.f32.mrf.mxu0
          %v5949 = vadd.f32 %v5916, %v5948
          %v5950 = vpop.f32.mrf.mxu0
          %v5951 = vadd.f32 %v5918, %v5950
          %5952 = vmatmul.bf16.gmra.mxu0 %v5213
          %v5953 = vpop.f32.mrf.mxu0
          %v5954 = vadd.f32 %v5921, %v5953
          %v5955 = vpop.f32.mrf.mxu0
          %v5956 = vadd.f32 %v5923, %v5955
          %5957 = vmatmul.bf16.gmra.mxu0 %v5222
          %v5958 = vpop.f32.mrf.mxu0
          %v5959 = vadd.f32 %v5926, %v5958
          %v5960 = vpop.f32.mrf.mxu0
          %5961 = vdwg.mxu0
          %5962 = vmatpush.bf16.msra.mxu0 %v5614
          %5963 = vmatpush.bf16.msra.mxu0 %v5613
          %5964 = vmatpush.bf16.msra.mxu0 %v5612
          %5965 = vmatpush.bf16.msra.mxu0 %v5611
          %5966 = vmatpush.bf16.msra.mxu0 %v5610
          %5967 = vmatpush.bf16.msra.mxu0 %v5609
          %5968 = vmatpush.bf16.msra.mxu0 %v5608
          %5969 = vmatpush.bf16.msra.mxu0 %v5607
          %5970 = vmatmul.bf16.gmra.mxu0 %v5187
          %v5971 = vpop.f32.mrf.mxu0
          %v5972 = vadd.f32 %v5939, %v5971
          %v5973 = vpop.f32.mrf.mxu0
          %v5974 = vadd.f32 %v5941, %v5973
          %5975 = vmatmul.bf16.gmra.mxu0 %v5196
          %v5976 = vpop.f32.mrf.mxu0
          %v5977 = vadd.f32 %v5944, %v5976
          %v5978 = vpop.f32.mrf.mxu0
          %v5979 = vadd.f32 %v5946, %v5978
          %5980 = vmatmul.bf16.gmra.mxu0 %v5205
          %v5981 = vpop.f32.mrf.mxu0
          %v5982 = vadd.f32 %v5949, %v5981
          %v5983 = vpop.f32.mrf.mxu0
          %v5984 = vadd.f32 %v5951, %v5983
          %5985 = vmatmul.bf16.gmra.mxu0 %v5214
          %v5986 = vpop.f32.mrf.mxu0
          %v5987 = vadd.f32 %v5954, %v5986
          %v5988 = vpop.f32.mrf.mxu0
          %v5989 = vadd.f32 %v5956, %v5988
          %5990 = vmatmul.bf16.gmra.mxu0 %v5223
          %v5991 = vpop.f32.mrf.mxu0
          %v5992 = vadd.f32 %v5959, %v5991
          %v5993 = vpop.f32.mrf.mxu0
          %5994 = vdwg.mxu0
          %5995 = vmatpush.bf16.msra.mxu0 %v5622
          %5996 = vmatpush.bf16.msra.mxu0 %v5621
          %5997 = vmatpush.bf16.msra.mxu0 %v5620
          %5998 = vmatpush.bf16.msra.mxu0 %v5619
          %5999 = vmatpush.bf16.msra.mxu0 %v5618
          %6000 = vmatpush.bf16.msra.mxu0 %v5617
          %6001 = vmatpush.bf16.msra.mxu0 %v5616
          %6002 = vmatpush.bf16.msra.mxu0 %v5615
          %6003 = vmatmul.bf16.gmra.mxu0 %v5188
          %v6004 = vpop.f32.mrf.mxu0
          %v6005 = vadd.f32 %v5972, %v6004
          %v6006 = vpop.f32.mrf.mxu0
          %v6007 = vadd.f32 %v5974, %v6006
          %6008 = vmatmul.bf16.gmra.mxu0 %v5197
          %v6009 = vpop.f32.mrf.mxu0
          %v6010 = vadd.f32 %v5977, %v6009
          %v6011 = vpop.f32.mrf.mxu0
          %v6012 = vadd.f32 %v5979, %v6011
          %6013 = vmatmul.bf16.gmra.mxu0 %v5206
          %v6014 = vpop.f32.mrf.mxu0
          %v6015 = vadd.f32 %v5982, %v6014
          %v6016 = vpop.f32.mrf.mxu0
          %v6017 = vadd.f32 %v5984, %v6016
          %6018 = vmatmul.bf16.gmra.mxu0 %v5215
          %v6019 = vpop.f32.mrf.mxu0
          %v6020 = vadd.f32 %v5987, %v6019
          %v6021 = vpop.f32.mrf.mxu0
          %v6022 = vadd.f32 %v5989, %v6021
          %6023 = vmatmul.bf16.gmra.mxu0 %v5224
          %v6024 = vpop.f32.mrf.mxu0
          %v6025 = vadd.f32 %v5992, %v6024
          %v6026 = vpop.f32.mrf.mxu0
          %6027 = vdwg.mxu0
          %6028 = vmatpush.bf16.msra.mxu0 %v5630
          %6029 = vmatpush.bf16.msra.mxu0 %v5629
          %6030 = vmatpush.bf16.msra.mxu0 %v5628
          %6031 = vmatpush.bf16.msra.mxu0 %v5627
          %6032 = vmatpush.bf16.msra.mxu0 %v5626
          %6033 = vmatpush.bf16.msra.mxu0 %v5625
          %6034 = vmatpush.bf16.msra.mxu0 %v5624
          %6035 = vmatpush.bf16.msra.mxu0 %v5623
          %6036 = vmatmul.bf16.gmra.mxu0 %v5189
          %v6037 = vpop.f32.mrf.mxu0
          %v6038 = vadd.f32 %v6005, %v6037
          %v6039 = vpop.f32.mrf.mxu0
          %v6040 = vadd.f32 %v6007, %v6039
          %6041 = vmatmul.bf16.gmra.mxu0 %v5198
          %v6042 = vpop.f32.mrf.mxu0
          %v6043 = vadd.f32 %v6010, %v6042
          %v6044 = vpop.f32.mrf.mxu0
          %v6045 = vadd.f32 %v6012, %v6044
          %6046 = vmatmul.bf16.gmra.mxu0 %v5207
          %v6047 = vpop.f32.mrf.mxu0
          %v6048 = vadd.f32 %v6015, %v6047
          %v6049 = vpop.f32.mrf.mxu0
          %v6050 = vadd.f32 %v6017, %v6049
          %6051 = vmatmul.bf16.gmra.mxu0 %v5216
          %v6052 = vpop.f32.mrf.mxu0
          %v6053 = vadd.f32 %v6020, %v6052
          %v6054 = vpop.f32.mrf.mxu0
          %v6055 = vadd.f32 %v6022, %v6054
          %6056 = vmatmul.bf16.gmra.mxu0 %v5225
          %v6057 = vpop.f32.mrf.mxu0
          %v6058 = vadd.f32 %v6025, %v6057
          %v6059 = vpop.f32.mrf.mxu0
          %6060 = vdwg.mxu0
          %v6061 = vmax.f32 %v6038, 0.0
          %v6062 = vmax.f32 %v6040, 0.0
          %v6063 = vmax.f32 %v6043, 0.0
          %v6064 = vmax.f32 %v6045, 0.0
          %v6065 = vmax.f32 %v6048, 0.0
          %v6066 = vmax.f32 %v6050, 0.0
          %v6067 = vmax.f32 %v6053, 0.0
          %v6068 = vmax.f32 %v6055, 0.0
          %v6069 = vmax.f32 %v6058, 0.0
          %6070 = vrot.lane.b32.xlu0 %v6061, 64
          %v6071 = vpop.permute.xlu0 %6070
          %6072 = vrot.lane.b32.xlu0 %v6062, 64
          %v6073 = vpop.permute.xlu0 %6072
          %6074 = vrot.lane.b32.xlu0 %v6063, 64
          %v6075 = vpop.permute.xlu0 %6074
          %6076 = vrot.lane.b32.xlu0 %v6064, 64
          %v6077 = vpop.permute.xlu0 %6076
          %6078 = vrot.lane.b32.xlu0 %v6065, 64
          %v6079 = vpop.permute.xlu0 %6078
          %6080 = vrot.lane.b32.xlu0 %v6066, 64
          %v6081 = vpop.permute.xlu0 %6080
          %6082 = vrot.lane.b32.xlu0 %v6067, 64
          %v6083 = vpop.permute.xlu0 %6082
          %6084 = vrot.lane.b32.xlu0 %v6068, 64
          %v6085 = vpop.permute.xlu0 %6084
          %6086 = vrot.lane.b32.xlu0 %v6069, 64
          %v6087 = vpop.permute.xlu0 %6086
          %v6094 = vrot.slane %v6061, 4
          %v6095 = vrot.slane %v6062, 4
          %v6096 = vrot.slane %v6065, 4
          %v6097 = vrot.slane %v6066, 4
          %v6098 = vrot.slane %v6067, 4
          %v6108 = vrot.slane %v6071, 4
          %v6109 = vrot.slane %v6073, 4
          %v6110 = vrot.slane %v6075, 4
          %v6111 = vrot.slane %v6077, 4
          %v6112 = vrot.slane %v6079, 4
          %v6113 = vrot.slane %v6081, 4
          %v6114 = vrot.slane %v6083, 4
          %v6115 = vrot.slane %v6085, 4
          %v6116 = vrot.slane %v6087, 4
          %v6117 = vlaneseq
          %v6118 = vand.u32 %v6117, 127
          %vm6119 = vcmp.lt.s32.totalorder %v6118, 64
          %6120 = vst [vmem:[#allocation1] ss:$2 sm:$0xff] %v6061
          %s6121 = scalar_lea.vmem [#allocation1], 1
          %6122 = vst [vmem:[%s6121] ss:$2 sm:$0xff] %v6094
          %s6123 = scalar_lea.vmem [#allocation1], 16
          %6124 = vst [vmem:[%s6123] ss:$2 sm:$0xff] %v6062
          %s6125 = scalar_lea.vmem [#allocation1], 17
          %6126 = vst [vmem:[%s6125] ss:$2 sm:$0xff] %v6095
          %s6127 = scalar_lea.vmem [#allocation1], 32
          %6128 = vst [vmem:[%s6127] ss:$2 sm:$0xff] %v6063
          %v6129 = vld.sshfl [vmem:[#allocation1] sm:$0xff pattern:$0x75316420]
          %v6130 = vld.sshfl [vmem:[#allocation1 + $0x10] sm:$0xff pattern:$0x75316420]
          %v6131 = vld.sshfl [vmem:[#allocation1 + $0x20] sm:$0xff pattern:$0x75316420]
          %s6132 = scalar_lea.vmem [#allocation1], 48
          %6133 = vst [vmem:[%s6132] ss:$2 sm:$0xff] %v6096
          %s6134 = scalar_lea.vmem [#allocation1], 49
          %6135 = vst [vmem:[%s6134] ss:$2 sm:$0xff] %v6066
          %v6136 = vld.sshfl [vmem:[#allocation1 + $0x30] sm:$0xff pattern:$0x75316420]
          %6137 = vst [vmem:[#allocation1] ss:$2 sm:$0xff] %v6097
          %6138 = vst [vmem:[%s6121] ss:$2 sm:$0xff] %v6067
          %6139 = vst [vmem:[%s6123] ss:$2 sm:$0xff] %v6098
          %v6140 = vld.sshfl [vmem:[#allocation1] sm:$0xff pattern:$0x75316420]
          %v6141 = vld.sshfl [vmem:[#allocation1 + $0x10] sm:$0xff pattern:$0x75316420]
          %6148 = vst [vmem:[#allocation1] ss:$2 sm:$0xff] %v6075
          %s6149 = scalar_lea.vmem [#allocation1], 1
          %6150 = vst [vmem:[%s6149] ss:$2 sm:$0xff] %v6110
          %s6151 = scalar_lea.vmem [#allocation1], 16
          %6152 = vst [vmem:[%s6151] ss:$2 sm:$0xff] %v6077
          %s6153 = scalar_lea.vmem [#allocation1], 17
          %6154 = vst [vmem:[%s6153] ss:$2 sm:$0xff] %v6111
          %s6155 = scalar_lea.vmem [#allocation1], 32
          %6156 = vst [vmem:[%s6155] ss:$2 sm:$0xff] %v6079
          %v6157 = vld.sshfl [vmem:[#allocation1] sm:$0xff pattern:$0x75316420]
          %v6158 = vld.sshfl [vmem:[#allocation1 + $0x10] sm:$0xff pattern:$0x75316420]
          %v6159 = vld.sshfl [vmem:[#allocation1 + $0x20] sm:$0xff pattern:$0x75316420]
          %s6160 = scalar_lea.vmem [#allocation1], 48
          %6161 = vst [vmem:[%s6160] ss:$2 sm:$0xff] %v6114
          %s6162 = scalar_lea.vmem [#allocation1], 49
          %6163 = vst [vmem:[%s6162] ss:$2 sm:$0xff] %v6085
          %v6164 = vld.sshfl [vmem:[#allocation1 + $0x30] sm:$0xff pattern:$0x75316420]
          %6165 = vst [vmem:[#allocation1] ss:$2 sm:$0xff] %v6115
          %6166 = vst [vmem:[%s6149] ss:$2 sm:$0xff] %v6087
          %6167 = vst [vmem:[%s6151] ss:$2 sm:$0xff] %v6116
          %v6168 = vld.sshfl [vmem:[#allocation1] sm:$0xff pattern:$0x75316420]
          %v6169 = vld.sshfl [vmem:[#allocation1 + $0x10] sm:$0xff pattern:$0x75316420]
          %vm6170 = vcmask 1045504
          %v6171 = vrot.slane %v6157, 2
          %v6172 = vrot.slane %v6158, 2
          %v6173 = vsel %vm6170, %v6171, %v6172
          %v6174 = vrot.slane %v6159, 2
          %v6175 = vsel %vm6170, %v6172, %v6174
          %v6176 = vrot.slane %v6164, 2
          %v6177 = vrot.slane %v6168, 2
          %v6178 = vsel %vm6170, %v6176, %v6177
          %v6179 = vrot.slane %v6169, 2
          %v6180 = vsel %vm6170, %v6177, %v6179
          %v6187 = vsel %vm6119, %v6129, %v6173
          %v6188 = vsel %vm6119, %v6130, %v6175
          %v6189 = vsel %vm6119, %v6131, %v6174
          %v6190 = vsel %vm6119, %v6136, %v6178
          %v6191 = vsel %vm6119, %v6140, %v6180
          %v6192 = vsel %vm6119, %v6141, %v6179
          %v6193 = vpack.c.bf16 %v6187, %v6187
          %v6194 = vpack.c.bf16 %v6188, %v6188
          %v6195 = vpack.c.bf16 %v6189, %v6189
          %v6196 = vpack.c.bf16 %v6190, %v6190
          %v6197 = vpack.c.bf16 %v6191, %v6191
          %v6198 = vpack.c.bf16 %v6192, %v6192
          %v6201 = vrot.slane %v6193, 3
          %v6202 = vrot.slane %v6196, 3
          %v6205 = vsel %vm483, %v6193, %v6201
          %v6208 = vsel %vm483, %v6196, %v6202
          %6209 = vst [vmem:[#allocation1] ss:$4 sm:$0xff] %v6205
          %v6210 = vld [vmem:[#allocation1] sm:$0xff]
          %s6212 = scalar_lea.vmem [#allocation1], 32
          %6213 = vst [vmem:[%s6212] ss:$4 sm:$0xff] %v6208
          %v6214 = vld [vmem:[#allocation1 + $0x20] sm:$0xff]
          %v6216 = vunpack.c.l.b16 %v6210
          %v6217 = vunpack.c.l.b16 %v6214
          %v6218 = vrot.slane %v6217, 7
          %v6219 = vsel %vm487, %v6218, %v6216
          %v6220 = vpack.c.b16 %v6219, %v6219
          %v6221 = vrot.slane %v6220, 3
          %v6224 = vsel %vm483, %v6220, %v6221
          %6226 = vst [vmem:[#allocation4] sm:$0x1] %v6224
          %6227 = vst [vmem:[#allocation1] ss:$4 sm:$0xff] %v6205
          %v6228 = vld [vmem:[#allocation1] sm:$0xff]
          %s6230 = scalar_lea.vmem [#allocation1], 32
          %6231 = vst [vmem:[%s6230] ss:$4 sm:$0xff] %v6208
          %v6232 = vld [vmem:[#allocation1 + $0x20] sm:$0xff]
          %v6234 = vunpack.c.l.b16 %v6228
          %v6235 = vunpack.c.l.b16 %v6232
          %v6236 = vrot.slane %v6234, 1
          %v6237 = vsel %vm487, %v6235, %v6236
          %v6238 = vpack.c.b16 %v6237, %v6237
          %v6239 = vrot.slane %v6238, 3
          %v6242 = vsel %vm483, %v6238, %v6239
          %6244 = vst [vmem:[#allocation4 + $0x1] sm:$0x1] %v6242
          %6245 = vst [vmem:[#allocation1] sm:$0xff] %v6193
          %s6246 = scalar_lea.vmem [#allocation1], 1
          %v6247 = vld [vmem:[%s6246] ss:$4 sm:$0xff]
          %6248 = vst [vmem:[#allocation1 + $0x20] sm:$0xff] %v6196
          %s6249 = scalar_lea.vmem [#allocation1], 33
          %v6250 = vld [vmem:[%s6249] ss:$4 sm:$0xff]
          %6251 = vst [vmem:[#allocation1] ss:$4 sm:$0xff] %v6247
          %v6252 = vld [vmem:[#allocation1] sm:$0xff]
          %s6254 = scalar_lea.vmem [#allocation1], 32
          %6255 = vst [vmem:[%s6254] ss:$4 sm:$0xff] %v6250
          %v6256 = vld [vmem:[#allocation1 + $0x20] sm:$0xff]
          %v6258 = vunpack.c.l.b16 %v6252
          %v6259 = vunpack.c.l.b16 %v6256
          %v6260 = vrot.slane %v6259, 7
          %v6261 = vsel %vm487, %v6260, %v6258
          %v6262 = vpack.c.b16 %v6261, %v6261
          %v6263 = vrot.slane %v6262, 3
          %v6266 = vsel %vm483, %v6262, %v6263
          %6268 = vst [vmem:[#allocation4 + $0x2] sm:$0x1] %v6266
          %6269 = vst [vmem:[#allocation1] sm:$0xff] %v6193
          %s6270 = scalar_lea.vmem [#allocation1], 1
          %v6271 = vld [vmem:[%s6270] ss:$4 sm:$0xff]
          %6272 = vst [vmem:[#allocation1 + $0x20] sm:$0xff] %v6196
          %s6273 = scalar_lea.vmem [#allocation1], 33
          %v6274 = vld [vmem:[%s6273] ss:$4 sm:$0xff]
          %6275 = vst [vmem:[#allocation1] ss:$4 sm:$0xff] %v6271
          %v6276 = vld [vmem:[#allocation1] sm:$0xff]
          %s6278 = scalar_lea.vmem [#allocation1], 32
          %6279 = vst [vmem:[%s6278] ss:$4 sm:$0xff] %v6274
          %v6280 = vld [vmem:[#allocation1 + $0x20] sm:$0xff]
          %v6282 = vunpack.c.l.b16 %v6276
          %v6283 = vunpack.c.l.b16 %v6280
          %v6284 = vrot.slane %v6282, 1
          %v6285 = vsel %vm487, %v6283, %v6284
          %v6286 = vpack.c.b16 %v6285, %v6285
          %v6287 = vrot.slane %v6286, 3
          %v6290 = vsel %vm483, %v6286, %v6287
          %6292 = vst [vmem:[#allocation4 + $0x3] sm:$0x1] %v6290
          %6293 = vst [vmem:[#allocation1] sm:$0xff] %v6193
          %s6294 = scalar_lea.vmem [#allocation1], 2
          %v6295 = vld [vmem:[%s6294] ss:$4 sm:$0xff]
          %6296 = vst [vmem:[#allocation1 + $0x20] sm:$0xff] %v6196
          %s6297 = scalar_lea.vmem [#allocation1], 34
          %v6298 = vld [vmem:[%s6297] ss:$4 sm:$0xff]
          %6299 = vst [vmem:[#allocation1] ss:$4 sm:$0xff] %v6295
          %v6300 = vld [vmem:[#allocation1] sm:$0xff]
          %s6302 = scalar_lea.vmem [#allocation1], 32
          %6303 = vst [vmem:[%s6302] ss:$4 sm:$0xff] %v6298
          %v6304 = vld [vmem:[#allocation1 + $0x20] sm:$0xff]
          %v6306 = vunpack.c.l.b16 %v6300
          %v6307 = vunpack.c.l.b16 %v6304
          %v6308 = vrot.slane %v6307, 7
          %v6309 = vsel %vm487, %v6308, %v6306
          %v6310 = vpack.c.b16 %v6309, %v6309
          %v6311 = vrot.slane %v6310, 3
          %v6314 = vsel %vm483, %v6310, %v6311
          %6316 = vst [vmem:[#allocation4 + $0x4] sm:$0x1] %v6314
          %6317 = vst [vmem:[#allocation1] sm:$0xff] %v6193
          %s6318 = scalar_lea.vmem [#allocation1], 2
          %v6319 = vld [vmem:[%s6318] ss:$4 sm:$0xff]
          %6320 = vst [vmem:[#allocation1 + $0x20] sm:$0xff] %v6196
          %s6321 = scalar_lea.vmem [#allocation1], 34
          %v6322 = vld [vmem:[%s6321] ss:$4 sm:$0xff]
          %6323 = vst [vmem:[#allocation1] ss:$4 sm:$0xff] %v6319
          %v6324 = vld [vmem:[#allocation1] sm:$0xff]
          %s6326 = scalar_lea.vmem [#allocation1], 32
          %6327 = vst [vmem:[%s6326] ss:$4 sm:$0xff] %v6322
          %v6328 = vld [vmem:[#allocation1 + $0x20] sm:$0xff]
          %v6330 = vunpack.c.l.b16 %v6324
          %v6331 = vunpack.c.l.b16 %v6328
          %v6332 = vrot.slane %v6330, 1
          %v6333 = vsel %vm487, %v6331, %v6332
          %v6334 = vpack.c.b16 %v6333, %v6333
          %v6335 = vrot.slane %v6334, 3
          %v6338 = vsel %vm483, %v6334, %v6335
          %6340 = vst [vmem:[#allocation4 + $0x5] sm:$0x1] %v6338
          %6341 = vst [vmem:[#allocation1] sm:$0xff] %v6193
          %s6342 = scalar_lea.vmem [#allocation1], 3
          %v6343 = vld [vmem:[%s6342] ss:$4 sm:$0xff]
          %6344 = vst [vmem:[#allocation1 + $0x20] sm:$0xff] %v6196
          %s6345 = scalar_lea.vmem [#allocation1], 35
          %v6346 = vld [vmem:[%s6345] ss:$4 sm:$0xff]
          %6347 = vst [vmem:[#allocation1] ss:$4 sm:$0xff] %v6343
          %v6348 = vld [vmem:[#allocation1] sm:$0xff]
          %s6350 = scalar_lea.vmem [#allocation1], 32
          %6351 = vst [vmem:[%s6350] ss:$4 sm:$0xff] %v6346
          %v6352 = vld [vmem:[#allocation1 + $0x20] sm:$0xff]
          %v6354 = vunpack.c.l.b16 %v6348
          %v6355 = vunpack.c.l.b16 %v6352
          %v6356 = vrot.slane %v6355, 7
          %v6357 = vsel %vm487, %v6356, %v6354
          %v6358 = vpack.c.b16 %v6357, %v6357
          %v6359 = vrot.slane %v6358, 3
          %v6362 = vsel %vm483, %v6358, %v6359
          %6364 = vst [vmem:[#allocation4 + $0x6] sm:$0x1] %v6362
          %6365 = vst [vmem:[#allocation1] sm:$0xff] %v6193
          %s6366 = scalar_lea.vmem [#allocation1], 3
          %v6367 = vld [vmem:[%s6366] ss:$4 sm:$0xff]
          %6368 = vst [vmem:[#allocation1 + $0x20] sm:$0xff] %v6196
          %s6369 = scalar_lea.vmem [#allocation1], 35
          %v6370 = vld [vmem:[%s6369] ss:$4 sm:$0xff]
          %6371 = vst [vmem:[#allocation1] ss:$4 sm:$0xff] %v6367
          %v6372 = vld [vmem:[#allocation1] sm:$0xff]
          %s6374 = scalar_lea.vmem [#allocation1], 32
          %6375 = vst [vmem:[%s6374] ss:$4 sm:$0xff] %v6370
          %v6376 = vld [vmem:[#allocation1 + $0x20] sm:$0xff]
          %v6378 = vunpack.c.l.b16 %v6372
          %v6379 = vunpack.c.l.b16 %v6376
          %v6380 = vrot.slane %v6378, 1
          %v6381 = vsel %vm487, %v6379, %v6380
          %v6382 = vpack.c.b16 %v6381, %v6381
          %v6383 = vrot.slane %v6382, 3
          %v6386 = vsel %vm483, %v6382, %v6383
          %6388 = vst [vmem:[#allocation4 + $0x7] sm:$0x1] %v6386
          %v6391 = vrot.slane %v6194, 3
          %v6392 = vrot.slane %v6197, 3
          %v6395 = vsel %vm483, %v6194, %v6391
          %v6398 = vsel %vm483, %v6197, %v6392
          %6399 = vst [vmem:[#allocation1] ss:$4 sm:$0xff] %v6395
          %v6400 = vld [vmem:[#allocation1] sm:$0xff]
          %s6402 = scalar_lea.vmem [#allocation1], 32
          %6403 = vst [vmem:[%s6402] ss:$4 sm:$0xff] %v6398
          %v6404 = vld [vmem:[#allocation1 + $0x20] sm:$0xff]
          %v6406 = vunpack.c.l.b16 %v6400
          %v6407 = vunpack.c.l.b16 %v6404
          %v6408 = vrot.slane %v6407, 7
          %v6409 = vsel %vm487, %v6408, %v6406
          %v6410 = vpack.c.b16 %v6409, %v6409
          %v6411 = vrot.slane %v6410, 3
          %v6414 = vsel %vm483, %v6410, %v6411
          %6416 = vst [vmem:[#allocation4 + $0x8] sm:$0x1] %v6414
          %6417 = vst [vmem:[#allocation1] ss:$4 sm:$0xff] %v6395
          %v6418 = vld [vmem:[#allocation1] sm:$0xff]
          %s6420 = scalar_lea.vmem [#allocation1], 32
          %6421 = vst [vmem:[%s6420] ss:$4 sm:$0xff] %v6398
          %v6422 = vld [vmem:[#allocation1 + $0x20] sm:$0xff]
          %v6424 = vunpack.c.l.b16 %v6418
          %v6425 = vunpack.c.l.b16 %v6422
          %v6426 = vrot.slane %v6424, 1
          %v6427 = vsel %vm487, %v6425, %v6426
          %v6428 = vpack.c.b16 %v6427, %v6427
          %v6429 = vrot.slane %v6428, 3
          %v6432 = vsel %vm483, %v6428, %v6429
          %6434 = vst [vmem:[#allocation4 + $0x9] sm:$0x1] %v6432
          %6435 = vst [vmem:[#allocation1] sm:$0xff] %v6194
          %s6436 = scalar_lea.vmem [#allocation1], 1
          %v6437 = vld [vmem:[%s6436] ss:$4 sm:$0xff]
          %6438 = vst [vmem:[#allocation1 + $0x20] sm:$0xff] %v6197
          %s6439 = scalar_lea.vmem [#allocation1], 33
          %v6440 = vld [vmem:[%s6439] ss:$4 sm:$0xff]
          %6441 = vst [vmem:[#allocation1] ss:$4 sm:$0xff] %v6437
          %v6442 = vld [vmem:[#allocation1] sm:$0xff]
          %s6444 = scalar_lea.vmem [#allocation1], 32
          %6445 = vst [vmem:[%s6444] ss:$4 sm:$0xff] %v6440
          %v6446 = vld [vmem:[#allocation1 + $0x20] sm:$0xff]
          %v6448 = vunpack.c.l.b16 %v6442
          %v6449 = vunpack.c.l.b16 %v6446
          %v6450 = vrot.slane %v6449, 7
          %v6451 = vsel %vm487, %v6450, %v6448
          %v6452 = vpack.c.b16 %v6451, %v6451
          %v6453 = vrot.slane %v6452, 3
          %v6456 = vsel %vm483, %v6452, %v6453
          %6458 = vst [vmem:[#allocation4 + $0xa] sm:$0x1] %v6456
          %6459 = vst [vmem:[#allocation1] sm:$0xff] %v6194
          %s6460 = scalar_lea.vmem [#allocation1], 1
          %v6461 = vld [vmem:[%s6460] ss:$4 sm:$0xff]
          %6462 = vst [vmem:[#allocation1 + $0x20] sm:$0xff] %v6197
          %s6463 = scalar_lea.vmem [#allocation1], 33
          %v6464 = vld [vmem:[%s6463] ss:$4 sm:$0xff]
          %6465 = vst [vmem:[#allocation1] ss:$4 sm:$0xff] %v6461
          %v6466 = vld [vmem:[#allocation1] sm:$0xff]
          %s6468 = scalar_lea.vmem [#allocation1], 32
          %6469 = vst [vmem:[%s6468] ss:$4 sm:$0xff] %v6464
          %v6470 = vld [vmem:[#allocation1 + $0x20] sm:$0xff]
          %v6472 = vunpack.c.l.b16 %v6466
          %v6473 = vunpack.c.l.b16 %v6470
          %v6474 = vrot.slane %v6472, 1
          %v6475 = vsel %vm487, %v6473, %v6474
          %v6476 = vpack.c.b16 %v6475, %v6475
          %v6477 = vrot.slane %v6476, 3
          %v6480 = vsel %vm483, %v6476, %v6477
          %6482 = vst [vmem:[#allocation4 + $0xb] sm:$0x1] %v6480
          %6483 = vst [vmem:[#allocation1] sm:$0xff] %v6194
          %s6484 = scalar_lea.vmem [#allocation1], 2
          %v6485 = vld [vmem:[%s6484] ss:$4 sm:$0xff]
          %6486 = vst [vmem:[#allocation1 + $0x20] sm:$0xff] %v6197
          %s6487 = scalar_lea.vmem [#allocation1], 34
          %v6488 = vld [vmem:[%s6487] ss:$4 sm:$0xff]
          %6489 = vst [vmem:[#allocation1] ss:$4 sm:$0xff] %v6485
          %v6490 = vld [vmem:[#allocation1] sm:$0xff]
          %s6492 = scalar_lea.vmem [#allocation1], 32
          %6493 = vst [vmem:[%s6492] ss:$4 sm:$0xff] %v6488
          %v6494 = vld [vmem:[#allocation1 + $0x20] sm:$0xff]
          %v6496 = vunpack.c.l.b16 %v6490
          %v6497 = vunpack.c.l.b16 %v6494
          %v6498 = vrot.slane %v6497, 7
          %v6499 = vsel %vm487, %v6498, %v6496
          %v6500 = vpack.c.b16 %v6499, %v6499
          %v6501 = vrot.slane %v6500, 3
          %v6504 = vsel %vm483, %v6500, %v6501
          %6506 = vst [vmem:[#allocation4 + $0xc] sm:$0x1] %v6504
          %6507 = vst [vmem:[#allocation1] sm:$0xff] %v6194
          %s6508 = scalar_lea.vmem [#allocation1], 2
          %v6509 = vld [vmem:[%s6508] ss:$4 sm:$0xff]
          %6510 = vst [vmem:[#allocation1 + $0x20] sm:$0xff] %v6197
          %s6511 = scalar_lea.vmem [#allocation1], 34
          %v6512 = vld [vmem:[%s6511] ss:$4 sm:$0xff]
          %6513 = vst [vmem:[#allocation1] ss:$4 sm:$0xff] %v6509
          %v6514 = vld [vmem:[#allocation1] sm:$0xff]
          %s6516 = scalar_lea.vmem [#allocation1], 32
          %6517 = vst [vmem:[%s6516] ss:$4 sm:$0xff] %v6512
          %v6518 = vld [vmem:[#allocation1 + $0x20] sm:$0xff]
          %v6520 = vunpack.c.l.b16 %v6514
          %v6521 = vunpack.c.l.b16 %v6518
          %v6522 = vrot.slane %v6520, 1
          %v6523 = vsel %vm487, %v6521, %v6522
          %v6524 = vpack.c.b16 %v6523, %v6523
          %v6525 = vrot.slane %v6524, 3
          %v6528 = vsel %vm483, %v6524, %v6525
          %6530 = vst [vmem:[#allocation4 + $0xd] sm:$0x1] %v6528
          %6531 = vst [vmem:[#allocation1] sm:$0xff] %v6194
          %s6532 = scalar_lea.vmem [#allocation1], 3
          %v6533 = vld [vmem:[%s6532] ss:$4 sm:$0xff]
          %6534 = vst [vmem:[#allocation1 + $0x20] sm:$0xff] %v6197
          %s6535 = scalar_lea.vmem [#allocation1], 35
          %v6536 = vld [vmem:[%s6535] ss:$4 sm:$0xff]
          %6537 = vst [vmem:[#allocation1] ss:$4 sm:$0xff] %v6533
          %v6538 = vld [vmem:[#allocation1] sm:$0xff]
          %s6540 = scalar_lea.vmem [#allocation1], 32
          %6541 = vst [vmem:[%s6540] ss:$4 sm:$0xff] %v6536
          %v6542 = vld [vmem:[#allocation1 + $0x20] sm:$0xff]
          %v6544 = vunpack.c.l.b16 %v6538
          %v6545 = vunpack.c.l.b16 %v6542
          %v6546 = vrot.slane %v6545, 7
          %v6547 = vsel %vm487, %v6546, %v6544
          %v6548 = vpack.c.b16 %v6547, %v6547
          %v6549 = vrot.slane %v6548, 3
          %v6552 = vsel %vm483, %v6548, %v6549
          %6554 = vst [vmem:[#allocation4 + $0xe] sm:$0x1] %v6552
          %6555 = vst [vmem:[#allocation1] sm:$0xff] %v6194
          %s6556 = scalar_lea.vmem [#allocation1], 3
          %v6557 = vld [vmem:[%s6556] ss:$4 sm:$0xff]
          %6558 = vst [vmem:[#allocation1 + $0x20] sm:$0xff] %v6197
          %s6559 = scalar_lea.vmem [#allocation1], 35
          %v6560 = vld [vmem:[%s6559] ss:$4 sm:$0xff]
          %6561 = vst [vmem:[#allocation1] ss:$4 sm:$0xff] %v6557
          %v6562 = vld [vmem:[#allocation1] sm:$0xff]
          %s6564 = scalar_lea.vmem [#allocation1], 32
          %6565 = vst [vmem:[%s6564] ss:$4 sm:$0xff] %v6560
          %v6566 = vld [vmem:[#allocation1 + $0x20] sm:$0xff]
          %v6568 = vunpack.c.l.b16 %v6562
          %v6569 = vunpack.c.l.b16 %v6566
          %v6570 = vrot.slane %v6568, 1
          %v6571 = vsel %vm487, %v6569, %v6570
          %v6572 = vpack.c.b16 %v6571, %v6571
          %v6573 = vrot.slane %v6572, 3
          %v6576 = vsel %vm483, %v6572, %v6573
          %6578 = vst [vmem:[#allocation4 + $0xf] sm:$0x1] %v6576
          %v6581 = vrot.slane %v6195, 3
          %v6582 = vrot.slane %v6198, 3
          %v6585 = vsel %vm483, %v6195, %v6581
          %v6588 = vsel %vm483, %v6198, %v6582
          %6589 = vst [vmem:[#allocation1] ss:$4 sm:$0xff] %v6585
          %v6590 = vld [vmem:[#allocation1] sm:$0xff]
          %s6592 = scalar_lea.vmem [#allocation1], 32
          %6593 = vst [vmem:[%s6592] ss:$4 sm:$0xff] %v6588
          %v6594 = vld [vmem:[#allocation1 + $0x20] sm:$0xff]
          %v6596 = vunpack.c.l.b16 %v6590
          %v6597 = vunpack.c.l.b16 %v6594
          %v6598 = vrot.slane %v6597, 7
          %v6599 = vsel %vm487, %v6598, %v6596
          %v6600 = vpack.c.b16 %v6599, %v6599
          %v6601 = vrot.slane %v6600, 3
          %v6604 = vsel %vm483, %v6600, %v6601
          %6606 = vst [vmem:[#allocation4 + $0x10] sm:$0x1] %v6604
          %6607 = vst [vmem:[#allocation1] ss:$4 sm:$0xff] %v6585
          %v6608 = vld [vmem:[#allocation1] sm:$0xff]
          %s6610 = scalar_lea.vmem [#allocation1], 32
          %6611 = vst [vmem:[%s6610] ss:$4 sm:$0xff] %v6588
          %v6612 = vld [vmem:[#allocation1 + $0x20] sm:$0xff]
          %v6614 = vunpack.c.l.b16 %v6608
          %v6615 = vunpack.c.l.b16 %v6612
          %v6616 = vrot.slane %v6614, 1
          %v6617 = vsel %vm487, %v6615, %v6616
          %v6618 = vpack.c.b16 %v6617, %v6617
          %v6619 = vrot.slane %v6618, 3
          %v6622 = vsel %vm483, %v6618, %v6619
          %6624 = vst [vmem:[#allocation4 + $0x11] sm:$0x1] %v6622
          %6625 = vst [vmem:[#allocation1] ss:$2 sm:$0xff] %v6071
          %s6626 = scalar_lea.vmem [#allocation1], 1
          %6627 = vst [vmem:[%s6626] ss:$2 sm:$0xff] %v6108
          %s6628 = scalar_lea.vmem [#allocation1], 16
          %6629 = vst [vmem:[%s6628] ss:$2 sm:$0xff] %v6073
          %s6630 = scalar_lea.vmem [#allocation1], 17
          %6631 = vst [vmem:[%s6630] ss:$2 sm:$0xff] %v6109
          %s6632 = scalar_lea.vmem [#allocation1], 32
          %6633 = vst [vmem:[%s6632] ss:$2 sm:$0xff] %v6075
          %s6634 = scalar_lea.vmem [#allocation1], 33
          %6635 = vst [vmem:[%s6634] ss:$2 sm:$0xff] %v6110
          %s6636 = scalar_lea.vmem [#allocation1], 48
          %6637 = vst [vmem:[%s6636] ss:$2 sm:$0xff] %v6077
          %s6638 = scalar_lea.vmem [#allocation1], 49
          %6639 = vst [vmem:[%s6638] ss:$2 sm:$0xff] %v6111
          %v6640 = vld.sshfl [vmem:[#allocation1] sm:$0xff pattern:$0x75316420]
          %v6641 = vld.sshfl [vmem:[#allocation1 + $0x10] sm:$0xff pattern:$0x75316420]
          %v6642 = vld.sshfl [vmem:[#allocation1 + $0x20] sm:$0xff pattern:$0x75316420]
          %v6643 = vld.sshfl [vmem:[#allocation1 + $0x30] sm:$0xff pattern:$0x75316420]
          %6644 = vst [vmem:[#allocation1] ss:$2 sm:$0xff] %v6079
          %v6645 = vld.sshfl [vmem:[#allocation1] sm:$0xff pattern:$0x75316420]
          %6646 = vst [vmem:[%s6628] ss:$2 sm:$0xff] %v6112
          %6647 = vst [vmem:[%s6630] ss:$2 sm:$0xff] %v6081
          %6648 = vst [vmem:[%s6632] ss:$2 sm:$0xff] %v6113
          %6649 = vst [vmem:[%s6634] ss:$2 sm:$0xff] %v6083
          %6650 = vst [vmem:[%s6636] ss:$2 sm:$0xff] %v6114
          %6651 = vst [vmem:[%s6638] ss:$2 sm:$0xff] %v6085
          %v6652 = vld.sshfl [vmem:[#allocation1 + $0x10] sm:$0xff pattern:$0x75316420]
          %v6653 = vld.sshfl [vmem:[#allocation1 + $0x20] sm:$0xff pattern:$0x75316420]
          %v6654 = vld.sshfl [vmem:[#allocation1 + $0x30] sm:$0xff pattern:$0x75316420]
          %6655 = vst [vmem:[#allocation1] ss:$2 sm:$0xff] %v6115
          %6656 = vst [vmem:[%s6626] ss:$2 sm:$0xff] %v6087
          %6657 = vst [vmem:[%s6628] ss:$2 sm:$0xff] %v6116
          %v6658 = vld.sshfl [vmem:[#allocation1] sm:$0xff pattern:$0x75316420]
          %v6659 = vld.sshfl [vmem:[#allocation1 + $0x10] sm:$0xff pattern:$0x75316420]
          %vm6670 = vcmask 7168
          %6671 = vst.msk [vmem:[#allocation5] sm:$0xff] %vm6670, %v6640
          %6672 = vst.msk [vmem:[#allocation5 + $0x8] sm:$0xff] %vm6670, %v6641
          %6673 = vst.msk [vmem:[#allocation5 + $0x10] sm:$0xff] %vm6670, %v6642
          %6674 = vst.msk [vmem:[#allocation5 + $0x18] sm:$0xff] %vm6670, %v6643
          %vm6675 = vcmask 3072
          %6676 = vst.msk [vmem:[#allocation5 + $0x20] sm:$0xf] %vm6675, %v6645
          %6677 = vst.msk [vmem:[#allocation5 + $0x28] sm:$0xff] %vm6670, %v6652
          %6678 = vst.msk [vmem:[#allocation5 + $0x30] sm:$0xff] %vm6670, %v6653
          %6679 = vst.msk [vmem:[#allocation5 + $0x38] sm:$0xff] %vm6670, %v6654
          %6680 = vst.msk [vmem:[#allocation5 + $0x40] sm:$0xff] %vm6670, %v6658
          %6681 = vst.msk [vmem:[#allocation5 + $0x48] sm:$0xf] %vm6675, %v6659
        $region76: #{tpu_custom_call.1} parent=47 // pred_fallthru
          _
        %v6682 = vld [vmem:[#allocation4] sm:$0xff]
        %v6683 = vld [vmem:[#allocation4 + $0x8] sm:$0xff]
        %v6684 = vld [vmem:[#allocation4 + $0x10] sm:$0x3]
        %v6685 = vld [vmem:[%s352] sm:$0xf]
        %v6686 = vld [vmem:[%s352 + $0x4] sm:$0xf]
        %v6687 = vld [vmem:[%s352 + $0x8] sm:$0xf]
        %v6688 = vld [vmem:[%s352 + $0xc] sm:$0xf]
        %v6689 = vld [vmem:[%s352 + $0x10] sm:$0xf]
        %v6690 = vld [vmem:[%s352 + $0x14] sm:$0xf]
        %v6691 = vld [vmem:[%s352 + $0x18] sm:$0xf]
        %v6692 = vld [vmem:[%s352 + $0x1c] sm:$0xf]
        %v6693 = vld [vmem:[%s352 + $0x20] sm:$0xf]
        %v6694 = vld [vmem:[%s352 + $0x24] sm:$0xf]
        %v6695 = vld [vmem:[%s352 + $0x28] sm:$0xf]
        %v6696 = vld [vmem:[%s352 + $0x2c] sm:$0xf]
        %v6697 = vld [vmem:[%s352 + $0x30] sm:$0xf]
        %v6698 = vld [vmem:[%s352 + $0x34] sm:$0xf]
        %v6699 = vld [vmem:[%s352 + $0x38] sm:$0xf]
        %v6700 = vld [vmem:[%s352 + $0x3c] sm:$0xf]
        %v6701 = vld [vmem:[%s352 + $0x40] sm:$0xf]
        %v6702 = vld [vmem:[%s352 + $0x44] sm:$0xf]
        %v6703 = vld [vmem:[%s352 + $0x48] sm:$0xf]
        %v6704 = vld [vmem:[%s352 + $0x4c] sm:$0xf]
        %v6705 = vld [vmem:[%s352 + $0x50] sm:$0xf]
        %v6706 = vld [vmem:[%s352 + $0x54] sm:$0xf]
        %v6707 = vld [vmem:[%s352 + $0x58] sm:$0xf]
        %v6708 = vld [vmem:[%s352 + $0x5c] sm:$0xf]
        %v6709 = vld [vmem:[%s352 + $0x60] sm:$0xf]
        %v6710 = vld [vmem:[%s352 + $0x64] sm:$0xf]
        %v6711 = vld [vmem:[%s352 + $0x68] sm:$0xf]
        %v6712 = vld [vmem:[%s352 + $0x6c] sm:$0xf]
        %v6713 = vld [vmem:[%s352 + $0x70] sm:$0xf]
        %v6714 = vld [vmem:[%s352 + $0x74] sm:$0xf]
        %v6715 = vld [vmem:[%s352 + $0x78] sm:$0xf]
        %v6716 = vld [vmem:[%s352 + $0x7c] sm:$0xf]
        %v6717 = vld [vmem:[%s352 + $0x80] sm:$0xf]
        %v6718 = vld [vmem:[%s352 + $0x84] sm:$0xf]
        %v6719 = vld [vmem:[%s352 + $0x88] sm:$0xf]
        %v6720 = vld [vmem:[%s352 + $0x8c] sm:$0xf]
        %v6721 = vld [vmem:[%s352 + $0x90] sm:$0xf]
        %v6722 = vld [vmem:[%s352 + $0x94] sm:$0xf]
        %v6723 = vld [vmem:[%s352 + $0x98] sm:$0xf]
        %v6724 = vld [vmem:[%s352 + $0x9c] sm:$0xf]
        %v6725 = vld [vmem:[%s352 + $0xa0] sm:$0xf]
        %v6726 = vld [vmem:[%s352 + $0xa4] sm:$0xf]
        %v6727 = vld [vmem:[%s352 + $0xa8] sm:$0xf]
        %v6728 = vld [vmem:[%s352 + $0xac] sm:$0xf]
        %v6729 = vld [vmem:[%s352 + $0xb0] sm:$0xf]
        %v6730 = vld [vmem:[%s352 + $0xb4] sm:$0xf]
        %v6731 = vld [vmem:[%s352 + $0xb8] sm:$0xf]
        %v6732 = vld [vmem:[%s352 + $0xbc] sm:$0xf]
        %v6733 = vld [vmem:[%s352 + $0xc0] sm:$0xf]
        %v6734 = vld [vmem:[%s352 + $0xc4] sm:$0xf]
        %v6735 = vld [vmem:[%s352 + $0xc8] sm:$0xf]
        %v6736 = vld [vmem:[%s352 + $0xcc] sm:$0xf]
        %v6737 = vld [vmem:[%s352 + $0xd0] sm:$0xf]
        %v6738 = vld [vmem:[%s352 + $0xd4] sm:$0xf]
        %v6739 = vld [vmem:[%s352 + $0xd8] sm:$0xf]
        %v6740 = vld [vmem:[%s352 + $0xdc] sm:$0xf]
        %v6741 = vld [vmem:[%s352 + $0xe0] sm:$0xf]
        %v6742 = vld [vmem:[%s352 + $0xe4] sm:$0xf]
        %v6743 = vld [vmem:[%s352 + $0xe8] sm:$0xf]
        %v6744 = vld [vmem:[%s352 + $0xec] sm:$0xf]
        %v6745 = vld [vmem:[%s352 + $0xf0] sm:$0xf]
        %v6746 = vld [vmem:[%s352 + $0xf4] sm:$0xf]
        %v6747 = vld [vmem:[%s352 + $0xf8] sm:$0xf]
        %v6748 = vld [vmem:[%s352 + $0xfc] sm:$0xf]
        %v6749 = vld [vmem:[%s352 + $0x100] sm:$0xf]
        %v6750 = vld [vmem:[%s352 + $0x104] sm:$0xf]
        %v6751 = vld [vmem:[%s352 + $0x108] sm:$0xf]
        %v6752 = vld [vmem:[%s352 + $0x10c] sm:$0xf]
        %v6753 = vld [vmem:[%s352 + $0x110] sm:$0xf]
        %v6754 = vld [vmem:[%s352 + $0x114] sm:$0xf]
        %v6755 = vld [vmem:[%s352 + $0x118] sm:$0xf]
        %v6756 = vld [vmem:[%s352 + $0x11c] sm:$0xf]
        %v6757 = vld [vmem:[%s352 + $0x120] sm:$0xf]
        %v6758 = vld [vmem:[%s352 + $0x124] sm:$0xf]
        %v6759 = vld [vmem:[%s352 + $0x128] sm:$0xf]
        %v6760 = vld [vmem:[%s352 + $0x12c] sm:$0xf]
        %v6761 = vld [vmem:[%s352 + $0x130] sm:$0xf]
        %v6762 = vld [vmem:[%s352 + $0x134] sm:$0xf]
        %v6763 = vld [vmem:[%s352 + $0x138] sm:$0xf]
        %v6764 = vld [vmem:[%s352 + $0x13c] sm:$0xf]
        %v6765 = vld [vmem:[%s352 + $0x140] sm:$0xf]
        %v6766 = vld [vmem:[%s352 + $0x144] sm:$0xf]
        %v6767 = vld [vmem:[%s352 + $0x148] sm:$0xf]
        %v6768 = vld [vmem:[%s352 + $0x14c] sm:$0xf]
        %v6769 = vld [vmem:[%s352 + $0x150] sm:$0xf]
        %v6770 = vld [vmem:[%s352 + $0x154] sm:$0xf]
        %v6771 = vld [vmem:[%s352 + $0x158] sm:$0xf]
        %v6772 = vld [vmem:[%s352 + $0x15c] sm:$0xf]
        %v6773 = vld [vmem:[%s352 + $0x160] sm:$0xf]
        %v6774 = vld [vmem:[%s352 + $0x164] sm:$0xf]
        %v6775 = vld [vmem:[%s352 + $0x168] sm:$0xf]
        %v6776 = vld [vmem:[%s352 + $0x16c] sm:$0xf]
        %v6777 = vld [vmem:[%s352 + $0x170] sm:$0xf]
        %v6778 = vld [vmem:[%s352 + $0x174] sm:$0xf]
        %v6779 = vld [vmem:[%s352 + $0x178] sm:$0xf]
        %v6780 = vld [vmem:[%s352 + $0x17c] sm:$0xf]
        %v6781 = vld [vmem:[%s352 + $0x180] sm:$0xf]
        %v6782 = vld [vmem:[%s352 + $0x184] sm:$0xf]
        %v6783 = vld [vmem:[%s352 + $0x188] sm:$0xf]
        %v6784 = vld [vmem:[%s352 + $0x18c] sm:$0xf]
        %v6785 = vld [vmem:[%s352 + $0x190] sm:$0xf]
        %v6786 = vld [vmem:[%s352 + $0x194] sm:$0xf]
        %v6787 = vld [vmem:[%s352 + $0x198] sm:$0xf]
        %v6788 = vld [vmem:[%s352 + $0x19c] sm:$0xf]
        %v6789 = vld [vmem:[%s352 + $0x1a0] sm:$0xf]
        %v6790 = vld [vmem:[%s352 + $0x1a4] sm:$0xf]
        %v6791 = vld [vmem:[%s352 + $0x1a8] sm:$0xf]
        %v6792 = vld [vmem:[%s352 + $0x1ac] sm:$0xf]
        %v6793 = vld [vmem:[%s352 + $0x1b0] sm:$0xf]
        %v6794 = vld [vmem:[%s352 + $0x1b4] sm:$0xf]
        %v6795 = vld [vmem:[%s352 + $0x1b8] sm:$0xf]
        %v6796 = vld [vmem:[%s352 + $0x1bc] sm:$0xf]
        %v6797 = vld [vmem:[%s352 + $0x1c0] sm:$0xf]
        %v6798 = vld [vmem:[%s352 + $0x1c4] sm:$0xf]
        %v6799 = vld [vmem:[%s352 + $0x1c8] sm:$0xf]
        %v6800 = vld [vmem:[%s352 + $0x1cc] sm:$0xf]
        %v6801 = vld [vmem:[%s352 + $0x1d0] sm:$0xf]
        %v6802 = vld [vmem:[%s352 + $0x1d4] sm:$0xf]
        %v6803 = vld [vmem:[%s352 + $0x1d8] sm:$0xf]
        %v6804 = vld [vmem:[%s352 + $0x1dc] sm:$0xf]
        %v6805 = vld [vmem:[%s352 + $0x1e0] sm:$0xf]
        %v6806 = vld [vmem:[%s352 + $0x1e4] sm:$0xf]
        %v6807 = vld [vmem:[%s352 + $0x1e8] sm:$0xf]
        %v6808 = vld [vmem:[%s352 + $0x1ec] sm:$0xf]
        %v6809 = vld [vmem:[%s352 + $0x1f0] sm:$0xf]
        %v6810 = vld [vmem:[%s352 + $0x1f4] sm:$0xf]
        %v6811 = vld [vmem:[%s352 + $0x1f8] sm:$0xf]
        %v6812 = vld [vmem:[%s352 + $0x1fc] sm:$0xf]
        %v6813 = vld [vmem:[%s352 + $0x200] sm:$0xf]
        %v6814 = vld [vmem:[%s352 + $0x204] sm:$0xf]
        %v6815 = vld [vmem:[%s352 + $0x208] sm:$0xf]
        %v6816 = vld [vmem:[%s352 + $0x20c] sm:$0xf]
        %v6817 = vld [vmem:[%s352 + $0x210] sm:$0xf]
        %v6818 = vld [vmem:[%s352 + $0x214] sm:$0xf]
        %v6819 = vld [vmem:[%s352 + $0x218] sm:$0xf]
        %v6820 = vld [vmem:[%s352 + $0x21c] sm:$0xf]
        %v6821 = vld [vmem:[%s352 + $0x220] sm:$0xf]
        %v6822 = vld [vmem:[%s352 + $0x224] sm:$0xf]
        %v6823 = vld [vmem:[%s352 + $0x228] sm:$0xf]
        %v6824 = vld [vmem:[%s352 + $0x22c] sm:$0xf]
        %v6825 = vld [vmem:[%s352 + $0x230] sm:$0xf]
        %v6826 = vld [vmem:[%s352 + $0x234] sm:$0xf]
        %v6827 = vld [vmem:[%s352 + $0x238] sm:$0xf]
        %v6828 = vld [vmem:[%s352 + $0x23c] sm:$0xf]
        %v6829 = vld [vmem:[%s352 + $0x240] sm:$0xf]
        %v6830 = vld [vmem:[%s352 + $0x244] sm:$0xf]
        %v6831 = vld [vmem:[%s352 + $0x248] sm:$0xf]
        %v6832 = vld [vmem:[%s352 + $0x24c] sm:$0xf]
        %v6833 = vld [vmem:[%s352 + $0x250] sm:$0xf]
        %v6834 = vld [vmem:[%s352 + $0x254] sm:$0xf]
        %v6835 = vld [vmem:[%s352 + $0x258] sm:$0xf]
        %v6836 = vld [vmem:[%s352 + $0x25c] sm:$0xf]
        %v6837 = vld [vmem:[%s352 + $0x260] sm:$0xf]
        %v6838 = vld [vmem:[%s352 + $0x264] sm:$0xf]
        %v6839 = vld [vmem:[%s352 + $0x268] sm:$0xf]
        %v6840 = vld [vmem:[%s352 + $0x26c] sm:$0xf]
        %v6841 = vld [vmem:[%s352 + $0x270] sm:$0xf]
        %v6842 = vld [vmem:[%s352 + $0x274] sm:$0xf]
        %v6843 = vld [vmem:[%s352 + $0x278] sm:$0xf]
        %v6844 = vld [vmem:[%s352 + $0x27c] sm:$0xf]
        %v6845 = vld [vmem:[%s352 + $0x280] sm:$0xf]
        %v6846 = vld [vmem:[%s352 + $0x284] sm:$0xf]
        %v6847 = vld [vmem:[%s352 + $0x288] sm:$0xf]
        %v6848 = vld [vmem:[%s352 + $0x28c] sm:$0xf]
        %v6849 = vld [vmem:[%s352 + $0x290] sm:$0xf]
        %v6850 = vld [vmem:[%s352 + $0x294] sm:$0xf]
        %v6851 = vld [vmem:[%s352 + $0x298] sm:$0xf]
        %v6852 = vld [vmem:[%s352 + $0x29c] sm:$0xf]
        %v6853 = vld [vmem:[%s352 + $0x2a0] sm:$0xf]
        %v6854 = vld [vmem:[%s352 + $0x2a4] sm:$0xf]
        %v6855 = vld [vmem:[%s352 + $0x2a8] sm:$0xf]
        %v6856 = vld [vmem:[%s352 + $0x2ac] sm:$0xf]
        %v6857 = vld [vmem:[%s352 + $0x2b0] sm:$0xf]
        %v6858 = vld [vmem:[%s352 + $0x2b4] sm:$0xf]
        %v6859 = vld [vmem:[%s352 + $0x2b8] sm:$0xf]
        %v6860 = vld [vmem:[%s352 + $0x2bc] sm:$0xf]
        %v6861 = vld [vmem:[%s352 + $0x2c0] sm:$0xf]
        %v6862 = vld [vmem:[%s352 + $0x2c4] sm:$0xf]
        %v6863 = vld [vmem:[%s352 + $0x2c8] sm:$0xf]
        %v6864 = vld [vmem:[%s352 + $0x2cc] sm:$0xf]
        %v6865 = vld [vmem:[%s352 + $0x2d0] sm:$0xf]
        %v6866 = vld [vmem:[%s352 + $0x2d4] sm:$0xf]
        %v6867 = vld [vmem:[%s352 + $0x2d8] sm:$0xf]
        %v6868 = vld [vmem:[%s352 + $0x2dc] sm:$0xf]
        %v6869 = vld [vmem:[%s352 + $0x2e0] sm:$0xf]
        %v6870 = vld [vmem:[%s352 + $0x2e4] sm:$0xf]
        %v6871 = vld [vmem:[%s352 + $0x2e8] sm:$0xf]
        %v6872 = vld [vmem:[%s352 + $0x2ec] sm:$0xf]
        %v6873 = vld [vmem:[%s352 + $0x2f0] sm:$0xf]
        %v6874 = vld [vmem:[%s352 + $0x2f4] sm:$0xf]
        %v6875 = vld [vmem:[%s352 + $0x2f8] sm:$0xf]
        %v6876 = vld [vmem:[%s352 + $0x2fc] sm:$0xf]
        %v6877 = vld [vmem:[%s352 + $0x300] sm:$0xf]
        %v6878 = vld [vmem:[%s352 + $0x304] sm:$0xf]
        %v6879 = vld [vmem:[%s352 + $0x308] sm:$0xf]
        %v6880 = vld [vmem:[%s352 + $0x30c] sm:$0xf]
        %v6881 = vld [vmem:[%s352 + $0x310] sm:$0xf]
        %v6882 = vld [vmem:[%s352 + $0x314] sm:$0xf]
        %v6883 = vld [vmem:[%s352 + $0x318] sm:$0xf]
        %v6884 = vld [vmem:[%s352 + $0x31c] sm:$0xf]
        %v6885 = vld [vmem:[%s352 + $0x320] sm:$0xf]
        %v6886 = vld [vmem:[%s352 + $0x324] sm:$0xf]
        %v6887 = vld [vmem:[%s352 + $0x328] sm:$0xf]
        %v6888 = vld [vmem:[%s352 + $0x32c] sm:$0xf]
        %v6889 = vld [vmem:[%s352 + $0x330] sm:$0xf]
        %v6890 = vld [vmem:[%s352 + $0x334] sm:$0xf]
        %v6891 = vld [vmem:[%s352 + $0x338] sm:$0xf]
        %v6892 = vld [vmem:[%s352 + $0x33c] sm:$0xf]
        %v6893 = vld [vmem:[%s352 + $0x340] sm:$0xf]
        %v6894 = vld [vmem:[%s352 + $0x344] sm:$0xf]
        %v6895 = vld [vmem:[%s352 + $0x348] sm:$0xf]
        %v6896 = vld [vmem:[%s352 + $0x34c] sm:$0xf]
        %v6897 = vld [vmem:[%s352 + $0x350] sm:$0xf]
        %v6898 = vld [vmem:[%s352 + $0x354] sm:$0xf]
        %v6899 = vld [vmem:[%s352 + $0x358] sm:$0xf]
        %v6900 = vld [vmem:[%s352 + $0x35c] sm:$0xf]
        %v6901 = vld [vmem:[%s352 + $0x360] sm:$0xf]
        %v6902 = vld [vmem:[%s352 + $0x364] sm:$0xf]
        %v6903 = vld [vmem:[%s352 + $0x368] sm:$0xf]
        %v6904 = vld [vmem:[%s352 + $0x36c] sm:$0xf]
        %v6905 = vld [vmem:[%s352 + $0x370] sm:$0xf]
        %v6906 = vld [vmem:[%s352 + $0x374] sm:$0xf]
        %v6907 = vld [vmem:[%s352 + $0x378] sm:$0xf]
        %v6908 = vld [vmem:[%s352 + $0x37c] sm:$0xf]
        %v6909 = vld [vmem:[%s352 + $0x380] sm:$0xf]
        %v6910 = vld [vmem:[%s352 + $0x384] sm:$0xf]
        %v6911 = vld [vmem:[%s352 + $0x388] sm:$0xf]
        %v6912 = vld [vmem:[%s352 + $0x38c] sm:$0xf]
        %v6913 = vld [vmem:[%s352 + $0x390] sm:$0xf]
        %v6914 = vld [vmem:[%s352 + $0x394] sm:$0xf]
        %v6915 = vld [vmem:[%s352 + $0x398] sm:$0xf]
        %v6916 = vld [vmem:[%s352 + $0x39c] sm:$0xf]
        %v6917 = vld [vmem:[%s352 + $0x3a0] sm:$0xf]
        %v6918 = vld [vmem:[%s352 + $0x3a4] sm:$0xf]
        %v6919 = vld [vmem:[%s352 + $0x3a8] sm:$0xf]
        %v6920 = vld [vmem:[%s352 + $0x3ac] sm:$0xf]
        %v6921 = vld [vmem:[%s352 + $0x3b0] sm:$0xf]
        %v6922 = vld [vmem:[%s352 + $0x3b4] sm:$0xf]
        %v6923 = vld [vmem:[%s352 + $0x3b8] sm:$0xf]
        %v6924 = vld [vmem:[%s352 + $0x3bc] sm:$0xf]
        %v6925 = vld [vmem:[%s352 + $0x3c0] sm:$0xf]
        %v6926 = vld [vmem:[%s352 + $0x3c4] sm:$0xf]
        %v6927 = vld [vmem:[%s352 + $0x3c8] sm:$0xf]
        %v6928 = vld [vmem:[%s352 + $0x3cc] sm:$0xf]
        %v6929 = vld [vmem:[%s352 + $0x3d0] sm:$0xf]
        %v6930 = vld [vmem:[%s352 + $0x3d4] sm:$0xf]
        %v6931 = vld [vmem:[%s352 + $0x3d8] sm:$0xf]
        %v6932 = vld [vmem:[%s352 + $0x3dc] sm:$0xf]
        %v6933 = vld [vmem:[%s352 + $0x3e0] sm:$0xf]
        %v6934 = vld [vmem:[%s352 + $0x3e4] sm:$0xf]
        %v6935 = vld [vmem:[%s352 + $0x3e8] sm:$0xf]
        %v6936 = vld [vmem:[%s352 + $0x3ec] sm:$0xf]
        %v6937 = vld [vmem:[%s352 + $0x3f0] sm:$0xf]
        %v6938 = vld [vmem:[%s352 + $0x3f4] sm:$0xf]
        %v6939 = vld [vmem:[%s352 + $0x3f8] sm:$0xf]
        %v6940 = vld [vmem:[%s352 + $0x3fc] sm:$0xf]
        %v6941 = vld [vmem:[%s352 + $0x400] sm:$0xf]
        %v6942 = vld [vmem:[%s352 + $0x404] sm:$0xf]
        %v6943 = vld [vmem:[%s352 + $0x408] sm:$0xf]
        %v6944 = vld [vmem:[%s352 + $0x40c] sm:$0xf]
        %v6945 = vld [vmem:[%s352 + $0x410] sm:$0xf]
        %v6946 = vld [vmem:[%s352 + $0x414] sm:$0xf]
        %v6947 = vld [vmem:[%s352 + $0x418] sm:$0xf]
        %v6948 = vld [vmem:[%s352 + $0x41c] sm:$0xf]
        %v6949 = vld [vmem:[%s352 + $0x420] sm:$0xf]
        %v6950 = vld [vmem:[%s352 + $0x424] sm:$0xf]
        %v6951 = vld [vmem:[%s352 + $0x428] sm:$0xf]
        %v6952 = vld [vmem:[%s352 + $0x42c] sm:$0xf]
        %v6953 = vld [vmem:[%s352 + $0x430] sm:$0xf]
        %v6954 = vld [vmem:[%s352 + $0x434] sm:$0xf]
        %v6955 = vld [vmem:[%s352 + $0x438] sm:$0xf]
        %v6956 = vld [vmem:[%s352 + $0x43c] sm:$0xf]
        %v6957 = vld [vmem:[%s352 + $0x440] sm:$0xf]
        %v6958 = vld [vmem:[%s352 + $0x444] sm:$0xf]
        %v6959 = vld [vmem:[%s352 + $0x448] sm:$0xf]
        %v6960 = vld [vmem:[%s352 + $0x44c] sm:$0xf]
        %v6961 = vld [vmem:[%s352 + $0x450] sm:$0xf]
        %v6962 = vld [vmem:[%s352 + $0x454] sm:$0xf]
        %v6963 = vld [vmem:[%s352 + $0x458] sm:$0xf]
        %v6964 = vld [vmem:[%s352 + $0x45c] sm:$0xf]
        %v6965 = vld [vmem:[%s352 + $0x460] sm:$0xf]
        %v6966 = vld [vmem:[%s352 + $0x464] sm:$0xf]
        %v6967 = vld [vmem:[%s352 + $0x468] sm:$0xf]
        %v6968 = vld [vmem:[%s352 + $0x46c] sm:$0xf]
        %v6969 = vld [vmem:[%s352 + $0x470] sm:$0xf]
        %v6970 = vld [vmem:[%s352 + $0x474] sm:$0xf]
        %v6971 = vld [vmem:[%s352 + $0x478] sm:$0xf]
        %v6972 = vld [vmem:[%s352 + $0x47c] sm:$0xf]
        %v6973 = vld [vmem:[#allocation5] sm:$0xff]
        %v6974 = vld [vmem:[#allocation5 + $0x8] sm:$0xff]
        %v6975 = vld [vmem:[#allocation5 + $0x10] sm:$0xff]
        %v6976 = vld [vmem:[#allocation5 + $0x18] sm:$0xff]
        %v6977 = vld [vmem:[#allocation5 + $0x20] sm:$0xf]
        %v6978 = vld [vmem:[#allocation5 + $0x28] sm:$0xff]
        %v6979 = vld [vmem:[#allocation5 + $0x30] sm:$0xff]
        %v6980 = vld [vmem:[#allocation5 + $0x38] sm:$0xff]
        %v6981 = vld [vmem:[#allocation5 + $0x40] sm:$0xff]
        %v6982 = vld [vmem:[#allocation5 + $0x48] sm:$0xf]
        %v6983 = vld [vmem:[%s371] sm:$0xff]
        %v6984 = vld [vmem:[%s371 + $0x8] sm:$0xff]
        %v6985 = vld [vmem:[%s371 + $0x10] sm:$0xff]
        %v6986 = vld [vmem:[%s371 + $0x18] sm:$0xff]
        %v6987 = vld [vmem:[%s371 + $0x20] sm:$0xf]
        %6989 = vset.pattern.permute.xlu0 0
        %6990 = vperm.xlu0 %6989, %v6973
        %v6991 = vpop.permute.xlu0 %6990
        %6994 = vset.pattern.permute.xlu0 0
        %6995 = vperm.xlu0 %6994, %v6974
        %v6996 = vpop.permute.xlu0 %6995
        %6999 = vset.pattern.permute.xlu0 0
        %7000 = vperm.xlu0 %6999, %v6975
        %v7001 = vpop.permute.xlu0 %7000
        %7004 = vset.pattern.permute.xlu0 0
        %7005 = vperm.xlu0 %7004, %v6976
        %v7006 = vpop.permute.xlu0 %7005
        %7009 = vset.pattern.permute.xlu0 0
        %7010 = vperm.xlu0 %7009, %v6977
        %v7011 = vpop.permute.xlu0 %7010
        %7014 = vset.pattern.permute.xlu0 0
        %7015 = vperm.xlu0 %7014, %v6978
        %v7016 = vpop.permute.xlu0 %7015
        %7019 = vset.pattern.permute.xlu0 0
        %7020 = vperm.xlu0 %7019, %v6979
        %v7021 = vpop.permute.xlu0 %7020
        %7024 = vset.pattern.permute.xlu0 0
        %7025 = vperm.xlu0 %7024, %v6980
        %v7026 = vpop.permute.xlu0 %7025
        %7029 = vset.pattern.permute.xlu0 0
        %7030 = vperm.xlu0 %7029, %v6981
        %v7031 = vpop.permute.xlu0 %7030
        %7034 = vset.pattern.permute.xlu0 0
        %7035 = vperm.xlu0 %7034, %v6982
        %v7036 = vpop.permute.xlu0 %7035
        %v7038 = vmul.f32 %v6991, %v6983
        %v7039 = vmul.f32 %v6996, %v6984
        %v7040 = vmul.f32 %v7001, %v6985
        %v7041 = vmul.f32 %v7006, %v6986
        %v7042 = vmul.f32 %v7011, %v6987
        %v7043 = vmul.f32 %v7016, %v6983
        %v7044 = vmul.f32 %v7021, %v6984
        %v7045 = vmul.f32 %v7026, %v6985
        %v7046 = vmul.f32 %v7031, %v6986
        %v7047 = vmul.f32 %v7036, %v6987
        %v7048 = vadd.f32 %v7038, %v7039
        %v7049 = vadd.f32 %v7048, %v7040
        %v7050 = vadd.f32 %v7049, %v7041
        %vm7051 = vcmask 1043456
        %v7052 = vsel %vm7051, %v7042, 0.0
        %v7053 = vadd.f32 %v7050, %v7052
        %v7054 = vrot.slane %v7053, 4
        %v7055 = vadd.f32 %v7053, %v7054
        %v7056 = vrot.slane %v7055, 2
        %v7057 = vadd.f32 %v7055, %v7056
        %v7058 = vrot.slane %v7057, 1
        %v7059 = vadd.f32 %v7057, %v7058
        %v7060 = vadd.f32 %v7043, %v7044
        %v7061 = vadd.f32 %v7060, %v7045
        %v7062 = vadd.f32 %v7061, %v7046
        %v7063 = vsel %vm7051, %v7047, 0.0
        %v7064 = vadd.f32 %v7062, %v7063
        %v7065 = vrot.slane %v7064, 4
        %v7066 = vadd.f32 %v7064, %v7065
        %v7067 = vrot.slane %v7066, 2
        %v7068 = vadd.f32 %v7066, %v7067
        %v7069 = vrot.slane %v7068, 1
        %v7070 = vadd.f32 %v7068, %v7069
        %7072 = vst [vmem:[#allocation1] ss:$9 sm:$0xff] %v6682
        %v7073 = vld [vmem:[#allocation1] sm:$0xff]
        %v7074 = vld [vmem:[#allocation1 + $0x9] sm:$0xff]
        %v7075 = vld [vmem:[#allocation1 + $0x12] sm:$0xff]
        %v7076 = vld [vmem:[#allocation1 + $0x1b] sm:$0xff]
        %v7077 = vld [vmem:[#allocation1 + $0x24] sm:$0xff]
        %v7078 = vld [vmem:[#allocation1 + $0x2d] sm:$0xff]
        %v7079 = vld [vmem:[#allocation1 + $0x36] sm:$0xff]
        %v7080 = vld [vmem:[#allocation1 + $0x3f] sm:$0xff]
        %7082 = vst [vmem:[#allocation1] ss:$9 sm:$0xff] %v6683
        %v7083 = vld [vmem:[#allocation1] sm:$0xff]
        %v7084 = vld [vmem:[#allocation1 + $0x9] sm:$0xff]
        %v7085 = vld [vmem:[#allocation1 + $0x12] sm:$0xff]
        %v7086 = vld [vmem:[#allocation1 + $0x1b] sm:$0xff]
        %v7087 = vld [vmem:[#allocation1 + $0x24] sm:$0xff]
        %v7088 = vld [vmem:[#allocation1 + $0x2d] sm:$0xff]
        %v7089 = vld [vmem:[#allocation1 + $0x36] sm:$0xff]
        %v7090 = vld [vmem:[#allocation1 + $0x3f] sm:$0xff]
        %7092 = vst [vmem:[#allocation1] ss:$9 sm:$0xff] %v6684
        %v7093 = vld [vmem:[#allocation1] sm:$0xff]
        %v7094 = vld [vmem:[#allocation1 + $0x9] sm:$0xff]
        %v7401 = vunpack.c.l.b16 %v6685
        %v7402 = vunpack.c.l.b16 %v6686
        %v7403 = vunpack.c.l.b16 %v6687
        %v7404 = vunpack.c.l.b16 %v6688
        %v7405 = vunpack.c.l.b16 %v6689
        %v7406 = vunpack.c.l.b16 %v6690
        %v7407 = vunpack.c.l.b16 %v6691
        %v7408 = vunpack.c.l.b16 %v6692
        %v7409 = vunpack.c.l.b16 %v6693
        %v7410 = vunpack.c.l.b16 %v6694
        %v7411 = vunpack.c.l.b16 %v6695
        %v7412 = vunpack.c.l.b16 %v6696
        %v7413 = vunpack.c.l.b16 %v6697
        %v7414 = vunpack.c.l.b16 %v6698
        %v7415 = vunpack.c.l.b16 %v6699
        %v7416 = vunpack.c.l.b16 %v6700
        %v7417 = vunpack.c.l.b16 %v6701
        %v7418 = vunpack.c.l.b16 %v6702
        %v7419 = vunpack.c.l.b16 %v6703
        %v7420 = vunpack.c.l.b16 %v6704
        %v7421 = vunpack.c.l.b16 %v6705
        %v7422 = vunpack.c.l.b16 %v6706
        %v7423 = vunpack.c.l.b16 %v6707
        %v7424 = vunpack.c.l.b16 %v6708
        %v7425 = vunpack.c.l.b16 %v6709
        %v7426 = vunpack.c.l.b16 %v6710
        %v7427 = vunpack.c.l.b16 %v6711
        %v7428 = vunpack.c.l.b16 %v6712
        %v7429 = vunpack.c.l.b16 %v6713
        %v7430 = vunpack.c.l.b16 %v6714
        %v7431 = vunpack.c.l.b16 %v6715
        %v7432 = vunpack.c.l.b16 %v6716
        %v7433 = vunpack.c.l.b16 %v6717
        %v7434 = vunpack.c.l.b16 %v6718
        %v7435 = vunpack.c.l.b16 %v6719
        %v7436 = vunpack.c.l.b16 %v6720
        %v7437 = vunpack.c.l.b16 %v6721
        %v7438 = vunpack.c.l.b16 %v6722
        %v7439 = vunpack.c.l.b16 %v6723
        %v7440 = vunpack.c.l.b16 %v6724
        %v7441 = vunpack.c.l.b16 %v6725
        %v7442 = vunpack.c.l.b16 %v6726
        %v7443 = vunpack.c.l.b16 %v6727
        %v7444 = vunpack.c.l.b16 %v6728
        %v7445 = vunpack.c.l.b16 %v6729
        %v7446 = vunpack.c.l.b16 %v6730
        %v7447 = vunpack.c.l.b16 %v6731
        %v7448 = vunpack.c.l.b16 %v6732
        %v7449 = vunpack.c.l.b16 %v6733
        %v7450 = vunpack.c.l.b16 %v6734
        %v7451 = vunpack.c.l.b16 %v6735
        %v7452 = vunpack.c.l.b16 %v6736
        %v7453 = vunpack.c.l.b16 %v6737
        %v7454 = vunpack.c.l.b16 %v6738
        %v7455 = vunpack.c.l.b16 %v6739
        %v7456 = vunpack.c.l.b16 %v6740
        %v7457 = vunpack.c.l.b16 %v6741
        %v7458 = vunpack.c.l.b16 %v6742
        %v7459 = vunpack.c.l.b16 %v6743
        %v7460 = vunpack.c.l.b16 %v6744
        %v7461 = vunpack.c.l.b16 %v6745
        %v7462 = vunpack.c.l.b16 %v6746
        %v7463 = vunpack.c.l.b16 %v6747
        %v7464 = vunpack.c.l.b16 %v6748
        %v7465 = vunpack.c.l.b16 %v6749
        %v7466 = vunpack.c.l.b16 %v6750
        %v7467 = vunpack.c.l.b16 %v6751
        %v7468 = vunpack.c.l.b16 %v6752
        %v7469 = vunpack.c.l.b16 %v6753
        %v7470 = vunpack.c.l.b16 %v6754
        %v7471 = vunpack.c.l.b16 %v6755
        %v7472 = vunpack.c.l.b16 %v6756
        %v7473 = vunpack.c.l.b16 %v6757
        %v7474 = vunpack.c.l.b16 %v6758
        %v7475 = vunpack.c.l.b16 %v6759
        %v7476 = vunpack.c.l.b16 %v6760
        %v7477 = vunpack.c.l.b16 %v6761
        %v7478 = vunpack.c.l.b16 %v6762
        %v7479 = vunpack.c.l.b16 %v6763
        %v7480 = vunpack.c.l.b16 %v6764
        %v7481 = vunpack.c.l.b16 %v6765
        %v7482 = vunpack.c.l.b16 %v6766
        %v7483 = vunpack.c.l.b16 %v6767
        %v7484 = vunpack.c.l.b16 %v6768
        %v7485 = vunpack.c.l.b16 %v6769
        %v7486 = vunpack.c.l.b16 %v6770
        %v7487 = vunpack.c.l.b16 %v6771
        %v7488 = vunpack.c.l.b16 %v6772
        %v7489 = vunpack.c.l.b16 %v6773
        %v7490 = vunpack.c.l.b16 %v6774
        %v7491 = vunpack.c.l.b16 %v6775
        %v7492 = vunpack.c.l.b16 %v6776
        %v7493 = vunpack.c.l.b16 %v6777
        %v7494 = vunpack.c.l.b16 %v6778
        %v7495 = vunpack.c.l.b16 %v6779
        %v7496 = vunpack.c.l.b16 %v6780
        %v7497 = vunpack.c.l.b16 %v6781
        %v7498 = vunpack.c.l.b16 %v6782
        %v7499 = vunpack.c.l.b16 %v6783
        %v7500 = vunpack.c.l.b16 %v6784
        %v7501 = vunpack.c.l.b16 %v6785
        %v7502 = vunpack.c.l.b16 %v6786
        %v7503 = vunpack.c.l.b16 %v6787
        %v7504 = vunpack.c.l.b16 %v6788
        %v7505 = vunpack.c.l.b16 %v6789
        %v7506 = vunpack.c.l.b16 %v6790
        %v7507 = vunpack.c.l.b16 %v6791
        %v7508 = vunpack.c.l.b16 %v6792
        %v7509 = vunpack.c.l.b16 %v6793
        %v7510 = vunpack.c.l.b16 %v6794
        %v7511 = vunpack.c.l.b16 %v6795
        %v7512 = vunpack.c.l.b16 %v6796
        %v7513 = vunpack.c.l.b16 %v6797
        %v7514 = vunpack.c.l.b16 %v6798
        %v7515 = vunpack.c.l.b16 %v6799
        %v7516 = vunpack.c.l.b16 %v6800
        %v7517 = vunpack.c.l.b16 %v6801
        %v7518 = vunpack.c.l.b16 %v6802
        %v7519 = vunpack.c.l.b16 %v6803
        %v7520 = vunpack.c.l.b16 %v6804
        %v7521 = vunpack.c.l.b16 %v6805
        %v7522 = vunpack.c.l.b16 %v6806
        %v7523 = vunpack.c.l.b16 %v6807
        %v7524 = vunpack.c.l.b16 %v6808
        %v7525 = vunpack.c.l.b16 %v6809
        %v7526 = vunpack.c.l.b16 %v6810
        %v7527 = vunpack.c.l.b16 %v6811
        %v7528 = vunpack.c.l.b16 %v6812
        %v7529 = vunpack.c.l.b16 %v6813
        %v7530 = vunpack.c.l.b16 %v6814
        %v7531 = vunpack.c.l.b16 %v6815
        %v7532 = vunpack.c.l.b16 %v6816
        %v7533 = vunpack.c.l.b16 %v6817
        %v7534 = vunpack.c.l.b16 %v6818
        %v7535 = vunpack.c.l.b16 %v6819
        %v7536 = vunpack.c.l.b16 %v6820
        %v7537 = vunpack.c.l.b16 %v6821
        %v7538 = vunpack.c.l.b16 %v6822
        %v7539 = vunpack.c.l.b16 %v6823
        %v7540 = vunpack.c.l.b16 %v6824
        %v7541 = vunpack.c.l.b16 %v6825
        %v7542 = vunpack.c.l.b16 %v6826
        %v7543 = vunpack.c.l.b16 %v6827
        %v7544 = vunpack.c.l.b16 %v6828
        %v7545 = vunpack.c.l.b16 %v6829
        %v7546 = vunpack.c.l.b16 %v6830
        %v7547 = vunpack.c.l.b16 %v6831
        %v7548 = vunpack.c.l.b16 %v6832
        %v7549 = vunpack.c.l.b16 %v6833
        %v7550 = vunpack.c.l.b16 %v6834
        %v7551 = vunpack.c.l.b16 %v6835
        %v7552 = vunpack.c.l.b16 %v6836
        %v7553 = vunpack.c.l.b16 %v6837
        %v7554 = vunpack.c.l.b16 %v6838
        %v7555 = vunpack.c.l.b16 %v6839
        %v7556 = vunpack.c.l.b16 %v6840
        %v7557 = vunpack.c.l.b16 %v6841
        %v7558 = vunpack.c.l.b16 %v6842
        %v7559 = vunpack.c.l.b16 %v6843
        %v7560 = vunpack.c.l.b16 %v6844
        %v7561 = vunpack.c.l.b16 %v6845
        %v7562 = vunpack.c.l.b16 %v6846
        %v7563 = vunpack.c.l.b16 %v6847
        %v7564 = vunpack.c.l.b16 %v6848
        %v7565 = vunpack.c.l.b16 %v6849
        %v7566 = vunpack.c.l.b16 %v6850
        %v7567 = vunpack.c.l.b16 %v6851
        %v7568 = vunpack.c.l.b16 %v6852
        %v7569 = vunpack.c.l.b16 %v6853
        %v7570 = vunpack.c.l.b16 %v6854
        %v7571 = vunpack.c.l.b16 %v6855
        %v7572 = vunpack.c.l.b16 %v6856
        %v7573 = vunpack.c.l.b16 %v6857
        %v7574 = vunpack.c.l.b16 %v6858
        %v7575 = vunpack.c.l.b16 %v6859
        %v7576 = vunpack.c.l.b16 %v6860
        %v7577 = vunpack.c.l.b16 %v6861
        %v7578 = vunpack.c.l.b16 %v6862
        %v7579 = vunpack.c.l.b16 %v6863
        %v7580 = vunpack.c.l.b16 %v6864
        %v7581 = vunpack.c.l.b16 %v6865
        %v7582 = vunpack.c.l.b16 %v6866
        %v7583 = vunpack.c.l.b16 %v6867
        %v7584 = vunpack.c.l.b16 %v6868
        %v7585 = vunpack.c.l.b16 %v6869
        %v7586 = vunpack.c.l.b16 %v6870
        %v7587 = vunpack.c.l.b16 %v6871
        %v7588 = vunpack.c.l.b16 %v6872
        %v7589 = vunpack.c.l.b16 %v6873
        %v7590 = vunpack.c.l.b16 %v6874
        %v7591 = vunpack.c.l.b16 %v6875
        %v7592 = vunpack.c.l.b16 %v6876
        %v7593 = vunpack.c.l.b16 %v6877
        %v7594 = vunpack.c.l.b16 %v6878
        %v7595 = vunpack.c.l.b16 %v6879
        %v7596 = vunpack.c.l.b16 %v6880
        %v7597 = vunpack.c.l.b16 %v6881
        %v7598 = vunpack.c.l.b16 %v6882
        %v7599 = vunpack.c.l.b16 %v6883
        %v7600 = vunpack.c.l.b16 %v6884
        %v7601 = vunpack.c.l.b16 %v6885
        %v7602 = vunpack.c.l.b16 %v6886
        %v7603 = vunpack.c.l.b16 %v6887
        %v7604 = vunpack.c.l.b16 %v6888
        %v7605 = vunpack.c.l.b16 %v6889
        %v7606 = vunpack.c.l.b16 %v6890
        %v7607 = vunpack.c.l.b16 %v6891
        %v7608 = vunpack.c.l.b16 %v6892
        %v7609 = vunpack.c.l.b16 %v6893
        %v7610 = vunpack.c.l.b16 %v6894
        %v7611 = vunpack.c.l.b16 %v6895
        %v7612 = vunpack.c.l.b16 %v6896
        %v7613 = vunpack.c.l.b16 %v6897
        %v7614 = vunpack.c.l.b16 %v6898
        %v7615 = vunpack.c.l.b16 %v6899
        %v7616 = vunpack.c.l.b16 %v6900
        %v7617 = vunpack.c.l.b16 %v6901
        %v7618 = vunpack.c.l.b16 %v6902
        %v7619 = vunpack.c.l.b16 %v6903
        %v7620 = vunpack.c.l.b16 %v6904
        %v7621 = vunpack.c.l.b16 %v6905
        %v7622 = vunpack.c.l.b16 %v6906
        %v7623 = vunpack.c.l.b16 %v6907
        %v7624 = vunpack.c.l.b16 %v6908
        %v7625 = vunpack.c.l.b16 %v6909
        %v7626 = vunpack.c.l.b16 %v6910
        %v7627 = vunpack.c.l.b16 %v6911
        %v7628 = vunpack.c.l.b16 %v6912
        %v7629 = vunpack.c.l.b16 %v6913
        %v7630 = vunpack.c.l.b16 %v6914
        %v7631 = vunpack.c.l.b16 %v6915
        %v7632 = vunpack.c.l.b16 %v6916
        %v7633 = vunpack.c.l.b16 %v6917
        %v7634 = vunpack.c.l.b16 %v6918
        %v7635 = vunpack.c.l.b16 %v6919
        %v7636 = vunpack.c.l.b16 %v6920
        %v7637 = vunpack.c.l.b16 %v6921
        %v7638 = vunpack.c.l.b16 %v6922
        %v7639 = vunpack.c.l.b16 %v6923
        %v7640 = vunpack.c.l.b16 %v6924
        %v7641 = vunpack.c.l.b16 %v6925
        %v7642 = vunpack.c.l.b16 %v6926
        %v7643 = vunpack.c.l.b16 %v6927
        %v7644 = vunpack.c.l.b16 %v6928
        %v7645 = vunpack.c.l.b16 %v6929
        %v7646 = vunpack.c.l.b16 %v6930
        %v7647 = vunpack.c.l.b16 %v6931
        %v7648 = vunpack.c.l.b16 %v6932
        %v7649 = vunpack.c.l.b16 %v6933
        %v7650 = vunpack.c.l.b16 %v6934
        %v7651 = vunpack.c.l.b16 %v6935
        %v7652 = vunpack.c.l.b16 %v6936
        %v7653 = vunpack.c.l.b16 %v6937
        %v7654 = vunpack.c.l.b16 %v6938
        %v7655 = vunpack.c.l.b16 %v6939
        %v7656 = vunpack.c.l.b16 %v6940
        %v7657 = vunpack.c.l.b16 %v6941
        %v7658 = vunpack.c.l.b16 %v6942
        %v7659 = vunpack.c.l.b16 %v6943
        %v7660 = vunpack.c.l.b16 %v6944
        %v7661 = vunpack.c.l.b16 %v6945
        %v7662 = vunpack.c.l.b16 %v6946
        %v7663 = vunpack.c.l.b16 %v6947
        %v7664 = vunpack.c.l.b16 %v6948
        %v7665 = vunpack.c.l.b16 %v6949
        %v7666 = vunpack.c.l.b16 %v6950
        %v7667 = vunpack.c.l.b16 %v6951
        %v7668 = vunpack.c.l.b16 %v6952
        %v7669 = vunpack.c.l.b16 %v6953
        %v7670 = vunpack.c.l.b16 %v6954
        %v7671 = vunpack.c.l.b16 %v6955
        %v7672 = vunpack.c.l.b16 %v6956
        %v7673 = vunpack.c.l.b16 %v6957
        %v7674 = vunpack.c.l.b16 %v6958
        %v7675 = vunpack.c.l.b16 %v6959
        %v7676 = vunpack.c.l.b16 %v6960
        %v7677 = vunpack.c.l.b16 %v6961
        %v7678 = vunpack.c.l.b16 %v6962
        %v7679 = vunpack.c.l.b16 %v6963
        %v7680 = vunpack.c.l.b16 %v6964
        %v7681 = vunpack.c.l.b16 %v6965
        %v7682 = vunpack.c.l.b16 %v6966
        %v7683 = vunpack.c.l.b16 %v6967
        %v7684 = vunpack.c.l.b16 %v6968
        %v7685 = vunpack.c.l.b16 %v6969
        %v7686 = vunpack.c.l.b16 %v6970
        %v7687 = vunpack.c.l.b16 %v6971
        %v7688 = vunpack.c.l.b16 %v6972
        %v7689 = vpack.c.b16 %v7402, %v7401
        %v7690 = vpack.c.b16 %v7404, %v7403
        %v7691 = vpack.c.b16 %v7406, %v7405
        %v7692 = vpack.c.b16 %v7408, %v7407
        %v7693 = vpack.c.b16 %v7410, %v7409
        %v7694 = vpack.c.b16 %v7412, %v7411
        %v7695 = vpack.c.b16 %v7414, %v7413
        %v7696 = vpack.c.b16 %v7416, %v7415
        %v7697 = vpack.c.b16 %v7418, %v7417
        %v7698 = vpack.c.b16 %v7420, %v7419
        %v7699 = vpack.c.b16 %v7422, %v7421
        %v7700 = vpack.c.b16 %v7424, %v7423
        %v7701 = vpack.c.b16 %v7426, %v7425
        %v7702 = vpack.c.b16 %v7428, %v7427
        %v7703 = vpack.c.b16 %v7430, %v7429
        %v7704 = vpack.c.b16 %v7432, %v7431
        %v7705 = vpack.c.b16 %v7434, %v7433
        %v7706 = vpack.c.b16 %v7436, %v7435
        %v7707 = vpack.c.b16 %v7438, %v7437
        %v7708 = vpack.c.b16 %v7440, %v7439
        %v7709 = vpack.c.b16 %v7442, %v7441
        %v7710 = vpack.c.b16 %v7444, %v7443
        %v7711 = vpack.c.b16 %v7446, %v7445
        %v7712 = vpack.c.b16 %v7448, %v7447
        %v7713 = vpack.c.b16 %v7450, %v7449
        %v7714 = vpack.c.b16 %v7452, %v7451
        %v7715 = vpack.c.b16 %v7454, %v7453
        %v7716 = vpack.c.b16 %v7456, %v7455
        %v7717 = vpack.c.b16 %v7458, %v7457
        %v7718 = vpack.c.b16 %v7460, %v7459
        %v7719 = vpack.c.b16 %v7462, %v7461
        %v7720 = vpack.c.b16 %v7464, %v7463
        %v7721 = vpack.c.b16 %v7466, %v7465
        %v7722 = vpack.c.b16 %v7468, %v7467
        %v7723 = vpack.c.b16 %v7470, %v7469
        %v7724 = vpack.c.b16 %v7472, %v7471
        %v7725 = vpack.c.b16 %v7474, %v7473
        %v7726 = vpack.c.b16 %v7476, %v7475
        %v7727 = vpack.c.b16 %v7478, %v7477
        %v7728 = vpack.c.b16 %v7480, %v7479
        %v7729 = vpack.c.b16 %v7482, %v7481
        %v7730 = vpack.c.b16 %v7484, %v7483
        %v7731 = vpack.c.b16 %v7486, %v7485
        %v7732 = vpack.c.b16 %v7488, %v7487
        %v7733 = vpack.c.b16 %v7490, %v7489
        %v7734 = vpack.c.b16 %v7492, %v7491
        %v7735 = vpack.c.b16 %v7494, %v7493
        %v7736 = vpack.c.b16 %v7496, %v7495
        %v7737 = vpack.c.b16 %v7498, %v7497
        %v7738 = vpack.c.b16 %v7500, %v7499
        %v7739 = vpack.c.b16 %v7502, %v7501
        %v7740 = vpack.c.b16 %v7504, %v7503
        %v7741 = vpack.c.b16 %v7506, %v7505
        %v7742 = vpack.c.b16 %v7508, %v7507
        %v7743 = vpack.c.b16 %v7510, %v7509
        %v7744 = vpack.c.b16 %v7512, %v7511
        %v7745 = vpack.c.b16 %v7514, %v7513
        %v7746 = vpack.c.b16 %v7516, %v7515
        %v7747 = vpack.c.b16 %v7518, %v7517
        %v7748 = vpack.c.b16 %v7520, %v7519
        %v7749 = vpack.c.b16 %v7522, %v7521
        %v7750 = vpack.c.b16 %v7524, %v7523
        %v7751 = vpack.c.b16 %v7526, %v7525
        %v7752 = vpack.c.b16 %v7528, %v7527
        %v7753 = vpack.c.b16 %v7530, %v7529
        %v7754 = vpack.c.b16 %v7532, %v7531
        %v7755 = vpack.c.b16 %v7534, %v7533
        %v7756 = vpack.c.b16 %v7536, %v7535
        %v7757 = vpack.c.b16 %v7538, %v7537
        %v7758 = vpack.c.b16 %v7540, %v7539
        %v7759 = vpack.c.b16 %v7542, %v7541
        %v7760 = vpack.c.b16 %v7544, %v7543
        %v7761 = vpack.c.b16 %v7546, %v7545
        %v7762 = vpack.c.b16 %v7548, %v7547
        %v7763 = vpack.c.b16 %v7550, %v7549
        %v7764 = vpack.c.b16 %v7552, %v7551
        %v7765 = vpack.c.b16 %v7554, %v7553
        %v7766 = vpack.c.b16 %v7556, %v7555
        %v7767 = vpack.c.b16 %v7558, %v7557
        %v7768 = vpack.c.b16 %v7560, %v7559
        %v7769 = vpack.c.b16 %v7562, %v7561
        %v7770 = vpack.c.b16 %v7564, %v7563
        %v7771 = vpack.c.b16 %v7566, %v7565
        %v7772 = vpack.c.b16 %v7568, %v7567
        %v7773 = vpack.c.b16 %v7570, %v7569
        %v7774 = vpack.c.b16 %v7572, %v7571
        %v7775 = vpack.c.b16 %v7574, %v7573
        %v7776 = vpack.c.b16 %v7576, %v7575
        %v7777 = vpack.c.b16 %v7578, %v7577
        %v7778 = vpack.c.b16 %v7580, %v7579
        %v7779 = vpack.c.b16 %v7582, %v7581
        %v7780 = vpack.c.b16 %v7584, %v7583
        %v7781 = vpack.c.b16 %v7586, %v7585
        %v7782 = vpack.c.b16 %v7588, %v7587
        %v7783 = vpack.c.b16 %v7590, %v7589
        %v7784 = vpack.c.b16 %v7592, %v7591
        %v7785 = vpack.c.b16 %v7594, %v7593
        %v7786 = vpack.c.b16 %v7596, %v7595
        %v7787 = vpack.c.b16 %v7598, %v7597
        %v7788 = vpack.c.b16 %v7600, %v7599
        %v7789 = vpack.c.b16 %v7602, %v7601
        %v7790 = vpack.c.b16 %v7604, %v7603
        %v7791 = vpack.c.b16 %v7606, %v7605
        %v7792 = vpack.c.b16 %v7608, %v7607
        %v7793 = vpack.c.b16 %v7610, %v7609
        %v7794 = vpack.c.b16 %v7612, %v7611
        %v7795 = vpack.c.b16 %v7614, %v7613
        %v7796 = vpack.c.b16 %v7616, %v7615
        %v7797 = vpack.c.b16 %v7618, %v7617
        %v7798 = vpack.c.b16 %v7620, %v7619
        %v7799 = vpack.c.b16 %v7622, %v7621
        %v7800 = vpack.c.b16 %v7624, %v7623
        %v7801 = vpack.c.b16 %v7626, %v7625
        %v7802 = vpack.c.b16 %v7628, %v7627
        %v7803 = vpack.c.b16 %v7630, %v7629
        %v7804 = vpack.c.b16 %v7632, %v7631
        %v7805 = vpack.c.b16 %v7634, %v7633
        %v7806 = vpack.c.b16 %v7636, %v7635
        %v7807 = vpack.c.b16 %v7638, %v7637
        %v7808 = vpack.c.b16 %v7640, %v7639
        %v7809 = vpack.c.b16 %v7642, %v7641
        %v7810 = vpack.c.b16 %v7644, %v7643
        %v7811 = vpack.c.b16 %v7646, %v7645
        %v7812 = vpack.c.b16 %v7648, %v7647
        %v7813 = vpack.c.b16 %v7650, %v7649
        %v7814 = vpack.c.b16 %v7652, %v7651
        %v7815 = vpack.c.b16 %v7654, %v7653
        %v7816 = vpack.c.b16 %v7656, %v7655
        %v7817 = vpack.c.b16 %v7658, %v7657
        %v7818 = vpack.c.b16 %v7660, %v7659
        %v7819 = vpack.c.b16 %v7662, %v7661
        %v7820 = vpack.c.b16 %v7664, %v7663
        %v7821 = vpack.c.b16 %v7666, %v7665
        %v7822 = vpack.c.b16 %v7668, %v7667
        %v7823 = vpack.c.b16 %v7670, %v7669
        %v7824 = vpack.c.b16 %v7672, %v7671
        %v7825 = vpack.c.b16 %v7674, %v7673
        %v7826 = vpack.c.b16 %v7676, %v7675
        %v7827 = vpack.c.b16 %v7678, %v7677
        %v7828 = vpack.c.b16 %v7680, %v7679
        %v7829 = vpack.c.b16 %v7682, %v7681
        %v7830 = vpack.c.b16 %v7684, %v7683
        %v7831 = vpack.c.b16 %v7686, %v7685
        %v7832 = vpack.c.b16 %v7688, %v7687
        %vm7979 = vcmask 1041409
        %v7980 = vsel %vm7979, %v7070, %v7059
        %7982 = vmatpush.bf16.msra.mxu0 %v7696
        %7983 = vmatpush.bf16.msra.mxu0 %v7695
        %7984 = vmatpush.bf16.msra.mxu0 %v7694
        %7985 = vmatpush.bf16.msra.mxu0 %v7693
        %7986 = vmatpush.bf16.msra.mxu0 %v7692
        %7987 = vmatpush.bf16.msra.mxu0 %v7691
        %7988 = vmatpush.bf16.msra.mxu0 %v7690
        %7989 = vmatpush.bf16.msra.mxu0 %v7689
        %7990 = vmatmul.bf16.gmra.mxu0 %v7073
        %v7991 = vpop.f32.mrf.mxu0
        %v7992 = vadd.f32 %v7980, %v7991
        %v7993 = vpop.f32.mrf.mxu0
        %7994 = vdwg.mxu0
        %7995 = vmatpush.bf16.msra.mxu0 %v7704
        %7996 = vmatpush.bf16.msra.mxu0 %v7703
        %7997 = vmatpush.bf16.msra.mxu0 %v7702
        %7998 = vmatpush.bf16.msra.mxu0 %v7701
        %7999 = vmatpush.bf16.msra.mxu0 %v7700
        %8000 = vmatpush.bf16.msra.mxu0 %v7699
        %8001 = vmatpush.bf16.msra.mxu0 %v7698
        %8002 = vmatpush.bf16.msra.mxu0 %v7697
        %8003 = vmatmul.bf16.gmra.mxu0 %v7074
        %v8004 = vpop.f32.mrf.mxu0
        %v8005 = vadd.f32 %v7992, %v8004
        %v8006 = vpop.f32.mrf.mxu0
        %8007 = vdwg.mxu0
        %8008 = vmatpush.bf16.msra.mxu0 %v7712
        %8009 = vmatpush.bf16.msra.mxu0 %v7711
        %8010 = vmatpush.bf16.msra.mxu0 %v7710
        %8011 = vmatpush.bf16.msra.mxu0 %v7709
        %8012 = vmatpush.bf16.msra.mxu0 %v7708
        %8013 = vmatpush.bf16.msra.mxu0 %v7707
        %8014 = vmatpush.bf16.msra.mxu0 %v7706
        %8015 = vmatpush.bf16.msra.mxu0 %v7705
        %8016 = vmatmul.bf16.gmra.mxu0 %v7075
        %v8017 = vpop.f32.mrf.mxu0
        %v8018 = vadd.f32 %v8005, %v8017
        %v8019 = vpop.f32.mrf.mxu0
        %8020 = vdwg.mxu0
        %8021 = vmatpush.bf16.msra.mxu0 %v7720
        %8022 = vmatpush.bf16.msra.mxu0 %v7719
        %8023 = vmatpush.bf16.msra.mxu0 %v7718
        %8024 = vmatpush.bf16.msra.mxu0 %v7717
        %8025 = vmatpush.bf16.msra.mxu0 %v7716
        %8026 = vmatpush.bf16.msra.mxu0 %v7715
        %8027 = vmatpush.bf16.msra.mxu0 %v7714
        %8028 = vmatpush.bf16.msra.mxu0 %v7713
        %8029 = vmatmul.bf16.gmra.mxu0 %v7076
        %v8030 = vpop.f32.mrf.mxu0
        %v8031 = vadd.f32 %v8018, %v8030
        %v8032 = vpop.f32.mrf.mxu0
        %8033 = vdwg.mxu0
        %8034 = vmatpush.bf16.msra.mxu0 %v7728
        %8035 = vmatpush.bf16.msra.mxu0 %v7727
        %8036 = vmatpush.bf16.msra.mxu0 %v7726
        %8037 = vmatpush.bf16.msra.mxu0 %v7725
        %8038 = vmatpush.bf16.msra.mxu0 %v7724
        %8039 = vmatpush.bf16.msra.mxu0 %v7723
        %8040 = vmatpush.bf16.msra.mxu0 %v7722
        %8041 = vmatpush.bf16.msra.mxu0 %v7721
        %8042 = vmatmul.bf16.gmra.mxu0 %v7077
        %v8043 = vpop.f32.mrf.mxu0
        %v8044 = vadd.f32 %v8031, %v8043
        %v8045 = vpop.f32.mrf.mxu0
        %8046 = vdwg.mxu0
        %8047 = vmatpush.bf16.msra.mxu0 %v7736
        %8048 = vmatpush.bf16.msra.mxu0 %v7735
        %8049 = vmatpush.bf16.msra.mxu0 %v7734
        %8050 = vmatpush.bf16.msra.mxu0 %v7733
        %8051 = vmatpush.bf16.msra.mxu0 %v7732
        %8052 = vmatpush.bf16.msra.mxu0 %v7731
        %8053 = vmatpush.bf16.msra.mxu0 %v7730
        %8054 = vmatpush.bf16.msra.mxu0 %v7729
        %8055 = vmatmul.bf16.gmra.mxu0 %v7078
        %v8056 = vpop.f32.mrf.mxu0
        %v8057 = vadd.f32 %v8044, %v8056
        %v8058 = vpop.f32.mrf.mxu0
        %8059 = vdwg.mxu0
        %8060 = vmatpush.bf16.msra.mxu0 %v7744
        %8061 = vmatpush.bf16.msra.mxu0 %v7743
        %8062 = vmatpush.bf16.msra.mxu0 %v7742
        %8063 = vmatpush.bf16.msra.mxu0 %v7741
        %8064 = vmatpush.bf16.msra.mxu0 %v7740
        %8065 = vmatpush.bf16.msra.mxu0 %v7739
        %8066 = vmatpush.bf16.msra.mxu0 %v7738
        %8067 = vmatpush.bf16.msra.mxu0 %v7737
        %8068 = vmatmul.bf16.gmra.mxu0 %v7079
        %v8069 = vpop.f32.mrf.mxu0
        %v8070 = vadd.f32 %v8057, %v8069
        %v8071 = vpop.f32.mrf.mxu0
        %8072 = vdwg.mxu0
        %8073 = vmatpush.bf16.msra.mxu0 %v7752
        %8074 = vmatpush.bf16.msra.mxu0 %v7751
        %8075 = vmatpush.bf16.msra.mxu0 %v7750
        %8076 = vmatpush.bf16.msra.mxu0 %v7749
        %8077 = vmatpush.bf16.msra.mxu0 %v7748
        %8078 = vmatpush.bf16.msra.mxu0 %v7747
        %8079 = vmatpush.bf16.msra.mxu0 %v7746
        %8080 = vmatpush.bf16.msra.mxu0 %v7745
        %8081 = vmatmul.bf16.gmra.mxu0 %v7080
        %v8082 = vpop.f32.mrf.mxu0
        %v8083 = vadd.f32 %v8070, %v8082
        %v8084 = vpop.f32.mrf.mxu0
        %8085 = vdwg.mxu0
        %8086 = vmatpush.bf16.msra.mxu0 %v7760
        %8087 = vmatpush.bf16.msra.mxu0 %v7759
        %8088 = vmatpush.bf16.msra.mxu0 %v7758
        %8089 = vmatpush.bf16.msra.mxu0 %v7757
        %8090 = vmatpush.bf16.msra.mxu0 %v7756
        %8091 = vmatpush.bf16.msra.mxu0 %v7755
        %8092 = vmatpush.bf16.msra.mxu0 %v7754
        %8093 = vmatpush.bf16.msra.mxu0 %v7753
        %8094 = vmatmul.bf16.gmra.mxu0 %v7083
        %v8095 = vpop.f32.mrf.mxu0
        %v8096 = vadd.f32 %v8083, %v8095
        %v8097 = vpop.f32.mrf.mxu0
        %8098 = vdwg.mxu0
        %8099 = vmatpush.bf16.msra.mxu0 %v7768
        %8100 = vmatpush.bf16.msra.mxu0 %v7767
        %8101 = vmatpush.bf16.msra.mxu0 %v7766
        %8102 = vmatpush.bf16.msra.mxu0 %v7765
        %8103 = vmatpush.bf16.msra.mxu0 %v7764
        %8104 = vmatpush.bf16.msra.mxu0 %v7763
        %8105 = vmatpush.bf16.msra.mxu0 %v7762
        %8106 = vmatpush.bf16.msra.mxu0 %v7761
        %8107 = vmatmul.bf16.gmra.mxu0 %v7084
        %v8108 = vpop.f32.mrf.mxu0
        %v8109 = vadd.f32 %v8096, %v8108
        %v8110 = vpop.f32.mrf.mxu0
        %8111 = vdwg.mxu0
        %8112 = vmatpush.bf16.msra.mxu0 %v7776
        %8113 = vmatpush.bf16.msra.mxu0 %v7775
        %8114 = vmatpush.bf16.msra.mxu0 %v7774
        %8115 = vmatpush.bf16.msra.mxu0 %v7773
        %8116 = vmatpush.bf16.msra.mxu0 %v7772
        %8117 = vmatpush.bf16.msra.mxu0 %v7771
        %8118 = vmatpush.bf16.msra.mxu0 %v7770
        %8119 = vmatpush.bf16.msra.mxu0 %v7769
        %8120 = vmatmul.bf16.gmra.mxu0 %v7085
        %v8121 = vpop.f32.mrf.mxu0
        %v8122 = vadd.f32 %v8109, %v8121
        %v8123 = vpop.f32.mrf.mxu0
        %8124 = vdwg.mxu0
        %8125 = vmatpush.bf16.msra.mxu0 %v7784
        %8126 = vmatpush.bf16.msra.mxu0 %v7783
        %8127 = vmatpush.bf16.msra.mxu0 %v7782
        %8128 = vmatpush.bf16.msra.mxu0 %v7781
        %8129 = vmatpush.bf16.msra.mxu0 %v7780
        %8130 = vmatpush.bf16.msra.mxu0 %v7779
        %8131 = vmatpush.bf16.msra.mxu0 %v7778
        %8132 = vmatpush.bf16.msra.mxu0 %v7777
        %8133 = vmatmul.bf16.gmra.mxu0 %v7086
        %v8134 = vpop.f32.mrf.mxu0
        %v8135 = vadd.f32 %v8122, %v8134
        %v8136 = vpop.f32.mrf.mxu0
        %8137 = vdwg.mxu0
        %8138 = vmatpush.bf16.msra.mxu0 %v7792
        %8139 = vmatpush.bf16.msra.mxu0 %v7791
        %8140 = vmatpush.bf16.msra.mxu0 %v7790
        %8141 = vmatpush.bf16.msra.mxu0 %v7789
        %8142 = vmatpush.bf16.msra.mxu0 %v7788
        %8143 = vmatpush.bf16.msra.mxu0 %v7787
        %8144 = vmatpush.bf16.msra.mxu0 %v7786
        %8145 = vmatpush.bf16.msra.mxu0 %v7785
        %8146 = vmatmul.bf16.gmra.mxu0 %v7087
        %v8147 = vpop.f32.mrf.mxu0
        %v8148 = vadd.f32 %v8135, %v8147
        %v8149 = vpop.f32.mrf.mxu0
        %8150 = vdwg.mxu0
        %8151 = vmatpush.bf16.msra.mxu0 %v7800
        %8152 = vmatpush.bf16.msra.mxu0 %v7799
        %8153 = vmatpush.bf16.msra.mxu0 %v7798
        %8154 = vmatpush.bf16.msra.mxu0 %v7797
        %8155 = vmatpush.bf16.msra.mxu0 %v7796
        %8156 = vmatpush.bf16.msra.mxu0 %v7795
        %8157 = vmatpush.bf16.msra.mxu0 %v7794
        %8158 = vmatpush.bf16.msra.mxu0 %v7793
        %8159 = vmatmul.bf16.gmra.mxu0 %v7088
        %v8160 = vpop.f32.mrf.mxu0
        %v8161 = vadd.f32 %v8148, %v8160
        %v8162 = vpop.f32.mrf.mxu0
        %8163 = vdwg.mxu0
        %8164 = vmatpush.bf16.msra.mxu0 %v7808
        %8165 = vmatpush.bf16.msra.mxu0 %v7807
        %8166 = vmatpush.bf16.msra.mxu0 %v7806
        %8167 = vmatpush.bf16.msra.mxu0 %v7805
        %8168 = vmatpush.bf16.msra.mxu0 %v7804
        %8169 = vmatpush.bf16.msra.mxu0 %v7803
        %8170 = vmatpush.bf16.msra.mxu0 %v7802
        %8171 = vmatpush.bf16.msra.mxu0 %v7801
        %8172 = vmatmul.bf16.gmra.mxu0 %v7089
        %v8173 = vpop.f32.mrf.mxu0
        %v8174 = vadd.f32 %v8161, %v8173
        %v8175 = vpop.f32.mrf.mxu0
        %8176 = vdwg.mxu0
        %8177 = vmatpush.bf16.msra.mxu0 %v7816
        %8178 = vmatpush.bf16.msra.mxu0 %v7815
        %8179 = vmatpush.bf16.msra.mxu0 %v7814
        %8180 = vmatpush.bf16.msra.mxu0 %v7813
        %8181 = vmatpush.bf16.msra.mxu0 %v7812
        %8182 = vmatpush.bf16.msra.mxu0 %v7811
        %8183 = vmatpush.bf16.msra.mxu0 %v7810
        %8184 = vmatpush.bf16.msra.mxu0 %v7809
        %8185 = vmatmul.bf16.gmra.mxu0 %v7090
        %v8186 = vpop.f32.mrf.mxu0
        %v8187 = vadd.f32 %v8174, %v8186
        %v8188 = vpop.f32.mrf.mxu0
        %8189 = vdwg.mxu0
        %8190 = vmatpush.bf16.msra.mxu0 %v7824
        %8191 = vmatpush.bf16.msra.mxu0 %v7823
        %8192 = vmatpush.bf16.msra.mxu0 %v7822
        %8193 = vmatpush.bf16.msra.mxu0 %v7821
        %8194 = vmatpush.bf16.msra.mxu0 %v7820
        %8195 = vmatpush.bf16.msra.mxu0 %v7819
        %8196 = vmatpush.bf16.msra.mxu0 %v7818
        %8197 = vmatpush.bf16.msra.mxu0 %v7817
        %8198 = vmatmul.bf16.gmra.mxu0 %v7093
        %v8199 = vpop.f32.mrf.mxu0
        %v8200 = vadd.f32 %v8187, %v8199
        %v8201 = vpop.f32.mrf.mxu0
        %8202 = vdwg.mxu0
        %8203 = vmatpush.bf16.msra.mxu0 %v7832
        %8204 = vmatpush.bf16.msra.mxu0 %v7831
        %8205 = vmatpush.bf16.msra.mxu0 %v7830
        %8206 = vmatpush.bf16.msra.mxu0 %v7829
        %8207 = vmatpush.bf16.msra.mxu0 %v7828
        %8208 = vmatpush.bf16.msra.mxu0 %v7827
        %8209 = vmatpush.bf16.msra.mxu0 %v7826
        %8210 = vmatpush.bf16.msra.mxu0 %v7825
        %8211 = vmatmul.bf16.gmra.mxu0 %v7094
        %v8212 = vpop.f32.mrf.mxu0
        %v8213 = vadd.f32 %v8200, %v8212
        %v8214 = vpop.f32.mrf.mxu0
        %8215 = vdwg.mxu0
        %v8216 = vld [vmem:[%s361] sm:$0x1]
        %v8218 = vperm.slane %v8216, 0
        %v8220 = vadd.f32 %v8213, %v8218
        %v8221 = vmax.f32 %v8220, 0.0
        %v8222 = vld [vmem:[%s421] sm:$0xff]
        %v8223 = vld [vmem:[%s421 + $0x8] sm:$0xff]
        %v8224 = vld [vmem:[%s421 + $0x10] sm:$0xff]
        %v8225 = vld [vmem:[%s421 + $0x18] sm:$0xff]
        %v8226 = vld [vmem:[%s421 + $0x20] sm:$0xff]
        %v8227 = vld [vmem:[%s421 + $0x28] sm:$0xff]
        %v8228 = vld [vmem:[%s421 + $0x30] sm:$0xff]
        %v8229 = vld [vmem:[%s421 + $0x38] sm:$0xff]
        %v8230 = vld [vmem:[%s421 + $0x40] sm:$0xff]
        %v8231 = vld [vmem:[%s421 + $0x48] sm:$0xff]
        %v8232 = vld [vmem:[%s421 + $0x50] sm:$0xff]
        %v8233 = vld [vmem:[%s421 + $0x58] sm:$0xff]
        %v8234 = vld [vmem:[%s421 + $0x60] sm:$0xff]
        %v8235 = vld [vmem:[%s421 + $0x68] sm:$0xff]
        %v8236 = vld [vmem:[%s421 + $0x70] sm:$0xff]
        %v8237 = vld [vmem:[%s421 + $0x78] sm:$0xff]
        %8238 = vmatpush.msra.mxu0 %v8237
        %8239 = vmatpush.msra.mxu0 %v8236
        %8240 = vmatpush.msra.mxu0 %v8235
        %8241 = vmatpush.msra.mxu0 %v8234
        %8242 = vmatpush.msra.mxu0 %v8233
        %8243 = vmatpush.msra.mxu0 %v8232
        %8244 = vmatpush.msra.mxu0 %v8231
        %8245 = vmatpush.msra.mxu0 %v8230
        %8246 = vmatpush.msra.mxu0 %v8229
        %8247 = vmatpush.msra.mxu0 %v8228
        %8248 = vmatpush.msra.mxu0 %v8227
        %8249 = vmatpush.msra.mxu0 %v8226
        %8250 = vmatpush.msra.mxu0 %v8225
        %8251 = vmatpush.msra.mxu0 %v8224
        %8252 = vmatpush.msra.mxu0 %v8223
        %8253 = vmatpush.msra.mxu0 %v8222
        %8254 = vmatmul.f32.gmra.mxu0 %v8221
        %v8255 = vpop.f32.mrf.mxu0
        %v8256 = vadd.f32 0.0, %v8255
        %8257 = vdwg.mxu0
        // Predicated region
        $region77: #{tpu_custom_call.1} parent=47 // pred_check
          %p8258 = pneg %p423
        $region78: #{tpu_custom_call.1} parent=47 // pred_check_branch
          %8260 = sbr.rel (%p8258) target = $region80
        $region79: #{tpu_custom_call.1} parent=47 // pred_region
          %v8261 = vld [vmem:[#allocation15] sm:$0x1]
          %v8263 = vperm.slane %v8261, 0
          %v8265 = vadd.f32 %v8256, %v8263
          %vm8266 = vcmask 164864
          %8267 = vst.msk [vmem:[#allocation6] sm:$0x3] %vm8266, %v8265
        $region80: #{tpu_custom_call.1} parent=47 // pred_fallthru
          _
        %p8268 = scmp.gt.s32.totalorder %s21, 0
        // Predicated region
        $region81: #{tpu_custom_call.1} parent=47 // pred_check
          %p8269 = pneg %p8268
        $region82: #{tpu_custom_call.1} parent=47 // pred_check_branch
          %8271 = sbr.rel (%p8269) target = $region84
        $region83: #{tpu_custom_call.1} parent=47 // pred_region
          %v8272 = vld [vmem:[#allocation6] sm:$0x3]
          %v8273 = vadd.f32 %v8272, %v8256
          %vm8274 = vcmask 164864
          %8275 = vst.msk [vmem:[#allocation6] sm:$0x3] %vm8274, %v8273
        $region84: #{tpu_custom_call.1} parent=47 // pred_fallthru
          _
        %p8276 = scmp.eq.s32.totalorder %s21, 3
        // Predicated region
        $region85: #{tpu_custom_call.1} parent=47 // pred_check
          %p8277 = pneg %p8276
        $region86: #{tpu_custom_call.1} parent=47 // pred_check_branch
          %8279 = sbr.rel (%p8277) target = $region88
        $region87: #{tpu_custom_call.1} parent=47 // pred_region
          %v8280 = vld [vmem:[#allocation6] sm:$0x3]
          %vm8281 = vcmask 164864
          %8282 = vst.msk [vmem:[#allocation16] sm:$0x3] %vm8281, %v8280
        $region88: #{tpu_custom_call.1} parent=47 // pred_fallthru
          _
        // Predicated region
        $region89: #{tpu_custom_call.1} parent=47 // pred_check
          %p8283 = pneg %p201
        $region90: #{tpu_custom_call.1} parent=47 // pred_check_branch
          %8285 = sbr.rel (%p8283) target = $region92
        $region91: #{tpu_custom_call.1} parent=47 // pred_region
          %8287 = vsyncadd [#allocation9], 0
          %s8289 = sshll.u32 [#allocation16], 4
          %s8290 = int_to_ptr.vmem [resolvable:$true] %s8289
          %s8291 = sshll.u32 %s7, 4
          %s8292 = int_to_ptr.hbm [resolvable:$true] %s8291
          %8294 = dma.vmem_to_hbm [thread:$0]  %s8290, 32, %s8292, [#allocation9]
        $region92: #{tpu_custom_call.1} parent=47 // pred_fallthru
          _
        // Predicated region
        $region93: #{tpu_custom_call.1} parent=47 // pred_check
          %p8295 = pneg %p201
        $region94: #{tpu_custom_call.1} parent=47 // pred_check_branch
          %8297 = sbr.rel (%p8295) target = $region96
        $region95: #{tpu_custom_call.1} parent=47 // pred_region
          %8299 = dma.done [#allocation9], 32
        $region96: #{tpu_custom_call.1} parent=47 // pred_fallthru
          _
      $region48: #{tpu_custom_call.1} parent=5 // pred_fallthru
        _
      %p8300 = scmp.le.s32.totalorder 2, %s16
      // Predicated region
      $region97: #{tpu_custom_call.1} parent=5 // pred_check
        %p8301 = pneg %p8300
      $region98: #{tpu_custom_call.1} parent=5 // pred_check_branch
        %8303 = sbr.rel (%p8301) target = $region100
      $region99: #{tpu_custom_call.1} parent=5 // pred_region
        %s8304 = ssub.s32 %s16, 2
      $region100: #{tpu_custom_call.1} parent=5 // pred_fallthru
        _
    $region6: #{tpu_custom_call.1} parent=1 // loop_footer
      %s20 = sadd.s32 1, %s16
    $region7: #{tpu_custom_call.1} parent=1 // loop_footer_branch
      %15 = sbr.rel target = $region3
    $region8: #{tpu_custom_call.1} parent=1 // loop_exit
      _
    %8305 = vsyncpa [#allocation8], 1
    %s8306 = scalar_lea.sflag [#allocation8], 1
    %8307 = vsyncpa %s8306, 1
    %8308 = vsyncpa [#allocation11], 1
    %8309 = vsyncpa [#allocation9], 1
    %s8310 = scalar_lea.sflag [#allocation9], 1
    %8311 = vsyncpa %s8310, 1

</llo_original>
